<compile_context>
chip_gen: v7x
topology: tpu7x:2x2x1
jax: 0.10.0
libtpu: 0.0.40
codegen_flags: <defaults>
</compile_context>

<pallas_src>
import functools

import jax
import jax.numpy as jnp
from jax.experimental import pallas as pl
from jax.experimental.pallas import tpu as pltpu


_CONV_ROW_TILE = 2048   # rows per grid step for the im2col conv matmuls
_BATCH_TILE = 256       # images per grid step for the fused conv3+FC+head


def _pick_tile(m, max_tile):
    """Largest useful 8-aligned row tile; >=2 grid steps once m is large."""
    if m > max_tile:
        return max_tile                       # max_tile is a multiple of 8
    if m >= 1024:                             # give v7x's 2 TCs >=2 grid steps
        return ((m + 15) // 16) * 8           # ~m/2, rounded up to 8
    return m                                  # full-extent block


# ----------------------------------------------------------------------------
# Pallas kernel 1: matmul + bias + ReLU (used for conv1 / conv2 via im2col)
# ----------------------------------------------------------------------------
def _matmul_bias_relu_kernel(x_ref, w_ref, b_ref, o_ref):
    # o = relu(x @ w + b); bf16 MXU inputs, f32 accumulation, bf16 store.
    y = jnp.dot(x_ref[...], w_ref[...], preferred_element_type=jnp.float32)
    y = jnp.maximum(y + b_ref[...], 0.0)
    o_ref[...] = y.astype(o_ref.dtype)


def pallas_matmul_bias_relu(x, w, b, *, row_tile=_CONV_ROW_TILE,
                            out_dtype=jnp.bfloat16):
    """x: (M, K) bf16, w: (K, N) bf16, b: (N,) f32 -> (M, N) out_dtype."""
    M, K = x.shape
    N = w.shape[1]
    tm = _pick_tile(M, row_tile)
    grid = (pl.cdiv(M, tm),)
    # TODO(synk): fold rows into lanes (>=128-wide stores) for the 32/64-wide
    # conv outputs once the in-kernel relayout is verified cheaper than the
    # masked vst; weights/bias could also use pipeline_mode=pl.Buffered(1),
    # but VMEM is nowhere near the limit for these shapes.
    return pl.pallas_call(
        _matmul_bias_relu_kernel,
        out_shape=jax.ShapeDtypeStruct((M, N), out_dtype),
        grid=grid,
        in_specs=[
            pl.BlockSpec((tm, K), lambda i: (i, 0)),
            pl.BlockSpec((K, N), lambda i: (0, 0)),
            pl.BlockSpec((1, N), lambda i: (0, 0)),
        ],
        out_specs=pl.BlockSpec((tm, N), lambda i: (i, 0)),
        compiler_params=pltpu.CompilerParams(dimension_semantics=("parallel",)),
    )(x, w, b.reshape(1, N).astype(jnp.float32))


# ----------------------------------------------------------------------------
# Pallas kernel 2: fused conv3 (3x3, stride 1) + FC(1024->512) + dueling head
# ----------------------------------------------------------------------------
def _tail_kernel(x_ref, w3_ref, b3_ref, wf_ref, bf_ref, wh_ref, bh_ref, o_ref,
                 *, num_actions):
    # x_ref: (tb, 6*6*64) bf16  -- conv2 output, NHWC flatten (h, w, c)
    # w3_ref: (3, 3*64, 64) bf16 (per kernel-row), b3_ref: (1, 64) f32
    # wf_ref: (16, 64, 512) bf16 (per conv3 output position), bf_ref: (1, 512)
    # wh_ref: (512, A+1) bf16, bh_ref: (1, A+1) f32
    tb = x_ref.shape[0]
    c = w3_ref.shape[2]            # 64 channels
    in_w = 6                       # conv2 output spatial size (6x6)
    out_hw = 4                     # conv3 output spatial size (4x4)
    h_dim = wf_ref.shape[2]        # 512 FC features

    x2 = x_ref[...]                # (tb, 2304) bf16, stays in VMEM/vregs
    b3 = b3_ref[...]               # (1, c) f32
    feat_acc = jnp.zeros((tb, h_dim), jnp.float32)

    # conv3 + FC, unrolled over the 4x4 output positions; each conv3 output
    # position is 3 contiguous (tb, 3*c) lane slices matmul'd against the
    # per-row weight blocks, then immediately folded into the FC accumulator.
    for oh in range(out_hw):
        for ow in range(out_hw):
            acc = jnp.zeros((tb, c), jnp.float32)
            for i in range(3):                       # conv3 kernel rows
                start = ((oh + i) * in_w + ow) * c   # row oh+i, cols ow..ow+2
                acc = acc + jnp.dot(x2[:, start:start + 3 * c], w3_ref[i],
                                    preferred_element_type=jnp.float32)
            y = jnp.maximum(acc + b3, 0.0).astype(jnp.bfloat16)   # (tb, c)
            feat_acc = feat_acc + jnp.dot(y, wf_ref[oh * out_hw + ow],
                                          preferred_element_type=jnp.float32)

    feat = jnp.maximum(feat_acc + bf_ref[...], 0.0).astype(jnp.bfloat16)
    h = jnp.dot(feat, wh_ref[...], preferred_element_type=jnp.float32)
    h = h + bh_ref[...]
    adv = h[:, :num_actions]
    val = h[:, num_actions:num_actions + 1]
    o_ref[...] = val + adv - jnp.mean(adv, axis=1, keepdims=True)


def pallas_conv3_fc_dueling(x2_flat, w3, b3, fc_w, fc_b, head_w, head_b, *,
                            num_actions, batch_tile=_BATCH_TILE):
    """x2_flat: (B, 2304) bf16 -> Q: (B, num_actions) f32."""
    B, D = x2_flat.shape
    tb = _pick_tile(B, batch_tile)
    H = fc_w.shape[2]
    A1 = head_w.shape[1]
    grid = (pl.cdiv(B, tb),)
    return pl.pallas_call(
        functools.partial(_tail_kernel, num_actions=num_actions),
        out_shape=jax.ShapeDtypeStruct((B, num_actions), jnp.float32),
        grid=grid,
        in_specs=[
            pl.BlockSpec((tb, D), lambda i: (i, 0)),
            pl.BlockSpec(w3.shape, lambda i: (0, 0, 0)),
            pl.BlockSpec((1, w3.shape[2]), lambda i: (0, 0)),
            pl.BlockSpec(fc_w.shape, lambda i: (0, 0, 0)),
            pl.BlockSpec((1, H), lambda i: (0, 0)),
            pl.BlockSpec(head_w.shape, lambda i: (0, 0)),
            pl.BlockSpec((1, A1), lambda i: (0, 0)),
        ],
        out_specs=pl.BlockSpec((tb, num_actions), lambda i: (i, 0)),
        compiler_params=pltpu.CompilerParams(dimension_semantics=("parallel",)),
    )(x2_flat, w3, b3.reshape(1, -1), fc_w, fc_b.reshape(1, -1),
      head_w, head_b.reshape(1, -1))


# ----------------------------------------------------------------------------
# im2col glue (plain JAX/XLA) — NHWC, bf16, no transposes
# ----------------------------------------------------------------------------
def im2col_nhwc(x, kh, kw, stride):
    """x: (B, H, W, C) -> (B*OH*OW, kh*kw*C), columns in (kh, kw, C) order."""
    B, H, W, C = x.shape
    oh = (H - kh) // stride + 1
    ow = (W - kw) // stride + 1
    cols = []
    for i in range(kh):
        for j in range(kw):
            cols.append(
                x[:, i:i + stride * oh:stride, j:j + stride * ow:stride, :])
    patches = jnp.stack(cols, axis=3)                  # (B, oh, ow, kh*kw, C)
    return patches.reshape(B * oh * ow, kh * kw * C), (oh, ow)


# ----------------------------------------------------------------------------
# Parameters: PyTorch-shaped init, then a one-time repack into kernel layout
# ----------------------------------------------------------------------------
def init_params(key, input_channels=1, num_actions=3):
    """Deterministic init mirroring PyTorch default (uniform +-1/sqrt(fan_in))."""
    def uniform(k, shape, fan_in):
        bound = 1.0 / jnp.sqrt(jnp.float32(fan_in))
        return jax.random.uniform(k, shape, jnp.float32, -bound, bound)

    ks = jax.random.split(key, 12)
    p = {}
    p["conv1_w"] = uniform(ks[0], (32, input_channels, 8, 8), input_channels * 64)
    p["conv1_b"] = uniform(ks[1], (32,), input_channels * 64)
    p["conv2_w"] = uniform(ks[2], (64, 32, 4, 4), 32 * 16)
    p["conv2_b"] = uniform(ks[3], (64,), 32 * 16)
    p["conv3_w"] = uniform(ks[4], (64, 64, 3, 3), 64 * 9)
    p["conv3_b"] = uniform(ks[5], (64,), 64 * 9)
    flattened = 64 * 4 * 4  # 1024 for a 64x64 input, as in the PyTorch module
    p["fc_w"] = uniform(ks[6], (512, flattened), flattened)          # (out, in)
    p["fc_b"] = uniform(ks[7], (512,), flattened)
    p["adv_w"] = uniform(ks[8], (num_actions, 512), 512)
    p["adv_b"] = uniform(ks[9], (num_actions,), 512)
    p["val_w"] = uniform(ks[10], (1, 512), 512)
    p["val_b"] = uniform(ks[11], (1,), 512)
    return p


def prepare_params(p):
    """One-time repack of PyTorch-layout params into kernel layout.

    Weights are pre-cast to bf16 (MXU input dtype) so no per-tile casts or f32
    weight DMA happen at forward time; biases stay f32 (accumulator dtype).
    """
    def conv_w_to_mat(w):
        # (c_out, c_in, kh, kw) -> (kh*kw*c_in, c_out), matching im2col_nhwc
        c_out, c_in, kh, kw = w.shape
        return jnp.transpose(w, (2, 3, 1, 0)).reshape(kh * kw * c_in, c_out)

    bf16 = jnp.bfloat16
    # conv3 weights grouped per kernel row: (kh, kw*c, c_out), so the fused
    # kernel matmuls one contiguous (row, 3 cols, c) lane slice per step.
    w3 = jnp.transpose(p["conv3_w"], (2, 3, 1, 0)).reshape(3, 3 * 64, 64)
    # fc weights grouped per conv3 output position p = oh*4+ow: (16, 64, 512);
    # this also converts PyTorch's NCHW flatten order to the kernel's NHWC.
    fc_w = p["fc_w"].reshape(512, 64, 4, 4)            # (out, c, oh, ow)
    fc_w = jnp.transpose(fc_w, (2, 3, 1, 0)).reshape(16, 64, 512)
    # adv/val streams concatenated into one (512, A+1) head matrix.
    head_w = jnp.concatenate([p["adv_w"].T, p["val_w"].T], axis=1)
    head_b = jnp.concatenate([p["adv_b"], p["val_b"]], axis=0)

    return {
        "conv1_w": conv_w_to_mat(p["conv1_w"]).astype(bf16), "conv1_b": p["conv1_b"],
        "conv2_w": conv_w_to_mat(p["conv2_w"]).astype(bf16), "conv2_b": p["conv2_b"],
        "conv3_w": w3.astype(bf16), "conv3_b": p["conv3_b"],
        "fc_w": fc_w.astype(bf16), "fc_b": p["fc_b"],
        "head_w": head_w.astype(bf16), "head_b": head_b,
    }


# ----------------------------------------------------------------------------
# Forward pass (mirrors DDDQN.forward)
# ----------------------------------------------------------------------------
def dddqn_forward(params, x, *, num_actions=3):
    # x: (B, C_in, 64, 64) f32 NCHW (PyTorch interface); NHWC + bf16 once.
    B = x.shape[0]
    x = jnp.transpose(x, (0, 2, 3, 1)).astype(jnp.bfloat16)
    # conv1: 8x8 stride 4 -> (B, 15, 15, 32)
    p1, (oh, ow) = im2col_nhwc(x, 8, 8, 4)
    x = pallas_matmul_bias_relu(p1, params["conv1_w"], params["conv1_b"])
    x = x.reshape(B, oh, ow, 32)
    # conv2: 4x4 stride 2 -> (B, 6, 6, 64)
    p2, (oh, ow) = im2col_nhwc(x, 4, 4, 2)
    x = pallas_matmul_bias_relu(p2, params["conv2_w"], params["conv2_b"])
    x2_flat = x.reshape(B, oh * ow * 64)     # lane-dense NHWC flatten (free)
    # conv3 (3x3 stride 1) + FC + dueling head: one fused kernel, no im2col.
    return pallas_conv3_fc_dueling(
        x2_flat, params["conv3_w"], params["conv3_b"],
        params["fc_w"], params["fc_b"], params["head_w"], params["head_b"],
        num_actions=num_actions)


def reference_forward(params, x, *, num_actions=3):
    """Plain-JAX forward with identical bf16/f32 math, for self-checking."""
    def mm(a, w, b):
        return jnp.dot(a, w, preferred_element_type=jnp.float32) + b.reshape(1, -1)

    B = x.shape[0]
    x = jnp.transpose(x, (0, 2, 3, 1)).astype(jnp.bfloat16)
    p1, (oh, ow) = im2col_nhwc(x, 8, 8, 4)
    x = jnp.maximum(mm(p1, params["conv1_w"], params["conv1_b"]), 0.0)
    x = x.astype(jnp.bfloat16).reshape(B, oh, ow, 32)
    p2, (oh, ow) = im2col_nhwc(x, 4, 4, 2)
    x = jnp.maximum(mm(p2, params["conv2_w"], params["conv2_b"]), 0.0)
    x = x.astype(jnp.bfloat16).reshape(B, oh, ow, 64)
    p3, (oh, ow) = im2col_nhwc(x, 3, 3, 1)
    w3_mat = params["conv3_w"].reshape(3 * 3 * 64, 64)   # rows already (kh, kw, c)
    x = jnp.maximum(mm(p3, w3_mat, params["conv3_b"]), 0.0)
    x = x.astype(jnp.bfloat16).reshape(B, oh * ow * 64)  # NHWC flatten
    fc_mat = params["fc_w"].reshape(16 * 64, 512)        # rows already (oh, ow, c)
    feat = jnp.maximum(mm(x, fc_mat, params["fc_b"]), 0.0).astype(jnp.bfloat16)
    h = mm(feat, params["head_w"], params["head_b"])
    adv = h[:, :num_actions]
    val = h[:, num_actions:num_actions + 1]
    return val + adv - jnp.mean(adv, axis=1, keepdims=True)


if __name__ == "__main__":
    key = jax.random.PRNGKey(0)
    pkey, xkey = jax.random.split(key)
    torch_params = init_params(pkey, input_channels=1, num_actions=3)
    params = prepare_params(torch_params)

    # The fc layer size (1024) is derived from a 64x64 input in the PyTorch
    # module, so H=W=64 is required; batch=2, channels=1 keeps it small.
    x = jax.random.normal(xkey, (2, 1, 64, 64), dtype=jnp.float32)

    fwd = jax.jit(functools.partial(dddqn_forward, num_actions=3))
    q = fwd(params, x)
    jax.block_until_ready(q)
    assert q.shape == (2, 3) and q.dtype == jnp.float32

    # Self-check against a plain-JAX forward with identical bf16/f32 math.
    q_ref = reference_forward(params, x, num_actions=3)
    assert bool(jnp.allclose(q, q_ref, rtol=2e-2, atol=2e-2)), (q, q_ref)

    print("KERNEL_OK")
</pallas_src>

<mosaic_0001>
module attributes {stable_mosaic.version = 11 : i64} {
  func.func @_matmul_bias_relu_kernel(%arg0: i32, %arg1: memref<450x64xbf16, #tpu.memory_space<vmem>>, %arg2: memref<64x32xbf16, #tpu.memory_space<vmem>>, %arg3: memref<1x32xf32, #tpu.memory_space<vmem>>, %arg4: memref<450x32xbf16, #tpu.memory_space<vmem>>) attributes {dimension_semantics = [#tpu.dimension_semantics<parallel>], iteration_bounds = array<i64: 1>, scalar_prefetch = 0 : i64, scratch_operands = 0 : i64, tpu.core_type = #tpu.core_type<tc>, window_params = [{transform_indices = @transform_0, window_bounds = array<i64: 450, 64>}, {pipeline_mode = #tpu.pipeline_mode<synchronous>, transform_indices = @transform_1, window_bounds = array<i64: 64, 32>}, {pipeline_mode = #tpu.pipeline_mode<synchronous>, transform_indices = @transform_2, window_bounds = array<i64: 1, 32>}, {transform_indices = @transform_3, window_bounds = array<i64: 450, 32>}]} {
    %c0 = arith.constant 0 : index
    %c0_0 = arith.constant 0 : index
    %0 = vector.load %arg1[%c0, %c0_0] : memref<450x64xbf16, #tpu.memory_space<vmem>>, vector<450x64xbf16>
    %c0_1 = arith.constant 0 : index
    %c0_2 = arith.constant 0 : index
    %1 = vector.load %arg2[%c0_1, %c0_2] : memref<64x32xbf16, #tpu.memory_space<vmem>>, vector<64x32xbf16>
    %cst = arith.constant dense<0.000000e+00> : vector<450x32xf32>
    %2 = tpu.matmul %0, %1, %cst {dimension_numbers = #tpu.dot_dimension_numbers<[1], [0], [0], [1], [0, 0, 1, 1], [], []>} : vector<450x64xbf16>, vector<64x32xbf16>, vector<450x32xf32> -> vector<450x32xf32>
    %c0_3 = arith.constant 0 : index
    %c0_4 = arith.constant 0 : index
    %3 = vector.load %arg3[%c0_3, %c0_4] : memref<1x32xf32, #tpu.memory_space<vmem>>, vector<1x32xf32>
    %4 = vector.broadcast %3 : vector<1x32xf32> to vector<450x32xf32>
    %5 = arith.addf %2, %4 : vector<450x32xf32>
    %cst_5 = arith.constant 0.000000e+00 : f32
    %6 = vector.broadcast %cst_5 : f32 to vector<450x32xf32>
    %7 = arith.maximumf %5, %6 : vector<450x32xf32>
    %8 = arith.truncf %7 : vector<450x32xf32> to vector<450x32xbf16>
    %c0_6 = arith.constant 0 : index
    %c0_7 = arith.constant 0 : index
    %9 = vector.load %arg4[%c0_6, %c0_7] : memref<450x32xbf16, #tpu.memory_space<vmem>>, vector<450x32xbf16>
    tpu.vector_store %arg4[%c0_6, %c0_7], %8 {strides = array<i32>} : memref<450x32xbf16, #tpu.memory_space<vmem>>, vector<450x32xbf16>,
    return
  }
  func.func @transform_0(%arg0: i32) -> (i32, i32) {
    %c0_i32 = arith.constant 0 : i32
    %c0_i32_0 = arith.constant 0 : i32
    return %arg0, %c0_i32 : i32, i32
  }
  func.func @transform_1(%arg0: i32) -> (i32, i32) {
    %c0_i32 = arith.constant 0 : i32
    %c0_i32_0 = arith.constant 0 : i32
    %c0_i32_1 = arith.constant 0 : i32
    return %c0_i32, %c0_i32_0 : i32, i32
  }
  func.func @transform_2(%arg0: i32) -> (i32, i32) {
    %c0_i32 = arith.constant 0 : i32
    %c0_i32_0 = arith.constant 0 : i32
    %c0_i32_1 = arith.constant 0 : i32
    return %c0_i32, %c0_i32_0 : i32, i32
  }
  func.func @transform_3(%arg0: i32) -> (i32, i32) {
    %c0_i32 = arith.constant 0 : i32
    %c0_i32_0 = arith.constant 0 : i32
    return %arg0, %c0_i32 : i32, i32
  }
}

module attributes {stable_mosaic.version = 11 : i64} {
  func.func @_matmul_bias_relu_kernel(%arg0: i32, %arg1: memref<72x512xbf16, #tpu.memory_space<vmem>>, %arg2: memref<512x64xbf16, #tpu.memory_space<vmem>>, %arg3: memref<1x64xf32, #tpu.memory_space<vmem>>, %arg4: memref<72x64xbf16, #tpu.memory_space<vmem>>) attributes {dimension_semantics = [#tpu.dimension_semantics<parallel>], iteration_bounds = array<i64: 1>, scalar_prefetch = 0 : i64, scratch_operands = 0 : i64, tpu.core_type = #tpu.core_type<tc>, window_params = [{transform_indices = @transform_0, window_bounds = array<i64: 72, 512>}, {pipeline_mode = #tpu.pipeline_mode<synchronous>, transform_indices = @transform_1, window_bounds = array<i64: 512, 64>}, {pipeline_mode = #tpu.pipeline_mode<synchronous>, transform_indices = @transform_2, window_bounds = array<i64: 1, 64>}, {transform_indices = @transform_3, window_bounds = array<i64: 72, 64>}]} {
    %c0 = arith.constant 0 : index
    %c0_0 = arith.constant 0 : index
    %0 = vector.load %arg1[%c0, %c0_0] : memref<72x512xbf16, #tpu.memory_space<vmem>>, vector<72x512xbf16>
    %c0_1 = arith.constant 0 : index
    %c0_2 = arith.constant 0 : index
    %1 = vector.load %arg2[%c0_1, %c0_2] : memref<512x64xbf16, #tpu.memory_space<vmem>>, vector<512x64xbf16>
    %cst = arith.constant dense<0.000000e+00> : vector<72x64xf32>
    %2 = tpu.matmul %0, %1, %cst {dimension_numbers = #tpu.dot_dimension_numbers<[1], [0], [0], [1], [0, 0, 1, 1], [], []>} : vector<72x512xbf16>, vector<512x64xbf16>, vector<72x64xf32> -> vector<72x64xf32>
    %c0_3 = arith.constant 0 : index
    %c0_4 = arith.constant 0 : index
    %3 = vector.load %arg3[%c0_3, %c0_4] : memref<1x64xf32, #tpu.memory_space<vmem>>, vector<1x64xf32>
    %4 = vector.broadcast %3 : vector<1x64xf32> to vector<72x64xf32>
    %5 = arith.addf %2, %4 : vector<72x64xf32>
    %cst_5 = arith.constant 0.000000e+00 : f32
    %6 = vector.broadcast %cst_5 : f32 to vector<72x64xf32>
    %7 = arith.maximumf %5, %6 : vector<72x64xf32>
    %8 = arith.truncf %7 : vector<72x64xf32> to vector<72x64xbf16>
    %c0_6 = arith.constant 0 : index
    %c0_7 = arith.constant 0 : index
    %9 = vector.load %arg4[%c0_6, %c0_7] : memref<72x64xbf16, #tpu.memory_space<vmem>>, vector<72x64xbf16>
    tpu.vector_store %arg4[%c0_6, %c0_7], %8 {strides = array<i32>} : memref<72x64xbf16, #tpu.memory_space<vmem>>, vector<72x64xbf16>,
    return
  }
  func.func @transform_0(%arg0: i32) -> (i32, i32) {
    %c0_i32 = arith.constant 0 : i32
    %c0_i32_0 = arith.constant 0 : i32
    return %arg0, %c0_i32 : i32, i32
  }
  func.func @transform_1(%arg0: i32) -> (i32, i32) {
    %c0_i32 = arith.constant 0 : i32
    %c0_i32_0 = arith.constant 0 : i32
    %c0_i32_1 = arith.constant 0 : i32
    return %c0_i32, %c0_i32_0 : i32, i32
  }
  func.func @transform_2(%arg0: i32) -> (i32, i32) {
    %c0_i32 = arith.constant 0 : i32
    %c0_i32_0 = arith.constant 0 : i32
    %c0_i32_1 = arith.constant 0 : i32
    return %c0_i32, %c0_i32_0 : i32, i32
  }
  func.func @transform_3(%arg0: i32) -> (i32, i32) {
    %c0_i32 = arith.constant 0 : i32
    %c0_i32_0 = arith.constant 0 : i32
    return %arg0, %c0_i32 : i32, i32
  }
}

module attributes {stable_mosaic.version = 11 : i64} {
  func.func @_tail_kernel(%arg0: i32, %arg1: memref<2x2304xbf16, #tpu.memory_space<vmem>>, %arg2: memref<3x192x64xbf16, #tpu.memory_space<vmem>>, %arg3: memref<1x64xf32, #tpu.memory_space<vmem>>, %arg4: memref<16x64x512xbf16, #tpu.memory_space<vmem>>, %arg5: memref<1x512xf32, #tpu.memory_space<vmem>>, %arg6: memref<512x4xbf16, #tpu.memory_space<vmem>>, %arg7: memref<1x4xf32, #tpu.memory_space<vmem>>, %arg8: memref<2x3xf32, #tpu.memory_space<vmem>>) attributes {dimension_semantics = [#tpu.dimension_semantics<parallel>], iteration_bounds = array<i64: 1>, scalar_prefetch = 0 : i64, scratch_operands = 0 : i64, tpu.core_type = #tpu.core_type<tc>, window_params = [{transform_indices = @transform_0, window_bounds = array<i64: 2, 2304>}, {pipeline_mode = #tpu.pipeline_mode<synchronous>, transform_indices = @transform_1, window_bounds = array<i64: 3, 192, 64>}, {pipeline_mode = #tpu.pipeline_mode<synchronous>, transform_indices = @transform_2, window_bounds = array<i64: 1, 64>}, {pipeline_mode = #tpu.pipeline_mode<synchronous>, transform_indices = @transform_3, window_bounds = array<i64: 16, 64, 512>}, {pipeline_mode = #tpu.pipeline_mode<synchronous>, transform_indices = @transform_4, window_bounds = array<i64: 1, 512>}, {pipeline_mode = #tpu.pipeline_mode<synchronous>, transform_indices = @transform_5, window_bounds = array<i64: 512, 4>}, {pipeline_mode = #tpu.pipeline_mode<synchronous>, transform_indices = @transform_6, window_bounds = array<i64: 1, 4>}, {transform_indices = @transform_7, window_bounds = array<i64: 2, 3>}]} {
    %c0 = arith.constant 0 : index
    %c0_0 = arith.constant 0 : index
    %0 = vector.load %arg1[%c0, %c0_0] : memref<2x2304xbf16, #tpu.memory_space<vmem>>, vector<2x2304xbf16>
    %c0_1 = arith.constant 0 : index
    %c0_2 = arith.constant 0 : index
    %1 = vector.load %arg3[%c0_1, %c0_2] : memref<1x64xf32, #tpu.memory_space<vmem>>, vector<1x64xf32>
    %cst = arith.constant 0.000000e+00 : f32
    %2 = vector.broadcast %cst : f32 to vector<2x512xf32>
    %cst_3 = arith.constant 0.000000e+00 : f32
    %3 = vector.broadcast %cst_3 : f32 to vector<2x64xf32>
    %4 = vector.extract_strided_slice %0 {offsets = [0, 0], sizes = [2, 192], strides = [1, 1]} : vector<2x2304xbf16> to vector<2x192xbf16>
    %c0_4 = arith.constant 0 : index
    %c0_5 = arith.constant 0 : index
    %c0_6 = arith.constant 0 : index
    %5 = vector.load %arg2[%c0_4, %c0_5, %c0_6] : memref<3x192x64xbf16, #tpu.memory_space<vmem>>, vector<1x192x64xbf16>
    %6 = vector.shape_cast %5 : vector<1x192x64xbf16> to vector<192x64xbf16>
    %cst_7 = arith.constant dense<0.000000e+00> : vector<2x64xf32>
    %7 = tpu.matmul %4, %6, %cst_7 {dimension_numbers = #tpu.dot_dimension_numbers<[1], [0], [0], [1], [0, 0, 1, 1], [], []>} : vector<2x192xbf16>, vector<192x64xbf16>, vector<2x64xf32> -> vector<2x64xf32>
    %8 = arith.addf %3, %7 : vector<2x64xf32>
    %9 = vector.extract_strided_slice %0 {offsets = [0, 384], sizes = [2, 192], strides = [1, 1]} : vector<2x2304xbf16> to vector<2x192xbf16>
    %c1 = arith.constant 1 : index
    %c0_8 = arith.constant 0 : index
    %c0_9 = arith.constant 0 : index
    %10 = vector.load %arg2[%c1, %c0_8, %c0_9] : memref<3x192x64xbf16, #tpu.memory_space<vmem>>, vector<1x192x64xbf16>
    %11 = vector.shape_cast %10 : vector<1x192x64xbf16> to vector<192x64xbf16>
    %cst_10 = arith.constant dense<0.000000e+00> : vector<2x64xf32>
    %12 = tpu.matmul %9, %11, %cst_10 {dimension_numbers = #tpu.dot_dimension_numbers<[1], [0], [0], [1], [0, 0, 1, 1], [], []>} : vector<2x192xbf16>, vector<192x64xbf16>, vector<2x64xf32> -> vector<2x64xf32>
    %13 = arith.addf %8, %12 : vector<2x64xf32>
    %14 = vector.extract_strided_slice %0 {offsets = [0, 768], sizes = [2, 192], strides = [1, 1]} : vector<2x2304xbf16> to vector<2x192xbf16>
    %c2 = arith.constant 2 : index
    %c0_11 = arith.constant 0 : index
    %c0_12 = arith.constant 0 : index
    %15 = vector.load %arg2[%c2, %c0_11, %c0_12] : memref<3x192x64xbf16, #tpu.memory_space<vmem>>, vector<1x192x64xbf16>
    %16 = vector.shape_cast %15 : vector<1x192x64xbf16> to vector<192x64xbf16>
    %cst_13 = arith.constant dense<0.000000e+00> : vector<2x64xf32>
    %17 = tpu.matmul %14, %16, %cst_13 {dimension_numbers = #tpu.dot_dimension_numbers<[1], [0], [0], [1], [0, 0, 1, 1], [], []>} : vector<2x192xbf16>, vector<192x64xbf16>, vector<2x64xf32> -> vector<2x64xf32>
    %18 = arith.addf %13, %17 : vector<2x64xf32>
    %19 = vector.broadcast %1 : vector<1x64xf32> to vector<2x64xf32>
    %20 = arith.addf %18, %19 : vector<2x64xf32>
    %cst_14 = arith.constant 0.000000e+00 : f32
    %21 = vector.broadcast %cst_14 : f32 to vector<2x64xf32>
    %22 = arith.maximumf %20, %21 : vector<2x64xf32>
    %23 = arith.truncf %22 : vector<2x64xf32> to vector<2x64xbf16>
    %c0_15 = arith.constant 0 : index
    %c0_16 = arith.constant 0 : index
    %c0_17 = arith.constant 0 : index
    %24 = vector.load %arg4[%c0_15, %c0_16, %c0_17] : memref<16x64x512xbf16, #tpu.memory_space<vmem>>, vector<1x64x512xbf16>
    %25 = vector.shape_cast %24 : vector<1x64x512xbf16> to vector<64x512xbf16>
    %cst_18 = arith.constant dense<0.000000e+00> : vector<2x512xf32>
    %26 = tpu.matmul %23, %25, %cst_18 {dimension_numbers = #tpu.dot_dimension_numbers<[1], [0], [0], [1], [0, 0, 1, 1], [], []>} : vector<2x64xbf16>, vector<64x512xbf16>, vector<2x512xf32> -> vector<2x512xf32>
    %27 = arith.addf %2, %26 : vector<2x512xf32>
    %cst_19 = arith.constant 0.000000e+00 : f32
    %28 = vector.broadcast %cst_19 : f32 to vector<2x64xf32>
    %29 = vector.extract_strided_slice %0 {offsets = [0, 64], sizes = [2, 192], strides = [1, 1]} : vector<2x2304xbf16> to vector<2x192xbf16>
    %c0_20 = arith.constant 0 : index
    %c0_21 = arith.constant 0 : index
    %c0_22 = arith.constant 0 : index
    %30 = vector.load %arg2[%c0_20, %c0_21, %c0_22] : memref<3x192x64xbf16, #tpu.memory_space<vmem>>, vector<1x192x64xbf16>
    %31 = vector.shape_cast %30 : vector<1x192x64xbf16> to vector<192x64xbf16>
    %cst_23 = arith.constant dense<0.000000e+00> : vector<2x64xf32>
    %32 = tpu.matmul %29, %31, %cst_23 {dimension_numbers = #tpu.dot_dimension_numbers<[1], [0], [0], [1], [0, 0, 1, 1], [], []>} : vector<2x192xbf16>, vector<192x64xbf16>, vector<2x64xf32> -> vector<2x64xf32>
    %33 = arith.addf %28, %32 : vector<2x64xf32>
    %34 = vector.extract_strided_slice %0 {offsets = [0, 448], sizes = [2, 192], strides = [1, 1]} : vector<2x2304xbf16> to vector<2x192xbf16>
    %c1_24 = arith.constant 1 : index
    %c0_25 = arith.constant 0 : index
    %c0_26 = arith.constant 0 : index
    %35 = vector.load %arg2[%c1_24, %c0_25, %c0_26] : memref<3x192x64xbf16, #tpu.memory_space<vmem>>, vector<1x192x64xbf16>
    %36 = vector.shape_cast %35 : vector<1x192x64xbf16> to vector<192x64xbf16>
    %cst_27 = arith.constant dense<0.000000e+00> : vector<2x64xf32>
    %37 = tpu.matmul %34, %36, %cst_27 {dimension_numbers = #tpu.dot_dimension_numbers<[1], [0], [0], [1], [0, 0, 1, 1], [], []>} : vector<2x192xbf16>, vector<192x64xbf16>, vector<2x64xf32> -> vector<2x64xf32>
    %38 = arith.addf %33, %37 : vector<2x64xf32>
    %39 = vector.extract_strided_slice %0 {offsets = [0, 832], sizes = [2, 192], strides = [1, 1]} : vector<2x2304xbf16> to vector<2x192xbf16>
    %c2_28 = arith.constant 2 : index
    %c0_29 = arith.constant 0 : index
    %c0_30 = arith.constant 0 : index
    %40 = vector.load %arg2[%c2_28, %c0_29, %c0_30] : memref<3x192x64xbf16, #tpu.memory_space<vmem>>, vector<1x192x64xbf16>
    %41 = vector.shape_cast %40 : vector<1x192x64xbf16> to vector<192x64xbf16>
    %cst_31 = arith.constant dense<0.000000e+00> : vector<2x64xf32>
    %42 = tpu.matmul %39, %41, %cst_31 {dimension_numbers = #tpu.dot_dimension_numbers<[1], [0], [0], [1], [0, 0, 1, 1], [], []>} : vector<2x192xbf16>, vector<192x64xbf16>, vector<2x64xf32> -> vector<2x64xf32>
    %43 = arith.addf %38, %42 : vector<2x64xf32>
    %44 = vector.broadcast %1 : vector<1x64xf32> to vector<2x64xf32>
    %45 = arith.addf %43, %44 : vector<2x64xf32>
    %cst_32 = arith.constant 0.000000e+00 : f32
    %46 = vector.broadcast %cst_32 : f32 to vector<2x64xf32>
    %47 = arith.maximumf %45, %46 : vector<2x64xf32>
    %48 = arith.truncf %47 : vector<2x64xf32> to vector<2x64xbf16>
    %c1_33 = arith.constant 1 : index
    %c0_34 = arith.constant 0 : index
    %c0_35 = arith.constant 0 : index
    %49 = vector.load %arg4[%c1_33, %c0_34, %c0_35] : memref<16x64x512xbf16, #tpu.memory_space<vmem>>, vector<1x64x512xbf16>
    %50 = vector.shape_cast %49 : vector<1x64x512xbf16> to vector<64x512xbf16>
    %cst_36 = arith.constant dense<0.000000e+00> : vector<2x512xf32>
    %51 = tpu.matmul %48, %50, %cst_36 {dimension_numbers = #tpu.dot_dimension_numbers<[1], [0], [0], [1], [0, 0, 1, 1], [], []>} : vector<2x64xbf16>, vector<64x512xbf16>, vector<2x512xf32> -> vector<2x512xf32>
    %52 = arith.addf %27, %51 : vector<2x512xf32>
    %cst_37 = arith.constant 0.000000e+00 : f32
    %53 = vector.broadcast %cst_37 : f32 to vector<2x64xf32>
    %54 = vector.extract_strided_slice %0 {offsets = [0, 128], sizes = [2, 192], strides = [1, 1]} : vector<2x2304xbf16> to vector<2x192xbf16>
    %c0_38 = arith.constant 0 : index
    %c0_39 = arith.constant 0 : index
    %c0_40 = arith.constant 0 : index
    %55 = vector.load %arg2[%c0_38, %c0_39, %c0_40] : memref<3x192x64xbf16, #tpu.memory_space<vmem>>, vector<1x192x64xbf16>
    %56 = vector.shape_cast %55 : vector<1x192x64xbf16> to vector<192x64xbf16>
    %cst_41 = arith.constant dense<0.000000e+00> : vector<2x64xf32>
    %57 = tpu.matmul %54, %56, %cst_41 {dimension_numbers = #tpu.dot_dimension_numbers<[1], [0], [0], [1], [0, 0, 1, 1], [], []>} : vector<2x192xbf16>, vector<192x64xbf16>, vector<2x64xf32> -> vector<2x64xf32>
    %58 = arith.addf %53, %57 : vector<2x64xf32>
    %59 = vector.extract_strided_slice %0 {offsets = [0, 512], sizes = [2, 192], strides = [1, 1]} : vector<2x2304xbf16> to vector<2x192xbf16>
    %c1_42 = arith.constant 1 : index
    %c0_43 = arith.constant 0 : index
    %c0_44 = arith.constant 0 : index
    %60 = vector.load %arg2[%c1_42, %c0_43, %c0_44] : memref<3x192x64xbf16, #tpu.memory_space<vmem>>, vector<1x192x64xbf16>
    %61 = vector.shape_cast %60 : vector<1x192x64xbf16> to vector<192x64xbf16>
    %cst_45 = arith.constant dense<0.000000e+00> : vector<2x64xf32>
    %62 = tpu.matmul %59, %61, %cst_45 {dimension_numbers = #tpu.dot_dimension_numbers<[1], [0], [0], [1], [0, 0, 1, 1], [], []>} : vector<2x192xbf16>, vector<192x64xbf16>, vector<2x64xf32> -> vector<2x64xf32>
    %63 = arith.addf %58, %62 : vector<2x64xf32>
    %64 = vector.extract_strided_slice %0 {offsets = [0, 896], sizes = [2, 192], strides = [1, 1]} : vector<2x2304xbf16> to vector<2x192xbf16>
    %c2_46 = arith.constant 2 : index
    %c0_47 = arith.constant 0 : index
    %c0_48 = arith.constant 0 : index
    %65 = vector.load %arg2[%c2_46, %c0_47, %c0_48] : memref<3x192x64xbf16, #tpu.memory_space<vmem>>, vector<1x192x64xbf16>
    %66 = vector.shape_cast %65 : vector<1x192x64xbf16> to vector<192x64xbf16>
    %cst_49 = arith.constant dense<0.000000e+00> : vector<2x64xf32>
    %67 = tpu.matmul %64, %66, %cst_49 {dimension_numbers = #tpu.dot_dimension_numbers<[1], [0], [0], [1], [0, 0, 1, 1], [], []>} : vector<2x192xbf16>, vector<192x64xbf16>, vector<2x64xf32> -> vector<2x64xf32>
    %68 = arith.addf %63, %67 : vector<2x64xf32>
    %69 = vector.broadcast %1 : vector<1x64xf32> to vector<2x64xf32>
    %70 = arith.addf %68, %69 : vector<2x64xf32>
    %cst_50 = arith.constant 0.000000e+00 : f32
    %71 = vector.broadcast %cst_50 : f32 to vector<2x64xf32>
    %72 = arith.maximumf %70, %71 : vector<2x64xf32>
    %73 = arith.truncf %72 : vector<2x64xf32> to vector<2x64xbf16>
    %c2_51 = arith.constant 2 : index
    %c0_52 = arith.constant 0 : index
    %c0_53 = arith.constant 0 : index
    %74 = vector.load %arg4[%c2_51, %c0_52, %c0_53] : memref<16x64x512xbf16, #tpu.memory_space<vmem>>, vector<1x64x512xbf16>
    %75 = vector.shape_cast %74 : vector<1x64x512xbf16> to vector<64x512xbf16>
    %cst_54 = arith.constant dense<0.000000e+00> : vector<2x512xf32>
    %76 = tpu.matmul %73, %75, %cst_54 {dimension_numbers = #tpu.dot_dimension_numbers<[1], [0], [0], [1], [0, 0, 1, 1], [], []>} : vector<2x64xbf16>, vector<64x512xbf16>, vector<2x512xf32> -> vector<2x512xf32>
    %77 = arith.addf %52, %76 : vector<2x512xf32>
    %cst_55 = arith.constant 0.000000e+00 : f32
    %78 = vector.broadcast %cst_55 : f32 to vector<2x64xf32>
    %79 = vector.extract_strided_slice %0 {offsets = [0, 192], sizes = [2, 192], strides = [1, 1]} : vector<2x2304xbf16> to vector<2x192xbf16>
    %c0_56 = arith.constant 0 : index
    %c0_57 = arith.constant 0 : index
    %c0_58 = arith.constant 0 : index
    %80 = vector.load %arg2[%c0_56, %c0_57, %c0_58] : memref<3x192x64xbf16, #tpu.memory_space<vmem>>, vector<1x192x64xbf16>
    %81 = vector.shape_cast %80 : vector<1x192x64xbf16> to vector<192x64xbf16>
    %cst_59 = arith.constant dense<0.000000e+00> : vector<2x64xf32>
    %82 = tpu.matmul %79, %81, %cst_59 {dimension_numbers = #tpu.dot_dimension_numbers<[1], [0], [0], [1], [0, 0, 1, 1], [], []>} : vector<2x192xbf16>, vector<192x64xbf16>, vector<2x64xf32> -> vector<2x64xf32>
    %83 = arith.addf %78, %82 : vector<2x64xf32>
    %84 = vector.extract_strided_slice %0 {offsets = [0, 576], sizes = [2, 192], strides = [1, 1]} : vector<2x2304xbf16> to vector<2x192xbf16>
    %c1_60 = arith.constant 1 : index
    %c0_61 = arith.constant 0 : index
    %c0_62 = arith.constant 0 : index
    %85 = vector.load %arg2[%c1_60, %c0_61, %c0_62] : memref<3x192x64xbf16, #tpu.memory_space<vmem>>, vector<1x192x64xbf16>
    %86 = vector.shape_cast %85 : vector<1x192x64xbf16> to vector<192x64xbf16>
    %cst_63 = arith.constant dense<0.000000e+00> : vector<2x64xf32>
    %87 = tpu.matmul %84, %86, %cst_63 {dimension_numbers = #tpu.dot_dimension_numbers<[1], [0], [0], [1], [0, 0, 1, 1], [], []>} : vector<2x192xbf16>, vector<192x64xbf16>, vector<2x64xf32> -> vector<2x64xf32>
    %88 = arith.addf %83, %87 : vector<2x64xf32>
    %89 = vector.extract_strided_slice %0 {offsets = [0, 960], sizes = [2, 192], strides = [1, 1]} : vector<2x2304xbf16> to vector<2x192xbf16>
    %c2_64 = arith.constant 2 : index
    %c0_65 = arith.constant 0 : index
    %c0_66 = arith.constant 0 : index
    %90 = vector.load %arg2[%c2_64, %c0_65, %c0_66] : memref<3x192x64xbf16, #tpu.memory_space<vmem>>, vector<1x192x64xbf16>
    %91 = vector.shape_cast %90 : vector<1x192x64xbf16> to vector<192x64xbf16>
    %cst_67 = arith.constant dense<0.000000e+00> : vector<2x64xf32>
    %92 = tpu.matmul %89, %91, %cst_67 {dimension_numbers = #tpu.dot_dimension_numbers<[1], [0], [0], [1], [0, 0, 1, 1], [], []>} : vector<2x192xbf16>, vector<192x64xbf16>, vector<2x64xf32> -> vector<2x64xf32>
    %93 = arith.addf %88, %92 : vector<2x64xf32>
    %94 = vector.broadcast %1 : vector<1x64xf32> to vector<2x64xf32>
    %95 = arith.addf %93, %94 : vector<2x64xf32>
    %cst_68 = arith.constant 0.000000e+00 : f32
    %96 = vector.broadcast %cst_68 : f32 to vector<2x64xf32>
    %97 = arith.maximumf %95, %96 : vector<2x64xf32>
    %98 = arith.truncf %97 : vector<2x64xf32> to vector<2x64xbf16>
    %c3 = arith.constant 3 : index
    %c0_69 = arith.constant 0 : index
    %c0_70 = arith.constant 0 : index
    %99 = vector.load %arg4[%c3, %c0_69, %c0_70] : memref<16x64x512xbf16, #tpu.memory_space<vmem>>, vector<1x64x512xbf16>
    %100 = vector.shape_cast %99 : vector<1x64x512xbf16> to vector<64x512xbf16>
    %cst_71 = arith.constant dense<0.000000e+00> : vector<2x512xf32>
    %101 = tpu.matmul %98, %100, %cst_71 {dimension_numbers = #tpu.dot_dimension_numbers<[1], [0], [0], [1], [0, 0, 1, 1], [], []>} : vector<2x64xbf16>, vector<64x512xbf16>, vector<2x512xf32> -> vector<2x512xf32>
    %102 = arith.addf %77, %101 : vector<2x512xf32>
    %cst_72 = arith.constant 0.000000e+00 : f32
    %103 = vector.broadcast %cst_72 : f32 to vector<2x64xf32>
    %104 = vector.extract_strided_slice %0 {offsets = [0, 384], sizes = [2, 192], strides = [1, 1]} : vector<2x2304xbf16> to vector<2x192xbf16>
    %c0_73 = arith.constant 0 : index
    %c0_74 = arith.constant 0 : index
    %c0_75 = arith.constant 0 : index
    %105 = vector.load %arg2[%c0_73, %c0_74, %c0_75] : memref<3x192x64xbf16, #tpu.memory_space<vmem>>, vector<1x192x64xbf16>
    %106 = vector.shape_cast %105 : vector<1x192x64xbf16> to vector<192x64xbf16>
    %cst_76 = arith.constant dense<0.000000e+00> : vector<2x64xf32>
    %107 = tpu.matmul %104, %106, %cst_76 {dimension_numbers = #tpu.dot_dimension_numbers<[1], [0], [0], [1], [0, 0, 1, 1], [], []>} : vector<2x192xbf16>, vector<192x64xbf16>, vector<2x64xf32> -> vector<2x64xf32>
    %108 = arith.addf %103, %107 : vector<2x64xf32>
    %109 = vector.extract_strided_slice %0 {offsets = [0, 768], sizes = [2, 192], strides = [1, 1]} : vector<2x2304xbf16> to vector<2x192xbf16>
    %c1_77 = arith.constant 1 : index
    %c0_78 = arith.constant 0 : index
    %c0_79 = arith.constant 0 : index
    %110 = vector.load %arg2[%c1_77, %c0_78, %c0_79] : memref<3x192x64xbf16, #tpu.memory_space<vmem>>, vector<1x192x64xbf16>
    %111 = vector.shape_cast %110 : vector<1x192x64xbf16> to vector<192x64xbf16>
    %cst_80 = arith.constant dense<0.000000e+00> : vector<2x64xf32>
    %112 = tpu.matmul %109, %111, %cst_80 {dimension_numbers = #tpu.dot_dimension_numbers<[1], [0], [0], [1], [0, 0, 1, 1], [], []>} : vector<2x192xbf16>, vector<192x64xbf16>, vector<2x64xf32> -> vector<2x64xf32>
    %113 = arith.addf %108, %112 : vector<2x64xf32>
    %114 = vector.extract_strided_slice %0 {offsets = [0, 1152], sizes = [2, 192], strides = [1, 1]} : vector<2x2304xbf16> to vector<2x192xbf16>
    %c2_81 = arith.constant 2 : index
    %c0_82 = arith.constant 0 : index
    %c0_83 = arith.constant 0 : index
    %115 = vector.load %arg2[%c2_81, %c0_82, %c0_83] : memref<3x192x64xbf16, #tpu.memory_space<vmem>>, vector<1x192x64xbf16>
    %116 = vector.shape_cast %115 : vector<1x192x64xbf16> to vector<192x64xbf16>
    %cst_84 = arith.constant dense<0.000000e+00> : vector<2x64xf32>
    %117 = tpu.matmul %114, %116, %cst_84 {dimension_numbers = #tpu.dot_dimension_numbers<[1], [0], [0], [1], [0, 0, 1, 1], [], []>} : vector<2x192xbf16>, vector<192x64xbf16>, vector<2x64xf32> -> vector<2x64xf32>
    %118 = arith.addf %113, %117 : vector<2x64xf32>
    %119 = vector.broadcast %1 : vector<1x64xf32> to vector<2x64xf32>
    %120 = arith.addf %118, %119 : vector<2x64xf32>
    %cst_85 = arith.constant 0.000000e+00 : f32
    %121 = vector.broadcast %cst_85 : f32 to vector<2x64xf32>
    %122 = arith.maximumf %120, %121 : vector<2x64xf32>
    %123 = arith.truncf %122 : vector<2x64xf32> to vector<2x64xbf16>
    %c4 = arith.constant 4 : index
    %c0_86 = arith.constant 0 : index
    %c0_87 = arith.constant 0 : index
    %124 = vector.load %arg4[%c4, %c0_86, %c0_87] : memref<16x64x512xbf16, #tpu.memory_space<vmem>>, vector<1x64x512xbf16>
    %125 = vector.shape_cast %124 : vector<1x64x512xbf16> to vector<64x512xbf16>
    %cst_88 = arith.constant dense<0.000000e+00> : vector<2x512xf32>
    %126 = tpu.matmul %123, %125, %cst_88 {dimension_numbers = #tpu.dot_dimension_numbers<[1], [0], [0], [1], [0, 0, 1, 1], [], []>} : vector<2x64xbf16>, vector<64x512xbf16>, vector<2x512xf32> -> vector<2x512xf32>
    %127 = arith.addf %102, %126 : vector<2x512xf32>
    %cst_89 = arith.constant 0.000000e+00 : f32
    %128 = vector.broadcast %cst_89 : f32 to vector<2x64xf32>
    %129 = vector.extract_strided_slice %0 {offsets = [0, 448], sizes = [2, 192], strides = [1, 1]} : vector<2x2304xbf16> to vector<2x192xbf16>
    %c0_90 = arith.constant 0 : index
    %c0_91 = arith.constant 0 : index
    %c0_92 = arith.constant 0 : index
    %130 = vector.load %arg2[%c0_90, %c0_91, %c0_92] : memref<3x192x64xbf16, #tpu.memory_space<vmem>>, vector<1x192x64xbf16>
    %131 = vector.shape_cast %130 : vector<1x192x64xbf16> to vector<192x64xbf16>
    %cst_93 = arith.constant dense<0.000000e+00> : vector<2x64xf32>
    %132 = tpu.matmul %129, %131, %cst_93 {dimension_numbers = #tpu.dot_dimension_numbers<[1], [0], [0], [1], [0, 0, 1, 1], [], []>} : vector<2x192xbf16>, vector<192x64xbf16>, vector<2x64xf32> -> vector<2x64xf32>
    %133 = arith.addf %128, %132 : vector<2x64xf32>
    %134 = vector.extract_strided_slice %0 {offsets = [0, 832], sizes = [2, 192], strides = [1, 1]} : vector<2x2304xbf16> to vector<2x192xbf16>
    %c1_94 = arith.constant 1 : index
    %c0_95 = arith.constant 0 : index
    %c0_96 = arith.constant 0 : index
    %135 = vector.load %arg2[%c1_94, %c0_95, %c0_96] : memref<3x192x64xbf16, #tpu.memory_space<vmem>>, vector<1x192x64xbf16>
    %136 = vector.shape_cast %135 : vector<1x192x64xbf16> to vector<192x64xbf16>
    %cst_97 = arith.constant dense<0.000000e+00> : vector<2x64xf32>
    %137 = tpu.matmul %134, %136, %cst_97 {dimension_numbers = #tpu.dot_dimension_numbers<[1], [0], [0], [1], [0, 0, 1, 1], [], []>} : vector<2x192xbf16>, vector<192x64xbf16>, vector<2x64xf32> -> vector<2x64xf32>
    %138 = arith.addf %133, %137 : vector<2x64xf32>
    %139 = vector.extract_strided_slice %0 {offsets = [0, 1216], sizes = [2, 192], strides = [1, 1]} : vector<2x2304xbf16> to vector<2x192xbf16>
    %c2_98 = arith.constant 2 : index
    %c0_99 = arith.constant 0 : index
    %c0_100 = arith.constant 0 : index
    %140 = vector.load %arg2[%c2_98, %c0_99, %c0_100] : memref<3x192x64xbf16, #tpu.memory_space<vmem>>, vector<1x192x64xbf16>
    %141 = vector.shape_cast %140 : vector<1x192x64xbf16> to vector<192x64xbf16>
    %cst_101 = arith.constant dense<0.000000e+00> : vector<2x64xf32>
    %142 = tpu.matmul %139, %141, %cst_101 {dimension_numbers = #tpu.dot_dimension_numbers<[1], [0], [0], [1], [0, 0, 1, 1], [], []>} : vector<2x192xbf16>, vector<192x64xbf16>, vector<2x64xf32> -> vector<2x64xf32>
    %143 = arith.addf %138, %142 : vector<2x64xf32>
    %144 = vector.broadcast %1 : vector<1x64xf32> to vector<2x64xf32>
    %145 = arith.addf %143, %144 : vector<2x64xf32>
    %cst_102 = arith.constant 0.000000e+00 : f32
    %146 = vector.broadcast %cst_102 : f32 to vector<2x64xf32>
    %147 = arith.maximumf %145, %146 : vector<2x64xf32>
    %148 = arith.truncf %147 : vector<2x64xf32> to vector<2x64xbf16>
    %c5 = arith.constant 5 : index
    %c0_103 = arith.constant 0 : index
    %c0_104 = arith.constant 0 : index
    %149 = vector.load %arg4[%c5, %c0_103, %c0_104] : memref<16x64x512xbf16, #tpu.memory_space<vmem>>, vector<1x64x512xbf16>
    %150 = vector.shape_cast %149 : vector<1x64x512xbf16> to vector<64x512xbf16>
    %cst_105 = arith.constant dense<0.000000e+00> : vector<2x512xf32>
    %151 = tpu.matmul %148, %150, %cst_105 {dimension_numbers = #tpu.dot_dimension_numbers<[1], [0], [0], [1], [0, 0, 1, 1], [], []>} : vector<2x64xbf16>, vector<64x512xbf16>, vector<2x512xf32> -> vector<2x512xf32>
    %152 = arith.addf %127, %151 : vector<2x512xf32>
    %cst_106 = arith.constant 0.000000e+00 : f32
    %153 = vector.broadcast %cst_106 : f32 to vector<2x64xf32>
    %154 = vector.extract_strided_slice %0 {offsets = [0, 512], sizes = [2, 192], strides = [1, 1]} : vector<2x2304xbf16> to vector<2x192xbf16>
    %c0_107 = arith.constant 0 : index
    %c0_108 = arith.constant 0 : index
    %c0_109 = arith.constant 0 : index
    %155 = vector.load %arg2[%c0_107, %c0_108, %c0_109] : memref<3x192x64xbf16, #tpu.memory_space<vmem>>, vector<1x192x64xbf16>
    %156 = vector.shape_cast %155 : vector<1x192x64xbf16> to vector<192x64xbf16>
    %cst_110 = arith.constant dense<0.000000e+00> : vector<2x64xf32>
    %157 = tpu.matmul %154, %156, %cst_110 {dimension_numbers = #tpu.dot_dimension_numbers<[1], [0], [0], [1], [0, 0, 1, 1], [], []>} : vector<2x192xbf16>, vector<192x64xbf16>, vector<2x64xf32> -> vector<2x64xf32>
    %158 = arith.addf %153, %157 : vector<2x64xf32>
    %159 = vector.extract_strided_slice %0 {offsets = [0, 896], sizes = [2, 192], strides = [1, 1]} : vector<2x2304xbf16> to vector<2x192xbf16>
    %c1_111 = arith.constant 1 : index
    %c0_112 = arith.constant 0 : index
    %c0_113 = arith.constant 0 : index
    %160 = vector.load %arg2[%c1_111, %c0_112, %c0_113] : memref<3x192x64xbf16, #tpu.memory_space<vmem>>, vector<1x192x64xbf16>
    %161 = vector.shape_cast %160 : vector<1x192x64xbf16> to vector<192x64xbf16>
    %cst_114 = arith.constant dense<0.000000e+00> : vector<2x64xf32>
    %162 = tpu.matmul %159, %161, %cst_114 {dimension_numbers = #tpu.dot_dimension_numbers<[1], [0], [0], [1], [0, 0, 1, 1], [], []>} : vector<2x192xbf16>, vector<192x64xbf16>, vector<2x64xf32> -> vector<2x64xf32>
    %163 = arith.addf %158, %162 : vector<2x64xf32>
    %164 = vector.extract_strided_slice %0 {offsets = [0, 1280], sizes = [2, 192], strides = [1, 1]} : vector<2x2304xbf16> to vector<2x192xbf16>
    %c2_115 = arith.constant 2 : index
    %c0_116 = arith.constant 0 : index
    %c0_117 = arith.constant 0 : index
    %165 = vector.load %arg2[%c2_115, %c0_116, %c0_117] : memref<3x192x64xbf16, #tpu.memory_space<vmem>>, vector<1x192x64xbf16>
    %166 = vector.shape_cast %165 : vector<1x192x64xbf16> to vector<192x64xbf16>
    %cst_118 = arith.constant dense<0.000000e+00> : vector<2x64xf32>
    %167 = tpu.matmul %164, %166, %cst_118 {dimension_numbers = #tpu.dot_dimension_numbers<[1], [0], [0], [1], [0, 0, 1, 1], [], []>} : vector<2x192xbf16>, vector<192x64xbf16>, vector<2x64xf32> -> vector<2x64xf32>
    %168 = arith.addf %163, %167 : vector<2x64xf32>
    %169 = vector.broadcast %1 : vector<1x64xf32> to vector<2x64xf32>
    %170 = arith.addf %168, %169 : vector<2x64xf32>
    %cst_119 = arith.constant 0.000000e+00 : f32
    %171 = vector.broadcast %cst_119 : f32 to vector<2x64xf32>
    %172 = arith.maximumf %170, %171 : vector<2x64xf32>
    %173 = arith.truncf %172 : vector<2x64xf32> to vector<2x64xbf16>
    %c6 = arith.constant 6 : index
    %c0_120 = arith.constant 0 : index
    %c0_121 = arith.constant 0 : index
    %174 = vector.load %arg4[%c6, %c0_120, %c0_121] : memref<16x64x512xbf16, #tpu.memory_space<vmem>>, vector<1x64x512xbf16>
    %175 = vector.shape_cast %174 : vector<1x64x512xbf16> to vector<64x512xbf16>
    %cst_122 = arith.constant dense<0.000000e+00> : vector<2x512xf32>
    %176 = tpu.matmul %173, %175, %cst_122 {dimension_numbers = #tpu.dot_dimension_numbers<[1], [0], [0], [1], [0, 0, 1, 1], [], []>} : vector<2x64xbf16>, vector<64x512xbf16>, vector<2x512xf32> -> vector<2x512xf32>
    %177 = arith.addf %152, %176 : vector<2x512xf32>
    %cst_123 = arith.constant 0.000000e+00 : f32
    %178 = vector.broadcast %cst_123 : f32 to vector<2x64xf32>
    %179 = vector.extract_strided_slice %0 {offsets = [0, 576], sizes = [2, 192], strides = [1, 1]} : vector<2x2304xbf16> to vector<2x192xbf16>
    %c0_124 = arith.constant 0 : index
    %c0_125 = arith.constant 0 : index
    %c0_126 = arith.constant 0 : index
    %180 = vector.load %arg2[%c0_124, %c0_125, %c0_126] : memref<3x192x64xbf16, #tpu.memory_space<vmem>>, vector<1x192x64xbf16>
    %181 = vector.shape_cast %180 : vector<1x192x64xbf16> to vector<192x64xbf16>
    %cst_127 = arith.constant dense<0.000000e+00> : vector<2x64xf32>
    %182 = tpu.matmul %179, %181, %cst_127 {dimension_numbers = #tpu.dot_dimension_numbers<[1], [0], [0], [1], [0, 0, 1, 1], [], []>} : vector<2x192xbf16>, vector<192x64xbf16>, vector<2x64xf32> -> vector<2x64xf32>
    %183 = arith.addf %178, %182 : vector<2x64xf32>
    %184 = vector.extract_strided_slice %0 {offsets = [0, 960], sizes = [2, 192], strides = [1, 1]} : vector<2x2304xbf16> to vector<2x192xbf16>
    %c1_128 = arith.constant 1 : index
    %c0_129 = arith.constant 0 : index
    %c0_130 = arith.constant 0 : index
    %185 = vector.load %arg2[%c1_128, %c0_129, %c0_130] : memref<3x192x64xbf16, #tpu.memory_space<vmem>>, vector<1x192x64xbf16>
    %186 = vector.shape_cast %185 : vector<1x192x64xbf16> to vector<192x64xbf16>
    %cst_131 = arith.constant dense<0.000000e+00> : vector<2x64xf32>
    %187 = tpu.matmul %184, %186, %cst_131 {dimension_numbers = #tpu.dot_dimension_numbers<[1], [0], [0], [1], [0, 0, 1, 1], [], []>} : vector<2x192xbf16>, vector<192x64xbf16>, vector<2x64xf32> -> vector<2x64xf32>
    %188 = arith.addf %183, %187 : vector<2x64xf32>
    %189 = vector.extract_strided_slice %0 {offsets = [0, 1344], sizes = [2, 192], strides = [1, 1]} : vector<2x2304xbf16> to vector<2x192xbf16>
    %c2_132 = arith.constant 2 : index
    %c0_133 = arith.constant 0 : index
    %c0_134 = arith.constant 0 : index
    %190 = vector.load %arg2[%c2_132, %c0_133, %c0_134] : memref<3x192x64xbf16, #tpu.memory_space<vmem>>, vector<1x192x64xbf16>
    %191 = vector.shape_cast %190 : vector<1x192x64xbf16> to vector<192x64xbf16>
    %cst_135 = arith.constant dense<0.000000e+00> : vector<2x64xf32>
    %192 = tpu.matmul %189, %191, %cst_135 {dimension_numbers = #tpu.dot_dimension_numbers<[1], [0], [0], [1], [0, 0, 1, 1], [], []>} : vector<2x192xbf16>, vector<192x64xbf16>, vector<2x64xf32> -> vector<2x64xf32>
    %193 = arith.addf %188, %192 : vector<2x64xf32>
    %194 = vector.broadcast %1 : vector<1x64xf32> to vector<2x64xf32>
    %195 = arith.addf %193, %194 : vector<2x64xf32>
    %cst_136 = arith.constant 0.000000e+00 : f32
    %196 = vector.broadcast %cst_136 : f32 to vector<2x64xf32>
    %197 = arith.maximumf %195, %196 : vector<2x64xf32>
    %198 = arith.truncf %197 : vector<2x64xf32> to vector<2x64xbf16>
    %c7 = arith.constant 7 : index
    %c0_137 = arith.constant 0 : index
    %c0_138 = arith.constant 0 : index
    %199 = vector.load %arg4[%c7, %c0_137, %c0_138] : memref<16x64x512xbf16, #tpu.memory_space<vmem>>, vector<1x64x512xbf16>
    %200 = vector.shape_cast %199 : vector<1x64x512xbf16> to vector<64x512xbf16>
    %cst_139 = arith.constant dense<0.000000e+00> : vector<2x512xf32>
    %201 = tpu.matmul %198, %200, %cst_139 {dimension_numbers = #tpu.dot_dimension_numbers<[1], [0], [0], [1], [0, 0, 1, 1], [], []>} : vector<2x64xbf16>, vector<64x512xbf16>, vector<2x512xf32> -> vector<2x512xf32>
    %202 = arith.addf %177, %201 : vector<2x512xf32>
    %cst_140 = arith.constant 0.000000e+00 : f32
    %203 = vector.broadcast %cst_140 : f32 to vector<2x64xf32>
    %204 = vector.extract_strided_slice %0 {offsets = [0, 768], sizes = [2, 192], strides = [1, 1]} : vector<2x2304xbf16> to vector<2x192xbf16>
    %c0_141 = arith.constant 0 : index
    %c0_142 = arith.constant 0 : index
    %c0_143 = arith.constant 0 : index
    %205 = vector.load %arg2[%c0_141, %c0_142, %c0_143] : memref<3x192x64xbf16, #tpu.memory_space<vmem>>, vector<1x192x64xbf16>
    %206 = vector.shape_cast %205 : vector<1x192x64xbf16> to vector<192x64xbf16>
    %cst_144 = arith.constant dense<0.000000e+00> : vector<2x64xf32>
    %207 = tpu.matmul %204, %206, %cst_144 {dimension_numbers = #tpu.dot_dimension_numbers<[1], [0], [0], [1], [0, 0, 1, 1], [], []>} : vector<2x192xbf16>, vector<192x64xbf16>, vector<2x64xf32> -> vector<2x64xf32>
    %208 = arith.addf %203, %207 : vector<2x64xf32>
    %209 = vector.extract_strided_slice %0 {offsets = [0, 1152], sizes = [2, 192], strides = [1, 1]} : vector<2x2304xbf16> to vector<2x192xbf16>
    %c1_145 = arith.constant 1 : index
    %c0_146 = arith.constant 0 : index
    %c0_147 = arith.constant 0 : index
    %210 = vector.load %arg2[%c1_145, %c0_146, %c0_147] : memref<3x192x64xbf16, #tpu.memory_space<vmem>>, vector<1x192x64xbf16>
    %211 = vector.shape_cast %210 : vector<1x192x64xbf16> to vector<192x64xbf16>
    %cst_148 = arith.constant dense<0.000000e+00> : vector<2x64xf32>
    %212 = tpu.matmul %209, %211, %cst_148 {dimension_numbers = #tpu.dot_dimension_numbers<[1], [0], [0], [1], [0, 0, 1, 1], [], []>} : vector<2x192xbf16>, vector<192x64xbf16>, vector<2x64xf32> -> vector<2x64xf32>
    %213 = arith.addf %208, %212 : vector<2x64xf32>
    %214 = vector.extract_strided_slice %0 {offsets = [0, 1536], sizes = [2, 192], strides = [1, 1]} : vector<2x2304xbf16> to vector<2x192xbf16>
    %c2_149 = arith.constant 2 : index
    %c0_150 = arith.constant 0 : index
    %c0_151 = arith.constant 0 : index
    %215 = vector.load %arg2[%c2_149, %c0_150, %c0_151] : memref<3x192x64xbf16, #tpu.memory_space<vmem>>, vector<1x192x64xbf16>
    %216 = vector.shape_cast %215 : vector<1x192x64xbf16> to vector<192x64xbf16>
    %cst_152 = arith.constant dense<0.000000e+00> : vector<2x64xf32>
    %217 = tpu.matmul %214, %216, %cst_152 {dimension_numbers = #tpu.dot_dimension_numbers<[1], [0], [0], [1], [0, 0, 1, 1], [], []>} : vector<2x192xbf16>, vector<192x64xbf16>, vector<2x64xf32> -> vector<2x64xf32>
    %218 = arith.addf %213, %217 : vector<2x64xf32>
    %219 = vector.broadcast %1 : vector<1x64xf32> to vector<2x64xf32>
    %220 = arith.addf %218, %219 : vector<2x64xf32>
    %cst_153 = arith.constant 0.000000e+00 : f32
    %221 = vector.broadcast %cst_153 : f32 to vector<2x64xf32>
    %222 = arith.maximumf %220, %221 : vector<2x64xf32>
    %223 = arith.truncf %222 : vector<2x64xf32> to vector<2x64xbf16>
    %c8 = arith.constant 8 : index
    %c0_154 = arith.constant 0 : index
    %c0_155 = arith.constant 0 : index
    %224 = vector.load %arg4[%c8, %c0_154, %c0_155] : memref<16x64x512xbf16, #tpu.memory_space<vmem>>, vector<1x64x512xbf16>
    %225 = vector.shape_cast %224 : vector<1x64x512xbf16> to vector<64x512xbf16>
    %cst_156 = arith.constant dense<0.000000e+00> : vector<2x512xf32>
    %226 = tpu.matmul %223, %225, %cst_156 {dimension_numbers = #tpu.dot_dimension_numbers<[1], [0], [0], [1], [0, 0, 1, 1], [], []>} : vector<2x64xbf16>, vector<64x512xbf16>, vector<2x512xf32> -> vector<2x512xf32>
    %227 = arith.addf %202, %226 : vector<2x512xf32>
    %cst_157 = arith.constant 0.000000e+00 : f32
    %228 = vector.broadcast %cst_157 : f32 to vector<2x64xf32>
    %229 = vector.extract_strided_slice %0 {offsets = [0, 832], sizes = [2, 192], strides = [1, 1]} : vector<2x2304xbf16> to vector<2x192xbf16>
    %c0_158 = arith.constant 0 : index
    %c0_159 = arith.constant 0 : index
    %c0_160 = arith.constant 0 : index
    %230 = vector.load %arg2[%c0_158, %c0_159, %c0_160] : memref<3x192x64xbf16, #tpu.memory_space<vmem>>, vector<1x192x64xbf16>
    %231 = vector.shape_cast %230 : vector<1x192x64xbf16> to vector<192x64xbf16>
    %cst_161 = arith.constant dense<0.000000e+00> : vector<2x64xf32>
    %232 = tpu.matmul %229, %231, %cst_161 {dimension_numbers = #tpu.dot_dimension_numbers<[1], [0], [0], [1], [0, 0, 1, 1], [], []>} : vector<2x192xbf16>, vector<192x64xbf16>, vector<2x64xf32> -> vector<2x64xf32>
    %233 = arith.addf %228, %232 : vector<2x64xf32>
    %234 = vector.extract_strided_slice %0 {offsets = [0, 1216], sizes = [2, 192], strides = [1, 1]} : vector<2x2304xbf16> to vector<2x192xbf16>
    %c1_162 = arith.constant 1 : index
    %c0_163 = arith.constant 0 : index
    %c0_164 = arith.constant 0 : index
    %235 = vector.load %arg2[%c1_162, %c0_163, %c0_164] : memref<3x192x64xbf16, #tpu.memory_space<vmem>>, vector<1x192x64xbf16>
    %236 = vector.shape_cast %235 : vector<1x192x64xbf16> to vector<192x64xbf16>
    %cst_165 = arith.constant dense<0.000000e+00> : vector<2x64xf32>
    %237 = tpu.matmul %234, %236, %cst_165 {dimension_numbers = #tpu.dot_dimension_numbers<[1], [0], [0], [1], [0, 0, 1, 1], [], []>} : vector<2x192xbf16>, vector<192x64xbf16>, vector<2x64xf32> -> vector<2x64xf32>
    %238 = arith.addf %233, %237 : vector<2x64xf32>
    %239 = vector.extract_strided_slice %0 {offsets = [0, 1600], sizes = [2, 192], strides = [1, 1]} : vector<2x2304xbf16> to vector<2x192xbf16>
    %c2_166 = arith.constant 2 : index
    %c0_167 = arith.constant 0 : index
    %c0_168 = arith.constant 0 : index
    %240 = vector.load %arg2[%c2_166, %c0_167, %c0_168] : memref<3x192x64xbf16, #tpu.memory_space<vmem>>, vector<1x192x64xbf16>
    %241 = vector.shape_cast %240 : vector<1x192x64xbf16> to vector<192x64xbf16>
    %cst_169 = arith.constant dense<0.000000e+00> : vector<2x64xf32>
    %242 = tpu.matmul %239, %241, %cst_169 {dimension_numbers = #tpu.dot_dimension_numbers<[1], [0], [0], [1], [0, 0, 1, 1], [], []>} : vector<2x192xbf16>, vector<192x64xbf16>, vector<2x64xf32> -> vector<2x64xf32>
    %243 = arith.addf %238, %242 : vector<2x64xf32>
    %244 = vector.broadcast %1 : vector<1x64xf32> to vector<2x64xf32>
    %245 = arith.addf %243, %244 : vector<2x64xf32>
    %cst_170 = arith.constant 0.000000e+00 : f32
    %246 = vector.broadcast %cst_170 : f32 to vector<2x64xf32>
    %247 = arith.maximumf %245, %246 : vector<2x64xf32>
    %248 = arith.truncf %247 : vector<2x64xf32> to vector<2x64xbf16>
    %c9 = arith.constant 9 : index
    %c0_171 = arith.constant 0 : index
    %c0_172 = arith.constant 0 : index
    %249 = vector.load %arg4[%c9, %c0_171, %c0_172] : memref<16x64x512xbf16, #tpu.memory_space<vmem>>, vector<1x64x512xbf16>
    %250 = vector.shape_cast %249 : vector<1x64x512xbf16> to vector<64x512xbf16>
    %cst_173 = arith.constant dense<0.000000e+00> : vector<2x512xf32>
    %251 = tpu.matmul %248, %250, %cst_173 {dimension_numbers = #tpu.dot_dimension_numbers<[1], [0], [0], [1], [0, 0, 1, 1], [], []>} : vector<2x64xbf16>, vector<64x512xbf16>, vector<2x512xf32> -> vector<2x512xf32>
    %252 = arith.addf %227, %251 : vector<2x512xf32>
    %cst_174 = arith.constant 0.000000e+00 : f32
    %253 = vector.broadcast %cst_174 : f32 to vector<2x64xf32>
    %254 = vector.extract_strided_slice %0 {offsets = [0, 896], sizes = [2, 192], strides = [1, 1]} : vector<2x2304xbf16> to vector<2x192xbf16>
    %c0_175 = arith.constant 0 : index
    %c0_176 = arith.constant 0 : index
    %c0_177 = arith.constant 0 : index
    %255 = vector.load %arg2[%c0_175, %c0_176, %c0_177] : memref<3x192x64xbf16, #tpu.memory_space<vmem>>, vector<1x192x64xbf16>
    %256 = vector.shape_cast %255 : vector<1x192x64xbf16> to vector<192x64xbf16>
    %cst_178 = arith.constant dense<0.000000e+00> : vector<2x64xf32>
    %257 = tpu.matmul %254, %256, %cst_178 {dimension_numbers = #tpu.dot_dimension_numbers<[1], [0], [0], [1], [0, 0, 1, 1], [], []>} : vector<2x192xbf16>, vector<192x64xbf16>, vector<2x64xf32> -> vector<2x64xf32>
    %258 = arith.addf %253, %257 : vector<2x64xf32>
    %259 = vector.extract_strided_slice %0 {offsets = [0, 1280], sizes = [2, 192], strides = [1, 1]} : vector<2x2304xbf16> to vector<2x192xbf16>
    %c1_179 = arith.constant 1 : index
    %c0_180 = arith.constant 0 : index
    %c0_181 = arith.constant 0 : index
    %260 = vector.load %arg2[%c1_179, %c0_180, %c0_181] : memref<3x192x64xbf16, #tpu.memory_space<vmem>>, vector<1x192x64xbf16>
    %261 = vector.shape_cast %260 : vector<1x192x64xbf16> to vector<192x64xbf16>
    %cst_182 = arith.constant dense<0.000000e+00> : vector<2x64xf32>
    %262 = tpu.matmul %259, %261, %cst_182 {dimension_numbers = #tpu.dot_dimension_numbers<[1], [0], [0], [1], [0, 0, 1, 1], [], []>} : vector<2x192xbf16>, vector<192x64xbf16>, vector<2x64xf32> -> vector<2x64xf32>
    %263 = arith.addf %258, %262 : vector<2x64xf32>
    %264 = vector.extract_strided_slice %0 {offsets = [0, 1664], sizes = [2, 192], strides = [1, 1]} : vector<2x2304xbf16> to vector<2x192xbf16>
    %c2_183 = arith.constant 2 : index
    %c0_184 = arith.constant 0 : index
    %c0_185 = arith.constant 0 : index
    %265 = vector.load %arg2[%c2_183, %c0_184, %c0_185] : memref<3x192x64xbf16, #tpu.memory_space<vmem>>, vector<1x192x64xbf16>
    %266 = vector.shape_cast %265 : vector<1x192x64xbf16> to vector<192x64xbf16>
    %cst_186 = arith.constant dense<0.000000e+00> : vector<2x64xf32>
    %267 = tpu.matmul %264, %266, %cst_186 {dimension_numbers = #tpu.dot_dimension_numbers<[1], [0], [0], [1], [0, 0, 1, 1], [], []>} : vector<2x192xbf16>, vector<192x64xbf16>, vector<2x64xf32> -> vector<2x64xf32>
    %268 = arith.addf %263, %267 : vector<2x64xf32>
    %269 = vector.broadcast %1 : vector<1x64xf32> to vector<2x64xf32>
    %270 = arith.addf %268, %269 : vector<2x64xf32>
    %cst_187 = arith.constant 0.000000e+00 : f32
    %271 = vector.broadcast %cst_187 : f32 to vector<2x64xf32>
    %272 = arith.maximumf %270, %271 : vector<2x64xf32>
    %273 = arith.truncf %272 : vector<2x64xf32> to vector<2x64xbf16>
    %c10 = arith.constant 10 : index
    %c0_188 = arith.constant 0 : index
    %c0_189 = arith.constant 0 : index
    %274 = vector.load %arg4[%c10, %c0_188, %c0_189] : memref<16x64x512xbf16, #tpu.memory_space<vmem>>, vector<1x64x512xbf16>
    %275 = vector.shape_cast %274 : vector<1x64x512xbf16> to vector<64x512xbf16>
    %cst_190 = arith.constant dense<0.000000e+00> : vector<2x512xf32>
    %276 = tpu.matmul %273, %275, %cst_190 {dimension_numbers = #tpu.dot_dimension_numbers<[1], [0], [0], [1], [0, 0, 1, 1], [], []>} : vector<2x64xbf16>, vector<64x512xbf16>, vector<2x512xf32> -> vector<2x512xf32>
    %277 = arith.addf %252, %276 : vector<2x512xf32>
    %cst_191 = arith.constant 0.000000e+00 : f32
    %278 = vector.broadcast %cst_191 : f32 to vector<2x64xf32>
    %279 = vector.extract_strided_slice %0 {offsets = [0, 960], sizes = [2, 192], strides = [1, 1]} : vector<2x2304xbf16> to vector<2x192xbf16>
    %c0_192 = arith.constant 0 : index
    %c0_193 = arith.constant 0 : index
    %c0_194 = arith.constant 0 : index
    %280 = vector.load %arg2[%c0_192, %c0_193, %c0_194] : memref<3x192x64xbf16, #tpu.memory_space<vmem>>, vector<1x192x64xbf16>
    %281 = vector.shape_cast %280 : vector<1x192x64xbf16> to vector<192x64xbf16>
    %cst_195 = arith.constant dense<0.000000e+00> : vector<2x64xf32>
    %282 = tpu.matmul %279, %281, %cst_195 {dimension_numbers = #tpu.dot_dimension_numbers<[1], [0], [0], [1], [0, 0, 1, 1], [], []>} : vector<2x192xbf16>, vector<192x64xbf16>, vector<2x64xf32> -> vector<2x64xf32>
    %283 = arith.addf %278, %282 : vector<2x64xf32>
    %284 = vector.extract_strided_slice %0 {offsets = [0, 1344], sizes = [2, 192], strides = [1, 1]} : vector<2x2304xbf16> to vector<2x192xbf16>
    %c1_196 = arith.constant 1 : index
    %c0_197 = arith.constant 0 : index
    %c0_198 = arith.constant 0 : index
    %285 = vector.load %arg2[%c1_196, %c0_197, %c0_198] : memref<3x192x64xbf16, #tpu.memory_space<vmem>>, vector<1x192x64xbf16>
    %286 = vector.shape_cast %285 : vector<1x192x64xbf16> to vector<192x64xbf16>
    %cst_199 = arith.constant dense<0.000000e+00> : vector<2x64xf32>
    %287 = tpu.matmul %284, %286, %cst_199 {dimension_numbers = #tpu.dot_dimension_numbers<[1], [0], [0], [1], [0, 0, 1, 1], [], []>} : vector<2x192xbf16>, vector<192x64xbf16>, vector<2x64xf32> -> vector<2x64xf32>
    %288 = arith.addf %283, %287 : vector<2x64xf32>
    %289 = vector.extract_strided_slice %0 {offsets = [0, 1728], sizes = [2, 192], strides = [1, 1]} : vector<2x2304xbf16> to vector<2x192xbf16>
    %c2_200 = arith.constant 2 : index
    %c0_201 = arith.constant 0 : index
    %c0_202 = arith.constant 0 : index
    %290 = vector.load %arg2[%c2_200, %c0_201, %c0_202] : memref<3x192x64xbf16, #tpu.memory_space<vmem>>, vector<1x192x64xbf16>
    %291 = vector.shape_cast %290 : vector<1x192x64xbf16> to vector<192x64xbf16>
    %cst_203 = arith.constant dense<0.000000e+00> : vector<2x64xf32>
    %292 = tpu.matmul %289, %291, %cst_203 {dimension_numbers = #tpu.dot_dimension_numbers<[1], [0], [0], [1], [0, 0, 1, 1], [], []>} : vector<2x192xbf16>, vector<192x64xbf16>, vector<2x64xf32> -> vector<2x64xf32>
    %293 = arith.addf %288, %292 : vector<2x64xf32>
    %294 = vector.broadcast %1 : vector<1x64xf32> to vector<2x64xf32>
    %295 = arith.addf %293, %294 : vector<2x64xf32>
    %cst_204 = arith.constant 0.000000e+00 : f32
    %296 = vector.broadcast %cst_204 : f32 to vector<2x64xf32>
    %297 = arith.maximumf %295, %296 : vector<2x64xf32>
    %298 = arith.truncf %297 : vector<2x64xf32> to vector<2x64xbf16>
    %c11 = arith.constant 11 : index
    %c0_205 = arith.constant 0 : index
    %c0_206 = arith.constant 0 : index
    %299 = vector.load %arg4[%c11, %c0_205, %c0_206] : memref<16x64x512xbf16, #tpu.memory_space<vmem>>, vector<1x64x512xbf16>
    %300 = vector.shape_cast %299 : vector<1x64x512xbf16> to vector<64x512xbf16>
    %cst_207 = arith.constant dense<0.000000e+00> : vector<2x512xf32>
    %301 = tpu.matmul %298, %300, %cst_207 {dimension_numbers = #tpu.dot_dimension_numbers<[1], [0], [0], [1], [0, 0, 1, 1], [], []>} : vector<2x64xbf16>, vector<64x512xbf16>, vector<2x512xf32> -> vector<2x512xf32>
    %302 = arith.addf %277, %301 : vector<2x512xf32>
    %cst_208 = arith.constant 0.000000e+00 : f32
    %303 = vector.broadcast %cst_208 : f32 to vector<2x64xf32>
    %304 = vector.extract_strided_slice %0 {offsets = [0, 1152], sizes = [2, 192], strides = [1, 1]} : vector<2x2304xbf16> to vector<2x192xbf16>
    %c0_209 = arith.constant 0 : index
    %c0_210 = arith.constant 0 : index
    %c0_211 = arith.constant 0 : index
    %305 = vector.load %arg2[%c0_209, %c0_210, %c0_211] : memref<3x192x64xbf16, #tpu.memory_space<vmem>>, vector<1x192x64xbf16>
    %306 = vector.shape_cast %305 : vector<1x192x64xbf16> to vector<192x64xbf16>
    %cst_212 = arith.constant dense<0.000000e+00> : vector<2x64xf32>
    %307 = tpu.matmul %304, %306, %cst_212 {dimension_numbers = #tpu.dot_dimension_numbers<[1], [0], [0], [1], [0, 0, 1, 1], [], []>} : vector<2x192xbf16>, vector<192x64xbf16>, vector<2x64xf32> -> vector<2x64xf32>
    %308 = arith.addf %303, %307 : vector<2x64xf32>
    %309 = vector.extract_strided_slice %0 {offsets = [0, 1536], sizes = [2, 192], strides = [1, 1]} : vector<2x2304xbf16> to vector<2x192xbf16>
    %c1_213 = arith.constant 1 : index
    %c0_214 = arith.constant 0 : index
    %c0_215 = arith.constant 0 : index
    %310 = vector.load %arg2[%c1_213, %c0_214, %c0_215] : memref<3x192x64xbf16, #tpu.memory_space<vmem>>, vector<1x192x64xbf16>
    %311 = vector.shape_cast %310 : vector<1x192x64xbf16> to vector<192x64xbf16>
    %cst_216 = arith.constant dense<0.000000e+00> : vector<2x64xf32>
    %312 = tpu.matmul %309, %311, %cst_216 {dimension_numbers = #tpu.dot_dimension_numbers<[1], [0], [0], [1], [0, 0, 1, 1], [], []>} : vector<2x192xbf16>, vector<192x64xbf16>, vector<2x64xf32> -> vector<2x64xf32>
    %313 = arith.addf %308, %312 : vector<2x64xf32>
    %314 = vector.extract_strided_slice %0 {offsets = [0, 1920], sizes = [2, 192], strides = [1, 1]} : vector<2x2304xbf16> to vector<2x192xbf16>
    %c2_217 = arith.constant 2 : index
    %c0_218 = arith.constant 0 : index
    %c0_219 = arith.constant 0 : index
    %315 = vector.load %arg2[%c2_217, %c0_218, %c0_219] : memref<3x192x64xbf16, #tpu.memory_space<vmem>>, vector<1x192x64xbf16>
    %316 = vector.shape_cast %315 : vector<1x192x64xbf16> to vector<192x64xbf16>
    %cst_220 = arith.constant dense<0.000000e+00> : vector<2x64xf32>
    %317 = tpu.matmul %314, %316, %cst_220 {dimension_numbers = #tpu.dot_dimension_numbers<[1], [0], [0], [1], [0, 0, 1, 1], [], []>} : vector<2x192xbf16>, vector<192x64xbf16>, vector<2x64xf32> -> vector<2x64xf32>
    %318 = arith.addf %313, %317 : vector<2x64xf32>
    %319 = vector.broadcast %1 : vector<1x64xf32> to vector<2x64xf32>
    %320 = arith.addf %318, %319 : vector<2x64xf32>
    %cst_221 = arith.constant 0.000000e+00 : f32
    %321 = vector.broadcast %cst_221 : f32 to vector<2x64xf32>
    %322 = arith.maximumf %320, %321 : vector<2x64xf32>
    %323 = arith.truncf %322 : vector<2x64xf32> to vector<2x64xbf16>
    %c12 = arith.constant 12 : index
    %c0_222 = arith.constant 0 : index
    %c0_223 = arith.constant 0 : index
    %324 = vector.load %arg4[%c12, %c0_222, %c0_223] : memref<16x64x512xbf16, #tpu.memory_space<vmem>>, vector<1x64x512xbf16>
    %325 = vector.shape_cast %324 : vector<1x64x512xbf16> to vector<64x512xbf16>
    %cst_224 = arith.constant dense<0.000000e+00> : vector<2x512xf32>
    %326 = tpu.matmul %323, %325, %cst_224 {dimension_numbers = #tpu.dot_dimension_numbers<[1], [0], [0], [1], [0, 0, 1, 1], [], []>} : vector<2x64xbf16>, vector<64x512xbf16>, vector<2x512xf32> -> vector<2x512xf32>
    %327 = arith.addf %302, %326 : vector<2x512xf32>
    %cst_225 = arith.constant 0.000000e+00 : f32
    %328 = vector.broadcast %cst_225 : f32 to vector<2x64xf32>
    %329 = vector.extract_strided_slice %0 {offsets = [0, 1216], sizes = [2, 192], strides = [1, 1]} : vector<2x2304xbf16> to vector<2x192xbf16>
    %c0_226 = arith.constant 0 : index
    %c0_227 = arith.constant 0 : index
    %c0_228 = arith.constant 0 : index
    %330 = vector.load %arg2[%c0_226, %c0_227, %c0_228] : memref<3x192x64xbf16, #tpu.memory_space<vmem>>, vector<1x192x64xbf16>
    %331 = vector.shape_cast %330 : vector<1x192x64xbf16> to vector<192x64xbf16>
    %cst_229 = arith.constant dense<0.000000e+00> : vector<2x64xf32>
    %332 = tpu.matmul %329, %331, %cst_229 {dimension_numbers = #tpu.dot_dimension_numbers<[1], [0], [0], [1], [0, 0, 1, 1], [], []>} : vector<2x192xbf16>, vector<192x64xbf16>, vector<2x64xf32> -> vector<2x64xf32>
    %333 = arith.addf %328, %332 : vector<2x64xf32>
    %334 = vector.extract_strided_slice %0 {offsets = [0, 1600], sizes = [2, 192], strides = [1, 1]} : vector<2x2304xbf16> to vector<2x192xbf16>
    %c1_230 = arith.constant 1 : index
    %c0_231 = arith.constant 0 : index
    %c0_232 = arith.constant 0 : index
    %335 = vector.load %arg2[%c1_230, %c0_231, %c0_232] : memref<3x192x64xbf16, #tpu.memory_space<vmem>>, vector<1x192x64xbf16>
    %336 = vector.shape_cast %335 : vector<1x192x64xbf16> to vector<192x64xbf16>
    %cst_233 = arith.constant dense<0.000000e+00> : vector<2x64xf32>
    %337 = tpu.matmul %334, %336, %cst_233 {dimension_numbers = #tpu.dot_dimension_numbers<[1], [0], [0], [1], [0, 0, 1, 1], [], []>} : vector<2x192xbf16>, vector<192x64xbf16>, vector<2x64xf32> -> vector<2x64xf32>
    %338 = arith.addf %333, %337 : vector<2x64xf32>
    %339 = vector.extract_strided_slice %0 {offsets = [0, 1984], sizes = [2, 192], strides = [1, 1]} : vector<2x2304xbf16> to vector<2x192xbf16>
    %c2_234 = arith.constant 2 : index
    %c0_235 = arith.constant 0 : index
    %c0_236 = arith.constant 0 : index
    %340 = vector.load %arg2[%c2_234, %c0_235, %c0_236] : memref<3x192x64xbf16, #tpu.memory_space<vmem>>, vector<1x192x64xbf16>
    %341 = vector.shape_cast %340 : vector<1x192x64xbf16> to vector<192x64xbf16>
    %cst_237 = arith.constant dense<0.000000e+00> : vector<2x64xf32>
    %342 = tpu.matmul %339, %341, %cst_237 {dimension_numbers = #tpu.dot_dimension_numbers<[1], [0], [0], [1], [0, 0, 1, 1], [], []>} : vector<2x192xbf16>, vector<192x64xbf16>, vector<2x64xf32> -> vector<2x64xf32>
    %343 = arith.addf %338, %342 : vector<2x64xf32>
    %344 = vector.broadcast %1 : vector<1x64xf32> to vector<2x64xf32>
    %345 = arith.addf %343, %344 : vector<2x64xf32>
    %cst_238 = arith.constant 0.000000e+00 : f32
    %346 = vector.broadcast %cst_238 : f32 to vector<2x64xf32>
    %347 = arith.maximumf %345, %346 : vector<2x64xf32>
    %348 = arith.truncf %347 : vector<2x64xf32> to vector<2x64xbf16>
    %c13 = arith.constant 13 : index
    %c0_239 = arith.constant 0 : index
    %c0_240 = arith.constant 0 : index
    %349 = vector.load %arg4[%c13, %c0_239, %c0_240] : memref<16x64x512xbf16, #tpu.memory_space<vmem>>, vector<1x64x512xbf16>
    %350 = vector.shape_cast %349 : vector<1x64x512xbf16> to vector<64x512xbf16>
    %cst_241 = arith.constant dense<0.000000e+00> : vector<2x512xf32>
    %351 = tpu.matmul %348, %350, %cst_241 {dimension_numbers = #tpu.dot_dimension_numbers<[1], [0], [0], [1], [0, 0, 1, 1], [], []>} : vector<2x64xbf16>, vector<64x512xbf16>, vector<2x512xf32> -> vector<2x512xf32>
    %352 = arith.addf %327, %351 : vector<2x512xf32>
    %cst_242 = arith.constant 0.000000e+00 : f32
    %353 = vector.broadcast %cst_242 : f32 to vector<2x64xf32>
    %354 = vector.extract_strided_slice %0 {offsets = [0, 1280], sizes = [2, 192], strides = [1, 1]} : vector<2x2304xbf16> to vector<2x192xbf16>
    %c0_243 = arith.constant 0 : index
    %c0_244 = arith.constant 0 : index
    %c0_245 = arith.constant 0 : index
    %355 = vector.load %arg2[%c0_243, %c0_244, %c0_245] : memref<3x192x64xbf16, #tpu.memory_space<vmem>>, vector<1x192x64xbf16>
    %356 = vector.shape_cast %355 : vector<1x192x64xbf16> to vector<192x64xbf16>
    %cst_246 = arith.constant dense<0.000000e+00> : vector<2x64xf32>
    %357 = tpu.matmul %354, %356, %cst_246 {dimension_numbers = #tpu.dot_dimension_numbers<[1], [0], [0], [1], [0, 0, 1, 1], [], []>} : vector<2x192xbf16>, vector<192x64xbf16>, vector<2x64xf32> -> vector<2x64xf32>
    %358 = arith.addf %353, %357 : vector<2x64xf32>
    %359 = vector.extract_strided_slice %0 {offsets = [0, 1664], sizes = [2, 192], strides = [1, 1]} : vector<2x2304xbf16> to vector<2x192xbf16>
    %c1_247 = arith.constant 1 : index
    %c0_248 = arith.constant 0 : index
    %c0_249 = arith.constant 0 : index
    %360 = vector.load %arg2[%c1_247, %c0_248, %c0_249] : memref<3x192x64xbf16, #tpu.memory_space<vmem>>, vector<1x192x64xbf16>
    %361 = vector.shape_cast %360 : vector<1x192x64xbf16> to vector<192x64xbf16>
    %cst_250 = arith.constant dense<0.000000e+00> : vector<2x64xf32>
    %362 = tpu.matmul %359, %361, %cst_250 {dimension_numbers = #tpu.dot_dimension_numbers<[1], [0], [0], [1], [0, 0, 1, 1], [], []>} : vector<2x192xbf16>, vector<192x64xbf16>, vector<2x64xf32> -> vector<2x64xf32>
    %363 = arith.addf %358, %362 : vector<2x64xf32>
    %364 = vector.extract_strided_slice %0 {offsets = [0, 2048], sizes = [2, 192], strides = [1, 1]} : vector<2x2304xbf16> to vector<2x192xbf16>
    %c2_251 = arith.constant 2 : index
    %c0_252 = arith.constant 0 : index
    %c0_253 = arith.constant 0 : index
    %365 = vector.load %arg2[%c2_251, %c0_252, %c0_253] : memref<3x192x64xbf16, #tpu.memory_space<vmem>>, vector<1x192x64xbf16>
    %366 = vector.shape_cast %365 : vector<1x192x64xbf16> to vector<192x64xbf16>
    %cst_254 = arith.constant dense<0.000000e+00> : vector<2x64xf32>
    %367 = tpu.matmul %364, %366, %cst_254 {dimension_numbers = #tpu.dot_dimension_numbers<[1], [0], [0], [1], [0, 0, 1, 1], [], []>} : vector<2x192xbf16>, vector<192x64xbf16>, vector<2x64xf32> -> vector<2x64xf32>
    %368 = arith.addf %363, %367 : vector<2x64xf32>
    %369 = vector.broadcast %1 : vector<1x64xf32> to vector<2x64xf32>
    %370 = arith.addf %368, %369 : vector<2x64xf32>
    %cst_255 = arith.constant 0.000000e+00 : f32
    %371 = vector.broadcast %cst_255 : f32 to vector<2x64xf32>
    %372 = arith.maximumf %370, %371 : vector<2x64xf32>
    %373 = arith.truncf %372 : vector<2x64xf32> to vector<2x64xbf16>
    %c14 = arith.constant 14 : index
    %c0_256 = arith.constant 0 : index
    %c0_257 = arith.constant 0 : index
    %374 = vector.load %arg4[%c14, %c0_256, %c0_257] : memref<16x64x512xbf16, #tpu.memory_space<vmem>>, vector<1x64x512xbf16>
    %375 = vector.shape_cast %374 : vector<1x64x512xbf16> to vector<64x512xbf16>
    %cst_258 = arith.constant dense<0.000000e+00> : vector<2x512xf32>
    %376 = tpu.matmul %373, %375, %cst_258 {dimension_numbers = #tpu.dot_dimension_numbers<[1], [0], [0], [1], [0, 0, 1, 1], [], []>} : vector<2x64xbf16>, vector<64x512xbf16>, vector<2x512xf32> -> vector<2x512xf32>
    %377 = arith.addf %352, %376 : vector<2x512xf32>
    %cst_259 = arith.constant 0.000000e+00 : f32
    %378 = vector.broadcast %cst_259 : f32 to vector<2x64xf32>
    %379 = vector.extract_strided_slice %0 {offsets = [0, 1344], sizes = [2, 192], strides = [1, 1]} : vector<2x2304xbf16> to vector<2x192xbf16>
    %c0_260 = arith.constant 0 : index
    %c0_261 = arith.constant 0 : index
    %c0_262 = arith.constant 0 : index
    %380 = vector.load %arg2[%c0_260, %c0_261, %c0_262] : memref<3x192x64xbf16, #tpu.memory_space<vmem>>, vector<1x192x64xbf16>
    %381 = vector.shape_cast %380 : vector<1x192x64xbf16> to vector<192x64xbf16>
    %cst_263 = arith.constant dense<0.000000e+00> : vector<2x64xf32>
    %382 = tpu.matmul %379, %381, %cst_263 {dimension_numbers = #tpu.dot_dimension_numbers<[1], [0], [0], [1], [0, 0, 1, 1], [], []>} : vector<2x192xbf16>, vector<192x64xbf16>, vector<2x64xf32> -> vector<2x64xf32>
    %383 = arith.addf %378, %382 : vector<2x64xf32>
    %384 = vector.extract_strided_slice %0 {offsets = [0, 1728], sizes = [2, 192], strides = [1, 1]} : vector<2x2304xbf16> to vector<2x192xbf16>
    %c1_264 = arith.constant 1 : index
    %c0_265 = arith.constant 0 : index
    %c0_266 = arith.constant 0 : index
    %385 = vector.load %arg2[%c1_264, %c0_265, %c0_266] : memref<3x192x64xbf16, #tpu.memory_space<vmem>>, vector<1x192x64xbf16>
    %386 = vector.shape_cast %385 : vector<1x192x64xbf16> to vector<192x64xbf16>
    %cst_267 = arith.constant dense<0.000000e+00> : vector<2x64xf32>
    %387 = tpu.matmul %384, %386, %cst_267 {dimension_numbers = #tpu.dot_dimension_numbers<[1], [0], [0], [1], [0, 0, 1, 1], [], []>} : vector<2x192xbf16>, vector<192x64xbf16>, vector<2x64xf32> -> vector<2x64xf32>
    %388 = arith.addf %383, %387 : vector<2x64xf32>
    %389 = vector.extract_strided_slice %0 {offsets = [0, 2112], sizes = [2, 192], strides = [1, 1]} : vector<2x2304xbf16> to vector<2x192xbf16>
    %c2_268 = arith.constant 2 : index
    %c0_269 = arith.constant 0 : index
    %c0_270 = arith.constant 0 : index
    %390 = vector.load %arg2[%c2_268, %c0_269, %c0_270] : memref<3x192x64xbf16, #tpu.memory_space<vmem>>, vector<1x192x64xbf16>
    %391 = vector.shape_cast %390 : vector<1x192x64xbf16> to vector<192x64xbf16>
    %cst_271 = arith.constant dense<0.000000e+00> : vector<2x64xf32>
    %392 = tpu.matmul %389, %391, %cst_271 {dimension_numbers = #tpu.dot_dimension_numbers<[1], [0], [0], [1], [0, 0, 1, 1], [], []>} : vector<2x192xbf16>, vector<192x64xbf16>, vector<2x64xf32> -> vector<2x64xf32>
    %393 = arith.addf %388, %392 : vector<2x64xf32>
    %394 = vector.broadcast %1 : vector<1x64xf32> to vector<2x64xf32>
    %395 = arith.addf %393, %394 : vector<2x64xf32>
    %cst_272 = arith.constant 0.000000e+00 : f32
    %396 = vector.broadcast %cst_272 : f32 to vector<2x64xf32>
    %397 = arith.maximumf %395, %396 : vector<2x64xf32>
    %398 = arith.truncf %397 : vector<2x64xf32> to vector<2x64xbf16>
    %c15 = arith.constant 15 : index
    %c0_273 = arith.constant 0 : index
    %c0_274 = arith.constant 0 : index
    %399 = vector.load %arg4[%c15, %c0_273, %c0_274] : memref<16x64x512xbf16, #tpu.memory_space<vmem>>, vector<1x64x512xbf16>
    %400 = vector.shape_cast %399 : vector<1x64x512xbf16> to vector<64x512xbf16>
    %cst_275 = arith.constant dense<0.000000e+00> : vector<2x512xf32>
    %401 = tpu.matmul %398, %400, %cst_275 {dimension_numbers = #tpu.dot_dimension_numbers<[1], [0], [0], [1], [0, 0, 1, 1], [], []>} : vector<2x64xbf16>, vector<64x512xbf16>, vector<2x512xf32> -> vector<2x512xf32>
    %402 = arith.addf %377, %401 : vector<2x512xf32>
    %c0_276 = arith.constant 0 : index
    %c0_277 = arith.constant 0 : index
    %403 = vector.load %arg5[%c0_276, %c0_277] : memref<1x512xf32, #tpu.memory_space<vmem>>, vector<1x512xf32>
    %404 = vector.broadcast %403 : vector<1x512xf32> to vector<2x512xf32>
    %405 = arith.addf %402, %404 : vector<2x512xf32>
    %cst_278 = arith.constant 0.000000e+00 : f32
    %406 = vector.broadcast %cst_278 : f32 to vector<2x512xf32>
    %407 = arith.maximumf %405, %406 : vector<2x512xf32>
    %408 = arith.truncf %407 : vector<2x512xf32> to vector<2x512xbf16>
    %c0_279 = arith.constant 0 : index
    %c0_280 = arith.constant 0 : index
    %409 = vector.load %arg6[%c0_279, %c0_280] : memref<512x4xbf16, #tpu.memory_space<vmem>>, vector<512x4xbf16>
    %cst_281 = arith.constant dense<0.000000e+00> : vector<2x4xf32>
    %410 = tpu.matmul %408, %409, %cst_281 {dimension_numbers = #tpu.dot_dimension_numbers<[1], [0], [0], [1], [0, 0, 1, 1], [], []>} : vector<2x512xbf16>, vector<512x4xbf16>, vector<2x4xf32> -> vector<2x4xf32>
    %c0_282 = arith.constant 0 : index
    %c0_283 = arith.constant 0 : index
    %411 = vector.load %arg7[%c0_282, %c0_283] : memref<1x4xf32, #tpu.memory_space<vmem>>, vector<1x4xf32>
    %412 = vector.broadcast %411 : vector<1x4xf32> to vector<2x4xf32>
    %413 = arith.addf %410, %412 : vector<2x4xf32>
    %414 = vector.extract_strided_slice %413 {offsets = [0, 0], sizes = [2, 3], strides = [1, 1]} : vector<2x4xf32> to vector<2x3xf32>
    %415 = vector.extract_strided_slice %413 {offsets = [0, 3], sizes = [2, 1], strides = [1, 1]} : vector<2x4xf32> to vector<2x1xf32>
    %416 = vector.broadcast %415 : vector<2x1xf32> to vector<2x3xf32>
    %417 = arith.addf %416, %414 : vector<2x3xf32>
    %cst_284 = arith.constant dense<0.000000e+00> : vector<2xf32>
    %418 = vector.multi_reduction <add>, %414, %cst_284 [1] : vector<2x3xf32> to vector<2xf32>
    %419 = vector.shape_cast %418 : vector<2xf32> to vector<2x1xf32>
    %cst_285 = arith.constant 3.000000e+00 : f32
    %420 = vector.broadcast %cst_285 : f32 to vector<2x1xf32>
    %421 = arith.divf %419, %420 : vector<2x1xf32>
    %422 = vector.broadcast %421 : vector<2x1xf32> to vector<2x3xf32>
    %423 = arith.subf %417, %422 : vector<2x3xf32>
    %c0_286 = arith.constant 0 : index
    %c0_287 = arith.constant 0 : index
    %424 = vector.load %arg8[%c0_286, %c0_287] : memref<2x3xf32, #tpu.memory_space<vmem>>, vector<2x3xf32>
    tpu.vector_store %arg8[%c0_286, %c0_287], %423 {strides = array<i32>} : memref<2x3xf32, #tpu.memory_space<vmem>>, vector<2x3xf32>,
    return
  }
  func.func @transform_0(%arg0: i32) -> (i32, i32) {
    %c0_i32 = arith.constant 0 : i32
    %c0_i32_0 = arith.constant 0 : i32
    return %arg0, %c0_i32 : i32, i32
  }
  func.func @transform_1(%arg0: i32) -> (i32, i32, i32) {
    %c0_i32 = arith.constant 0 : i32
    %c0_i32_0 = arith.constant 0 : i32
    %c0_i32_1 = arith.constant 0 : i32
    %c0_i32_2 = arith.constant 0 : i32
    return %c0_i32, %c0_i32_0, %c0_i32_1 : i32, i32, i32
  }
  func.func @transform_2(%arg0: i32) -> (i32, i32) {
    %c0_i32 = arith.constant 0 : i32
    %c0_i32_0 = arith.constant 0 : i32
    %c0_i32_1 = arith.constant 0 : i32
    return %c0_i32, %c0_i32_0 : i32, i32
  }
  func.func @transform_3(%arg0: i32) -> (i32, i32, i32) {
    %c0_i32 = arith.constant 0 : i32
    %c0_i32_0 = arith.constant 0 : i32
    %c0_i32_1 = arith.constant 0 : i32
    %c0_i32_2 = arith.constant 0 : i32
    return %c0_i32, %c0_i32_0, %c0_i32_1 : i32, i32, i32
  }
  func.func @transform_4(%arg0: i32) -> (i32, i32) {
    %c0_i32 = arith.constant 0 : i32
    %c0_i32_0 = arith.constant 0 : i32
    %c0_i32_1 = arith.constant 0 : i32
    return %c0_i32, %c0_i32_0 : i32, i32
  }
  func.func @transform_5(%arg0: i32) -> (i32, i32) {
    %c0_i32 = arith.constant 0 : i32
    %c0_i32_0 = arith.constant 0 : i32
    %c0_i32_1 = arith.constant 0 : i32
    return %c0_i32, %c0_i32_0 : i32, i32
  }
  func.func @transform_6(%arg0: i32) -> (i32, i32) {
    %c0_i32 = arith.constant 0 : i32
    %c0_i32_0 = arith.constant 0 : i32
    %c0_i32_1 = arith.constant 0 : i32
    return %c0_i32, %c0_i32_0 : i32, i32
  }
  func.func @transform_7(%arg0: i32) -> (i32, i32) {
    %c0_i32 = arith.constant 0 : i32
    %c0_i32_0 = arith.constant 0 : i32
    return %arg0, %c0_i32 : i32, i32
  }
}

</mosaic_0001>

<llo_original>
// kernel: dddqn_forward.3
$region0: #{dddqn_forward.3}
  #allocation0 [shape = 'u32[]', space=smem, size = 0x4, offset = 0x4, fixed_abs, tag = 'smem constant byte address 0x4 - core index']
  #allocation1 [shape = 'u32[144,128]{1,0:T(1,128)}', space=vmem, size = 0x12000, scoped, tag = 'internal scratch']
  %s0 = inlined_call_operand.vmem [shape: bf16[450,64], index: 0, kind: input, shape index: {}]
  %s1 = inlined_call_operand.vmem [shape: bf16[64,32], index: 1, kind: input, shape index: {}]
  %s2 = inlined_call_operand.vmem [shape: f32[1,32], index: 2, kind: input, shape index: {}]
  %s3 = inlined_call_operand.vmem [shape: bf16[450,32], index: 3, kind: output, shape index: {}]
  %s4 = sld [smem:[#allocation0]]
  $region22: #{dddqn_forward.3} parent=0
    _
  %s6 = ssub.s32 1, %s4
  %s7 = scalar_select 0, %s6, %s4
  // Predicated region
  $region2: #{dddqn_forward.3} parent=0 // pred_check
    _
  $region3: #{dddqn_forward.3} parent=0 // pred_check_branch
    %9 = sbr.rel (0) target = $region5
  $region4: #{dddqn_forward.3} parent=0 // pred_region
    _
  $region5: #{dddqn_forward.3} parent=0 // pred_fallthru
    _
  // Predicated region
  $region6: #{dddqn_forward.3} parent=0 // pred_check
    _
  $region7: #{dddqn_forward.3} parent=0 // pred_check_branch
    %11 = sbr.rel (0) target = $region9
  $region8: #{dddqn_forward.3} parent=0 // pred_region
    _
  $region9: #{dddqn_forward.3} parent=0 // pred_fallthru
    _
  // Predicated region
  $region10: #{dddqn_forward.3} parent=0 // pred_check
    _
  $region11: #{dddqn_forward.3} parent=0 // pred_check_branch
    %13 = sbr.rel (0) target = $region13
  $region12: #{dddqn_forward.3} parent=0 // pred_region
    _
  $region13: #{dddqn_forward.3} parent=0 // pred_fallthru
    _
  %v15 = vld [vmem:[%s0] sm:$0xf]
  %v16 = vld [vmem:[%s0 + $0x4] sm:$0xf]
  %v17 = vld [vmem:[%s0 + $0x8] sm:$0xf]
  %v18 = vld [vmem:[%s0 + $0xc] sm:$0xf]
  %v19 = vld [vmem:[%s0 + $0x10] sm:$0xf]
  %v20 = vld [vmem:[%s0 + $0x14] sm:$0xf]
  %v21 = vld [vmem:[%s0 + $0x18] sm:$0xf]
  %v22 = vld [vmem:[%s0 + $0x1c] sm:$0xf]
  %v23 = vld [vmem:[%s0 + $0x20] sm:$0xf]
  %v24 = vld [vmem:[%s0 + $0x24] sm:$0xf]
  %v25 = vld [vmem:[%s0 + $0x28] sm:$0xf]
  %v26 = vld [vmem:[%s0 + $0x2c] sm:$0xf]
  %v27 = vld [vmem:[%s0 + $0x30] sm:$0xf]
  %v28 = vld [vmem:[%s0 + $0x34] sm:$0xf]
  %v29 = vld [vmem:[%s0 + $0x38] sm:$0xf]
  %v30 = vld [vmem:[%s0 + $0x3c] sm:$0xf]
  %v31 = vld [vmem:[%s0 + $0x40] sm:$0xf]
  %v32 = vld [vmem:[%s0 + $0x44] sm:$0xf]
  %v33 = vld [vmem:[%s0 + $0x48] sm:$0xf]
  %v34 = vld [vmem:[%s0 + $0x4c] sm:$0xf]
  %v35 = vld [vmem:[%s0 + $0x50] sm:$0xf]
  %v36 = vld [vmem:[%s0 + $0x54] sm:$0xf]
  %v37 = vld [vmem:[%s0 + $0x58] sm:$0xf]
  %v38 = vld [vmem:[%s0 + $0x5c] sm:$0xf]
  %v39 = vld [vmem:[%s0 + $0x60] sm:$0xf]
  %v40 = vld [vmem:[%s0 + $0x64] sm:$0xf]
  %v41 = vld [vmem:[%s0 + $0x68] sm:$0xf]
  %v42 = vld [vmem:[%s0 + $0x6c] sm:$0xf]
  %v43 = vld [vmem:[%s0 + $0x70] sm:$0xf]
  %v44 = vld [vmem:[%s0 + $0x74] sm:$0xf]
  %v45 = vld [vmem:[%s0 + $0x78] sm:$0xf]
  %v46 = vld [vmem:[%s0 + $0x7c] sm:$0xf]
  %v47 = vld [vmem:[%s0 + $0x80] sm:$0xf]
  %v48 = vld [vmem:[%s0 + $0x84] sm:$0xf]
  %v49 = vld [vmem:[%s0 + $0x88] sm:$0xf]
  %v50 = vld [vmem:[%s0 + $0x8c] sm:$0xf]
  %v51 = vld [vmem:[%s0 + $0x90] sm:$0xf]
  %v52 = vld [vmem:[%s0 + $0x94] sm:$0xf]
  %v53 = vld [vmem:[%s0 + $0x98] sm:$0xf]
  %v54 = vld [vmem:[%s0 + $0x9c] sm:$0xf]
  %v55 = vld [vmem:[%s0 + $0xa0] sm:$0xf]
  %v56 = vld [vmem:[%s0 + $0xa4] sm:$0xf]
  %v57 = vld [vmem:[%s0 + $0xa8] sm:$0xf]
  %v58 = vld [vmem:[%s0 + $0xac] sm:$0xf]
  %v59 = vld [vmem:[%s0 + $0xb0] sm:$0xf]
  %v60 = vld [vmem:[%s0 + $0xb4] sm:$0xf]
  %v61 = vld [vmem:[%s0 + $0xb8] sm:$0xf]
  %v62 = vld [vmem:[%s0 + $0xbc] sm:$0xf]
  %v63 = vld [vmem:[%s0 + $0xc0] sm:$0xf]
  %v64 = vld [vmem:[%s0 + $0xc4] sm:$0xf]
  %v65 = vld [vmem:[%s0 + $0xc8] sm:$0xf]
  %v66 = vld [vmem:[%s0 + $0xcc] sm:$0xf]
  %v67 = vld [vmem:[%s0 + $0xd0] sm:$0xf]
  %v68 = vld [vmem:[%s0 + $0xd4] sm:$0xf]
  %v69 = vld [vmem:[%s0 + $0xd8] sm:$0xf]
  %v70 = vld [vmem:[%s0 + $0xdc] sm:$0xf]
  %v71 = vld [vmem:[%s0 + $0xe0] sm:$0x1]
  %v72 = vld [vmem:[%s1] sm:$0xf]
  %v73 = vld [vmem:[%s1 + $0x4] sm:$0xf]
  %v74 = vld [vmem:[%s1 + $0x8] sm:$0xf]
  %v75 = vld [vmem:[%s1 + $0xc] sm:$0xf]
  %v76 = vld [vmem:[%s1 + $0x10] sm:$0xf]
  %v77 = vld [vmem:[%s1 + $0x14] sm:$0xf]
  %v78 = vld [vmem:[%s1 + $0x18] sm:$0xf]
  %v79 = vld [vmem:[%s1 + $0x1c] sm:$0xf]
  %v80 = vld [vmem:[%s2] sm:$0x1]
  %v82 = vlaneseq
  %v83 = vshrl.u32 %v82, 7
  %v84 = vsub.s32 0, %v83
  %v85 = vrot.slane %v80, %v84
  %v144 = vunpack.c.l.b16 %v15
  %v145 = vunpack.c.l.b16 %v16
  %v146 = vunpack.c.l.b16 %v17
  %v147 = vunpack.c.l.b16 %v18
  %v148 = vunpack.c.l.b16 %v19
  %v149 = vunpack.c.l.b16 %v20
  %v150 = vunpack.c.l.b16 %v21
  %v151 = vunpack.c.l.b16 %v22
  %v152 = vunpack.c.l.b16 %v23
  %v153 = vunpack.c.l.b16 %v24
  %v154 = vunpack.c.l.b16 %v25
  %v155 = vunpack.c.l.b16 %v26
  %v156 = vunpack.c.l.b16 %v27
  %v157 = vunpack.c.l.b16 %v28
  %v158 = vunpack.c.l.b16 %v29
  %v159 = vunpack.c.l.b16 %v30
  %v160 = vunpack.c.l.b16 %v31
  %v161 = vunpack.c.l.b16 %v32
  %v162 = vunpack.c.l.b16 %v33
  %v163 = vunpack.c.l.b16 %v34
  %v164 = vunpack.c.l.b16 %v35
  %v165 = vunpack.c.l.b16 %v36
  %v166 = vunpack.c.l.b16 %v37
  %v167 = vunpack.c.l.b16 %v38
  %v168 = vunpack.c.l.b16 %v39
  %v169 = vunpack.c.l.b16 %v40
  %v170 = vunpack.c.l.b16 %v41
  %v171 = vunpack.c.l.b16 %v42
  %v172 = vunpack.c.l.b16 %v43
  %v173 = vunpack.c.l.b16 %v44
  %v174 = vunpack.c.l.b16 %v45
  %v175 = vunpack.c.l.b16 %v46
  %v176 = vunpack.c.l.b16 %v47
  %v177 = vunpack.c.l.b16 %v48
  %v178 = vunpack.c.l.b16 %v49
  %v179 = vunpack.c.l.b16 %v50
  %v180 = vunpack.c.l.b16 %v51
  %v181 = vunpack.c.l.b16 %v52
  %v182 = vunpack.c.l.b16 %v53
  %v183 = vunpack.c.l.b16 %v54
  %v184 = vunpack.c.l.b16 %v55
  %v185 = vunpack.c.l.b16 %v56
  %v186 = vunpack.c.l.b16 %v57
  %v187 = vunpack.c.l.b16 %v58
  %v188 = vunpack.c.l.b16 %v59
  %v189 = vunpack.c.l.b16 %v60
  %v190 = vunpack.c.l.b16 %v61
  %v191 = vunpack.c.l.b16 %v62
  %v192 = vunpack.c.l.b16 %v63
  %v193 = vunpack.c.l.b16 %v64
  %v194 = vunpack.c.l.b16 %v65
  %v195 = vunpack.c.l.b16 %v66
  %v196 = vunpack.c.l.b16 %v67
  %v197 = vunpack.c.l.b16 %v68
  %v198 = vunpack.c.l.b16 %v69
  %v199 = vunpack.c.l.b16 %v70
  %v200 = vunpack.c.l.b16 %v71
  %v201 = vpack.c.b16 %v145, %v144
  %v202 = vpack.c.b16 %v147, %v146
  %v203 = vpack.c.b16 %v149, %v148
  %v204 = vpack.c.b16 %v151, %v150
  %v205 = vpack.c.b16 %v153, %v152
  %v206 = vpack.c.b16 %v155, %v154
  %v207 = vpack.c.b16 %v157, %v156
  %v208 = vpack.c.b16 %v159, %v158
  %v209 = vpack.c.b16 %v161, %v160
  %v210 = vpack.c.b16 %v163, %v162
  %v211 = vpack.c.b16 %v165, %v164
  %v212 = vpack.c.b16 %v167, %v166
  %v213 = vpack.c.b16 %v169, %v168
  %v214 = vpack.c.b16 %v171, %v170
  %v215 = vpack.c.b16 %v173, %v172
  %v216 = vpack.c.b16 %v175, %v174
  %v217 = vpack.c.b16 %v177, %v176
  %v218 = vpack.c.b16 %v179, %v178
  %v219 = vpack.c.b16 %v181, %v180
  %v220 = vpack.c.b16 %v183, %v182
  %v221 = vpack.c.b16 %v185, %v184
  %v222 = vpack.c.b16 %v187, %v186
  %v223 = vpack.c.b16 %v189, %v188
  %v224 = vpack.c.b16 %v191, %v190
  %v225 = vpack.c.b16 %v193, %v192
  %v226 = vpack.c.b16 %v195, %v194
  %v227 = vpack.c.b16 %v197, %v196
  %v228 = vpack.c.b16 %v199, %v198
  %v229 = vpack.c.b16 %v200, %v200
  %v238 = vunpack.c.l.b16 %v72
  %v239 = vunpack.c.l.b16 %v73
  %v240 = vunpack.c.l.b16 %v74
  %v241 = vunpack.c.l.b16 %v75
  %v242 = vunpack.c.l.b16 %v76
  %v243 = vunpack.c.l.b16 %v77
  %v244 = vunpack.c.l.b16 %v78
  %v245 = vunpack.c.l.b16 %v79
  %v246 = vpack.c.b16 %v239, %v238
  %v247 = vpack.c.b16 %v241, %v240
  %v248 = vpack.c.b16 %v243, %v242
  %v249 = vpack.c.b16 %v245, %v244
  %vm254 = vcmask 523264
  %v256 = vsel %vm254, %v201, 0
  %v259 = vsel %vm254, %v202, 0
  %v262 = vsel %vm254, %v203, 0
  %v265 = vsel %vm254, %v204, 0
  %v268 = vsel %vm254, %v205, 0
  %v271 = vsel %vm254, %v206, 0
  %v274 = vsel %vm254, %v207, 0
  %v277 = vsel %vm254, %v208, 0
  %v280 = vsel %vm254, %v209, 0
  %v283 = vsel %vm254, %v210, 0
  %v286 = vsel %vm254, %v211, 0
  %v289 = vsel %vm254, %v212, 0
  %v292 = vsel %vm254, %v213, 0
  %v295 = vsel %vm254, %v214, 0
  %v298 = vsel %vm254, %v215, 0
  %v301 = vsel %vm254, %v216, 0
  %v304 = vsel %vm254, %v217, 0
  %v307 = vsel %vm254, %v218, 0
  %v310 = vsel %vm254, %v219, 0
  %v313 = vsel %vm254, %v220, 0
  %v316 = vsel %vm254, %v221, 0
  %v319 = vsel %vm254, %v222, 0
  %v322 = vsel %vm254, %v223, 0
  %v325 = vsel %vm254, %v224, 0
  %v328 = vsel %vm254, %v225, 0
  %v331 = vsel %vm254, %v226, 0
  %v334 = vsel %vm254, %v227, 0
  %v337 = vsel %vm254, %v228, 0
  %v340 = vsel %vm254, %v229, 0
  %342 = vmatprep.subr.bf16.mxu0 0
  %343 = vmatpush1.bf16.msra.mxu0 %v246
  %344 = vmatprep.subr.bf16.mxu0 0
  %345 = vmatpush1.bf16.msra.mxu0 %v247
  %346 = vmatprep.subr.bf16.mxu0 0
  %347 = vmatpush1.bf16.msra.mxu0 %v248
  %348 = vmatprep.subr.bf16.mxu0 0
  %349 = vmatpush1.bf16.msra.mxu0 %v249
  %350 = vmatprep.subr.bf16.mxu0 0
  %351 = vmatpush1.bf16.msra.mxu0 0
  %352 = vmatprep.subr.bf16.mxu0 0
  %353 = vmatpush1.bf16.msra.mxu0 0
  %354 = vmatprep.subr.bf16.mxu0 0
  %355 = vmatpush1.bf16.msra.mxu0 0
  %356 = vmatprep.subr.bf16.mxu0 0
  %357 = vmatpush1.bf16.msra.mxu0 0
  %358 = vmatprep.subr.bf16.mxu0 0
  %359 = vmatpush1.bf16.msra.mxu0 0
  %360 = vmatprep.subr.bf16.mxu0 0
  %361 = vmatpush1.bf16.msra.mxu0 0
  %362 = vmatprep.subr.bf16.mxu0 0
  %363 = vmatpush1.bf16.msra.mxu0 0
  %364 = vmatprep.subr.bf16.mxu0 0
  %365 = vmatpush1.bf16.msra.mxu0 0
  %366 = vmatprep.subr.bf16.mxu0 0
  %367 = vmatpush1.bf16.msra.mxu0 0
  %368 = vmatprep.subr.bf16.mxu0 0
  %369 = vmatpush1.bf16.msra.mxu0 0
  %370 = vmatprep.subr.bf16.mxu0 0
  %371 = vmatpush1.bf16.msra.mxu0 0
  %372 = vmatprep.subr.bf16.mxu0 0
  %373 = vmatpush1.bf16.msra.mxu0 0
  %374 = vmatprep.mubr.bf16.mxu0 0
  %375 = vmatmul.mubr.bf16.gmra.mrb[0].mxu0 %v256
  %v376 = vpop.f32.mrb[0].mxu0
  %v377 = vadd.f32 %v85, %v376
  %v378 = vpop.f32.mrb[0].mxu0
  %v379 = vpop.f32.mrb[0].mxu0
  %v380 = vadd.f32 %v85, %v379
  %v381 = vpop.f32.mrb[0].mxu0
  %382 = vmatprep.mubr.bf16.mxu0 0
  %383 = vmatmul.mubr.bf16.gmra.mrb[0].mxu0 %v259
  %v384 = vpop.f32.mrb[0].mxu0
  %v385 = vadd.f32 %v85, %v384
  %v386 = vpop.f32.mrb[0].mxu0
  %v387 = vpop.f32.mrb[0].mxu0
  %v388 = vadd.f32 %v85, %v387
  %v389 = vpop.f32.mrb[0].mxu0
  %390 = vmatprep.mubr.bf16.mxu0 0
  %391 = vmatmul.mubr.bf16.gmra.mrb[0].mxu0 %v262
  %v392 = vpop.f32.mrb[0].mxu0
  %v393 = vadd.f32 %v85, %v392
  %v394 = vpop.f32.mrb[0].mxu0
  %v395 = vpop.f32.mrb[0].mxu0
  %v396 = vadd.f32 %v85, %v395
  %v397 = vpop.f32.mrb[0].mxu0
  %398 = vmatprep.mubr.bf16.mxu0 0
  %399 = vmatmul.mubr.bf16.gmra.mrb[0].mxu0 %v265
  %v400 = vpop.f32.mrb[0].mxu0
  %v401 = vadd.f32 %v85, %v400
  %v402 = vpop.f32.mrb[0].mxu0
  %v403 = vpop.f32.mrb[0].mxu0
  %v404 = vadd.f32 %v85, %v403
  %v405 = vpop.f32.mrb[0].mxu0
  %406 = vmatprep.mubr.bf16.mxu0 0
  %407 = vmatmul.mubr.bf16.gmra.mrb[0].mxu0 %v268
  %v408 = vpop.f32.mrb[0].mxu0
  %v409 = vadd.f32 %v85, %v408
  %v410 = vpop.f32.mrb[0].mxu0
  %v411 = vpop.f32.mrb[0].mxu0
  %v412 = vadd.f32 %v85, %v411
  %v413 = vpop.f32.mrb[0].mxu0
  %414 = vmatprep.mubr.bf16.mxu0 0
  %415 = vmatmul.mubr.bf16.gmra.mrb[0].mxu0 %v271
  %v416 = vpop.f32.mrb[0].mxu0
  %v417 = vadd.f32 %v85, %v416
  %v418 = vpop.f32.mrb[0].mxu0
  %v419 = vpop.f32.mrb[0].mxu0
  %v420 = vadd.f32 %v85, %v419
  %v421 = vpop.f32.mrb[0].mxu0
  %422 = vmatprep.mubr.bf16.mxu0 0
  %423 = vmatmul.mubr.bf16.gmra.mrb[0].mxu0 %v274
  %v424 = vpop.f32.mrb[0].mxu0
  %v425 = vadd.f32 %v85, %v424
  %v426 = vpop.f32.mrb[0].mxu0
  %v427 = vpop.f32.mrb[0].mxu0
  %v428 = vadd.f32 %v85, %v427
  %v429 = vpop.f32.mrb[0].mxu0
  %430 = vmatprep.mubr.bf16.mxu0 0
  %431 = vmatmul.mubr.bf16.gmra.mrb[0].mxu0 %v277
  %v432 = vpop.f32.mrb[0].mxu0
  %v433 = vadd.f32 %v85, %v432
  %v434 = vpop.f32.mrb[0].mxu0
  %v435 = vpop.f32.mrb[0].mxu0
  %v436 = vadd.f32 %v85, %v435
  %v437 = vpop.f32.mrb[0].mxu0
  %438 = vmatprep.mubr.bf16.mxu0 0
  %439 = vmatmul.mubr.bf16.gmra.mrb[0].mxu0 %v280
  %v440 = vpop.f32.mrb[0].mxu0
  %v441 = vadd.f32 %v85, %v440
  %v442 = vpop.f32.mrb[0].mxu0
  %v443 = vpop.f32.mrb[0].mxu0
  %v444 = vadd.f32 %v85, %v443
  %v445 = vpop.f32.mrb[0].mxu0
  %446 = vmatprep.mubr.bf16.mxu0 0
  %447 = vmatmul.mubr.bf16.gmra.mrb[0].mxu0 %v283
  %v448 = vpop.f32.mrb[0].mxu0
  %v449 = vadd.f32 %v85, %v448
  %v450 = vpop.f32.mrb[0].mxu0
  %v451 = vpop.f32.mrb[0].mxu0
  %v452 = vadd.f32 %v85, %v451
  %v453 = vpop.f32.mrb[0].mxu0
  %454 = vmatprep.mubr.bf16.mxu0 0
  %455 = vmatmul.mubr.bf16.gmra.mrb[0].mxu0 %v286
  %v456 = vpop.f32.mrb[0].mxu0
  %v457 = vadd.f32 %v85, %v456
  %v458 = vpop.f32.mrb[0].mxu0
  %v459 = vpop.f32.mrb[0].mxu0
  %v460 = vadd.f32 %v85, %v459
  %v461 = vpop.f32.mrb[0].mxu0
  %462 = vmatprep.mubr.bf16.mxu0 0
  %463 = vmatmul.mubr.bf16.gmra.mrb[0].mxu0 %v289
  %v464 = vpop.f32.mrb[0].mxu0
  %v465 = vadd.f32 %v85, %v464
  %v466 = vpop.f32.mrb[0].mxu0
  %v467 = vpop.f32.mrb[0].mxu0
  %v468 = vadd.f32 %v85, %v467
  %v469 = vpop.f32.mrb[0].mxu0
  %470 = vmatprep.mubr.bf16.mxu0 0
  %471 = vmatmul.mubr.bf16.gmra.mrb[0].mxu0 %v292
  %v472 = vpop.f32.mrb[0].mxu0
  %v473 = vadd.f32 %v85, %v472
  %v474 = vpop.f32.mrb[0].mxu0
  %v475 = vpop.f32.mrb[0].mxu0
  %v476 = vadd.f32 %v85, %v475
  %v477 = vpop.f32.mrb[0].mxu0
  %478 = vmatprep.mubr.bf16.mxu0 0
  %479 = vmatmul.mubr.bf16.gmra.mrb[0].mxu0 %v295
  %v480 = vpop.f32.mrb[0].mxu0
  %v481 = vadd.f32 %v85, %v480
  %v482 = vpop.f32.mrb[0].mxu0
  %v483 = vpop.f32.mrb[0].mxu0
  %v484 = vadd.f32 %v85, %v483
  %v485 = vpop.f32.mrb[0].mxu0
  %486 = vmatprep.mubr.bf16.mxu0 0
  %487 = vmatmul.mubr.bf16.gmra.mrb[0].mxu0 %v298
  %v488 = vpop.f32.mrb[0].mxu0
  %v489 = vadd.f32 %v85, %v488
  %v490 = vpop.f32.mrb[0].mxu0
  %v491 = vpop.f32.mrb[0].mxu0
  %v492 = vadd.f32 %v85, %v491
  %v493 = vpop.f32.mrb[0].mxu0
  %494 = vmatprep.mubr.bf16.mxu0 0
  %495 = vmatmul.mubr.bf16.gmra.mrb[0].mxu0 %v301
  %v496 = vpop.f32.mrb[0].mxu0
  %v497 = vadd.f32 %v85, %v496
  %v498 = vpop.f32.mrb[0].mxu0
  %v499 = vpop.f32.mrb[0].mxu0
  %v500 = vadd.f32 %v85, %v499
  %v501 = vpop.f32.mrb[0].mxu0
  %502 = vmatprep.mubr.bf16.mxu0 0
  %503 = vmatmul.mubr.bf16.gmra.mrb[0].mxu0 %v304
  %v504 = vpop.f32.mrb[0].mxu0
  %v505 = vadd.f32 %v85, %v504
  %v506 = vpop.f32.mrb[0].mxu0
  %v507 = vpop.f32.mrb[0].mxu0
  %v508 = vadd.f32 %v85, %v507
  %v509 = vpop.f32.mrb[0].mxu0
  %510 = vmatprep.mubr.bf16.mxu0 0
  %511 = vmatmul.mubr.bf16.gmra.mrb[0].mxu0 %v307
  %v512 = vpop.f32.mrb[0].mxu0
  %v513 = vadd.f32 %v85, %v512
  %v514 = vpop.f32.mrb[0].mxu0
  %v515 = vpop.f32.mrb[0].mxu0
  %v516 = vadd.f32 %v85, %v515
  %v517 = vpop.f32.mrb[0].mxu0
  %518 = vmatprep.mubr.bf16.mxu0 0
  %519 = vmatmul.mubr.bf16.gmra.mrb[0].mxu0 %v310
  %v520 = vpop.f32.mrb[0].mxu0
  %v521 = vadd.f32 %v85, %v520
  %v522 = vpop.f32.mrb[0].mxu0
  %v523 = vpop.f32.mrb[0].mxu0
  %v524 = vadd.f32 %v85, %v523
  %v525 = vpop.f32.mrb[0].mxu0
  %526 = vmatprep.mubr.bf16.mxu0 0
  %527 = vmatmul.mubr.bf16.gmra.mrb[0].mxu0 %v313
  %v528 = vpop.f32.mrb[0].mxu0
  %v529 = vadd.f32 %v85, %v528
  %v530 = vpop.f32.mrb[0].mxu0
  %v531 = vpop.f32.mrb[0].mxu0
  %v532 = vadd.f32 %v85, %v531
  %v533 = vpop.f32.mrb[0].mxu0
  %534 = vmatprep.mubr.bf16.mxu0 0
  %535 = vmatmul.mubr.bf16.gmra.mrb[0].mxu0 %v316
  %v536 = vpop.f32.mrb[0].mxu0
  %v537 = vadd.f32 %v85, %v536
  %v538 = vpop.f32.mrb[0].mxu0
  %v539 = vpop.f32.mrb[0].mxu0
  %v540 = vadd.f32 %v85, %v539
  %v541 = vpop.f32.mrb[0].mxu0
  %542 = vmatprep.mubr.bf16.mxu0 0
  %543 = vmatmul.mubr.bf16.gmra.mrb[0].mxu0 %v319
  %v544 = vpop.f32.mrb[0].mxu0
  %v545 = vadd.f32 %v85, %v544
  %v546 = vpop.f32.mrb[0].mxu0
  %v547 = vpop.f32.mrb[0].mxu0
  %v548 = vadd.f32 %v85, %v547
  %v549 = vpop.f32.mrb[0].mxu0
  %550 = vmatprep.mubr.bf16.mxu0 0
  %551 = vmatmul.mubr.bf16.gmra.mrb[0].mxu0 %v322
  %v552 = vpop.f32.mrb[0].mxu0
  %v553 = vadd.f32 %v85, %v552
  %v554 = vpop.f32.mrb[0].mxu0
  %v555 = vpop.f32.mrb[0].mxu0
  %v556 = vadd.f32 %v85, %v555
  %v557 = vpop.f32.mrb[0].mxu0
  %558 = vmatprep.mubr.bf16.mxu0 0
  %559 = vmatmul.mubr.bf16.gmra.mrb[0].mxu0 %v325
  %v560 = vpop.f32.mrb[0].mxu0
  %v561 = vadd.f32 %v85, %v560
  %v562 = vpop.f32.mrb[0].mxu0
  %v563 = vpop.f32.mrb[0].mxu0
  %v564 = vadd.f32 %v85, %v563
  %v565 = vpop.f32.mrb[0].mxu0
  %566 = vmatprep.mubr.bf16.mxu0 0
  %567 = vmatmul.mubr.bf16.gmra.mrb[0].mxu0 %v328
  %v568 = vpop.f32.mrb[0].mxu0
  %v569 = vadd.f32 %v85, %v568
  %v570 = vpop.f32.mrb[0].mxu0
  %v571 = vpop.f32.mrb[0].mxu0
  %v572 = vadd.f32 %v85, %v571
  %v573 = vpop.f32.mrb[0].mxu0
  %574 = vmatprep.mubr.bf16.mxu0 0
  %575 = vmatmul.mubr.bf16.gmra.mrb[0].mxu0 %v331
  %v576 = vpop.f32.mrb[0].mxu0
  %v577 = vadd.f32 %v85, %v576
  %v578 = vpop.f32.mrb[0].mxu0
  %v579 = vpop.f32.mrb[0].mxu0
  %v580 = vadd.f32 %v85, %v579
  %v581 = vpop.f32.mrb[0].mxu0
  %582 = vmatprep.mubr.bf16.mxu0 0
  %583 = vmatmul.mubr.bf16.gmra.mrb[0].mxu0 %v334
  %v584 = vpop.f32.mrb[0].mxu0
  %v585 = vadd.f32 %v85, %v584
  %v586 = vpop.f32.mrb[0].mxu0
  %v587 = vpop.f32.mrb[0].mxu0
  %v588 = vadd.f32 %v85, %v587
  %v589 = vpop.f32.mrb[0].mxu0
  %590 = vmatprep.mubr.bf16.mxu0 0
  %591 = vmatmul.mubr.bf16.gmra.mrb[0].mxu0 %v337
  %v592 = vpop.f32.mrb[0].mxu0
  %v593 = vadd.f32 %v85, %v592
  %v594 = vpop.f32.mrb[0].mxu0
  %v595 = vpop.f32.mrb[0].mxu0
  %v596 = vadd.f32 %v85, %v595
  %v597 = vpop.f32.mrb[0].mxu0
  %598 = vmatprep.mubr.bf16.mxu0 0
  %599 = vmatmul.mubr.bf16.gmra.mrb[0].mxu0 %v340
  %v600 = vpop.f32.mrb[0].mxu0
  %v601 = vadd.f32 %v85, %v600
  %v602 = vpop.f32.mrb[0].mxu0
  %v603 = vpop.f32.mrb[0].mxu0
  %v604 = vpop.f32.mrb[0].mxu0
  %605 = vdwg.mxu0
  %v606 = vmax.f32 %v377, 0.0
  %v607 = vmax.f32 %v380, 0.0
  %v608 = vmax.f32 %v385, 0.0
  %v609 = vmax.f32 %v388, 0.0
  %v610 = vmax.f32 %v393, 0.0
  %v611 = vmax.f32 %v396, 0.0
  %v612 = vmax.f32 %v401, 0.0
  %v613 = vmax.f32 %v404, 0.0
  %v614 = vmax.f32 %v409, 0.0
  %v615 = vmax.f32 %v412, 0.0
  %v616 = vmax.f32 %v417, 0.0
  %v617 = vmax.f32 %v420, 0.0
  %v618 = vmax.f32 %v425, 0.0
  %v619 = vmax.f32 %v428, 0.0
  %v620 = vmax.f32 %v433, 0.0
  %v621 = vmax.f32 %v436, 0.0
  %v622 = vmax.f32 %v441, 0.0
  %v623 = vmax.f32 %v444, 0.0
  %v624 = vmax.f32 %v449, 0.0
  %v625 = vmax.f32 %v452, 0.0
  %v626 = vmax.f32 %v457, 0.0
  %v627 = vmax.f32 %v460, 0.0
  %v628 = vmax.f32 %v465, 0.0
  %v629 = vmax.f32 %v468, 0.0
  %v630 = vmax.f32 %v473, 0.0
  %v631 = vmax.f32 %v476, 0.0
  %v632 = vmax.f32 %v481, 0.0
  %v633 = vmax.f32 %v484, 0.0
  %v634 = vmax.f32 %v489, 0.0
  %v635 = vmax.f32 %v492, 0.0
  %v636 = vmax.f32 %v497, 0.0
  %v637 = vmax.f32 %v500, 0.0
  %v638 = vmax.f32 %v505, 0.0
  %v639 = vmax.f32 %v508, 0.0
  %v640 = vmax.f32 %v513, 0.0
  %v641 = vmax.f32 %v516, 0.0
  %v642 = vmax.f32 %v521, 0.0
  %v643 = vmax.f32 %v524, 0.0
  %v644 = vmax.f32 %v529, 0.0
  %v645 = vmax.f32 %v532, 0.0
  %v646 = vmax.f32 %v537, 0.0
  %v647 = vmax.f32 %v540, 0.0
  %v648 = vmax.f32 %v545, 0.0
  %v649 = vmax.f32 %v548, 0.0
  %v650 = vmax.f32 %v553, 0.0
  %v651 = vmax.f32 %v556, 0.0
  %v652 = vmax.f32 %v561, 0.0
  %v653 = vmax.f32 %v564, 0.0
  %v654 = vmax.f32 %v569, 0.0
  %v655 = vmax.f32 %v572, 0.0
  %v656 = vmax.f32 %v577, 0.0
  %v657 = vmax.f32 %v580, 0.0
  %v658 = vmax.f32 %v585, 0.0
  %v659 = vmax.f32 %v588, 0.0
  %v660 = vmax.f32 %v593, 0.0
  %v661 = vmax.f32 %v596, 0.0
  %v662 = vmax.f32 %v601, 0.0
  %v663 = vpack.c.bf16 %v607, %v606
  %v664 = vpack.c.bf16 %v609, %v608
  %v665 = vpack.c.bf16 %v611, %v610
  %v666 = vpack.c.bf16 %v613, %v612
  %v667 = vpack.c.bf16 %v615, %v614
  %v668 = vpack.c.bf16 %v617, %v616
  %v669 = vpack.c.bf16 %v619, %v618
  %v670 = vpack.c.bf16 %v621, %v620
  %v671 = vpack.c.bf16 %v623, %v622
  %v672 = vpack.c.bf16 %v625, %v624
  %v673 = vpack.c.bf16 %v627, %v626
  %v674 = vpack.c.bf16 %v629, %v628
  %v675 = vpack.c.bf16 %v631, %v630
  %v676 = vpack.c.bf16 %v633, %v632
  %v677 = vpack.c.bf16 %v635, %v634
  %v678 = vpack.c.bf16 %v637, %v636
  %v679 = vpack.c.bf16 %v639, %v638
  %v680 = vpack.c.bf16 %v641, %v640
  %v681 = vpack.c.bf16 %v643, %v642
  %v682 = vpack.c.bf16 %v645, %v644
  %v683 = vpack.c.bf16 %v647, %v646
  %v684 = vpack.c.bf16 %v649, %v648
  %v685 = vpack.c.bf16 %v651, %v650
  %v686 = vpack.c.bf16 %v653, %v652
  %v687 = vpack.c.bf16 %v655, %v654
  %v688 = vpack.c.bf16 %v657, %v656
  %v689 = vpack.c.bf16 %v659, %v658
  %v690 = vpack.c.bf16 %v661, %v660
  %v691 = vpack.c.bf16 %v662, %v662
  %v721 = vunpack.c.l.b16 %v663
  %v722 = vunpack.c.h.b16 %v663
  %v723 = vunpack.c.l.b16 %v664
  %v724 = vunpack.c.h.b16 %v664
  %v725 = vunpack.c.l.b16 %v665
  %v726 = vunpack.c.h.b16 %v665
  %v727 = vunpack.c.l.b16 %v666
  %v728 = vunpack.c.h.b16 %v666
  %v729 = vunpack.c.l.b16 %v667
  %v730 = vunpack.c.h.b16 %v667
  %v731 = vunpack.c.l.b16 %v668
  %v732 = vunpack.c.h.b16 %v668
  %v733 = vunpack.c.l.b16 %v669
  %v734 = vunpack.c.h.b16 %v669
  %v735 = vunpack.c.l.b16 %v670
  %v736 = vunpack.c.h.b16 %v670
  %v737 = vunpack.c.l.b16 %v671
  %v738 = vunpack.c.h.b16 %v671
  %v739 = vunpack.c.l.b16 %v672
  %v740 = vunpack.c.h.b16 %v672
  %v741 = vunpack.c.l.b16 %v673
  %v742 = vunpack.c.h.b16 %v673
  %v743 = vunpack.c.l.b16 %v674
  %v744 = vunpack.c.h.b16 %v674
  %v745 = vunpack.c.l.b16 %v675
  %v746 = vunpack.c.h.b16 %v675
  %v747 = vunpack.c.l.b16 %v676
  %v748 = vunpack.c.h.b16 %v676
  %v749 = vunpack.c.l.b16 %v677
  %v750 = vunpack.c.h.b16 %v677
  %v751 = vunpack.c.l.b16 %v678
  %v752 = vunpack.c.h.b16 %v678
  %v753 = vunpack.c.l.b16 %v679
  %v754 = vunpack.c.h.b16 %v679
  %v755 = vunpack.c.l.b16 %v680
  %v756 = vunpack.c.h.b16 %v680
  %v757 = vunpack.c.l.b16 %v681
  %v758 = vunpack.c.h.b16 %v681
  %v759 = vunpack.c.l.b16 %v682
  %v760 = vunpack.c.h.b16 %v682
  %v761 = vunpack.c.l.b16 %v683
  %v762 = vunpack.c.h.b16 %v683
  %v763 = vunpack.c.l.b16 %v684
  %v764 = vunpack.c.h.b16 %v684
  %v765 = vunpack.c.l.b16 %v685
  %v766 = vunpack.c.h.b16 %v685
  %v767 = vunpack.c.l.b16 %v686
  %v768 = vunpack.c.h.b16 %v686
  %v769 = vunpack.c.l.b16 %v687
  %v770 = vunpack.c.h.b16 %v687
  %v771 = vunpack.c.l.b16 %v688
  %v772 = vunpack.c.h.b16 %v688
  %v773 = vunpack.c.l.b16 %v689
  %v774 = vunpack.c.h.b16 %v689
  %v775 = vunpack.c.l.b16 %v690
  %v776 = vunpack.c.h.b16 %v690
  %v777 = vunpack.c.l.b16 %v691
  %v778 = vpack.c.b16 %v721, %v721
  %v779 = vpack.c.b16 %v722, %v722
  %v780 = vpack.c.b16 %v723, %v723
  %v781 = vpack.c.b16 %v724, %v724
  %v782 = vpack.c.b16 %v725, %v725
  %v783 = vpack.c.b16 %v726, %v726
  %v784 = vpack.c.b16 %v727, %v727
  %v785 = vpack.c.b16 %v728, %v728
  %v786 = vpack.c.b16 %v729, %v729
  %v787 = vpack.c.b16 %v730, %v730
  %v788 = vpack.c.b16 %v731, %v731
  %v789 = vpack.c.b16 %v732, %v732
  %v790 = vpack.c.b16 %v733, %v733
  %v791 = vpack.c.b16 %v734, %v734
  %v792 = vpack.c.b16 %v735, %v735
  %v793 = vpack.c.b16 %v736, %v736
  %v794 = vpack.c.b16 %v737, %v737
  %v795 = vpack.c.b16 %v738, %v738
  %v796 = vpack.c.b16 %v739, %v739
  %v797 = vpack.c.b16 %v740, %v740
  %v798 = vpack.c.b16 %v741, %v741
  %v799 = vpack.c.b16 %v742, %v742
  %v800 = vpack.c.b16 %v743, %v743
  %v801 = vpack.c.b16 %v744, %v744
  %v802 = vpack.c.b16 %v745, %v745
  %v803 = vpack.c.b16 %v746, %v746
  %v804 = vpack.c.b16 %v747, %v747
  %v805 = vpack.c.b16 %v748, %v748
  %v806 = vpack.c.b16 %v749, %v749
  %v807 = vpack.c.b16 %v750, %v750
  %v808 = vpack.c.b16 %v751, %v751
  %v809 = vpack.c.b16 %v752, %v752
  %v810 = vpack.c.b16 %v753, %v753
  %v811 = vpack.c.b16 %v754, %v754
  %v812 = vpack.c.b16 %v755, %v755
  %v813 = vpack.c.b16 %v756, %v756
  %v814 = vpack.c.b16 %v757, %v757
  %v815 = vpack.c.b16 %v758, %v758
  %v816 = vpack.c.b16 %v759, %v759
  %v817 = vpack.c.b16 %v760, %v760
  %v818 = vpack.c.b16 %v761, %v761
  %v819 = vpack.c.b16 %v762, %v762
  %v820 = vpack.c.b16 %v763, %v763
  %v821 = vpack.c.b16 %v764, %v764
  %v822 = vpack.c.b16 %v765, %v765
  %v823 = vpack.c.b16 %v766, %v766
  %v824 = vpack.c.b16 %v767, %v767
  %v825 = vpack.c.b16 %v768, %v768
  %v826 = vpack.c.b16 %v769, %v769
  %v827 = vpack.c.b16 %v770, %v770
  %v828 = vpack.c.b16 %v771, %v771
  %v829 = vpack.c.b16 %v772, %v772
  %v830 = vpack.c.b16 %v773, %v773
  %v831 = vpack.c.b16 %v774, %v774
  %v832 = vpack.c.b16 %v775, %v775
  %v833 = vpack.c.b16 %v776, %v776
  %v834 = vpack.c.b16 %v777, %v777
  %vm892 = vcmask 257024
  %893 = vst.msk [vmem:[%s3] sm:$0xf] %vm892, %v778
  %894 = vst.msk [vmem:[%s3 + $0x4] sm:$0xf] %vm892, %v779
  %895 = vst.msk [vmem:[%s3 + $0x8] sm:$0xf] %vm892, %v780
  %896 = vst.msk [vmem:[%s3 + $0xc] sm:$0xf] %vm892, %v781
  %897 = vst.msk [vmem:[%s3 + $0x10] sm:$0xf] %vm892, %v782
  %898 = vst.msk [vmem:[%s3 + $0x14] sm:$0xf] %vm892, %v783
  %899 = vst.msk [vmem:[%s3 + $0x18] sm:$0xf] %vm892, %v784
  %900 = vst.msk [vmem:[%s3 + $0x1c] sm:$0xf] %vm892, %v785
  %901 = vst.msk [vmem:[%s3 + $0x20] sm:$0xf] %vm892, %v786
  %902 = vst.msk [vmem:[%s3 + $0x24] sm:$0xf] %vm892, %v787
  %903 = vst.msk [vmem:[%s3 + $0x28] sm:$0xf] %vm892, %v788
  %904 = vst.msk [vmem:[%s3 + $0x2c] sm:$0xf] %vm892, %v789
  %905 = vst.msk [vmem:[%s3 + $0x30] sm:$0xf] %vm892, %v790
  %906 = vst.msk [vmem:[%s3 + $0x34] sm:$0xf] %vm892, %v791
  %907 = vst.msk [vmem:[%s3 + $0x38] sm:$0xf] %vm892, %v792
  %908 = vst.msk [vmem:[%s3 + $0x3c] sm:$0xf] %vm892, %v793
  %909 = vst.msk [vmem:[%s3 + $0x40] sm:$0xf] %vm892, %v794
  %910 = vst.msk [vmem:[%s3 + $0x44] sm:$0xf] %vm892, %v795
  %911 = vst.msk [vmem:[%s3 + $0x48] sm:$0xf] %vm892, %v796
  %912 = vst.msk [vmem:[%s3 + $0x4c] sm:$0xf] %vm892, %v797
  %913 = vst.msk [vmem:[%s3 + $0x50] sm:$0xf] %vm892, %v798
  %914 = vst.msk [vmem:[%s3 + $0x54] sm:$0xf] %vm892, %v799
  %915 = vst.msk [vmem:[%s3 + $0x58] sm:$0xf] %vm892, %v800
  %916 = vst.msk [vmem:[%s3 + $0x5c] sm:$0xf] %vm892, %v801
  %917 = vst.msk [vmem:[%s3 + $0x60] sm:$0xf] %vm892, %v802
  %918 = vst.msk [vmem:[%s3 + $0x64] sm:$0xf] %vm892, %v803
  %919 = vst.msk [vmem:[%s3 + $0x68] sm:$0xf] %vm892, %v804
  %920 = vst.msk [vmem:[%s3 + $0x6c] sm:$0xf] %vm892, %v805
  %921 = vst.msk [vmem:[%s3 + $0x70] sm:$0xf] %vm892, %v806
  %922 = vst.msk [vmem:[%s3 + $0x74] sm:$0xf] %vm892, %v807
  %923 = vst.msk [vmem:[%s3 + $0x78] sm:$0xf] %vm892, %v808
  %924 = vst.msk [vmem:[%s3 + $0x7c] sm:$0xf] %vm892, %v809
  %925 = vst.msk [vmem:[%s3 + $0x80] sm:$0xf] %vm892, %v810
  %926 = vst.msk [vmem:[%s3 + $0x84] sm:$0xf] %vm892, %v811
  %927 = vst.msk [vmem:[%s3 + $0x88] sm:$0xf] %vm892, %v812
  %928 = vst.msk [vmem:[%s3 + $0x8c] sm:$0xf] %vm892, %v813
  %929 = vst.msk [vmem:[%s3 + $0x90] sm:$0xf] %vm892, %v814
  %930 = vst.msk [vmem:[%s3 + $0x94] sm:$0xf] %vm892, %v815
  %931 = vst.msk [vmem:[%s3 + $0x98] sm:$0xf] %vm892, %v816
  %932 = vst.msk [vmem:[%s3 + $0x9c] sm:$0xf] %vm892, %v817
  %933 = vst.msk [vmem:[%s3 + $0xa0] sm:$0xf] %vm892, %v818
  %934 = vst.msk [vmem:[%s3 + $0xa4] sm:$0xf] %vm892, %v819
  %935 = vst.msk [vmem:[%s3 + $0xa8] sm:$0xf] %vm892, %v820
  %936 = vst.msk [vmem:[%s3 + $0xac] sm:$0xf] %vm892, %v821
  %937 = vst.msk [vmem:[%s3 + $0xb0] sm:$0xf] %vm892, %v822
  %938 = vst.msk [vmem:[%s3 + $0xb4] sm:$0xf] %vm892, %v823
  %939 = vst.msk [vmem:[%s3 + $0xb8] sm:$0xf] %vm892, %v824
  %940 = vst.msk [vmem:[%s3 + $0xbc] sm:$0xf] %vm892, %v825
  %941 = vst.msk [vmem:[%s3 + $0xc0] sm:$0xf] %vm892, %v826
  %942 = vst.msk [vmem:[%s3 + $0xc4] sm:$0xf] %vm892, %v827
  %943 = vst.msk [vmem:[%s3 + $0xc8] sm:$0xf] %vm892, %v828
  %944 = vst.msk [vmem:[%s3 + $0xcc] sm:$0xf] %vm892, %v829
  %945 = vst.msk [vmem:[%s3 + $0xd0] sm:$0xf] %vm892, %v830
  %946 = vst.msk [vmem:[%s3 + $0xd4] sm:$0xf] %vm892, %v831
  %947 = vst.msk [vmem:[%s3 + $0xd8] sm:$0xf] %vm892, %v832
  %948 = vst.msk [vmem:[%s3 + $0xdc] sm:$0xf] %vm892, %v833
  %vm949 = vcmask 253952
  %950 = vst.msk [vmem:[%s3 + $0xe0] sm:$0x1] %vm949, %v834
  // Predicated region
  $region14: #{dddqn_forward.3} parent=0 // pred_check
    _
  $region15: #{dddqn_forward.3} parent=0 // pred_check_branch
    %952 = sbr.rel (0) target = $region17
  $region16: #{dddqn_forward.3} parent=0 // pred_region
    _
  $region17: #{dddqn_forward.3} parent=0 // pred_fallthru
    _
  // Predicated region
  $region18: #{dddqn_forward.3} parent=0 // pred_check
    _
  $region19: #{dddqn_forward.3} parent=0 // pred_check_branch
    %954 = sbr.rel (0) target = $region21
  $region20: #{dddqn_forward.3} parent=0 // pred_region
    _
  $region21: #{dddqn_forward.3} parent=0 // pred_fallthru
    _

// kernel: dddqn_forward.4
$region0: #{dddqn_forward.4}
  #allocation0 [shape = 'u32[]', space=smem, size = 0x4, offset = 0x4, fixed_abs, tag = 'smem constant byte address 0x4 - core index']
  #allocation1 [shape = 'u32[144,128]{1,0:T(1,128)}', space=vmem, size = 0x12000, scoped, tag = 'internal scratch']
  %s0 = inlined_call_operand.vmem [shape: bf16[72,512], index: 0, kind: input, shape index: {}]
  %s1 = inlined_call_operand.vmem [shape: bf16[512,64], index: 1, kind: input, shape index: {}]
  %s2 = inlined_call_operand.vmem [shape: f32[1,64], index: 2, kind: input, shape index: {}]
  %s3 = inlined_call_operand.vmem [shape: bf16[72,64], index: 3, kind: output, shape index: {}]
  %s4 = sld [smem:[#allocation0]]
  $region22: #{dddqn_forward.4} parent=0
    _
  %s6 = ssub.s32 1, %s4
  %s7 = scalar_select 0, %s6, %s4
  // Predicated region
  $region2: #{dddqn_forward.4} parent=0 // pred_check
    _
  $region3: #{dddqn_forward.4} parent=0 // pred_check_branch
    %9 = sbr.rel (0) target = $region5
  $region4: #{dddqn_forward.4} parent=0 // pred_region
    _
  $region5: #{dddqn_forward.4} parent=0 // pred_fallthru
    _
  // Predicated region
  $region6: #{dddqn_forward.4} parent=0 // pred_check
    _
  $region7: #{dddqn_forward.4} parent=0 // pred_check_branch
    %11 = sbr.rel (0) target = $region9
  $region8: #{dddqn_forward.4} parent=0 // pred_region
    _
  $region9: #{dddqn_forward.4} parent=0 // pred_fallthru
    _
  // Predicated region
  $region10: #{dddqn_forward.4} parent=0 // pred_check
    _
  $region11: #{dddqn_forward.4} parent=0 // pred_check_branch
    %13 = sbr.rel (0) target = $region13
  $region12: #{dddqn_forward.4} parent=0 // pred_region
    _
  $region13: #{dddqn_forward.4} parent=0 // pred_fallthru
    _
  %v15 = vld [vmem:[%s0] sm:$0xff]
  %v16 = vld [vmem:[%s0 + $0x8] sm:$0xff]
  %v17 = vld [vmem:[%s0 + $0x10] sm:$0xff]
  %v18 = vld [vmem:[%s0 + $0x18] sm:$0xff]
  %v19 = vld [vmem:[%s0 + $0x20] sm:$0xff]
  %v20 = vld [vmem:[%s0 + $0x28] sm:$0xff]
  %v21 = vld [vmem:[%s0 + $0x30] sm:$0xff]
  %v22 = vld [vmem:[%s0 + $0x38] sm:$0xff]
  %v23 = vld [vmem:[%s0 + $0x40] sm:$0xff]
  %v24 = vld [vmem:[%s0 + $0x48] sm:$0xff]
  %v25 = vld [vmem:[%s0 + $0x50] sm:$0xff]
  %v26 = vld [vmem:[%s0 + $0x58] sm:$0xff]
  %v27 = vld [vmem:[%s0 + $0x60] sm:$0xff]
  %v28 = vld [vmem:[%s0 + $0x68] sm:$0xff]
  %v29 = vld [vmem:[%s0 + $0x70] sm:$0xff]
  %v30 = vld [vmem:[%s0 + $0x78] sm:$0xff]
  %v31 = vld [vmem:[%s0 + $0x80] sm:$0xff]
  %v32 = vld [vmem:[%s0 + $0x88] sm:$0xff]
  %v33 = vld [vmem:[%s1] sm:$0xf]
  %v34 = vld [vmem:[%s1 + $0x4] sm:$0xf]
  %v35 = vld [vmem:[%s1 + $0x8] sm:$0xf]
  %v36 = vld [vmem:[%s1 + $0xc] sm:$0xf]
  %v37 = vld [vmem:[%s1 + $0x10] sm:$0xf]
  %v38 = vld [vmem:[%s1 + $0x14] sm:$0xf]
  %v39 = vld [vmem:[%s1 + $0x18] sm:$0xf]
  %v40 = vld [vmem:[%s1 + $0x1c] sm:$0xf]
  %v41 = vld [vmem:[%s1 + $0x20] sm:$0xf]
  %v42 = vld [vmem:[%s1 + $0x24] sm:$0xf]
  %v43 = vld [vmem:[%s1 + $0x28] sm:$0xf]
  %v44 = vld [vmem:[%s1 + $0x2c] sm:$0xf]
  %v45 = vld [vmem:[%s1 + $0x30] sm:$0xf]
  %v46 = vld [vmem:[%s1 + $0x34] sm:$0xf]
  %v47 = vld [vmem:[%s1 + $0x38] sm:$0xf]
  %v48 = vld [vmem:[%s1 + $0x3c] sm:$0xf]
  %v49 = vld [vmem:[%s1 + $0x40] sm:$0xf]
  %v50 = vld [vmem:[%s1 + $0x44] sm:$0xf]
  %v51 = vld [vmem:[%s1 + $0x48] sm:$0xf]
  %v52 = vld [vmem:[%s1 + $0x4c] sm:$0xf]
  %v53 = vld [vmem:[%s1 + $0x50] sm:$0xf]
  %v54 = vld [vmem:[%s1 + $0x54] sm:$0xf]
  %v55 = vld [vmem:[%s1 + $0x58] sm:$0xf]
  %v56 = vld [vmem:[%s1 + $0x5c] sm:$0xf]
  %v57 = vld [vmem:[%s1 + $0x60] sm:$0xf]
  %v58 = vld [vmem:[%s1 + $0x64] sm:$0xf]
  %v59 = vld [vmem:[%s1 + $0x68] sm:$0xf]
  %v60 = vld [vmem:[%s1 + $0x6c] sm:$0xf]
  %v61 = vld [vmem:[%s1 + $0x70] sm:$0xf]
  %v62 = vld [vmem:[%s1 + $0x74] sm:$0xf]
  %v63 = vld [vmem:[%s1 + $0x78] sm:$0xf]
  %v64 = vld [vmem:[%s1 + $0x7c] sm:$0xf]
  %v65 = vld [vmem:[%s1 + $0x80] sm:$0xf]
  %v66 = vld [vmem:[%s1 + $0x84] sm:$0xf]
  %v67 = vld [vmem:[%s1 + $0x88] sm:$0xf]
  %v68 = vld [vmem:[%s1 + $0x8c] sm:$0xf]
  %v69 = vld [vmem:[%s1 + $0x90] sm:$0xf]
  %v70 = vld [vmem:[%s1 + $0x94] sm:$0xf]
  %v71 = vld [vmem:[%s1 + $0x98] sm:$0xf]
  %v72 = vld [vmem:[%s1 + $0x9c] sm:$0xf]
  %v73 = vld [vmem:[%s1 + $0xa0] sm:$0xf]
  %v74 = vld [vmem:[%s1 + $0xa4] sm:$0xf]
  %v75 = vld [vmem:[%s1 + $0xa8] sm:$0xf]
  %v76 = vld [vmem:[%s1 + $0xac] sm:$0xf]
  %v77 = vld [vmem:[%s1 + $0xb0] sm:$0xf]
  %v78 = vld [vmem:[%s1 + $0xb4] sm:$0xf]
  %v79 = vld [vmem:[%s1 + $0xb8] sm:$0xf]
  %v80 = vld [vmem:[%s1 + $0xbc] sm:$0xf]
  %v81 = vld [vmem:[%s1 + $0xc0] sm:$0xf]
  %v82 = vld [vmem:[%s1 + $0xc4] sm:$0xf]
  %v83 = vld [vmem:[%s1 + $0xc8] sm:$0xf]
  %v84 = vld [vmem:[%s1 + $0xcc] sm:$0xf]
  %v85 = vld [vmem:[%s1 + $0xd0] sm:$0xf]
  %v86 = vld [vmem:[%s1 + $0xd4] sm:$0xf]
  %v87 = vld [vmem:[%s1 + $0xd8] sm:$0xf]
  %v88 = vld [vmem:[%s1 + $0xdc] sm:$0xf]
  %v89 = vld [vmem:[%s1 + $0xe0] sm:$0xf]
  %v90 = vld [vmem:[%s1 + $0xe4] sm:$0xf]
  %v91 = vld [vmem:[%s1 + $0xe8] sm:$0xf]
  %v92 = vld [vmem:[%s1 + $0xec] sm:$0xf]
  %v93 = vld [vmem:[%s1 + $0xf0] sm:$0xf]
  %v94 = vld [vmem:[%s1 + $0xf4] sm:$0xf]
  %v95 = vld [vmem:[%s1 + $0xf8] sm:$0xf]
  %v96 = vld [vmem:[%s1 + $0xfc] sm:$0xf]
  %v97 = vld [vmem:[%s2] sm:$0x1]
  %v99 = vlaneseq
  %v100 = vshrl.u32 %v99, 7
  %v101 = vsub.s32 0, %v100
  %v102 = vrot.slane %v97, %v101
  %v122 = vunpack.c.l.b16 %v15
  %v123 = vunpack.c.h.b16 %v15
  %v124 = vunpack.c.l.b16 %v16
  %v125 = vunpack.c.h.b16 %v16
  %v126 = vunpack.c.l.b16 %v17
  %v127 = vunpack.c.h.b16 %v17
  %v128 = vunpack.c.l.b16 %v18
  %v129 = vunpack.c.h.b16 %v18
  %v130 = vunpack.c.l.b16 %v19
  %v131 = vunpack.c.h.b16 %v19
  %v132 = vunpack.c.l.b16 %v20
  %v133 = vunpack.c.h.b16 %v20
  %v134 = vunpack.c.l.b16 %v21
  %v135 = vunpack.c.h.b16 %v21
  %v136 = vunpack.c.l.b16 %v22
  %v137 = vunpack.c.h.b16 %v22
  %v138 = vunpack.c.l.b16 %v23
  %v139 = vunpack.c.h.b16 %v23
  %v140 = vunpack.c.l.b16 %v24
  %v141 = vunpack.c.h.b16 %v24
  %v142 = vunpack.c.l.b16 %v25
  %v143 = vunpack.c.h.b16 %v25
  %v144 = vunpack.c.l.b16 %v26
  %v145 = vunpack.c.h.b16 %v26
  %v146 = vunpack.c.l.b16 %v27
  %v147 = vunpack.c.h.b16 %v27
  %v148 = vunpack.c.l.b16 %v28
  %v149 = vunpack.c.h.b16 %v28
  %v150 = vunpack.c.l.b16 %v29
  %v151 = vunpack.c.h.b16 %v29
  %v152 = vunpack.c.l.b16 %v30
  %v153 = vunpack.c.h.b16 %v30
  %v154 = vunpack.c.l.b16 %v31
  %v155 = vunpack.c.h.b16 %v31
  %v156 = vunpack.c.l.b16 %v32
  %v157 = vunpack.c.h.b16 %v32
  %v158 = vpack.c.b16 %v126, %v122
  %v159 = vpack.c.b16 %v127, %v123
  %v160 = vpack.c.b16 %v128, %v124
  %v161 = vpack.c.b16 %v129, %v125
  %v162 = vpack.c.b16 %v134, %v130
  %v163 = vpack.c.b16 %v135, %v131
  %v164 = vpack.c.b16 %v136, %v132
  %v165 = vpack.c.b16 %v137, %v133
  %v166 = vpack.c.b16 %v142, %v138
  %v167 = vpack.c.b16 %v143, %v139
  %v168 = vpack.c.b16 %v144, %v140
  %v169 = vpack.c.b16 %v145, %v141
  %v170 = vpack.c.b16 %v150, %v146
  %v171 = vpack.c.b16 %v151, %v147
  %v172 = vpack.c.b16 %v152, %v148
  %v173 = vpack.c.b16 %v153, %v149
  %v174 = vpack.c.b16 %v154, %v154
  %v175 = vpack.c.b16 %v155, %v155
  %v176 = vpack.c.b16 %v156, %v156
  %v177 = vpack.c.b16 %v157, %v157
  %v262 = vunpack.c.l.b16 %v33
  %v263 = vunpack.c.l.b16 %v34
  %v264 = vunpack.c.l.b16 %v35
  %v265 = vunpack.c.l.b16 %v36
  %v266 = vunpack.c.l.b16 %v37
  %v267 = vunpack.c.l.b16 %v38
  %v268 = vunpack.c.l.b16 %v39
  %v269 = vunpack.c.l.b16 %v40
  %v270 = vunpack.c.l.b16 %v41
  %v271 = vunpack.c.l.b16 %v42
  %v272 = vunpack.c.l.b16 %v43
  %v273 = vunpack.c.l.b16 %v44
  %v274 = vunpack.c.l.b16 %v45
  %v275 = vunpack.c.l.b16 %v46
  %v276 = vunpack.c.l.b16 %v47
  %v277 = vunpack.c.l.b16 %v48
  %v278 = vunpack.c.l.b16 %v49
  %v279 = vunpack.c.l.b16 %v50
  %v280 = vunpack.c.l.b16 %v51
  %v281 = vunpack.c.l.b16 %v52
  %v282 = vunpack.c.l.b16 %v53
  %v283 = vunpack.c.l.b16 %v54
  %v284 = vunpack.c.l.b16 %v55
  %v285 = vunpack.c.l.b16 %v56
  %v286 = vunpack.c.l.b16 %v57
  %v287 = vunpack.c.l.b16 %v58
  %v288 = vunpack.c.l.b16 %v59
  %v289 = vunpack.c.l.b16 %v60
  %v290 = vunpack.c.l.b16 %v61
  %v291 = vunpack.c.l.b16 %v62
  %v292 = vunpack.c.l.b16 %v63
  %v293 = vunpack.c.l.b16 %v64
  %v294 = vunpack.c.l.b16 %v65
  %v295 = vunpack.c.l.b16 %v66
  %v296 = vunpack.c.l.b16 %v67
  %v297 = vunpack.c.l.b16 %v68
  %v298 = vunpack.c.l.b16 %v69
  %v299 = vunpack.c.l.b16 %v70
  %v300 = vunpack.c.l.b16 %v71
  %v301 = vunpack.c.l.b16 %v72
  %v302 = vunpack.c.l.b16 %v73
  %v303 = vunpack.c.l.b16 %v74
  %v304 = vunpack.c.l.b16 %v75
  %v305 = vunpack.c.l.b16 %v76
  %v306 = vunpack.c.l.b16 %v77
  %v307 = vunpack.c.l.b16 %v78
  %v308 = vunpack.c.l.b16 %v79
  %v309 = vunpack.c.l.b16 %v80
  %v310 = vunpack.c.l.b16 %v81
  %v311 = vunpack.c.l.b16 %v82
  %v312 = vunpack.c.l.b16 %v83
  %v313 = vunpack.c.l.b16 %v84
  %v314 = vunpack.c.l.b16 %v85
  %v315 = vunpack.c.l.b16 %v86
  %v316 = vunpack.c.l.b16 %v87
  %v317 = vunpack.c.l.b16 %v88
  %v318 = vunpack.c.l.b16 %v89
  %v319 = vunpack.c.l.b16 %v90
  %v320 = vunpack.c.l.b16 %v91
  %v321 = vunpack.c.l.b16 %v92
  %v322 = vunpack.c.l.b16 %v93
  %v323 = vunpack.c.l.b16 %v94
  %v324 = vunpack.c.l.b16 %v95
  %v325 = vunpack.c.l.b16 %v96
  %v326 = vpack.c.b16 %v263, %v262
  %v327 = vpack.c.b16 %v265, %v264
  %v328 = vpack.c.b16 %v267, %v266
  %v329 = vpack.c.b16 %v269, %v268
  %v330 = vpack.c.b16 %v271, %v270
  %v331 = vpack.c.b16 %v273, %v272
  %v332 = vpack.c.b16 %v275, %v274
  %v333 = vpack.c.b16 %v277, %v276
  %v334 = vpack.c.b16 %v279, %v278
  %v335 = vpack.c.b16 %v281, %v280
  %v336 = vpack.c.b16 %v283, %v282
  %v337 = vpack.c.b16 %v285, %v284
  %v338 = vpack.c.b16 %v287, %v286
  %v339 = vpack.c.b16 %v289, %v288
  %v340 = vpack.c.b16 %v291, %v290
  %v341 = vpack.c.b16 %v293, %v292
  %v342 = vpack.c.b16 %v295, %v294
  %v343 = vpack.c.b16 %v297, %v296
  %v344 = vpack.c.b16 %v299, %v298
  %v345 = vpack.c.b16 %v301, %v300
  %v346 = vpack.c.b16 %v303, %v302
  %v347 = vpack.c.b16 %v305, %v304
  %v348 = vpack.c.b16 %v307, %v306
  %v349 = vpack.c.b16 %v309, %v308
  %v350 = vpack.c.b16 %v311, %v310
  %v351 = vpack.c.b16 %v313, %v312
  %v352 = vpack.c.b16 %v315, %v314
  %v353 = vpack.c.b16 %v317, %v316
  %v354 = vpack.c.b16 %v319, %v318
  %v355 = vpack.c.b16 %v321, %v320
  %v356 = vpack.c.b16 %v323, %v322
  %v357 = vpack.c.b16 %v325, %v324
  %390 = vmatprep.subr.bf16.mxu0 0
  %391 = vmatpush1.bf16.msra.mxu0 %v326
  %392 = vmatprep.subr.bf16.mxu0 0
  %393 = vmatpush1.bf16.msra.mxu0 %v327
  %394 = vmatprep.subr.bf16.mxu0 0
  %395 = vmatpush1.bf16.msra.mxu0 %v328
  %396 = vmatprep.subr.bf16.mxu0 0
  %397 = vmatpush1.bf16.msra.mxu0 %v329
  %398 = vmatprep.subr.bf16.mxu0 0
  %399 = vmatpush1.bf16.msra.mxu0 %v330
  %400 = vmatprep.subr.bf16.mxu0 0
  %401 = vmatpush1.bf16.msra.mxu0 %v331
  %402 = vmatprep.subr.bf16.mxu0 0
  %403 = vmatpush1.bf16.msra.mxu0 %v332
  %404 = vmatprep.subr.bf16.mxu0 0
  %405 = vmatpush1.bf16.msra.mxu0 %v333
  %406 = vmatprep.subr.bf16.mxu0 0
  %407 = vmatpush1.bf16.msra.mxu0 %v334
  %408 = vmatprep.subr.bf16.mxu0 0
  %409 = vmatpush1.bf16.msra.mxu0 %v335
  %410 = vmatprep.subr.bf16.mxu0 0
  %411 = vmatpush1.bf16.msra.mxu0 %v336
  %412 = vmatprep.subr.bf16.mxu0 0
  %413 = vmatpush1.bf16.msra.mxu0 %v337
  %414 = vmatprep.subr.bf16.mxu0 0
  %415 = vmatpush1.bf16.msra.mxu0 %v338
  %416 = vmatprep.subr.bf16.mxu0 0
  %417 = vmatpush1.bf16.msra.mxu0 %v339
  %418 = vmatprep.subr.bf16.mxu0 0
  %419 = vmatpush1.bf16.msra.mxu0 %v340
  %420 = vmatprep.subr.bf16.mxu0 0
  %421 = vmatpush1.bf16.msra.mxu0 %v341
  %422 = vmatprep.mubr.bf16.mxu0 %v159
  %423 = vmatmul.mubr.bf16.gmra.mrb[0].mxu0 %v158
  %v424 = vpop.f32.mrb[0].mxu0
  %v425 = vadd.f32 %v102, %v424
  %v426 = vpop.f32.mrb[0].mxu0
  %v427 = vpop.f32.mrb[0].mxu0
  %v428 = vadd.f32 %v102, %v427
  %v429 = vpop.f32.mrb[0].mxu0
  %430 = vmatprep.mubr.bf16.mxu0 %v163
  %431 = vmatmul.mubr.bf16.gmra.mrb[0].mxu0 %v162
  %v432 = vpop.f32.mrb[0].mxu0
  %v433 = vadd.f32 %v102, %v432
  %v434 = vpop.f32.mrb[0].mxu0
  %v435 = vpop.f32.mrb[0].mxu0
  %v436 = vadd.f32 %v102, %v435
  %v437 = vpop.f32.mrb[0].mxu0
  %438 = vmatprep.mubr.bf16.mxu0 %v167
  %439 = vmatmul.mubr.bf16.gmra.mrb[0].mxu0 %v166
  %v440 = vpop.f32.mrb[0].mxu0
  %v441 = vadd.f32 %v102, %v440
  %v442 = vpop.f32.mrb[0].mxu0
  %v443 = vpop.f32.mrb[0].mxu0
  %v444 = vadd.f32 %v102, %v443
  %v445 = vpop.f32.mrb[0].mxu0
  %446 = vmatprep.mubr.bf16.mxu0 %v171
  %447 = vmatmul.mubr.bf16.gmra.mrb[0].mxu0 %v170
  %v448 = vpop.f32.mrb[0].mxu0
  %v449 = vadd.f32 %v102, %v448
  %v450 = vpop.f32.mrb[0].mxu0
  %v451 = vpop.f32.mrb[0].mxu0
  %v452 = vadd.f32 %v102, %v451
  %v453 = vpop.f32.mrb[0].mxu0
  %454 = vmatprep.mubr.bf16.mxu0 %v175
  %455 = vmatmul.mubr.bf16.gmra.mrb[0].mxu0 %v174
  %v456 = vpop.f32.mrb[0].mxu0
  %v457 = vadd.f32 %v102, %v456
  %v458 = vpop.f32.mrb[0].mxu0
  %v459 = vpop.f32.mrb[0].mxu0
  %v460 = vpop.f32.mrb[0].mxu0
  %461 = vdwg.mxu0
  %462 = vmatprep.subr.bf16.mxu0 0
  %463 = vmatpush1.bf16.msra.mxu0 %v342
  %464 = vmatprep.subr.bf16.mxu0 0
  %465 = vmatpush1.bf16.msra.mxu0 %v343
  %466 = vmatprep.subr.bf16.mxu0 0
  %467 = vmatpush1.bf16.msra.mxu0 %v344
  %468 = vmatprep.subr.bf16.mxu0 0
  %469 = vmatpush1.bf16.msra.mxu0 %v345
  %470 = vmatprep.subr.bf16.mxu0 0
  %471 = vmatpush1.bf16.msra.mxu0 %v346
  %472 = vmatprep.subr.bf16.mxu0 0
  %473 = vmatpush1.bf16.msra.mxu0 %v347
  %474 = vmatprep.subr.bf16.mxu0 0
  %475 = vmatpush1.bf16.msra.mxu0 %v348
  %476 = vmatprep.subr.bf16.mxu0 0
  %477 = vmatpush1.bf16.msra.mxu0 %v349
  %478 = vmatprep.subr.bf16.mxu0 0
  %479 = vmatpush1.bf16.msra.mxu0 %v350
  %480 = vmatprep.subr.bf16.mxu0 0
  %481 = vmatpush1.bf16.msra.mxu0 %v351
  %482 = vmatprep.subr.bf16.mxu0 0
  %483 = vmatpush1.bf16.msra.mxu0 %v352
  %484 = vmatprep.subr.bf16.mxu0 0
  %485 = vmatpush1.bf16.msra.mxu0 %v353
  %486 = vmatprep.subr.bf16.mxu0 0
  %487 = vmatpush1.bf16.msra.mxu0 %v354
  %488 = vmatprep.subr.bf16.mxu0 0
  %489 = vmatpush1.bf16.msra.mxu0 %v355
  %490 = vmatprep.subr.bf16.mxu0 0
  %491 = vmatpush1.bf16.msra.mxu0 %v356
  %492 = vmatprep.subr.bf16.mxu0 0
  %493 = vmatpush1.bf16.msra.mxu0 %v357
  %494 = vmatprep.mubr.bf16.mxu0 %v161
  %495 = vmatmul.mubr.bf16.gmra.mrb[0].mxu0 %v160
  %v496 = vpop.f32.mrb[0].mxu0
  %v497 = vadd.f32 %v425, %v496
  %v498 = vpop.f32.mrb[0].mxu0
  %v499 = vpop.f32.mrb[0].mxu0
  %v500 = vadd.f32 %v428, %v499
  %v501 = vpop.f32.mrb[0].mxu0
  %502 = vmatprep.mubr.bf16.mxu0 %v165
  %503 = vmatmul.mubr.bf16.gmra.mrb[0].mxu0 %v164
  %v504 = vpop.f32.mrb[0].mxu0
  %v505 = vadd.f32 %v433, %v504
  %v506 = vpop.f32.mrb[0].mxu0
  %v507 = vpop.f32.mrb[0].mxu0
  %v508 = vadd.f32 %v436, %v507
  %v509 = vpop.f32.mrb[0].mxu0
  %510 = vmatprep.mubr.bf16.mxu0 %v169
  %511 = vmatmul.mubr.bf16.gmra.mrb[0].mxu0 %v168
  %v512 = vpop.f32.mrb[0].mxu0
  %v513 = vadd.f32 %v441, %v512
  %v514 = vpop.f32.mrb[0].mxu0
  %v515 = vpop.f32.mrb[0].mxu0
  %v516 = vadd.f32 %v444, %v515
  %v517 = vpop.f32.mrb[0].mxu0
  %518 = vmatprep.mubr.bf16.mxu0 %v173
  %519 = vmatmul.mubr.bf16.gmra.mrb[0].mxu0 %v172
  %v520 = vpop.f32.mrb[0].mxu0
  %v521 = vadd.f32 %v449, %v520
  %v522 = vpop.f32.mrb[0].mxu0
  %v523 = vpop.f32.mrb[0].mxu0
  %v524 = vadd.f32 %v452, %v523
  %v525 = vpop.f32.mrb[0].mxu0
  %526 = vmatprep.mubr.bf16.mxu0 %v177
  %527 = vmatmul.mubr.bf16.gmra.mrb[0].mxu0 %v176
  %v528 = vpop.f32.mrb[0].mxu0
  %v529 = vadd.f32 %v457, %v528
  %v530 = vpop.f32.mrb[0].mxu0
  %v531 = vpop.f32.mrb[0].mxu0
  %v532 = vpop.f32.mrb[0].mxu0
  %533 = vdwg.mxu0
  %v534 = vmax.f32 %v497, 0.0
  %v535 = vmax.f32 %v500, 0.0
  %v536 = vmax.f32 %v505, 0.0
  %v537 = vmax.f32 %v508, 0.0
  %v538 = vmax.f32 %v513, 0.0
  %v539 = vmax.f32 %v516, 0.0
  %v540 = vmax.f32 %v521, 0.0
  %v541 = vmax.f32 %v524, 0.0
  %v542 = vmax.f32 %v529, 0.0
  %v543 = vpack.c.bf16 %v535, %v534
  %v544 = vpack.c.bf16 %v537, %v536
  %v545 = vpack.c.bf16 %v539, %v538
  %v546 = vpack.c.bf16 %v541, %v540
  %v547 = vpack.c.bf16 %v542, %v542
  %v553 = vunpack.c.l.b16 %v543
  %v554 = vunpack.c.h.b16 %v543
  %v555 = vunpack.c.l.b16 %v544
  %v556 = vunpack.c.h.b16 %v544
  %v557 = vunpack.c.l.b16 %v545
  %v558 = vunpack.c.h.b16 %v545
  %v559 = vunpack.c.l.b16 %v546
  %v560 = vunpack.c.h.b16 %v546
  %v561 = vunpack.c.l.b16 %v547
  %v562 = vpack.c.b16 %v553, %v553
  %v563 = vpack.c.b16 %v554, %v554
  %v564 = vpack.c.b16 %v555, %v555
  %v565 = vpack.c.b16 %v556, %v556
  %v566 = vpack.c.b16 %v557, %v557
  %v567 = vpack.c.b16 %v558, %v558
  %v568 = vpack.c.b16 %v559, %v559
  %v569 = vpack.c.b16 %v560, %v560
  %v570 = vpack.c.b16 %v561, %v561
  %vm580 = vcmask 519168
  %581 = vst.msk [vmem:[%s3] sm:$0xf] %vm580, %v562
  %582 = vst.msk [vmem:[%s3 + $0x4] sm:$0xf] %vm580, %v563
  %583 = vst.msk [vmem:[%s3 + $0x8] sm:$0xf] %vm580, %v564
  %584 = vst.msk [vmem:[%s3 + $0xc] sm:$0xf] %vm580, %v565
  %585 = vst.msk [vmem:[%s3 + $0x10] sm:$0xf] %vm580, %v566
  %586 = vst.msk [vmem:[%s3 + $0x14] sm:$0xf] %vm580, %v567
  %587 = vst.msk [vmem:[%s3 + $0x18] sm:$0xf] %vm580, %v568
  %588 = vst.msk [vmem:[%s3 + $0x1c] sm:$0xf] %vm580, %v569
  %589 = vst.msk [vmem:[%s3 + $0x20] sm:$0xf] %vm580, %v570
  // Predicated region
  $region14: #{dddqn_forward.4} parent=0 // pred_check
    _
  $region15: #{dddqn_forward.4} parent=0 // pred_check_branch
    %591 = sbr.rel (0) target = $region17
  $region16: #{dddqn_forward.4} parent=0 // pred_region
    _
  $region17: #{dddqn_forward.4} parent=0 // pred_fallthru
    _
  // Predicated region
  $region18: #{dddqn_forward.4} parent=0 // pred_check
    _
  $region19: #{dddqn_forward.4} parent=0 // pred_check_branch
    %593 = sbr.rel (0) target = $region21
  $region20: #{dddqn_forward.4} parent=0 // pred_region
    _
  $region21: #{dddqn_forward.4} parent=0 // pred_fallthru
    _

// kernel: dddqn_forward.5
$region0: #{dddqn_forward.5}
  #allocation0 [shape = 'u32[]', space=smem, size = 0x4, offset = 0x4, fixed_abs, tag = 'smem constant byte address 0x4 - core index']
  #allocation1 [shape = 'u32[144,128]{1,0:T(1,128)}', space=vmem, size = 0x12000, scoped, tag = 'internal scratch']
  %s0 = inlined_call_operand.vmem [shape: bf16[2,2304], index: 0, kind: input, shape index: {}]
  %s1 = inlined_call_operand.vmem [shape: bf16[3,192,64], index: 1, kind: input, shape index: {}]
  %s2 = inlined_call_operand.vmem [shape: f32[1,64], index: 2, kind: input, shape index: {}]
  %s3 = inlined_call_operand.vmem [shape: bf16[16,64,512], index: 3, kind: input, shape index: {}]
  %s4 = inlined_call_operand.vmem [shape: f32[1,512], index: 4, kind: input, shape index: {}]
  %s5 = inlined_call_operand.vmem [shape: bf16[512,4], index: 5, kind: input, shape index: {}]
  %s6 = inlined_call_operand.vmem [shape: f32[1,4], index: 6, kind: input, shape index: {}]
  %s7 = inlined_call_operand.hbm [shape: f32[2,3], index: 7, kind: output, shape index: {}]
  %s8 = sld [smem:[#allocation0]]
  $region38: #{dddqn_forward.5} parent=0
    _
  %s10 = ssub.s32 1, %s8
  %s11 = scalar_select 0, %s10, %s8
  $region1: #{dddqn_forward.5} parent=0
    #allocation2 [shape = 'u8[1024]{0}', space=vmem, size = 0x400, scoped, tag = 'output window, operand 0, single buffered']
    #allocation3 [shape = 's32[1]{0}', space=sflag, size = 0x4, scoped, tag = 'scoped memory for dddqn_forward.5']
    %12 = vsyncpa [#allocation3], 0
    // Predicated region
    $region2: #{dddqn_forward.5} parent=1 // pred_check
      _
    $region3: #{dddqn_forward.5} parent=1 // pred_check_branch
      %14 = sbr.rel (0) target = $region5
    $region4: #{dddqn_forward.5} parent=1 // pred_region
      _
    $region5: #{dddqn_forward.5} parent=1 // pred_fallthru
      _
    // Predicated region
    $region6: #{dddqn_forward.5} parent=1 // pred_check
      _
    $region7: #{dddqn_forward.5} parent=1 // pred_check_branch
      %16 = sbr.rel (0) target = $region9
    $region8: #{dddqn_forward.5} parent=1 // pred_region
      _
    $region9: #{dddqn_forward.5} parent=1 // pred_fallthru
      _
    // Predicated region
    $region10: #{dddqn_forward.5} parent=1 // pred_check
      _
    $region11: #{dddqn_forward.5} parent=1 // pred_check_branch
      %18 = sbr.rel (0) target = $region13
    $region12: #{dddqn_forward.5} parent=1 // pred_region
      _
    $region13: #{dddqn_forward.5} parent=1 // pred_fallthru
      _
    // Predicated region
    $region14: #{dddqn_forward.5} parent=1 // pred_check
      _
    $region15: #{dddqn_forward.5} parent=1 // pred_check_branch
      %20 = sbr.rel (0) target = $region17
    $region16: #{dddqn_forward.5} parent=1 // pred_region
      _
    $region17: #{dddqn_forward.5} parent=1 // pred_fallthru
      _
    // Predicated region
    $region18: #{dddqn_forward.5} parent=1 // pred_check
      _
    $region19: #{dddqn_forward.5} parent=1 // pred_check_branch
      %22 = sbr.rel (0) target = $region21
    $region20: #{dddqn_forward.5} parent=1 // pred_region
      _
    $region21: #{dddqn_forward.5} parent=1 // pred_fallthru
      _
    // Predicated region
    $region22: #{dddqn_forward.5} parent=1 // pred_check
      _
    $region23: #{dddqn_forward.5} parent=1 // pred_check_branch
      %24 = sbr.rel (0) target = $region25
    $region24: #{dddqn_forward.5} parent=1 // pred_region
      _
    $region25: #{dddqn_forward.5} parent=1 // pred_fallthru
      _
    // Predicated region
    $region26: #{dddqn_forward.5} parent=1 // pred_check
      _
    $region27: #{dddqn_forward.5} parent=1 // pred_check_branch
      %26 = sbr.rel (0) target = $region29
    $region28: #{dddqn_forward.5} parent=1 // pred_region
      _
    $region29: #{dddqn_forward.5} parent=1 // pred_fallthru
      _
    %v28 = vld [vmem:[%s0] sm:$0xff]
    %v29 = vld [vmem:[%s0 + $0x8] sm:$0xff]
    %v30 = vld [vmem:[%s0 + $0x10] sm:$0x3]
    %v31 = vld [vmem:[%s2] sm:$0x1]
    %v32 = vld [vmem:[%s1] sm:$0xf]
    %v33 = vld [vmem:[%s1 + $0x4] sm:$0xf]
    %v34 = vld [vmem:[%s1 + $0x8] sm:$0xf]
    %v35 = vld [vmem:[%s1 + $0xc] sm:$0xf]
    %v36 = vld [vmem:[%s1 + $0x10] sm:$0xf]
    %v37 = vld [vmem:[%s1 + $0x14] sm:$0xf]
    %v38 = vld [vmem:[%s1 + $0x18] sm:$0xf]
    %v39 = vld [vmem:[%s1 + $0x1c] sm:$0xf]
    %v40 = vld [vmem:[%s1 + $0x20] sm:$0xf]
    %v41 = vld [vmem:[%s1 + $0x24] sm:$0xf]
    %v42 = vld [vmem:[%s1 + $0x28] sm:$0xf]
    %v43 = vld [vmem:[%s1 + $0x2c] sm:$0xf]
    %v44 = vld [vmem:[%s1 + $0x30] sm:$0xf]
    %v45 = vld [vmem:[%s1 + $0x34] sm:$0xf]
    %v46 = vld [vmem:[%s1 + $0x38] sm:$0xf]
    %v47 = vld [vmem:[%s1 + $0x3c] sm:$0xf]
    %v48 = vld [vmem:[%s1 + $0x40] sm:$0xf]
    %v49 = vld [vmem:[%s1 + $0x44] sm:$0xf]
    %v50 = vld [vmem:[%s1 + $0x48] sm:$0xf]
    %v51 = vld [vmem:[%s1 + $0x4c] sm:$0xf]
    %v52 = vld [vmem:[%s1 + $0x50] sm:$0xf]
    %v53 = vld [vmem:[%s1 + $0x54] sm:$0xf]
    %v54 = vld [vmem:[%s1 + $0x58] sm:$0xf]
    %v55 = vld [vmem:[%s1 + $0x5c] sm:$0xf]
    %s56 = scalar_lea.vmem %s1, 96
    %v57 = vld [vmem:[%s56] sm:$0xf]
    %v58 = vld [vmem:[%s56 + $0x4] sm:$0xf]
    %v59 = vld [vmem:[%s56 + $0x8] sm:$0xf]
    %v60 = vld [vmem:[%s56 + $0xc] sm:$0xf]
    %v61 = vld [vmem:[%s56 + $0x10] sm:$0xf]
    %v62 = vld [vmem:[%s56 + $0x14] sm:$0xf]
    %v63 = vld [vmem:[%s56 + $0x18] sm:$0xf]
    %v64 = vld [vmem:[%s56 + $0x1c] sm:$0xf]
    %v65 = vld [vmem:[%s56 + $0x20] sm:$0xf]
    %v66 = vld [vmem:[%s56 + $0x24] sm:$0xf]
    %v67 = vld [vmem:[%s56 + $0x28] sm:$0xf]
    %v68 = vld [vmem:[%s56 + $0x2c] sm:$0xf]
    %v69 = vld [vmem:[%s56 + $0x30] sm:$0xf]
    %v70 = vld [vmem:[%s56 + $0x34] sm:$0xf]
    %v71 = vld [vmem:[%s56 + $0x38] sm:$0xf]
    %v72 = vld [vmem:[%s56 + $0x3c] sm:$0xf]
    %v73 = vld [vmem:[%s56 + $0x40] sm:$0xf]
    %v74 = vld [vmem:[%s56 + $0x44] sm:$0xf]
    %v75 = vld [vmem:[%s56 + $0x48] sm:$0xf]
    %v76 = vld [vmem:[%s56 + $0x4c] sm:$0xf]
    %v77 = vld [vmem:[%s56 + $0x50] sm:$0xf]
    %v78 = vld [vmem:[%s56 + $0x54] sm:$0xf]
    %v79 = vld [vmem:[%s56 + $0x58] sm:$0xf]
    %v80 = vld [vmem:[%s56 + $0x5c] sm:$0xf]
    %v82 = vcombine.high %v28, %v28
    %v84 = vunpack.c.l.s4 1966171168
    %v85 = vunpack.c.0.s8 %v84
    %v86 = vlaneseq
    %v87 = vshrl.u32 %v86, 7
    %v88 = vsub.s32 %v85, %v87
    %v89 = vrot.slane %v28, %v88
    %v91 = vunpack.c.l.s4 1966171168
    %v92 = vunpack.c.0.s8 %v91
    %v93 = vlaneseq
    %v94 = vshrl.u32 %v93, 7
    %v95 = vsub.s32 %v92, %v94
    %v96 = vrot.slane %v82, %v95
    %v97 = vcombine.high %v89, %v89
    %v99 = vunpack.c.l.s4 1966171168
    %v100 = vunpack.c.0.s8 %v99
    %v101 = vlaneseq
    %v102 = vshrl.u32 %v101, 7
    %v103 = vsub.s32 %v100, %v102
    %v104 = vrot.slane %v89, %v103
    %v106 = vunpack.c.l.s4 1966171168
    %v107 = vunpack.c.0.s8 %v106
    %v108 = vlaneseq
    %v109 = vshrl.u32 %v108, 7
    %v110 = vsub.s32 %v107, %v109
    %v111 = vrot.slane %v96, %v110
    %v113 = vunpack.c.l.s4 1966171168
    %v114 = vunpack.c.0.s8 %v113
    %v115 = vlaneseq
    %v116 = vshrl.u32 %v115, 7
    %v117 = vsub.s32 %v114, %v116
    %v118 = vrot.slane %v97, %v117
    %v119 = vcombine.high %v118, %v118
    %v145 = vunpack.c.l.b16 %v57
    %v146 = vunpack.c.l.b16 %v58
    %v147 = vunpack.c.l.b16 %v59
    %v148 = vunpack.c.l.b16 %v60
    %v149 = vunpack.c.l.b16 %v61
    %v150 = vunpack.c.l.b16 %v62
    %v151 = vunpack.c.l.b16 %v63
    %v152 = vunpack.c.l.b16 %v64
    %v153 = vunpack.c.l.b16 %v65
    %v154 = vunpack.c.l.b16 %v66
    %v155 = vunpack.c.l.b16 %v67
    %v156 = vunpack.c.l.b16 %v68
    %v157 = vunpack.c.l.b16 %v69
    %v158 = vunpack.c.l.b16 %v70
    %v159 = vunpack.c.l.b16 %v71
    %v160 = vunpack.c.l.b16 %v72
    %v161 = vunpack.c.l.b16 %v73
    %v162 = vunpack.c.l.b16 %v74
    %v163 = vunpack.c.l.b16 %v75
    %v164 = vunpack.c.l.b16 %v76
    %v165 = vunpack.c.l.b16 %v77
    %v166 = vunpack.c.l.b16 %v78
    %v167 = vunpack.c.l.b16 %v79
    %v168 = vunpack.c.l.b16 %v80
    %v169 = vpack.c.b16 %v146, %v145
    %v170 = vpack.c.b16 %v148, %v147
    %v171 = vpack.c.b16 %v150, %v149
    %v172 = vpack.c.b16 %v152, %v151
    %v173 = vpack.c.b16 %v154, %v153
    %v174 = vpack.c.b16 %v156, %v155
    %v175 = vpack.c.b16 %v158, %v157
    %v176 = vpack.c.b16 %v160, %v159
    %v177 = vpack.c.b16 %v162, %v161
    %v178 = vpack.c.b16 %v164, %v163
    %v179 = vpack.c.b16 %v166, %v165
    %v180 = vpack.c.b16 %v168, %v167
    %vm193 = vcmask 523264
    %v195 = vsel %vm193, %v111, 0
    %197 = vmatprep.subr.bf16.mxu0 0
    %198 = vmatpush1.bf16.msra.mxu0 %v169
    %199 = vmatprep.subr.bf16.mxu0 0
    %200 = vmatpush1.bf16.msra.mxu0 %v170
    %201 = vmatprep.subr.bf16.mxu0 0
    %202 = vmatpush1.bf16.msra.mxu0 %v171
    %203 = vmatprep.subr.bf16.mxu0 0
    %204 = vmatpush1.bf16.msra.mxu0 %v172
    %205 = vmatprep.subr.bf16.mxu0 0
    %206 = vmatpush1.bf16.msra.mxu0 %v173
    %207 = vmatprep.subr.bf16.mxu0 0
    %208 = vmatpush1.bf16.msra.mxu0 %v174
    %209 = vmatprep.subr.bf16.mxu0 0
    %210 = vmatpush1.bf16.msra.mxu0 %v175
    %211 = vmatprep.subr.bf16.mxu0 0
    %212 = vmatpush1.bf16.msra.mxu0 %v176
    %213 = vmatprep.subr.bf16.mxu0 0
    %214 = vmatpush1.bf16.msra.mxu0 %v177
    %215 = vmatprep.subr.bf16.mxu0 0
    %216 = vmatpush1.bf16.msra.mxu0 %v178
    %217 = vmatprep.subr.bf16.mxu0 0
    %218 = vmatpush1.bf16.msra.mxu0 %v179
    %219 = vmatprep.subr.bf16.mxu0 0
    %220 = vmatpush1.bf16.msra.mxu0 %v180
    %221 = vmatprep.subr.bf16.mxu0 0
    %222 = vmatpush1.bf16.msra.mxu0 0
    %223 = vmatprep.subr.bf16.mxu0 0
    %224 = vmatpush1.bf16.msra.mxu0 0
    %225 = vmatprep.subr.bf16.mxu0 0
    %226 = vmatpush1.bf16.msra.mxu0 0
    %227 = vmatprep.subr.bf16.mxu0 0
    %228 = vmatpush1.bf16.msra.mxu0 0
    %229 = vmatprep.mubr.bf16.mxu0 %v195
    %230 = vmatmul.mubr.bf16.gmra.mrb[0].mxu0 %v119
    %v231 = vpop.f32.mrb[0].mxu0
    %v232 = vadd.f32 0.0, %v231
    %v233 = vpop.f32.mrb[0].mxu0
    %v234 = vpop.f32.mrb[0].mxu0
    %v235 = vpop.f32.mrb[0].mxu0
    %236 = vdwg.mxu0
    %v262 = vunpack.c.l.b16 %v32
    %v263 = vunpack.c.l.b16 %v33
    %v264 = vunpack.c.l.b16 %v34
    %v265 = vunpack.c.l.b16 %v35
    %v266 = vunpack.c.l.b16 %v36
    %v267 = vunpack.c.l.b16 %v37
    %v268 = vunpack.c.l.b16 %v38
    %v269 = vunpack.c.l.b16 %v39
    %v270 = vunpack.c.l.b16 %v40
    %v271 = vunpack.c.l.b16 %v41
    %v272 = vunpack.c.l.b16 %v42
    %v273 = vunpack.c.l.b16 %v43
    %v274 = vunpack.c.l.b16 %v44
    %v275 = vunpack.c.l.b16 %v45
    %v276 = vunpack.c.l.b16 %v46
    %v277 = vunpack.c.l.b16 %v47
    %v278 = vunpack.c.l.b16 %v48
    %v279 = vunpack.c.l.b16 %v49
    %v280 = vunpack.c.l.b16 %v50
    %v281 = vunpack.c.l.b16 %v51
    %v282 = vunpack.c.l.b16 %v52
    %v283 = vunpack.c.l.b16 %v53
    %v284 = vunpack.c.l.b16 %v54
    %v285 = vunpack.c.l.b16 %v55
    %v286 = vpack.c.b16 %v263, %v262
    %v287 = vpack.c.b16 %v265, %v264
    %v288 = vpack.c.b16 %v267, %v266
    %v289 = vpack.c.b16 %v269, %v268
    %v290 = vpack.c.b16 %v271, %v270
    %v291 = vpack.c.b16 %v273, %v272
    %v292 = vpack.c.b16 %v275, %v274
    %v293 = vpack.c.b16 %v277, %v276
    %v294 = vpack.c.b16 %v279, %v278
    %v295 = vpack.c.b16 %v281, %v280
    %v296 = vpack.c.b16 %v283, %v282
    %v297 = vpack.c.b16 %v285, %v284
    %v311 = vsel %vm193, %v118, 0
    %313 = vmatprep.subr.bf16.mxu0 0
    %314 = vmatpush1.bf16.msra.mxu0 %v286
    %315 = vmatprep.subr.bf16.mxu0 0
    %316 = vmatpush1.bf16.msra.mxu0 %v287
    %317 = vmatprep.subr.bf16.mxu0 0
    %318 = vmatpush1.bf16.msra.mxu0 %v288
    %319 = vmatprep.subr.bf16.mxu0 0
    %320 = vmatpush1.bf16.msra.mxu0 %v289
    %321 = vmatprep.subr.bf16.mxu0 0
    %322 = vmatpush1.bf16.msra.mxu0 %v290
    %323 = vmatprep.subr.bf16.mxu0 0
    %324 = vmatpush1.bf16.msra.mxu0 %v291
    %325 = vmatprep.subr.bf16.mxu0 0
    %326 = vmatpush1.bf16.msra.mxu0 %v292
    %327 = vmatprep.subr.bf16.mxu0 0
    %328 = vmatpush1.bf16.msra.mxu0 %v293
    %329 = vmatprep.subr.bf16.mxu0 0
    %330 = vmatpush1.bf16.msra.mxu0 %v294
    %331 = vmatprep.subr.bf16.mxu0 0
    %332 = vmatpush1.bf16.msra.mxu0 %v295
    %333 = vmatprep.subr.bf16.mxu0 0
    %334 = vmatpush1.bf16.msra.mxu0 %v296
    %335 = vmatprep.subr.bf16.mxu0 0
    %336 = vmatpush1.bf16.msra.mxu0 %v297
    %337 = vmatprep.subr.bf16.mxu0 0
    %338 = vmatpush1.bf16.msra.mxu0 0
    %339 = vmatprep.subr.bf16.mxu0 0
    %340 = vmatpush1.bf16.msra.mxu0 0
    %341 = vmatprep.subr.bf16.mxu0 0
    %342 = vmatpush1.bf16.msra.mxu0 0
    %343 = vmatprep.subr.bf16.mxu0 0
    %344 = vmatpush1.bf16.msra.mxu0 0
    %345 = vmatprep.mubr.bf16.mxu0 %v311
    %346 = vmatmul.mubr.bf16.gmra.mrb[0].mxu0 %v104
    %v347 = vpop.f32.mrb[0].mxu0
    %v348 = vadd.f32 %v232, %v347
    %v349 = vpop.f32.mrb[0].mxu0
    %v350 = vpop.f32.mrb[0].mxu0
    %v351 = vpop.f32.mrb[0].mxu0
    %352 = vdwg.mxu0
    %s353 = scalar_lea.vmem %s1, 192
    %v354 = vld [vmem:[%s353] sm:$0xf]
    %v355 = vld [vmem:[%s353 + $0x4] sm:$0xf]
    %v356 = vld [vmem:[%s353 + $0x8] sm:$0xf]
    %v357 = vld [vmem:[%s353 + $0xc] sm:$0xf]
    %v358 = vld [vmem:[%s353 + $0x10] sm:$0xf]
    %v359 = vld [vmem:[%s353 + $0x14] sm:$0xf]
    %v360 = vld [vmem:[%s353 + $0x18] sm:$0xf]
    %v361 = vld [vmem:[%s353 + $0x1c] sm:$0xf]
    %v362 = vld [vmem:[%s353 + $0x20] sm:$0xf]
    %v363 = vld [vmem:[%s353 + $0x24] sm:$0xf]
    %v364 = vld [vmem:[%s353 + $0x28] sm:$0xf]
    %v365 = vld [vmem:[%s353 + $0x2c] sm:$0xf]
    %v366 = vld [vmem:[%s353 + $0x30] sm:$0xf]
    %v367 = vld [vmem:[%s353 + $0x34] sm:$0xf]
    %v368 = vld [vmem:[%s353 + $0x38] sm:$0xf]
    %v369 = vld [vmem:[%s353 + $0x3c] sm:$0xf]
    %v370 = vld [vmem:[%s353 + $0x40] sm:$0xf]
    %v371 = vld [vmem:[%s353 + $0x44] sm:$0xf]
    %v372 = vld [vmem:[%s353 + $0x48] sm:$0xf]
    %v373 = vld [vmem:[%s353 + $0x4c] sm:$0xf]
    %v374 = vld [vmem:[%s353 + $0x50] sm:$0xf]
    %v375 = vld [vmem:[%s353 + $0x54] sm:$0xf]
    %v376 = vld [vmem:[%s353 + $0x58] sm:$0xf]
    %v377 = vld [vmem:[%s353 + $0x5c] sm:$0xf]
    %v378 = vcombine.high %v96, %v96
    %v380 = vunpack.c.l.s4 1966171168
    %v381 = vunpack.c.0.s8 %v380
    %v382 = vlaneseq
    %v383 = vshrl.u32 %v382, 7
    %v384 = vsub.s32 %v381, %v383
    %v385 = vrot.slane %v378, %v384
    %v386 = vcombine.high %v111, %v111
    %v387 = vcombine.high %v385, %v385
    %v413 = vunpack.c.l.b16 %v354
    %v414 = vunpack.c.l.b16 %v355
    %v415 = vunpack.c.l.b16 %v356
    %v416 = vunpack.c.l.b16 %v357
    %v417 = vunpack.c.l.b16 %v358
    %v418 = vunpack.c.l.b16 %v359
    %v419 = vunpack.c.l.b16 %v360
    %v420 = vunpack.c.l.b16 %v361
    %v421 = vunpack.c.l.b16 %v362
    %v422 = vunpack.c.l.b16 %v363
    %v423 = vunpack.c.l.b16 %v364
    %v424 = vunpack.c.l.b16 %v365
    %v425 = vunpack.c.l.b16 %v366
    %v426 = vunpack.c.l.b16 %v367
    %v427 = vunpack.c.l.b16 %v368
    %v428 = vunpack.c.l.b16 %v369
    %v429 = vunpack.c.l.b16 %v370
    %v430 = vunpack.c.l.b16 %v371
    %v431 = vunpack.c.l.b16 %v372
    %v432 = vunpack.c.l.b16 %v373
    %v433 = vunpack.c.l.b16 %v374
    %v434 = vunpack.c.l.b16 %v375
    %v435 = vunpack.c.l.b16 %v376
    %v436 = vunpack.c.l.b16 %v377
    %v437 = vpack.c.b16 %v414, %v413
    %v438 = vpack.c.b16 %v416, %v415
    %v439 = vpack.c.b16 %v418, %v417
    %v440 = vpack.c.b16 %v420, %v419
    %v441 = vpack.c.b16 %v422, %v421
    %v442 = vpack.c.b16 %v424, %v423
    %v443 = vpack.c.b16 %v426, %v425
    %v444 = vpack.c.b16 %v428, %v427
    %v445 = vpack.c.b16 %v430, %v429
    %v446 = vpack.c.b16 %v432, %v431
    %v447 = vpack.c.b16 %v434, %v433
    %v448 = vpack.c.b16 %v436, %v435
    %v462 = vsel %vm193, %v387, 0
    %464 = vmatprep.subr.bf16.mxu0 0
    %465 = vmatpush1.bf16.msra.mxu0 %v437
    %466 = vmatprep.subr.bf16.mxu0 0
    %467 = vmatpush1.bf16.msra.mxu0 %v438
    %468 = vmatprep.subr.bf16.mxu0 0
    %469 = vmatpush1.bf16.msra.mxu0 %v439
    %470 = vmatprep.subr.bf16.mxu0 0
    %471 = vmatpush1.bf16.msra.mxu0 %v440
    %472 = vmatprep.subr.bf16.mxu0 0
    %473 = vmatpush1.bf16.msra.mxu0 %v441
    %474 = vmatprep.subr.bf16.mxu0 0
    %475 = vmatpush1.bf16.msra.mxu0 %v442
    %476 = vmatprep.subr.bf16.mxu0 0
    %477 = vmatpush1.bf16.msra.mxu0 %v443
    %478 = vmatprep.subr.bf16.mxu0 0
    %479 = vmatpush1.bf16.msra.mxu0 %v444
    %480 = vmatprep.subr.bf16.mxu0 0
    %481 = vmatpush1.bf16.msra.mxu0 %v445
    %482 = vmatprep.subr.bf16.mxu0 0
    %483 = vmatpush1.bf16.msra.mxu0 %v446
    %484 = vmatprep.subr.bf16.mxu0 0
    %485 = vmatpush1.bf16.msra.mxu0 %v447
    %486 = vmatprep.subr.bf16.mxu0 0
    %487 = vmatpush1.bf16.msra.mxu0 %v448
    %488 = vmatprep.subr.bf16.mxu0 0
    %489 = vmatpush1.bf16.msra.mxu0 0
    %490 = vmatprep.subr.bf16.mxu0 0
    %491 = vmatpush1.bf16.msra.mxu0 0
    %492 = vmatprep.subr.bf16.mxu0 0
    %493 = vmatpush1.bf16.msra.mxu0 0
    %494 = vmatprep.subr.bf16.mxu0 0
    %495 = vmatpush1.bf16.msra.mxu0 0
    %496 = vmatprep.mubr.bf16.mxu0 %v462
    %497 = vmatmul.mubr.bf16.gmra.mrb[0].mxu0 %v386
    %v498 = vpop.f32.mrb[0].mxu0
    %v499 = vadd.f32 0.0, %v498
    %v500 = vpop.f32.mrb[0].mxu0
    %v501 = vpop.f32.mrb[0].mxu0
    %v502 = vpop.f32.mrb[0].mxu0
    %503 = vdwg.mxu0
    %v504 = vadd.f32 %v348, %v499
    %v506 = vlaneseq
    %v507 = vshrl.u32 %v506, 7
    %v508 = vsub.s32 0, %v507
    %v509 = vrot.slane %v31, %v508
    %v511 = vadd.f32 %v504, %v509
    %v512 = vmax.f32 %v511, 0.0
    %v513 = vpack.c.bf16 %v512, %v512
    %v514 = vld [vmem:[%s3] sm:$0xff]
    %v515 = vld [vmem:[%s3 + $0x8] sm:$0xff]
    %v516 = vld [vmem:[%s3 + $0x10] sm:$0xff]
    %v517 = vld [vmem:[%s3 + $0x18] sm:$0xff]
    %v518 = vld [vmem:[%s3 + $0x20] sm:$0xff]
    %v519 = vld [vmem:[%s3 + $0x28] sm:$0xff]
    %v520 = vld [vmem:[%s3 + $0x30] sm:$0xff]
    %v521 = vld [vmem:[%s3 + $0x38] sm:$0xff]
    %v522 = vld [vmem:[%s3 + $0x40] sm:$0xff]
    %v523 = vld [vmem:[%s3 + $0x48] sm:$0xff]
    %v524 = vld [vmem:[%s3 + $0x50] sm:$0xff]
    %v525 = vld [vmem:[%s3 + $0x58] sm:$0xff]
    %v526 = vld [vmem:[%s3 + $0x60] sm:$0xff]
    %v527 = vld [vmem:[%s3 + $0x68] sm:$0xff]
    %v528 = vld [vmem:[%s3 + $0x70] sm:$0xff]
    %v529 = vld [vmem:[%s3 + $0x78] sm:$0xff]
    %530 = vrot.lane.b32.xlu0 %v119, 64
    %v531 = vpop.permute.xlu0 %530
    %532 = vrot.lane.b32.xlu0 %v111, 64
    %v533 = vpop.permute.xlu0 %532
    %vm534 = vcmask 523264
    %v535 = vsel %vm534, %v531, %v533
    %v538 = vsel %vm193, %v533, 0
    %540 = vmatprep.subr.bf16.mxu0 0
    %541 = vmatpush1.bf16.msra.mxu0 %v169
    %542 = vmatprep.subr.bf16.mxu0 0
    %543 = vmatpush1.bf16.msra.mxu0 %v170
    %544 = vmatprep.subr.bf16.mxu0 0
    %545 = vmatpush1.bf16.msra.mxu0 %v171
    %546 = vmatprep.subr.bf16.mxu0 0
    %547 = vmatpush1.bf16.msra.mxu0 %v172
    %548 = vmatprep.subr.bf16.mxu0 0
    %549 = vmatpush1.bf16.msra.mxu0 %v173
    %550 = vmatprep.subr.bf16.mxu0 0
    %551 = vmatpush1.bf16.msra.mxu0 %v174
    %552 = vmatprep.subr.bf16.mxu0 0
    %553 = vmatpush1.bf16.msra.mxu0 %v175
    %554 = vmatprep.subr.bf16.mxu0 0
    %555 = vmatpush1.bf16.msra.mxu0 %v176
    %556 = vmatprep.subr.bf16.mxu0 0
    %557 = vmatpush1.bf16.msra.mxu0 %v177
    %558 = vmatprep.subr.bf16.mxu0 0
    %559 = vmatpush1.bf16.msra.mxu0 %v178
    %560 = vmatprep.subr.bf16.mxu0 0
    %561 = vmatpush1.bf16.msra.mxu0 %v179
    %562 = vmatprep.subr.bf16.mxu0 0
    %563 = vmatpush1.bf16.msra.mxu0 %v180
    %564 = vmatprep.subr.bf16.mxu0 0
    %565 = vmatpush1.bf16.msra.mxu0 0
    %566 = vmatprep.subr.bf16.mxu0 0
    %567 = vmatpush1.bf16.msra.mxu0 0
    %568 = vmatprep.subr.bf16.mxu0 0
    %569 = vmatpush1.bf16.msra.mxu0 0
    %570 = vmatprep.subr.bf16.mxu0 0
    %571 = vmatpush1.bf16.msra.mxu0 0
    %572 = vmatprep.mubr.bf16.mxu0 %v538
    %573 = vmatmul.mubr.bf16.gmra.mrb[0].mxu0 %v535
    %v574 = vpop.f32.mrb[0].mxu0
    %v575 = vadd.f32 0.0, %v574
    %v576 = vpop.f32.mrb[0].mxu0
    %v577 = vpop.f32.mrb[0].mxu0
    %v578 = vpop.f32.mrb[0].mxu0
    %579 = vdwg.mxu0
    %580 = vrot.lane.b32.xlu0 %v104, 64
    %v581 = vpop.permute.xlu0 %580
    %582 = vrot.lane.b32.xlu0 %v118, 64
    %v583 = vpop.permute.xlu0 %582
    %v584 = vsel %vm534, %v581, %v583
    %v587 = vsel %vm193, %v583, 0
    %589 = vmatprep.subr.bf16.mxu0 0
    %590 = vmatpush1.bf16.msra.mxu0 %v286
    %591 = vmatprep.subr.bf16.mxu0 0
    %592 = vmatpush1.bf16.msra.mxu0 %v287
    %593 = vmatprep.subr.bf16.mxu0 0
    %594 = vmatpush1.bf16.msra.mxu0 %v288
    %595 = vmatprep.subr.bf16.mxu0 0
    %596 = vmatpush1.bf16.msra.mxu0 %v289
    %597 = vmatprep.subr.bf16.mxu0 0
    %598 = vmatpush1.bf16.msra.mxu0 %v290
    %599 = vmatprep.subr.bf16.mxu0 0
    %600 = vmatpush1.bf16.msra.mxu0 %v291
    %601 = vmatprep.subr.bf16.mxu0 0
    %602 = vmatpush1.bf16.msra.mxu0 %v292
    %603 = vmatprep.subr.bf16.mxu0 0
    %604 = vmatpush1.bf16.msra.mxu0 %v293
    %605 = vmatprep.subr.bf16.mxu0 0
    %606 = vmatpush1.bf16.msra.mxu0 %v294
    %607 = vmatprep.subr.bf16.mxu0 0
    %608 = vmatpush1.bf16.msra.mxu0 %v295
    %609 = vmatprep.subr.bf16.mxu0 0
    %610 = vmatpush1.bf16.msra.mxu0 %v296
    %611 = vmatprep.subr.bf16.mxu0 0
    %612 = vmatpush1.bf16.msra.mxu0 %v297
    %613 = vmatprep.subr.bf16.mxu0 0
    %614 = vmatpush1.bf16.msra.mxu0 0
    %615 = vmatprep.subr.bf16.mxu0 0
    %616 = vmatpush1.bf16.msra.mxu0 0
    %617 = vmatprep.subr.bf16.mxu0 0
    %618 = vmatpush1.bf16.msra.mxu0 0
    %619 = vmatprep.subr.bf16.mxu0 0
    %620 = vmatpush1.bf16.msra.mxu0 0
    %621 = vmatprep.mubr.bf16.mxu0 %v587
    %622 = vmatmul.mubr.bf16.gmra.mrb[0].mxu0 %v584
    %v623 = vpop.f32.mrb[0].mxu0
    %v624 = vadd.f32 %v575, %v623
    %v625 = vpop.f32.mrb[0].mxu0
    %v626 = vpop.f32.mrb[0].mxu0
    %v627 = vpop.f32.mrb[0].mxu0
    %628 = vdwg.mxu0
    %629 = vrot.lane.b32.xlu0 %v386, 64
    %v630 = vpop.permute.xlu0 %629
    %631 = vrot.lane.b32.xlu0 %v387, 64
    %v632 = vpop.permute.xlu0 %631
    %v633 = vsel %vm534, %v630, %v632
    %v636 = vsel %vm193, %v632, 0
    %638 = vmatprep.subr.bf16.mxu0 0
    %639 = vmatpush1.bf16.msra.mxu0 %v437
    %640 = vmatprep.subr.bf16.mxu0 0
    %641 = vmatpush1.bf16.msra.mxu0 %v438
    %642 = vmatprep.subr.bf16.mxu0 0
    %643 = vmatpush1.bf16.msra.mxu0 %v439
    %644 = vmatprep.subr.bf16.mxu0 0
    %645 = vmatpush1.bf16.msra.mxu0 %v440
    %646 = vmatprep.subr.bf16.mxu0 0
    %647 = vmatpush1.bf16.msra.mxu0 %v441
    %648 = vmatprep.subr.bf16.mxu0 0
    %649 = vmatpush1.bf16.msra.mxu0 %v442
    %650 = vmatprep.subr.bf16.mxu0 0
    %651 = vmatpush1.bf16.msra.mxu0 %v443
    %652 = vmatprep.subr.bf16.mxu0 0
    %653 = vmatpush1.bf16.msra.mxu0 %v444
    %654 = vmatprep.subr.bf16.mxu0 0
    %655 = vmatpush1.bf16.msra.mxu0 %v445
    %656 = vmatprep.subr.bf16.mxu0 0
    %657 = vmatpush1.bf16.msra.mxu0 %v446
    %658 = vmatprep.subr.bf16.mxu0 0
    %659 = vmatpush1.bf16.msra.mxu0 %v447
    %660 = vmatprep.subr.bf16.mxu0 0
    %661 = vmatpush1.bf16.msra.mxu0 %v448
    %662 = vmatprep.subr.bf16.mxu0 0
    %663 = vmatpush1.bf16.msra.mxu0 0
    %664 = vmatprep.subr.bf16.mxu0 0
    %665 = vmatpush1.bf16.msra.mxu0 0
    %666 = vmatprep.subr.bf16.mxu0 0
    %667 = vmatpush1.bf16.msra.mxu0 0
    %668 = vmatprep.subr.bf16.mxu0 0
    %669 = vmatpush1.bf16.msra.mxu0 0
    %670 = vmatprep.mubr.bf16.mxu0 %v636
    %671 = vmatmul.mubr.bf16.gmra.mrb[0].mxu0 %v633
    %v672 = vpop.f32.mrb[0].mxu0
    %v673 = vadd.f32 0.0, %v672
    %v674 = vpop.f32.mrb[0].mxu0
    %v675 = vpop.f32.mrb[0].mxu0
    %v676 = vpop.f32.mrb[0].mxu0
    %677 = vdwg.mxu0
    %v678 = vadd.f32 %v624, %v673
    %v679 = vadd.f32 %v678, %v509
    %v680 = vmax.f32 %v679, 0.0
    %v681 = vpack.c.bf16 %v680, %v680
    %s682 = scalar_lea.vmem %s3, 128
    %v683 = vld [vmem:[%s682] sm:$0xff]
    %v684 = vld [vmem:[%s682 + $0x8] sm:$0xff]
    %v685 = vld [vmem:[%s682 + $0x10] sm:$0xff]
    %v686 = vld [vmem:[%s682 + $0x18] sm:$0xff]
    %v687 = vld [vmem:[%s682 + $0x20] sm:$0xff]
    %v688 = vld [vmem:[%s682 + $0x28] sm:$0xff]
    %v689 = vld [vmem:[%s682 + $0x30] sm:$0xff]
    %v690 = vld [vmem:[%s682 + $0x38] sm:$0xff]
    %v691 = vld [vmem:[%s682 + $0x40] sm:$0xff]
    %v692 = vld [vmem:[%s682 + $0x48] sm:$0xff]
    %v693 = vld [vmem:[%s682 + $0x50] sm:$0xff]
    %v694 = vld [vmem:[%s682 + $0x58] sm:$0xff]
    %v695 = vld [vmem:[%s682 + $0x60] sm:$0xff]
    %v696 = vld [vmem:[%s682 + $0x68] sm:$0xff]
    %v697 = vld [vmem:[%s682 + $0x70] sm:$0xff]
    %v698 = vld [vmem:[%s682 + $0x78] sm:$0xff]
    %v715 = vunpack.c.l.b16 %v683
    %v716 = vunpack.c.h.b16 %v683
    %v717 = vunpack.c.l.b16 %v684
    %v718 = vunpack.c.h.b16 %v684
    %v719 = vunpack.c.l.b16 %v685
    %v720 = vunpack.c.h.b16 %v685
    %v721 = vunpack.c.l.b16 %v686
    %v722 = vunpack.c.h.b16 %v686
    %v723 = vunpack.c.l.b16 %v687
    %v724 = vunpack.c.h.b16 %v687
    %v725 = vunpack.c.l.b16 %v688
    %v726 = vunpack.c.h.b16 %v688
    %v727 = vunpack.c.l.b16 %v689
    %v728 = vunpack.c.h.b16 %v689
    %v729 = vunpack.c.l.b16 %v690
    %v730 = vunpack.c.h.b16 %v690
    %v731 = vunpack.c.l.b16 %v691
    %v732 = vunpack.c.h.b16 %v691
    %v733 = vunpack.c.l.b16 %v692
    %v734 = vunpack.c.h.b16 %v692
    %v735 = vunpack.c.l.b16 %v693
    %v736 = vunpack.c.h.b16 %v693
    %v737 = vunpack.c.l.b16 %v694
    %v738 = vunpack.c.h.b16 %v694
    %v739 = vunpack.c.l.b16 %v695
    %v740 = vunpack.c.h.b16 %v695
    %v741 = vunpack.c.l.b16 %v696
    %v742 = vunpack.c.h.b16 %v696
    %v743 = vunpack.c.l.b16 %v697
    %v744 = vunpack.c.h.b16 %v697
    %v745 = vunpack.c.l.b16 %v698
    %v746 = vunpack.c.h.b16 %v698
    %v747 = vpack.c.b16 %v719, %v715
    %v748 = vpack.c.b16 %v720, %v716
    %v749 = vpack.c.b16 %v721, %v717
    %v750 = vpack.c.b16 %v722, %v718
    %v751 = vpack.c.b16 %v727, %v723
    %v752 = vpack.c.b16 %v728, %v724
    %v753 = vpack.c.b16 %v729, %v725
    %v754 = vpack.c.b16 %v730, %v726
    %v755 = vpack.c.b16 %v735, %v731
    %v756 = vpack.c.b16 %v736, %v732
    %v757 = vpack.c.b16 %v737, %v733
    %v758 = vpack.c.b16 %v738, %v734
    %v759 = vpack.c.b16 %v743, %v739
    %v760 = vpack.c.b16 %v744, %v740
    %v761 = vpack.c.b16 %v745, %v741
    %v762 = vpack.c.b16 %v746, %v742
    %v780 = vsel %vm193, %v681, 0
    %782 = vmatprep.subr.bf16.mxu0 %v748
    %783 = vmatpush1.bf16.msra.mxu0 %v747
    %784 = vmatprep.subr.bf16.mxu0 %v752
    %785 = vmatpush1.bf16.msra.mxu0 %v751
    %786 = vmatprep.subr.bf16.mxu0 %v756
    %787 = vmatpush1.bf16.msra.mxu0 %v755
    %788 = vmatprep.subr.bf16.mxu0 %v760
    %789 = vmatpush1.bf16.msra.mxu0 %v759
    %790 = vmatprep.subr.bf16.mxu0 0
    %791 = vmatpush1.bf16.msra.mxu0 0
    %792 = vmatprep.subr.bf16.mxu0 0
    %793 = vmatpush1.bf16.msra.mxu0 0
    %794 = vmatprep.subr.bf16.mxu0 0
    %795 = vmatpush1.bf16.msra.mxu0 0
    %796 = vmatprep.subr.bf16.mxu0 0
    %797 = vmatpush1.bf16.msra.mxu0 0
    %798 = vmatprep.subr.bf16.mxu0 0
    %799 = vmatpush1.bf16.msra.mxu0 0
    %800 = vmatprep.subr.bf16.mxu0 0
    %801 = vmatpush1.bf16.msra.mxu0 0
    %802 = vmatprep.subr.bf16.mxu0 0
    %803 = vmatpush1.bf16.msra.mxu0 0
    %804 = vmatprep.subr.bf16.mxu0 0
    %805 = vmatpush1.bf16.msra.mxu0 0
    %806 = vmatprep.subr.bf16.mxu0 0
    %807 = vmatpush1.bf16.msra.mxu0 0
    %808 = vmatprep.subr.bf16.mxu0 0
    %809 = vmatpush1.bf16.msra.mxu0 0
    %810 = vmatprep.subr.bf16.mxu0 0
    %811 = vmatpush1.bf16.msra.mxu0 0
    %812 = vmatprep.subr.bf16.mxu0 0
    %813 = vmatpush1.bf16.msra.mxu0 0
    %814 = vmatprep.mubr.bf16.mxu0 0
    %815 = vmatmul.mubr.bf16.gmra.mrb[0].mxu0 %v780
    %v816 = vpop.f32.mrb[0].mxu0
    %v817 = vadd.f32 0.0, %v816
    %v818 = vpop.f32.mrb[0].mxu0
    %v819 = vadd.f32 0.0, %v818
    %v820 = vpop.f32.mrb[0].mxu0
    %v821 = vpop.f32.mrb[0].mxu0
    %822 = vdwg.mxu0
    %823 = vmatprep.subr.bf16.mxu0 %v750
    %824 = vmatpush1.bf16.msra.mxu0 %v749
    %825 = vmatprep.subr.bf16.mxu0 %v754
    %826 = vmatpush1.bf16.msra.mxu0 %v753
    %827 = vmatprep.subr.bf16.mxu0 %v758
    %828 = vmatpush1.bf16.msra.mxu0 %v757
    %829 = vmatprep.subr.bf16.mxu0 %v762
    %830 = vmatpush1.bf16.msra.mxu0 %v761
    %831 = vmatprep.subr.bf16.mxu0 0
    %832 = vmatpush1.bf16.msra.mxu0 0
    %833 = vmatprep.subr.bf16.mxu0 0
    %834 = vmatpush1.bf16.msra.mxu0 0
    %835 = vmatprep.subr.bf16.mxu0 0
    %836 = vmatpush1.bf16.msra.mxu0 0
    %837 = vmatprep.subr.bf16.mxu0 0
    %838 = vmatpush1.bf16.msra.mxu0 0
    %839 = vmatprep.subr.bf16.mxu0 0
    %840 = vmatpush1.bf16.msra.mxu0 0
    %841 = vmatprep.subr.bf16.mxu0 0
    %842 = vmatpush1.bf16.msra.mxu0 0
    %843 = vmatprep.subr.bf16.mxu0 0
    %844 = vmatpush1.bf16.msra.mxu0 0
    %845 = vmatprep.subr.bf16.mxu0 0
    %846 = vmatpush1.bf16.msra.mxu0 0
    %847 = vmatprep.subr.bf16.mxu0 0
    %848 = vmatpush1.bf16.msra.mxu0 0
    %849 = vmatprep.subr.bf16.mxu0 0
    %850 = vmatpush1.bf16.msra.mxu0 0
    %851 = vmatprep.subr.bf16.mxu0 0
    %852 = vmatpush1.bf16.msra.mxu0 0
    %853 = vmatprep.subr.bf16.mxu0 0
    %854 = vmatpush1.bf16.msra.mxu0 0
    %855 = vmatprep.mubr.bf16.mxu0 0
    %856 = vmatmul.mubr.bf16.gmra.mrb[0].mxu0 %v780
    %v857 = vpop.f32.mrb[0].mxu0
    %v858 = vadd.f32 0.0, %v857
    %v859 = vpop.f32.mrb[0].mxu0
    %v860 = vadd.f32 0.0, %v859
    %v861 = vpop.f32.mrb[0].mxu0
    %v862 = vpop.f32.mrb[0].mxu0
    %863 = vdwg.mxu0
    %v880 = vunpack.c.l.b16 %v514
    %v881 = vunpack.c.h.b16 %v514
    %v882 = vunpack.c.l.b16 %v515
    %v883 = vunpack.c.h.b16 %v515
    %v884 = vunpack.c.l.b16 %v516
    %v885 = vunpack.c.h.b16 %v516
    %v886 = vunpack.c.l.b16 %v517
    %v887 = vunpack.c.h.b16 %v517
    %v888 = vunpack.c.l.b16 %v518
    %v889 = vunpack.c.h.b16 %v518
    %v890 = vunpack.c.l.b16 %v519
    %v891 = vunpack.c.h.b16 %v519
    %v892 = vunpack.c.l.b16 %v520
    %v893 = vunpack.c.h.b16 %v520
    %v894 = vunpack.c.l.b16 %v521
    %v895 = vunpack.c.h.b16 %v521
    %v896 = vunpack.c.l.b16 %v522
    %v897 = vunpack.c.h.b16 %v522
    %v898 = vunpack.c.l.b16 %v523
    %v899 = vunpack.c.h.b16 %v523
    %v900 = vunpack.c.l.b16 %v524
    %v901 = vunpack.c.h.b16 %v524
    %v902 = vunpack.c.l.b16 %v525
    %v903 = vunpack.c.h.b16 %v525
    %v904 = vunpack.c.l.b16 %v526
    %v905 = vunpack.c.h.b16 %v526
    %v906 = vunpack.c.l.b16 %v527
    %v907 = vunpack.c.h.b16 %v527
    %v908 = vunpack.c.l.b16 %v528
    %v909 = vunpack.c.h.b16 %v528
    %v910 = vunpack.c.l.b16 %v529
    %v911 = vunpack.c.h.b16 %v529
    %v912 = vpack.c.b16 %v884, %v880
    %v913 = vpack.c.b16 %v885, %v881
    %v914 = vpack.c.b16 %v886, %v882
    %v915 = vpack.c.b16 %v887, %v883
    %v916 = vpack.c.b16 %v892, %v888
    %v917 = vpack.c.b16 %v893, %v889
    %v918 = vpack.c.b16 %v894, %v890
    %v919 = vpack.c.b16 %v895, %v891
    %v920 = vpack.c.b16 %v900, %v896
    %v921 = vpack.c.b16 %v901, %v897
    %v922 = vpack.c.b16 %v902, %v898
    %v923 = vpack.c.b16 %v903, %v899
    %v924 = vpack.c.b16 %v908, %v904
    %v925 = vpack.c.b16 %v909, %v905
    %v926 = vpack.c.b16 %v910, %v906
    %v927 = vpack.c.b16 %v911, %v907
    %v945 = vsel %vm193, %v513, 0
    %947 = vmatprep.subr.bf16.mxu0 %v913
    %948 = vmatpush1.bf16.msra.mxu0 %v912
    %949 = vmatprep.subr.bf16.mxu0 %v917
    %950 = vmatpush1.bf16.msra.mxu0 %v916
    %951 = vmatprep.subr.bf16.mxu0 %v921
    %952 = vmatpush1.bf16.msra.mxu0 %v920
    %953 = vmatprep.subr.bf16.mxu0 %v925
    %954 = vmatpush1.bf16.msra.mxu0 %v924
    %955 = vmatprep.subr.bf16.mxu0 0
    %956 = vmatpush1.bf16.msra.mxu0 0
    %957 = vmatprep.subr.bf16.mxu0 0
    %958 = vmatpush1.bf16.msra.mxu0 0
    %959 = vmatprep.subr.bf16.mxu0 0
    %960 = vmatpush1.bf16.msra.mxu0 0
    %961 = vmatprep.subr.bf16.mxu0 0
    %962 = vmatpush1.bf16.msra.mxu0 0
    %963 = vmatprep.subr.bf16.mxu0 0
    %964 = vmatpush1.bf16.msra.mxu0 0
    %965 = vmatprep.subr.bf16.mxu0 0
    %966 = vmatpush1.bf16.msra.mxu0 0
    %967 = vmatprep.subr.bf16.mxu0 0
    %968 = vmatpush1.bf16.msra.mxu0 0
    %969 = vmatprep.subr.bf16.mxu0 0
    %970 = vmatpush1.bf16.msra.mxu0 0
    %971 = vmatprep.subr.bf16.mxu0 0
    %972 = vmatpush1.bf16.msra.mxu0 0
    %973 = vmatprep.subr.bf16.mxu0 0
    %974 = vmatpush1.bf16.msra.mxu0 0
    %975 = vmatprep.subr.bf16.mxu0 0
    %976 = vmatpush1.bf16.msra.mxu0 0
    %977 = vmatprep.subr.bf16.mxu0 0
    %978 = vmatpush1.bf16.msra.mxu0 0
    %979 = vmatprep.mubr.bf16.mxu0 0
    %980 = vmatmul.mubr.bf16.gmra.mrb[0].mxu0 %v945
    %v981 = vpop.f32.mrb[0].mxu0
    %v982 = vadd.f32 %v817, %v981
    %v983 = vpop.f32.mrb[0].mxu0
    %v984 = vadd.f32 %v819, %v983
    %v985 = vpop.f32.mrb[0].mxu0
    %v986 = vpop.f32.mrb[0].mxu0
    %987 = vdwg.mxu0
    %988 = vmatprep.subr.bf16.mxu0 %v915
    %989 = vmatpush1.bf16.msra.mxu0 %v914
    %990 = vmatprep.subr.bf16.mxu0 %v919
    %991 = vmatpush1.bf16.msra.mxu0 %v918
    %992 = vmatprep.subr.bf16.mxu0 %v923
    %993 = vmatpush1.bf16.msra.mxu0 %v922
    %994 = vmatprep.subr.bf16.mxu0 %v927
    %995 = vmatpush1.bf16.msra.mxu0 %v926
    %996 = vmatprep.subr.bf16.mxu0 0
    %997 = vmatpush1.bf16.msra.mxu0 0
    %998 = vmatprep.subr.bf16.mxu0 0
    %999 = vmatpush1.bf16.msra.mxu0 0
    %1000 = vmatprep.subr.bf16.mxu0 0
    %1001 = vmatpush1.bf16.msra.mxu0 0
    %1002 = vmatprep.subr.bf16.mxu0 0
    %1003 = vmatpush1.bf16.msra.mxu0 0
    %1004 = vmatprep.subr.bf16.mxu0 0
    %1005 = vmatpush1.bf16.msra.mxu0 0
    %1006 = vmatprep.subr.bf16.mxu0 0
    %1007 = vmatpush1.bf16.msra.mxu0 0
    %1008 = vmatprep.subr.bf16.mxu0 0
    %1009 = vmatpush1.bf16.msra.mxu0 0
    %1010 = vmatprep.subr.bf16.mxu0 0
    %1011 = vmatpush1.bf16.msra.mxu0 0
    %1012 = vmatprep.subr.bf16.mxu0 0
    %1013 = vmatpush1.bf16.msra.mxu0 0
    %1014 = vmatprep.subr.bf16.mxu0 0
    %1015 = vmatpush1.bf16.msra.mxu0 0
    %1016 = vmatprep.subr.bf16.mxu0 0
    %1017 = vmatpush1.bf16.msra.mxu0 0
    %1018 = vmatprep.subr.bf16.mxu0 0
    %1019 = vmatpush1.bf16.msra.mxu0 0
    %1020 = vmatprep.mubr.bf16.mxu0 0
    %1021 = vmatmul.mubr.bf16.gmra.mrb[0].mxu0 %v945
    %v1022 = vpop.f32.mrb[0].mxu0
    %v1023 = vadd.f32 %v858, %v1022
    %v1024 = vpop.f32.mrb[0].mxu0
    %v1025 = vadd.f32 %v860, %v1024
    %v1026 = vpop.f32.mrb[0].mxu0
    %v1027 = vpop.f32.mrb[0].mxu0
    %1028 = vdwg.mxu0
    %v1031 = vsel %vm193, %v385, 0
    %1033 = vmatprep.subr.bf16.mxu0 0
    %1034 = vmatpush1.bf16.msra.mxu0 %v169
    %1035 = vmatprep.subr.bf16.mxu0 0
    %1036 = vmatpush1.bf16.msra.mxu0 %v170
    %1037 = vmatprep.subr.bf16.mxu0 0
    %1038 = vmatpush1.bf16.msra.mxu0 %v171
    %1039 = vmatprep.subr.bf16.mxu0 0
    %1040 = vmatpush1.bf16.msra.mxu0 %v172
    %1041 = vmatprep.subr.bf16.mxu0 0
    %1042 = vmatpush1.bf16.msra.mxu0 %v173
    %1043 = vmatprep.subr.bf16.mxu0 0
    %1044 = vmatpush1.bf16.msra.mxu0 %v174
    %1045 = vmatprep.subr.bf16.mxu0 0
    %1046 = vmatpush1.bf16.msra.mxu0 %v175
    %1047 = vmatprep.subr.bf16.mxu0 0
    %1048 = vmatpush1.bf16.msra.mxu0 %v176
    %1049 = vmatprep.subr.bf16.mxu0 0
    %1050 = vmatpush1.bf16.msra.mxu0 %v177
    %1051 = vmatprep.subr.bf16.mxu0 0
    %1052 = vmatpush1.bf16.msra.mxu0 %v178
    %1053 = vmatprep.subr.bf16.mxu0 0
    %1054 = vmatpush1.bf16.msra.mxu0 %v179
    %1055 = vmatprep.subr.bf16.mxu0 0
    %1056 = vmatpush1.bf16.msra.mxu0 %v180
    %1057 = vmatprep.subr.bf16.mxu0 0
    %1058 = vmatpush1.bf16.msra.mxu0 0
    %1059 = vmatprep.subr.bf16.mxu0 0
    %1060 = vmatpush1.bf16.msra.mxu0 0
    %1061 = vmatprep.subr.bf16.mxu0 0
    %1062 = vmatpush1.bf16.msra.mxu0 0
    %1063 = vmatprep.subr.bf16.mxu0 0
    %1064 = vmatpush1.bf16.msra.mxu0 0
    %1065 = vmatprep.mubr.bf16.mxu0 %v1031
    %1066 = vmatmul.mubr.bf16.gmra.mrb[0].mxu0 %v111
    %v1067 = vpop.f32.mrb[0].mxu0
    %v1068 = vadd.f32 0.0, %v1067
    %v1069 = vpop.f32.mrb[0].mxu0
    %v1070 = vpop.f32.mrb[0].mxu0
    %v1071 = vpop.f32.mrb[0].mxu0
    %1072 = vdwg.mxu0
    %v1073 = vcombine.high %v104, %v104
    %v1076 = vsel %vm193, %v1073, 0
    %1078 = vmatprep.subr.bf16.mxu0 0
    %1079 = vmatpush1.bf16.msra.mxu0 %v286
    %1080 = vmatprep.subr.bf16.mxu0 0
    %1081 = vmatpush1.bf16.msra.mxu0 %v287
    %1082 = vmatprep.subr.bf16.mxu0 0
    %1083 = vmatpush1.bf16.msra.mxu0 %v288
    %1084 = vmatprep.subr.bf16.mxu0 0
    %1085 = vmatpush1.bf16.msra.mxu0 %v289
    %1086 = vmatprep.subr.bf16.mxu0 0
    %1087 = vmatpush1.bf16.msra.mxu0 %v290
    %1088 = vmatprep.subr.bf16.mxu0 0
    %1089 = vmatpush1.bf16.msra.mxu0 %v291
    %1090 = vmatprep.subr.bf16.mxu0 0
    %1091 = vmatpush1.bf16.msra.mxu0 %v292
    %1092 = vmatprep.subr.bf16.mxu0 0
    %1093 = vmatpush1.bf16.msra.mxu0 %v293
    %1094 = vmatprep.subr.bf16.mxu0 0
    %1095 = vmatpush1.bf16.msra.mxu0 %v294
    %1096 = vmatprep.subr.bf16.mxu0 0
    %1097 = vmatpush1.bf16.msra.mxu0 %v295
    %1098 = vmatprep.subr.bf16.mxu0 0
    %1099 = vmatpush1.bf16.msra.mxu0 %v296
    %1100 = vmatprep.subr.bf16.mxu0 0
    %1101 = vmatpush1.bf16.msra.mxu0 %v297
    %1102 = vmatprep.subr.bf16.mxu0 0
    %1103 = vmatpush1.bf16.msra.mxu0 0
    %1104 = vmatprep.subr.bf16.mxu0 0
    %1105 = vmatpush1.bf16.msra.mxu0 0
    %1106 = vmatprep.subr.bf16.mxu0 0
    %1107 = vmatpush1.bf16.msra.mxu0 0
    %1108 = vmatprep.subr.bf16.mxu0 0
    %1109 = vmatpush1.bf16.msra.mxu0 0
    %1110 = vmatprep.mubr.bf16.mxu0 %v1076
    %1111 = vmatmul.mubr.bf16.gmra.mrb[0].mxu0 %v118
    %v1112 = vpop.f32.mrb[0].mxu0
    %v1113 = vadd.f32 %v1068, %v1112
    %v1114 = vpop.f32.mrb[0].mxu0
    %v1115 = vpop.f32.mrb[0].mxu0
    %v1116 = vpop.f32.mrb[0].mxu0
    %1117 = vdwg.mxu0
    %v1120 = vunpack.c.l.s4 1966171168
    %v1121 = vunpack.c.0.s8 %v1120
    %v1122 = vlaneseq
    %v1123 = vshrl.u32 %v1122, 7
    %v1124 = vsub.s32 %v1121, %v1123
    %v1125 = vrot.slane %v29, %v1124
    %v1127 = vunpack.c.l.s4 1966171168
    %v1128 = vunpack.c.0.s8 %v1127
    %v1129 = vlaneseq
    %v1130 = vshrl.u32 %v1129, 7
    %v1131 = vsub.s32 %v1128, %v1130
    %v1132 = vrot.slane %v1125, %v1131
    %v1135 = vsel %vm193, %v1132, 0
    %1137 = vmatprep.subr.bf16.mxu0 0
    %1138 = vmatpush1.bf16.msra.mxu0 %v437
    %1139 = vmatprep.subr.bf16.mxu0 0
    %1140 = vmatpush1.bf16.msra.mxu0 %v438
    %1141 = vmatprep.subr.bf16.mxu0 0
    %1142 = vmatpush1.bf16.msra.mxu0 %v439
    %1143 = vmatprep.subr.bf16.mxu0 0
    %1144 = vmatpush1.bf16.msra.mxu0 %v440
    %1145 = vmatprep.subr.bf16.mxu0 0
    %1146 = vmatpush1.bf16.msra.mxu0 %v441
    %1147 = vmatprep.subr.bf16.mxu0 0
    %1148 = vmatpush1.bf16.msra.mxu0 %v442
    %1149 = vmatprep.subr.bf16.mxu0 0
    %1150 = vmatpush1.bf16.msra.mxu0 %v443
    %1151 = vmatprep.subr.bf16.mxu0 0
    %1152 = vmatpush1.bf16.msra.mxu0 %v444
    %1153 = vmatprep.subr.bf16.mxu0 0
    %1154 = vmatpush1.bf16.msra.mxu0 %v445
    %1155 = vmatprep.subr.bf16.mxu0 0
    %1156 = vmatpush1.bf16.msra.mxu0 %v446
    %1157 = vmatprep.subr.bf16.mxu0 0
    %1158 = vmatpush1.bf16.msra.mxu0 %v447
    %1159 = vmatprep.subr.bf16.mxu0 0
    %1160 = vmatpush1.bf16.msra.mxu0 %v448
    %1161 = vmatprep.subr.bf16.mxu0 0
    %1162 = vmatpush1.bf16.msra.mxu0 0
    %1163 = vmatprep.subr.bf16.mxu0 0
    %1164 = vmatpush1.bf16.msra.mxu0 0
    %1165 = vmatprep.subr.bf16.mxu0 0
    %1166 = vmatpush1.bf16.msra.mxu0 0
    %1167 = vmatprep.subr.bf16.mxu0 0
    %1168 = vmatpush1.bf16.msra.mxu0 0
    %1169 = vmatprep.mubr.bf16.mxu0 %v1135
    %1170 = vmatmul.mubr.bf16.gmra.mrb[0].mxu0 %v387
    %v1171 = vpop.f32.mrb[0].mxu0
    %v1172 = vadd.f32 0.0, %v1171
    %v1173 = vpop.f32.mrb[0].mxu0
    %v1174 = vpop.f32.mrb[0].mxu0
    %v1175 = vpop.f32.mrb[0].mxu0
    %1176 = vdwg.mxu0
    %v1177 = vadd.f32 %v1113, %v1172
    %v1178 = vadd.f32 %v1177, %v509
    %v1179 = vmax.f32 %v1178, 0.0
    %v1180 = vpack.c.bf16 %v1179, %v1179
    %s1181 = scalar_lea.vmem %s3, 256
    %v1182 = vld [vmem:[%s1181] sm:$0xff]
    %v1183 = vld [vmem:[%s1181 + $0x8] sm:$0xff]
    %v1184 = vld [vmem:[%s1181 + $0x10] sm:$0xff]
    %v1185 = vld [vmem:[%s1181 + $0x18] sm:$0xff]
    %v1186 = vld [vmem:[%s1181 + $0x20] sm:$0xff]
    %v1187 = vld [vmem:[%s1181 + $0x28] sm:$0xff]
    %v1188 = vld [vmem:[%s1181 + $0x30] sm:$0xff]
    %v1189 = vld [vmem:[%s1181 + $0x38] sm:$0xff]
    %v1190 = vld [vmem:[%s1181 + $0x40] sm:$0xff]
    %v1191 = vld [vmem:[%s1181 + $0x48] sm:$0xff]
    %v1192 = vld [vmem:[%s1181 + $0x50] sm:$0xff]
    %v1193 = vld [vmem:[%s1181 + $0x58] sm:$0xff]
    %v1194 = vld [vmem:[%s1181 + $0x60] sm:$0xff]
    %v1195 = vld [vmem:[%s1181 + $0x68] sm:$0xff]
    %v1196 = vld [vmem:[%s1181 + $0x70] sm:$0xff]
    %v1197 = vld [vmem:[%s1181 + $0x78] sm:$0xff]
    %v1214 = vunpack.c.l.b16 %v1182
    %v1215 = vunpack.c.h.b16 %v1182
    %v1216 = vunpack.c.l.b16 %v1183
    %v1217 = vunpack.c.h.b16 %v1183
    %v1218 = vunpack.c.l.b16 %v1184
    %v1219 = vunpack.c.h.b16 %v1184
    %v1220 = vunpack.c.l.b16 %v1185
    %v1221 = vunpack.c.h.b16 %v1185
    %v1222 = vunpack.c.l.b16 %v1186
    %v1223 = vunpack.c.h.b16 %v1186
    %v1224 = vunpack.c.l.b16 %v1187
    %v1225 = vunpack.c.h.b16 %v1187
    %v1226 = vunpack.c.l.b16 %v1188
    %v1227 = vunpack.c.h.b16 %v1188
    %v1228 = vunpack.c.l.b16 %v1189
    %v1229 = vunpack.c.h.b16 %v1189
    %v1230 = vunpack.c.l.b16 %v1190
    %v1231 = vunpack.c.h.b16 %v1190
    %v1232 = vunpack.c.l.b16 %v1191
    %v1233 = vunpack.c.h.b16 %v1191
    %v1234 = vunpack.c.l.b16 %v1192
    %v1235 = vunpack.c.h.b16 %v1192
    %v1236 = vunpack.c.l.b16 %v1193
    %v1237 = vunpack.c.h.b16 %v1193
    %v1238 = vunpack.c.l.b16 %v1194
    %v1239 = vunpack.c.h.b16 %v1194
    %v1240 = vunpack.c.l.b16 %v1195
    %v1241 = vunpack.c.h.b16 %v1195
    %v1242 = vunpack.c.l.b16 %v1196
    %v1243 = vunpack.c.h.b16 %v1196
    %v1244 = vunpack.c.l.b16 %v1197
    %v1245 = vunpack.c.h.b16 %v1197
    %v1246 = vpack.c.b16 %v1218, %v1214
    %v1247 = vpack.c.b16 %v1219, %v1215
    %v1248 = vpack.c.b16 %v1220, %v1216
    %v1249 = vpack.c.b16 %v1221, %v1217
    %v1250 = vpack.c.b16 %v1226, %v1222
    %v1251 = vpack.c.b16 %v1227, %v1223
    %v1252 = vpack.c.b16 %v1228, %v1224
    %v1253 = vpack.c.b16 %v1229, %v1225
    %v1254 = vpack.c.b16 %v1234, %v1230
    %v1255 = vpack.c.b16 %v1235, %v1231
    %v1256 = vpack.c.b16 %v1236, %v1232
    %v1257 = vpack.c.b16 %v1237, %v1233
    %v1258 = vpack.c.b16 %v1242, %v1238
    %v1259 = vpack.c.b16 %v1243, %v1239
    %v1260 = vpack.c.b16 %v1244, %v1240
    %v1261 = vpack.c.b16 %v1245, %v1241
    %v1279 = vsel %vm193, %v1180, 0
    %1281 = vmatprep.subr.bf16.mxu0 %v1247
    %1282 = vmatpush1.bf16.msra.mxu0 %v1246
    %1283 = vmatprep.subr.bf16.mxu0 %v1251
    %1284 = vmatpush1.bf16.msra.mxu0 %v1250
    %1285 = vmatprep.subr.bf16.mxu0 %v1255
    %1286 = vmatpush1.bf16.msra.mxu0 %v1254
    %1287 = vmatprep.subr.bf16.mxu0 %v1259
    %1288 = vmatpush1.bf16.msra.mxu0 %v1258
    %1289 = vmatprep.subr.bf16.mxu0 0
    %1290 = vmatpush1.bf16.msra.mxu0 0
    %1291 = vmatprep.subr.bf16.mxu0 0
    %1292 = vmatpush1.bf16.msra.mxu0 0
    %1293 = vmatprep.subr.bf16.mxu0 0
    %1294 = vmatpush1.bf16.msra.mxu0 0
    %1295 = vmatprep.subr.bf16.mxu0 0
    %1296 = vmatpush1.bf16.msra.mxu0 0
    %1297 = vmatprep.subr.bf16.mxu0 0
    %1298 = vmatpush1.bf16.msra.mxu0 0
    %1299 = vmatprep.subr.bf16.mxu0 0
    %1300 = vmatpush1.bf16.msra.mxu0 0
    %1301 = vmatprep.subr.bf16.mxu0 0
    %1302 = vmatpush1.bf16.msra.mxu0 0
    %1303 = vmatprep.subr.bf16.mxu0 0
    %1304 = vmatpush1.bf16.msra.mxu0 0
    %1305 = vmatprep.subr.bf16.mxu0 0
    %1306 = vmatpush1.bf16.msra.mxu0 0
    %1307 = vmatprep.subr.bf16.mxu0 0
    %1308 = vmatpush1.bf16.msra.mxu0 0
    %1309 = vmatprep.subr.bf16.mxu0 0
    %1310 = vmatpush1.bf16.msra.mxu0 0
    %1311 = vmatprep.subr.bf16.mxu0 0
    %1312 = vmatpush1.bf16.msra.mxu0 0
    %1313 = vmatprep.mubr.bf16.mxu0 0
    %1314 = vmatmul.mubr.bf16.gmra.mrb[0].mxu0 %v1279
    %v1315 = vpop.f32.mrb[0].mxu0
    %v1316 = vadd.f32 0.0, %v1315
    %v1317 = vpop.f32.mrb[0].mxu0
    %v1318 = vadd.f32 0.0, %v1317
    %v1319 = vpop.f32.mrb[0].mxu0
    %v1320 = vpop.f32.mrb[0].mxu0
    %1321 = vdwg.mxu0
    %1322 = vmatprep.subr.bf16.mxu0 %v1249
    %1323 = vmatpush1.bf16.msra.mxu0 %v1248
    %1324 = vmatprep.subr.bf16.mxu0 %v1253
    %1325 = vmatpush1.bf16.msra.mxu0 %v1252
    %1326 = vmatprep.subr.bf16.mxu0 %v1257
    %1327 = vmatpush1.bf16.msra.mxu0 %v1256
    %1328 = vmatprep.subr.bf16.mxu0 %v1261
    %1329 = vmatpush1.bf16.msra.mxu0 %v1260
    %1330 = vmatprep.subr.bf16.mxu0 0
    %1331 = vmatpush1.bf16.msra.mxu0 0
    %1332 = vmatprep.subr.bf16.mxu0 0
    %1333 = vmatpush1.bf16.msra.mxu0 0
    %1334 = vmatprep.subr.bf16.mxu0 0
    %1335 = vmatpush1.bf16.msra.mxu0 0
    %1336 = vmatprep.subr.bf16.mxu0 0
    %1337 = vmatpush1.bf16.msra.mxu0 0
    %1338 = vmatprep.subr.bf16.mxu0 0
    %1339 = vmatpush1.bf16.msra.mxu0 0
    %1340 = vmatprep.subr.bf16.mxu0 0
    %1341 = vmatpush1.bf16.msra.mxu0 0
    %1342 = vmatprep.subr.bf16.mxu0 0
    %1343 = vmatpush1.bf16.msra.mxu0 0
    %1344 = vmatprep.subr.bf16.mxu0 0
    %1345 = vmatpush1.bf16.msra.mxu0 0
    %1346 = vmatprep.subr.bf16.mxu0 0
    %1347 = vmatpush1.bf16.msra.mxu0 0
    %1348 = vmatprep.subr.bf16.mxu0 0
    %1349 = vmatpush1.bf16.msra.mxu0 0
    %1350 = vmatprep.subr.bf16.mxu0 0
    %1351 = vmatpush1.bf16.msra.mxu0 0
    %1352 = vmatprep.subr.bf16.mxu0 0
    %1353 = vmatpush1.bf16.msra.mxu0 0
    %1354 = vmatprep.mubr.bf16.mxu0 0
    %1355 = vmatmul.mubr.bf16.gmra.mrb[0].mxu0 %v1279
    %v1356 = vpop.f32.mrb[0].mxu0
    %v1357 = vadd.f32 0.0, %v1356
    %v1358 = vpop.f32.mrb[0].mxu0
    %v1359 = vadd.f32 0.0, %v1358
    %v1360 = vpop.f32.mrb[0].mxu0
    %v1361 = vpop.f32.mrb[0].mxu0
    %1362 = vdwg.mxu0
    %v1363 = vadd.f32 %v982, %v1316
    %v1364 = vadd.f32 %v984, %v1318
    %v1365 = vadd.f32 %v1023, %v1357
    %v1366 = vadd.f32 %v1025, %v1359
    %1367 = vrot.lane.b32.xlu0 %v385, 64
    %v1368 = vpop.permute.xlu0 %1367
    %v1369 = vsel %vm534, %v533, %v1368
    %v1372 = vsel %vm193, %v1368, 0
    %1374 = vmatprep.subr.bf16.mxu0 0
    %1375 = vmatpush1.bf16.msra.mxu0 %v169
    %1376 = vmatprep.subr.bf16.mxu0 0
    %1377 = vmatpush1.bf16.msra.mxu0 %v170
    %1378 = vmatprep.subr.bf16.mxu0 0
    %1379 = vmatpush1.bf16.msra.mxu0 %v171
    %1380 = vmatprep.subr.bf16.mxu0 0
    %1381 = vmatpush1.bf16.msra.mxu0 %v172
    %1382 = vmatprep.subr.bf16.mxu0 0
    %1383 = vmatpush1.bf16.msra.mxu0 %v173
    %1384 = vmatprep.subr.bf16.mxu0 0
    %1385 = vmatpush1.bf16.msra.mxu0 %v174
    %1386 = vmatprep.subr.bf16.mxu0 0
    %1387 = vmatpush1.bf16.msra.mxu0 %v175
    %1388 = vmatprep.subr.bf16.mxu0 0
    %1389 = vmatpush1.bf16.msra.mxu0 %v176
    %1390 = vmatprep.subr.bf16.mxu0 0
    %1391 = vmatpush1.bf16.msra.mxu0 %v177
    %1392 = vmatprep.subr.bf16.mxu0 0
    %1393 = vmatpush1.bf16.msra.mxu0 %v178
    %1394 = vmatprep.subr.bf16.mxu0 0
    %1395 = vmatpush1.bf16.msra.mxu0 %v179
    %1396 = vmatprep.subr.bf16.mxu0 0
    %1397 = vmatpush1.bf16.msra.mxu0 %v180
    %1398 = vmatprep.subr.bf16.mxu0 0
    %1399 = vmatpush1.bf16.msra.mxu0 0
    %1400 = vmatprep.subr.bf16.mxu0 0
    %1401 = vmatpush1.bf16.msra.mxu0 0
    %1402 = vmatprep.subr.bf16.mxu0 0
    %1403 = vmatpush1.bf16.msra.mxu0 0
    %1404 = vmatprep.subr.bf16.mxu0 0
    %1405 = vmatpush1.bf16.msra.mxu0 0
    %1406 = vmatprep.mubr.bf16.mxu0 %v1372
    %1407 = vmatmul.mubr.bf16.gmra.mrb[0].mxu0 %v1369
    %v1408 = vpop.f32.mrb[0].mxu0
    %v1409 = vadd.f32 0.0, %v1408
    %v1410 = vpop.f32.mrb[0].mxu0
    %v1411 = vpop.f32.mrb[0].mxu0
    %v1412 = vpop.f32.mrb[0].mxu0
    %1413 = vdwg.mxu0
    %1414 = vrot.lane.b32.xlu0 %v1073, 64
    %v1415 = vpop.permute.xlu0 %1414
    %v1416 = vsel %vm534, %v583, %v1415
    %v1419 = vsel %vm193, %v1415, 0
    %1421 = vmatprep.subr.bf16.mxu0 0
    %1422 = vmatpush1.bf16.msra.mxu0 %v286
    %1423 = vmatprep.subr.bf16.mxu0 0
    %1424 = vmatpush1.bf16.msra.mxu0 %v287
    %1425 = vmatprep.subr.bf16.mxu0 0
    %1426 = vmatpush1.bf16.msra.mxu0 %v288
    %1427 = vmatprep.subr.bf16.mxu0 0
    %1428 = vmatpush1.bf16.msra.mxu0 %v289
    %1429 = vmatprep.subr.bf16.mxu0 0
    %1430 = vmatpush1.bf16.msra.mxu0 %v290
    %1431 = vmatprep.subr.bf16.mxu0 0
    %1432 = vmatpush1.bf16.msra.mxu0 %v291
    %1433 = vmatprep.subr.bf16.mxu0 0
    %1434 = vmatpush1.bf16.msra.mxu0 %v292
    %1435 = vmatprep.subr.bf16.mxu0 0
    %1436 = vmatpush1.bf16.msra.mxu0 %v293
    %1437 = vmatprep.subr.bf16.mxu0 0
    %1438 = vmatpush1.bf16.msra.mxu0 %v294
    %1439 = vmatprep.subr.bf16.mxu0 0
    %1440 = vmatpush1.bf16.msra.mxu0 %v295
    %1441 = vmatprep.subr.bf16.mxu0 0
    %1442 = vmatpush1.bf16.msra.mxu0 %v296
    %1443 = vmatprep.subr.bf16.mxu0 0
    %1444 = vmatpush1.bf16.msra.mxu0 %v297
    %1445 = vmatprep.subr.bf16.mxu0 0
    %1446 = vmatpush1.bf16.msra.mxu0 0
    %1447 = vmatprep.subr.bf16.mxu0 0
    %1448 = vmatpush1.bf16.msra.mxu0 0
    %1449 = vmatprep.subr.bf16.mxu0 0
    %1450 = vmatpush1.bf16.msra.mxu0 0
    %1451 = vmatprep.subr.bf16.mxu0 0
    %1452 = vmatpush1.bf16.msra.mxu0 0
    %1453 = vmatprep.mubr.bf16.mxu0 %v1419
    %1454 = vmatmul.mubr.bf16.gmra.mrb[0].mxu0 %v1416
    %v1455 = vpop.f32.mrb[0].mxu0
    %v1456 = vadd.f32 %v1409, %v1455
    %v1457 = vpop.f32.mrb[0].mxu0
    %v1458 = vpop.f32.mrb[0].mxu0
    %v1459 = vpop.f32.mrb[0].mxu0
    %1460 = vdwg.mxu0
    %1461 = vrot.lane.b32.xlu0 %v1132, 64
    %v1462 = vpop.permute.xlu0 %1461
    %v1463 = vsel %vm534, %v632, %v1462
    %v1466 = vsel %vm193, %v1462, 0
    %1468 = vmatprep.subr.bf16.mxu0 0
    %1469 = vmatpush1.bf16.msra.mxu0 %v437
    %1470 = vmatprep.subr.bf16.mxu0 0
    %1471 = vmatpush1.bf16.msra.mxu0 %v438
    %1472 = vmatprep.subr.bf16.mxu0 0
    %1473 = vmatpush1.bf16.msra.mxu0 %v439
    %1474 = vmatprep.subr.bf16.mxu0 0
    %1475 = vmatpush1.bf16.msra.mxu0 %v440
    %1476 = vmatprep.subr.bf16.mxu0 0
    %1477 = vmatpush1.bf16.msra.mxu0 %v441
    %1478 = vmatprep.subr.bf16.mxu0 0
    %1479 = vmatpush1.bf16.msra.mxu0 %v442
    %1480 = vmatprep.subr.bf16.mxu0 0
    %1481 = vmatpush1.bf16.msra.mxu0 %v443
    %1482 = vmatprep.subr.bf16.mxu0 0
    %1483 = vmatpush1.bf16.msra.mxu0 %v444
    %1484 = vmatprep.subr.bf16.mxu0 0
    %1485 = vmatpush1.bf16.msra.mxu0 %v445
    %1486 = vmatprep.subr.bf16.mxu0 0
    %1487 = vmatpush1.bf16.msra.mxu0 %v446
    %1488 = vmatprep.subr.bf16.mxu0 0
    %1489 = vmatpush1.bf16.msra.mxu0 %v447
    %1490 = vmatprep.subr.bf16.mxu0 0
    %1491 = vmatpush1.bf16.msra.mxu0 %v448
    %1492 = vmatprep.subr.bf16.mxu0 0
    %1493 = vmatpush1.bf16.msra.mxu0 0
    %1494 = vmatprep.subr.bf16.mxu0 0
    %1495 = vmatpush1.bf16.msra.mxu0 0
    %1496 = vmatprep.subr.bf16.mxu0 0
    %1497 = vmatpush1.bf16.msra.mxu0 0
    %1498 = vmatprep.subr.bf16.mxu0 0
    %1499 = vmatpush1.bf16.msra.mxu0 0
    %1500 = vmatprep.mubr.bf16.mxu0 %v1466
    %1501 = vmatmul.mubr.bf16.gmra.mrb[0].mxu0 %v1463
    %v1502 = vpop.f32.mrb[0].mxu0
    %v1503 = vadd.f32 0.0, %v1502
    %v1504 = vpop.f32.mrb[0].mxu0
    %v1505 = vpop.f32.mrb[0].mxu0
    %v1506 = vpop.f32.mrb[0].mxu0
    %1507 = vdwg.mxu0
    %v1508 = vadd.f32 %v1456, %v1503
    %v1509 = vadd.f32 %v1508, %v509
    %v1510 = vmax.f32 %v1509, 0.0
    %v1511 = vpack.c.bf16 %v1510, %v1510
    %s1512 = scalar_lea.vmem %s3, 384
    %v1513 = vld [vmem:[%s1512] sm:$0xff]
    %v1514 = vld [vmem:[%s1512 + $0x8] sm:$0xff]
    %v1515 = vld [vmem:[%s1512 + $0x10] sm:$0xff]
    %v1516 = vld [vmem:[%s1512 + $0x18] sm:$0xff]
    %v1517 = vld [vmem:[%s1512 + $0x20] sm:$0xff]
    %v1518 = vld [vmem:[%s1512 + $0x28] sm:$0xff]
    %v1519 = vld [vmem:[%s1512 + $0x30] sm:$0xff]
    %v1520 = vld [vmem:[%s1512 + $0x38] sm:$0xff]
    %v1521 = vld [vmem:[%s1512 + $0x40] sm:$0xff]
    %v1522 = vld [vmem:[%s1512 + $0x48] sm:$0xff]
    %v1523 = vld [vmem:[%s1512 + $0x50] sm:$0xff]
    %v1524 = vld [vmem:[%s1512 + $0x58] sm:$0xff]
    %v1525 = vld [vmem:[%s1512 + $0x60] sm:$0xff]
    %v1526 = vld [vmem:[%s1512 + $0x68] sm:$0xff]
    %v1527 = vld [vmem:[%s1512 + $0x70] sm:$0xff]
    %v1528 = vld [vmem:[%s1512 + $0x78] sm:$0xff]
    %v1545 = vunpack.c.l.b16 %v1513
    %v1546 = vunpack.c.h.b16 %v1513
    %v1547 = vunpack.c.l.b16 %v1514
    %v1548 = vunpack.c.h.b16 %v1514
    %v1549 = vunpack.c.l.b16 %v1515
    %v1550 = vunpack.c.h.b16 %v1515
    %v1551 = vunpack.c.l.b16 %v1516
    %v1552 = vunpack.c.h.b16 %v1516
    %v1553 = vunpack.c.l.b16 %v1517
    %v1554 = vunpack.c.h.b16 %v1517
    %v1555 = vunpack.c.l.b16 %v1518
    %v1556 = vunpack.c.h.b16 %v1518
    %v1557 = vunpack.c.l.b16 %v1519
    %v1558 = vunpack.c.h.b16 %v1519
    %v1559 = vunpack.c.l.b16 %v1520
    %v1560 = vunpack.c.h.b16 %v1520
    %v1561 = vunpack.c.l.b16 %v1521
    %v1562 = vunpack.c.h.b16 %v1521
    %v1563 = vunpack.c.l.b16 %v1522
    %v1564 = vunpack.c.h.b16 %v1522
    %v1565 = vunpack.c.l.b16 %v1523
    %v1566 = vunpack.c.h.b16 %v1523
    %v1567 = vunpack.c.l.b16 %v1524
    %v1568 = vunpack.c.h.b16 %v1524
    %v1569 = vunpack.c.l.b16 %v1525
    %v1570 = vunpack.c.h.b16 %v1525
    %v1571 = vunpack.c.l.b16 %v1526
    %v1572 = vunpack.c.h.b16 %v1526
    %v1573 = vunpack.c.l.b16 %v1527
    %v1574 = vunpack.c.h.b16 %v1527
    %v1575 = vunpack.c.l.b16 %v1528
    %v1576 = vunpack.c.h.b16 %v1528
    %v1577 = vpack.c.b16 %v1549, %v1545
    %v1578 = vpack.c.b16 %v1550, %v1546
    %v1579 = vpack.c.b16 %v1551, %v1547
    %v1580 = vpack.c.b16 %v1552, %v1548
    %v1581 = vpack.c.b16 %v1557, %v1553
    %v1582 = vpack.c.b16 %v1558, %v1554
    %v1583 = vpack.c.b16 %v1559, %v1555
    %v1584 = vpack.c.b16 %v1560, %v1556
    %v1585 = vpack.c.b16 %v1565, %v1561
    %v1586 = vpack.c.b16 %v1566, %v1562
    %v1587 = vpack.c.b16 %v1567, %v1563
    %v1588 = vpack.c.b16 %v1568, %v1564
    %v1589 = vpack.c.b16 %v1573, %v1569
    %v1590 = vpack.c.b16 %v1574, %v1570
    %v1591 = vpack.c.b16 %v1575, %v1571
    %v1592 = vpack.c.b16 %v1576, %v1572
    %v1610 = vsel %vm193, %v1511, 0
    %1612 = vmatprep.subr.bf16.mxu0 %v1578
    %1613 = vmatpush1.bf16.msra.mxu0 %v1577
    %1614 = vmatprep.subr.bf16.mxu0 %v1582
    %1615 = vmatpush1.bf16.msra.mxu0 %v1581
    %1616 = vmatprep.subr.bf16.mxu0 %v1586
    %1617 = vmatpush1.bf16.msra.mxu0 %v1585
    %1618 = vmatprep.subr.bf16.mxu0 %v1590
    %1619 = vmatpush1.bf16.msra.mxu0 %v1589
    %1620 = vmatprep.subr.bf16.mxu0 0
    %1621 = vmatpush1.bf16.msra.mxu0 0
    %1622 = vmatprep.subr.bf16.mxu0 0
    %1623 = vmatpush1.bf16.msra.mxu0 0
    %1624 = vmatprep.subr.bf16.mxu0 0
    %1625 = vmatpush1.bf16.msra.mxu0 0
    %1626 = vmatprep.subr.bf16.mxu0 0
    %1627 = vmatpush1.bf16.msra.mxu0 0
    %1628 = vmatprep.subr.bf16.mxu0 0
    %1629 = vmatpush1.bf16.msra.mxu0 0
    %1630 = vmatprep.subr.bf16.mxu0 0
    %1631 = vmatpush1.bf16.msra.mxu0 0
    %1632 = vmatprep.subr.bf16.mxu0 0
    %1633 = vmatpush1.bf16.msra.mxu0 0
    %1634 = vmatprep.subr.bf16.mxu0 0
    %1635 = vmatpush1.bf16.msra.mxu0 0
    %1636 = vmatprep.subr.bf16.mxu0 0
    %1637 = vmatpush1.bf16.msra.mxu0 0
    %1638 = vmatprep.subr.bf16.mxu0 0
    %1639 = vmatpush1.bf16.msra.mxu0 0
    %1640 = vmatprep.subr.bf16.mxu0 0
    %1641 = vmatpush1.bf16.msra.mxu0 0
    %1642 = vmatprep.subr.bf16.mxu0 0
    %1643 = vmatpush1.bf16.msra.mxu0 0
    %1644 = vmatprep.mubr.bf16.mxu0 0
    %1645 = vmatmul.mubr.bf16.gmra.mrb[0].mxu0 %v1610
    %v1646 = vpop.f32.mrb[0].mxu0
    %v1647 = vadd.f32 0.0, %v1646
    %v1648 = vpop.f32.mrb[0].mxu0
    %v1649 = vadd.f32 0.0, %v1648
    %v1650 = vpop.f32.mrb[0].mxu0
    %v1651 = vpop.f32.mrb[0].mxu0
    %1652 = vdwg.mxu0
    %1653 = vmatprep.subr.bf16.mxu0 %v1580
    %1654 = vmatpush1.bf16.msra.mxu0 %v1579
    %1655 = vmatprep.subr.bf16.mxu0 %v1584
    %1656 = vmatpush1.bf16.msra.mxu0 %v1583
    %1657 = vmatprep.subr.bf16.mxu0 %v1588
    %1658 = vmatpush1.bf16.msra.mxu0 %v1587
    %1659 = vmatprep.subr.bf16.mxu0 %v1592
    %1660 = vmatpush1.bf16.msra.mxu0 %v1591
    %1661 = vmatprep.subr.bf16.mxu0 0
    %1662 = vmatpush1.bf16.msra.mxu0 0
    %1663 = vmatprep.subr.bf16.mxu0 0
    %1664 = vmatpush1.bf16.msra.mxu0 0
    %1665 = vmatprep.subr.bf16.mxu0 0
    %1666 = vmatpush1.bf16.msra.mxu0 0
    %1667 = vmatprep.subr.bf16.mxu0 0
    %1668 = vmatpush1.bf16.msra.mxu0 0
    %1669 = vmatprep.subr.bf16.mxu0 0
    %1670 = vmatpush1.bf16.msra.mxu0 0
    %1671 = vmatprep.subr.bf16.mxu0 0
    %1672 = vmatpush1.bf16.msra.mxu0 0
    %1673 = vmatprep.subr.bf16.mxu0 0
    %1674 = vmatpush1.bf16.msra.mxu0 0
    %1675 = vmatprep.subr.bf16.mxu0 0
    %1676 = vmatpush1.bf16.msra.mxu0 0
    %1677 = vmatprep.subr.bf16.mxu0 0
    %1678 = vmatpush1.bf16.msra.mxu0 0
    %1679 = vmatprep.subr.bf16.mxu0 0
    %1680 = vmatpush1.bf16.msra.mxu0 0
    %1681 = vmatprep.subr.bf16.mxu0 0
    %1682 = vmatpush1.bf16.msra.mxu0 0
    %1683 = vmatprep.subr.bf16.mxu0 0
    %1684 = vmatpush1.bf16.msra.mxu0 0
    %1685 = vmatprep.mubr.bf16.mxu0 0
    %1686 = vmatmul.mubr.bf16.gmra.mrb[0].mxu0 %v1610
    %v1687 = vpop.f32.mrb[0].mxu0
    %v1688 = vadd.f32 0.0, %v1687
    %v1689 = vpop.f32.mrb[0].mxu0
    %v1690 = vadd.f32 0.0, %v1689
    %v1691 = vpop.f32.mrb[0].mxu0
    %v1692 = vpop.f32.mrb[0].mxu0
    %1693 = vdwg.mxu0
    %v1694 = vadd.f32 %v1363, %v1647
    %v1695 = vadd.f32 %v1364, %v1649
    %v1696 = vadd.f32 %v1365, %v1688
    %v1697 = vadd.f32 %v1366, %v1690
    %1698 = vmatprep.subr.bf16.mxu0 0
    %1699 = vmatpush1.bf16.msra.mxu0 %v169
    %1700 = vmatprep.subr.bf16.mxu0 0
    %1701 = vmatpush1.bf16.msra.mxu0 %v170
    %1702 = vmatprep.subr.bf16.mxu0 0
    %1703 = vmatpush1.bf16.msra.mxu0 %v171
    %1704 = vmatprep.subr.bf16.mxu0 0
    %1705 = vmatpush1.bf16.msra.mxu0 %v172
    %1706 = vmatprep.subr.bf16.mxu0 0
    %1707 = vmatpush1.bf16.msra.mxu0 %v173
    %1708 = vmatprep.subr.bf16.mxu0 0
    %1709 = vmatpush1.bf16.msra.mxu0 %v174
    %1710 = vmatprep.subr.bf16.mxu0 0
    %1711 = vmatpush1.bf16.msra.mxu0 %v175
    %1712 = vmatprep.subr.bf16.mxu0 0
    %1713 = vmatpush1.bf16.msra.mxu0 %v176
    %1714 = vmatprep.subr.bf16.mxu0 0
    %1715 = vmatpush1.bf16.msra.mxu0 %v177
    %1716 = vmatprep.subr.bf16.mxu0 0
    %1717 = vmatpush1.bf16.msra.mxu0 %v178
    %1718 = vmatprep.subr.bf16.mxu0 0
    %1719 = vmatpush1.bf16.msra.mxu0 %v179
    %1720 = vmatprep.subr.bf16.mxu0 0
    %1721 = vmatpush1.bf16.msra.mxu0 %v180
    %1722 = vmatprep.subr.bf16.mxu0 0
    %1723 = vmatpush1.bf16.msra.mxu0 0
    %1724 = vmatprep.subr.bf16.mxu0 0
    %1725 = vmatpush1.bf16.msra.mxu0 0
    %1726 = vmatprep.subr.bf16.mxu0 0
    %1727 = vmatpush1.bf16.msra.mxu0 0
    %1728 = vmatprep.subr.bf16.mxu0 0
    %1729 = vmatpush1.bf16.msra.mxu0 0
    %1730 = vmatprep.mubr.bf16.mxu0 %v462
    %1731 = vmatmul.mubr.bf16.gmra.mrb[0].mxu0 %v386
    %v1732 = vpop.f32.mrb[0].mxu0
    %v1733 = vadd.f32 0.0, %v1732
    %v1734 = vpop.f32.mrb[0].mxu0
    %v1735 = vpop.f32.mrb[0].mxu0
    %v1736 = vpop.f32.mrb[0].mxu0
    %1737 = vdwg.mxu0
    %1738 = vmatprep.subr.bf16.mxu0 0
    %1739 = vmatpush1.bf16.msra.mxu0 %v286
    %1740 = vmatprep.subr.bf16.mxu0 0
    %1741 = vmatpush1.bf16.msra.mxu0 %v287
    %1742 = vmatprep.subr.bf16.mxu0 0
    %1743 = vmatpush1.bf16.msra.mxu0 %v288
    %1744 = vmatprep.subr.bf16.mxu0 0
    %1745 = vmatpush1.bf16.msra.mxu0 %v289
    %1746 = vmatprep.subr.bf16.mxu0 0
    %1747 = vmatpush1.bf16.msra.mxu0 %v290
    %1748 = vmatprep.subr.bf16.mxu0 0
    %1749 = vmatpush1.bf16.msra.mxu0 %v291
    %1750 = vmatprep.subr.bf16.mxu0 0
    %1751 = vmatpush1.bf16.msra.mxu0 %v292
    %1752 = vmatprep.subr.bf16.mxu0 0
    %1753 = vmatpush1.bf16.msra.mxu0 %v293
    %1754 = vmatprep.subr.bf16.mxu0 0
    %1755 = vmatpush1.bf16.msra.mxu0 %v294
    %1756 = vmatprep.subr.bf16.mxu0 0
    %1757 = vmatpush1.bf16.msra.mxu0 %v295
    %1758 = vmatprep.subr.bf16.mxu0 0
    %1759 = vmatpush1.bf16.msra.mxu0 %v296
    %1760 = vmatprep.subr.bf16.mxu0 0
    %1761 = vmatpush1.bf16.msra.mxu0 %v297
    %1762 = vmatprep.subr.bf16.mxu0 0
    %1763 = vmatpush1.bf16.msra.mxu0 0
    %1764 = vmatprep.subr.bf16.mxu0 0
    %1765 = vmatpush1.bf16.msra.mxu0 0
    %1766 = vmatprep.subr.bf16.mxu0 0
    %1767 = vmatpush1.bf16.msra.mxu0 0
    %1768 = vmatprep.subr.bf16.mxu0 0
    %1769 = vmatpush1.bf16.msra.mxu0 0
    %1770 = vmatprep.mubr.bf16.mxu0 %v195
    %1771 = vmatmul.mubr.bf16.gmra.mrb[0].mxu0 %v119
    %v1772 = vpop.f32.mrb[0].mxu0
    %v1773 = vadd.f32 %v1733, %v1772
    %v1774 = vpop.f32.mrb[0].mxu0
    %v1775 = vpop.f32.mrb[0].mxu0
    %v1776 = vpop.f32.mrb[0].mxu0
    %1777 = vdwg.mxu0
    %v1778 = vcombine.high %v1125, %v1125
    %v1780 = vunpack.c.l.s4 1966171168
    %v1781 = vunpack.c.0.s8 %v1780
    %v1782 = vlaneseq
    %v1783 = vshrl.u32 %v1782, 7
    %v1784 = vsub.s32 %v1781, %v1783
    %v1785 = vrot.slane %v1778, %v1784
    %v1786 = vcombine.high %v1132, %v1132
    %v1789 = vsel %vm193, %v1786, 0
    %1791 = vmatprep.subr.bf16.mxu0 0
    %1792 = vmatpush1.bf16.msra.mxu0 %v437
    %1793 = vmatprep.subr.bf16.mxu0 0
    %1794 = vmatpush1.bf16.msra.mxu0 %v438
    %1795 = vmatprep.subr.bf16.mxu0 0
    %1796 = vmatpush1.bf16.msra.mxu0 %v439
    %1797 = vmatprep.subr.bf16.mxu0 0
    %1798 = vmatpush1.bf16.msra.mxu0 %v440
    %1799 = vmatprep.subr.bf16.mxu0 0
    %1800 = vmatpush1.bf16.msra.mxu0 %v441
    %1801 = vmatprep.subr.bf16.mxu0 0
    %1802 = vmatpush1.bf16.msra.mxu0 %v442
    %1803 = vmatprep.subr.bf16.mxu0 0
    %1804 = vmatpush1.bf16.msra.mxu0 %v443
    %1805 = vmatprep.subr.bf16.mxu0 0
    %1806 = vmatpush1.bf16.msra.mxu0 %v444
    %1807 = vmatprep.subr.bf16.mxu0 0
    %1808 = vmatpush1.bf16.msra.mxu0 %v445
    %1809 = vmatprep.subr.bf16.mxu0 0
    %1810 = vmatpush1.bf16.msra.mxu0 %v446
    %1811 = vmatprep.subr.bf16.mxu0 0
    %1812 = vmatpush1.bf16.msra.mxu0 %v447
    %1813 = vmatprep.subr.bf16.mxu0 0
    %1814 = vmatpush1.bf16.msra.mxu0 %v448
    %1815 = vmatprep.subr.bf16.mxu0 0
    %1816 = vmatpush1.bf16.msra.mxu0 0
    %1817 = vmatprep.subr.bf16.mxu0 0
    %1818 = vmatpush1.bf16.msra.mxu0 0
    %1819 = vmatprep.subr.bf16.mxu0 0
    %1820 = vmatpush1.bf16.msra.mxu0 0
    %1821 = vmatprep.subr.bf16.mxu0 0
    %1822 = vmatpush1.bf16.msra.mxu0 0
    %1823 = vmatprep.mubr.bf16.mxu0 %v1789
    %1824 = vmatmul.mubr.bf16.gmra.mrb[0].mxu0 %v1785
    %v1825 = vpop.f32.mrb[0].mxu0
    %v1826 = vadd.f32 0.0, %v1825
    %v1827 = vpop.f32.mrb[0].mxu0
    %v1828 = vpop.f32.mrb[0].mxu0
    %v1829 = vpop.f32.mrb[0].mxu0
    %1830 = vdwg.mxu0
    %v1831 = vadd.f32 %v1773, %v1826
    %v1832 = vadd.f32 %v1831, %v509
    %v1833 = vmax.f32 %v1832, 0.0
    %v1834 = vpack.c.bf16 %v1833, %v1833
    %s1835 = scalar_lea.vmem %s3, 512
    %v1836 = vld [vmem:[%s1835] sm:$0xff]
    %v1837 = vld [vmem:[%s1835 + $0x8] sm:$0xff]
    %v1838 = vld [vmem:[%s1835 + $0x10] sm:$0xff]
    %v1839 = vld [vmem:[%s1835 + $0x18] sm:$0xff]
    %v1840 = vld [vmem:[%s1835 + $0x20] sm:$0xff]
    %v1841 = vld [vmem:[%s1835 + $0x28] sm:$0xff]
    %v1842 = vld [vmem:[%s1835 + $0x30] sm:$0xff]
    %v1843 = vld [vmem:[%s1835 + $0x38] sm:$0xff]
    %v1844 = vld [vmem:[%s1835 + $0x40] sm:$0xff]
    %v1845 = vld [vmem:[%s1835 + $0x48] sm:$0xff]
    %v1846 = vld [vmem:[%s1835 + $0x50] sm:$0xff]
    %v1847 = vld [vmem:[%s1835 + $0x58] sm:$0xff]
    %v1848 = vld [vmem:[%s1835 + $0x60] sm:$0xff]
    %v1849 = vld [vmem:[%s1835 + $0x68] sm:$0xff]
    %v1850 = vld [vmem:[%s1835 + $0x70] sm:$0xff]
    %v1851 = vld [vmem:[%s1835 + $0x78] sm:$0xff]
    %v1868 = vunpack.c.l.b16 %v1836
    %v1869 = vunpack.c.h.b16 %v1836
    %v1870 = vunpack.c.l.b16 %v1837
    %v1871 = vunpack.c.h.b16 %v1837
    %v1872 = vunpack.c.l.b16 %v1838
    %v1873 = vunpack.c.h.b16 %v1838
    %v1874 = vunpack.c.l.b16 %v1839
    %v1875 = vunpack.c.h.b16 %v1839
    %v1876 = vunpack.c.l.b16 %v1840
    %v1877 = vunpack.c.h.b16 %v1840
    %v1878 = vunpack.c.l.b16 %v1841
    %v1879 = vunpack.c.h.b16 %v1841
    %v1880 = vunpack.c.l.b16 %v1842
    %v1881 = vunpack.c.h.b16 %v1842
    %v1882 = vunpack.c.l.b16 %v1843
    %v1883 = vunpack.c.h.b16 %v1843
    %v1884 = vunpack.c.l.b16 %v1844
    %v1885 = vunpack.c.h.b16 %v1844
    %v1886 = vunpack.c.l.b16 %v1845
    %v1887 = vunpack.c.h.b16 %v1845
    %v1888 = vunpack.c.l.b16 %v1846
    %v1889 = vunpack.c.h.b16 %v1846
    %v1890 = vunpack.c.l.b16 %v1847
    %v1891 = vunpack.c.h.b16 %v1847
    %v1892 = vunpack.c.l.b16 %v1848
    %v1893 = vunpack.c.h.b16 %v1848
    %v1894 = vunpack.c.l.b16 %v1849
    %v1895 = vunpack.c.h.b16 %v1849
    %v1896 = vunpack.c.l.b16 %v1850
    %v1897 = vunpack.c.h.b16 %v1850
    %v1898 = vunpack.c.l.b16 %v1851
    %v1899 = vunpack.c.h.b16 %v1851
    %v1900 = vpack.c.b16 %v1872, %v1868
    %v1901 = vpack.c.b16 %v1873, %v1869
    %v1902 = vpack.c.b16 %v1874, %v1870
    %v1903 = vpack.c.b16 %v1875, %v1871
    %v1904 = vpack.c.b16 %v1880, %v1876
    %v1905 = vpack.c.b16 %v1881, %v1877
    %v1906 = vpack.c.b16 %v1882, %v1878
    %v1907 = vpack.c.b16 %v1883, %v1879
    %v1908 = vpack.c.b16 %v1888, %v1884
    %v1909 = vpack.c.b16 %v1889, %v1885
    %v1910 = vpack.c.b16 %v1890, %v1886
    %v1911 = vpack.c.b16 %v1891, %v1887
    %v1912 = vpack.c.b16 %v1896, %v1892
    %v1913 = vpack.c.b16 %v1897, %v1893
    %v1914 = vpack.c.b16 %v1898, %v1894
    %v1915 = vpack.c.b16 %v1899, %v1895
    %v1933 = vsel %vm193, %v1834, 0
    %1935 = vmatprep.subr.bf16.mxu0 %v1901
    %1936 = vmatpush1.bf16.msra.mxu0 %v1900
    %1937 = vmatprep.subr.bf16.mxu0 %v1905
    %1938 = vmatpush1.bf16.msra.mxu0 %v1904
    %1939 = vmatprep.subr.bf16.mxu0 %v1909
    %1940 = vmatpush1.bf16.msra.mxu0 %v1908
    %1941 = vmatprep.subr.bf16.mxu0 %v1913
    %1942 = vmatpush1.bf16.msra.mxu0 %v1912
    %1943 = vmatprep.subr.bf16.mxu0 0
    %1944 = vmatpush1.bf16.msra.mxu0 0
    %1945 = vmatprep.subr.bf16.mxu0 0
    %1946 = vmatpush1.bf16.msra.mxu0 0
    %1947 = vmatprep.subr.bf16.mxu0 0
    %1948 = vmatpush1.bf16.msra.mxu0 0
    %1949 = vmatprep.subr.bf16.mxu0 0
    %1950 = vmatpush1.bf16.msra.mxu0 0
    %1951 = vmatprep.subr.bf16.mxu0 0
    %1952 = vmatpush1.bf16.msra.mxu0 0
    %1953 = vmatprep.subr.bf16.mxu0 0
    %1954 = vmatpush1.bf16.msra.mxu0 0
    %1955 = vmatprep.subr.bf16.mxu0 0
    %1956 = vmatpush1.bf16.msra.mxu0 0
    %1957 = vmatprep.subr.bf16.mxu0 0
    %1958 = vmatpush1.bf16.msra.mxu0 0
    %1959 = vmatprep.subr.bf16.mxu0 0
    %1960 = vmatpush1.bf16.msra.mxu0 0
    %1961 = vmatprep.subr.bf16.mxu0 0
    %1962 = vmatpush1.bf16.msra.mxu0 0
    %1963 = vmatprep.subr.bf16.mxu0 0
    %1964 = vmatpush1.bf16.msra.mxu0 0
    %1965 = vmatprep.subr.bf16.mxu0 0
    %1966 = vmatpush1.bf16.msra.mxu0 0
    %1967 = vmatprep.mubr.bf16.mxu0 0
    %1968 = vmatmul.mubr.bf16.gmra.mrb[0].mxu0 %v1933
    %v1969 = vpop.f32.mrb[0].mxu0
    %v1970 = vadd.f32 0.0, %v1969
    %v1971 = vpop.f32.mrb[0].mxu0
    %v1972 = vadd.f32 0.0, %v1971
    %v1973 = vpop.f32.mrb[0].mxu0
    %v1974 = vpop.f32.mrb[0].mxu0
    %1975 = vdwg.mxu0
    %1976 = vmatprep.subr.bf16.mxu0 %v1903
    %1977 = vmatpush1.bf16.msra.mxu0 %v1902
    %1978 = vmatprep.subr.bf16.mxu0 %v1907
    %1979 = vmatpush1.bf16.msra.mxu0 %v1906
    %1980 = vmatprep.subr.bf16.mxu0 %v1911
    %1981 = vmatpush1.bf16.msra.mxu0 %v1910
    %1982 = vmatprep.subr.bf16.mxu0 %v1915
    %1983 = vmatpush1.bf16.msra.mxu0 %v1914
    %1984 = vmatprep.subr.bf16.mxu0 0
    %1985 = vmatpush1.bf16.msra.mxu0 0
    %1986 = vmatprep.subr.bf16.mxu0 0
    %1987 = vmatpush1.bf16.msra.mxu0 0
    %1988 = vmatprep.subr.bf16.mxu0 0
    %1989 = vmatpush1.bf16.msra.mxu0 0
    %1990 = vmatprep.subr.bf16.mxu0 0
    %1991 = vmatpush1.bf16.msra.mxu0 0
    %1992 = vmatprep.subr.bf16.mxu0 0
    %1993 = vmatpush1.bf16.msra.mxu0 0
    %1994 = vmatprep.subr.bf16.mxu0 0
    %1995 = vmatpush1.bf16.msra.mxu0 0
    %1996 = vmatprep.subr.bf16.mxu0 0
    %1997 = vmatpush1.bf16.msra.mxu0 0
    %1998 = vmatprep.subr.bf16.mxu0 0
    %1999 = vmatpush1.bf16.msra.mxu0 0
    %2000 = vmatprep.subr.bf16.mxu0 0
    %2001 = vmatpush1.bf16.msra.mxu0 0
    %2002 = vmatprep.subr.bf16.mxu0 0
    %2003 = vmatpush1.bf16.msra.mxu0 0
    %2004 = vmatprep.subr.bf16.mxu0 0
    %2005 = vmatpush1.bf16.msra.mxu0 0
    %2006 = vmatprep.subr.bf16.mxu0 0
    %2007 = vmatpush1.bf16.msra.mxu0 0
    %2008 = vmatprep.mubr.bf16.mxu0 0
    %2009 = vmatmul.mubr.bf16.gmra.mrb[0].mxu0 %v1933
    %v2010 = vpop.f32.mrb[0].mxu0
    %v2011 = vadd.f32 0.0, %v2010
    %v2012 = vpop.f32.mrb[0].mxu0
    %v2013 = vadd.f32 0.0, %v2012
    %v2014 = vpop.f32.mrb[0].mxu0
    %v2015 = vpop.f32.mrb[0].mxu0
    %2016 = vdwg.mxu0
    %v2017 = vadd.f32 %v1694, %v1970
    %v2018 = vadd.f32 %v1695, %v1972
    %v2019 = vadd.f32 %v1696, %v2011
    %v2020 = vadd.f32 %v1697, %v2013
    %2021 = vmatprep.subr.bf16.mxu0 0
    %2022 = vmatpush1.bf16.msra.mxu0 %v169
    %2023 = vmatprep.subr.bf16.mxu0 0
    %2024 = vmatpush1.bf16.msra.mxu0 %v170
    %2025 = vmatprep.subr.bf16.mxu0 0
    %2026 = vmatpush1.bf16.msra.mxu0 %v171
    %2027 = vmatprep.subr.bf16.mxu0 0
    %2028 = vmatpush1.bf16.msra.mxu0 %v172
    %2029 = vmatprep.subr.bf16.mxu0 0
    %2030 = vmatpush1.bf16.msra.mxu0 %v173
    %2031 = vmatprep.subr.bf16.mxu0 0
    %2032 = vmatpush1.bf16.msra.mxu0 %v174
    %2033 = vmatprep.subr.bf16.mxu0 0
    %2034 = vmatpush1.bf16.msra.mxu0 %v175
    %2035 = vmatprep.subr.bf16.mxu0 0
    %2036 = vmatpush1.bf16.msra.mxu0 %v176
    %2037 = vmatprep.subr.bf16.mxu0 0
    %2038 = vmatpush1.bf16.msra.mxu0 %v177
    %2039 = vmatprep.subr.bf16.mxu0 0
    %2040 = vmatpush1.bf16.msra.mxu0 %v178
    %2041 = vmatprep.subr.bf16.mxu0 0
    %2042 = vmatpush1.bf16.msra.mxu0 %v179
    %2043 = vmatprep.subr.bf16.mxu0 0
    %2044 = vmatpush1.bf16.msra.mxu0 %v180
    %2045 = vmatprep.subr.bf16.mxu0 0
    %2046 = vmatpush1.bf16.msra.mxu0 0
    %2047 = vmatprep.subr.bf16.mxu0 0
    %2048 = vmatpush1.bf16.msra.mxu0 0
    %2049 = vmatprep.subr.bf16.mxu0 0
    %2050 = vmatpush1.bf16.msra.mxu0 0
    %2051 = vmatprep.subr.bf16.mxu0 0
    %2052 = vmatpush1.bf16.msra.mxu0 0
    %2053 = vmatprep.mubr.bf16.mxu0 %v636
    %2054 = vmatmul.mubr.bf16.gmra.mrb[0].mxu0 %v633
    %v2055 = vpop.f32.mrb[0].mxu0
    %v2056 = vadd.f32 0.0, %v2055
    %v2057 = vpop.f32.mrb[0].mxu0
    %v2058 = vpop.f32.mrb[0].mxu0
    %v2059 = vpop.f32.mrb[0].mxu0
    %2060 = vdwg.mxu0
    %2061 = vmatprep.subr.bf16.mxu0 0
    %2062 = vmatpush1.bf16.msra.mxu0 %v286
    %2063 = vmatprep.subr.bf16.mxu0 0
    %2064 = vmatpush1.bf16.msra.mxu0 %v287
    %2065 = vmatprep.subr.bf16.mxu0 0
    %2066 = vmatpush1.bf16.msra.mxu0 %v288
    %2067 = vmatprep.subr.bf16.mxu0 0
    %2068 = vmatpush1.bf16.msra.mxu0 %v289
    %2069 = vmatprep.subr.bf16.mxu0 0
    %2070 = vmatpush1.bf16.msra.mxu0 %v290
    %2071 = vmatprep.subr.bf16.mxu0 0
    %2072 = vmatpush1.bf16.msra.mxu0 %v291
    %2073 = vmatprep.subr.bf16.mxu0 0
    %2074 = vmatpush1.bf16.msra.mxu0 %v292
    %2075 = vmatprep.subr.bf16.mxu0 0
    %2076 = vmatpush1.bf16.msra.mxu0 %v293
    %2077 = vmatprep.subr.bf16.mxu0 0
    %2078 = vmatpush1.bf16.msra.mxu0 %v294
    %2079 = vmatprep.subr.bf16.mxu0 0
    %2080 = vmatpush1.bf16.msra.mxu0 %v295
    %2081 = vmatprep.subr.bf16.mxu0 0
    %2082 = vmatpush1.bf16.msra.mxu0 %v296
    %2083 = vmatprep.subr.bf16.mxu0 0
    %2084 = vmatpush1.bf16.msra.mxu0 %v297
    %2085 = vmatprep.subr.bf16.mxu0 0
    %2086 = vmatpush1.bf16.msra.mxu0 0
    %2087 = vmatprep.subr.bf16.mxu0 0
    %2088 = vmatpush1.bf16.msra.mxu0 0
    %2089 = vmatprep.subr.bf16.mxu0 0
    %2090 = vmatpush1.bf16.msra.mxu0 0
    %2091 = vmatprep.subr.bf16.mxu0 0
    %2092 = vmatpush1.bf16.msra.mxu0 0
    %2093 = vmatprep.mubr.bf16.mxu0 %v538
    %2094 = vmatmul.mubr.bf16.gmra.mrb[0].mxu0 %v535
    %v2095 = vpop.f32.mrb[0].mxu0
    %v2096 = vadd.f32 %v2056, %v2095
    %v2097 = vpop.f32.mrb[0].mxu0
    %v2098 = vpop.f32.mrb[0].mxu0
    %v2099 = vpop.f32.mrb[0].mxu0
    %2100 = vdwg.mxu0
    %2101 = vrot.lane.b32.xlu0 %v1785, 64
    %v2102 = vpop.permute.xlu0 %2101
    %2103 = vrot.lane.b32.xlu0 %v1786, 64
    %v2104 = vpop.permute.xlu0 %2103
    %v2105 = vsel %vm534, %v2102, %v2104
    %v2108 = vsel %vm193, %v2104, 0
    %2110 = vmatprep.subr.bf16.mxu0 0
    %2111 = vmatpush1.bf16.msra.mxu0 %v437
    %2112 = vmatprep.subr.bf16.mxu0 0
    %2113 = vmatpush1.bf16.msra.mxu0 %v438
    %2114 = vmatprep.subr.bf16.mxu0 0
    %2115 = vmatpush1.bf16.msra.mxu0 %v439
    %2116 = vmatprep.subr.bf16.mxu0 0
    %2117 = vmatpush1.bf16.msra.mxu0 %v440
    %2118 = vmatprep.subr.bf16.mxu0 0
    %2119 = vmatpush1.bf16.msra.mxu0 %v441
    %2120 = vmatprep.subr.bf16.mxu0 0
    %2121 = vmatpush1.bf16.msra.mxu0 %v442
    %2122 = vmatprep.subr.bf16.mxu0 0
    %2123 = vmatpush1.bf16.msra.mxu0 %v443
    %2124 = vmatprep.subr.bf16.mxu0 0
    %2125 = vmatpush1.bf16.msra.mxu0 %v444
    %2126 = vmatprep.subr.bf16.mxu0 0
    %2127 = vmatpush1.bf16.msra.mxu0 %v445
    %2128 = vmatprep.subr.bf16.mxu0 0
    %2129 = vmatpush1.bf16.msra.mxu0 %v446
    %2130 = vmatprep.subr.bf16.mxu0 0
    %2131 = vmatpush1.bf16.msra.mxu0 %v447
    %2132 = vmatprep.subr.bf16.mxu0 0
    %2133 = vmatpush1.bf16.msra.mxu0 %v448
    %2134 = vmatprep.subr.bf16.mxu0 0
    %2135 = vmatpush1.bf16.msra.mxu0 0
    %2136 = vmatprep.subr.bf16.mxu0 0
    %2137 = vmatpush1.bf16.msra.mxu0 0
    %2138 = vmatprep.subr.bf16.mxu0 0
    %2139 = vmatpush1.bf16.msra.mxu0 0
    %2140 = vmatprep.subr.bf16.mxu0 0
    %2141 = vmatpush1.bf16.msra.mxu0 0
    %2142 = vmatprep.mubr.bf16.mxu0 %v2108
    %2143 = vmatmul.mubr.bf16.gmra.mrb[0].mxu0 %v2105
    %v2144 = vpop.f32.mrb[0].mxu0
    %v2145 = vadd.f32 0.0, %v2144
    %v2146 = vpop.f32.mrb[0].mxu0
    %v2147 = vpop.f32.mrb[0].mxu0
    %v2148 = vpop.f32.mrb[0].mxu0
    %2149 = vdwg.mxu0
    %v2150 = vadd.f32 %v2096, %v2145
    %v2151 = vadd.f32 %v2150, %v509
    %v2152 = vmax.f32 %v2151, 0.0
    %v2153 = vpack.c.bf16 %v2152, %v2152
    %s2154 = scalar_lea.vmem %s3, 640
    %v2155 = vld [vmem:[%s2154] sm:$0xff]
    %v2156 = vld [vmem:[%s2154 + $0x8] sm:$0xff]
    %v2157 = vld [vmem:[%s2154 + $0x10] sm:$0xff]
    %v2158 = vld [vmem:[%s2154 + $0x18] sm:$0xff]
    %v2159 = vld [vmem:[%s2154 + $0x20] sm:$0xff]
    %v2160 = vld [vmem:[%s2154 + $0x28] sm:$0xff]
    %v2161 = vld [vmem:[%s2154 + $0x30] sm:$0xff]
    %v2162 = vld [vmem:[%s2154 + $0x38] sm:$0xff]
    %v2163 = vld [vmem:[%s2154 + $0x40] sm:$0xff]
    %v2164 = vld [vmem:[%s2154 + $0x48] sm:$0xff]
    %v2165 = vld [vmem:[%s2154 + $0x50] sm:$0xff]
    %v2166 = vld [vmem:[%s2154 + $0x58] sm:$0xff]
    %v2167 = vld [vmem:[%s2154 + $0x60] sm:$0xff]
    %v2168 = vld [vmem:[%s2154 + $0x68] sm:$0xff]
    %v2169 = vld [vmem:[%s2154 + $0x70] sm:$0xff]
    %v2170 = vld [vmem:[%s2154 + $0x78] sm:$0xff]
    %v2187 = vunpack.c.l.b16 %v2155
    %v2188 = vunpack.c.h.b16 %v2155
    %v2189 = vunpack.c.l.b16 %v2156
    %v2190 = vunpack.c.h.b16 %v2156
    %v2191 = vunpack.c.l.b16 %v2157
    %v2192 = vunpack.c.h.b16 %v2157
    %v2193 = vunpack.c.l.b16 %v2158
    %v2194 = vunpack.c.h.b16 %v2158
    %v2195 = vunpack.c.l.b16 %v2159
    %v2196 = vunpack.c.h.b16 %v2159
    %v2197 = vunpack.c.l.b16 %v2160
    %v2198 = vunpack.c.h.b16 %v2160
    %v2199 = vunpack.c.l.b16 %v2161
    %v2200 = vunpack.c.h.b16 %v2161
    %v2201 = vunpack.c.l.b16 %v2162
    %v2202 = vunpack.c.h.b16 %v2162
    %v2203 = vunpack.c.l.b16 %v2163
    %v2204 = vunpack.c.h.b16 %v2163
    %v2205 = vunpack.c.l.b16 %v2164
    %v2206 = vunpack.c.h.b16 %v2164
    %v2207 = vunpack.c.l.b16 %v2165
    %v2208 = vunpack.c.h.b16 %v2165
    %v2209 = vunpack.c.l.b16 %v2166
    %v2210 = vunpack.c.h.b16 %v2166
    %v2211 = vunpack.c.l.b16 %v2167
    %v2212 = vunpack.c.h.b16 %v2167
    %v2213 = vunpack.c.l.b16 %v2168
    %v2214 = vunpack.c.h.b16 %v2168
    %v2215 = vunpack.c.l.b16 %v2169
    %v2216 = vunpack.c.h.b16 %v2169
    %v2217 = vunpack.c.l.b16 %v2170
    %v2218 = vunpack.c.h.b16 %v2170
    %v2219 = vpack.c.b16 %v2191, %v2187
    %v2220 = vpack.c.b16 %v2192, %v2188
    %v2221 = vpack.c.b16 %v2193, %v2189
    %v2222 = vpack.c.b16 %v2194, %v2190
    %v2223 = vpack.c.b16 %v2199, %v2195
    %v2224 = vpack.c.b16 %v2200, %v2196
    %v2225 = vpack.c.b16 %v2201, %v2197
    %v2226 = vpack.c.b16 %v2202, %v2198
    %v2227 = vpack.c.b16 %v2207, %v2203
    %v2228 = vpack.c.b16 %v2208, %v2204
    %v2229 = vpack.c.b16 %v2209, %v2205
    %v2230 = vpack.c.b16 %v2210, %v2206
    %v2231 = vpack.c.b16 %v2215, %v2211
    %v2232 = vpack.c.b16 %v2216, %v2212
    %v2233 = vpack.c.b16 %v2217, %v2213
    %v2234 = vpack.c.b16 %v2218, %v2214
    %v2252 = vsel %vm193, %v2153, 0
    %2254 = vmatprep.subr.bf16.mxu0 %v2220
    %2255 = vmatpush1.bf16.msra.mxu0 %v2219
    %2256 = vmatprep.subr.bf16.mxu0 %v2224
    %2257 = vmatpush1.bf16.msra.mxu0 %v2223
    %2258 = vmatprep.subr.bf16.mxu0 %v2228
    %2259 = vmatpush1.bf16.msra.mxu0 %v2227
    %2260 = vmatprep.subr.bf16.mxu0 %v2232
    %2261 = vmatpush1.bf16.msra.mxu0 %v2231
    %2262 = vmatprep.subr.bf16.mxu0 0
    %2263 = vmatpush1.bf16.msra.mxu0 0
    %2264 = vmatprep.subr.bf16.mxu0 0
    %2265 = vmatpush1.bf16.msra.mxu0 0
    %2266 = vmatprep.subr.bf16.mxu0 0
    %2267 = vmatpush1.bf16.msra.mxu0 0
    %2268 = vmatprep.subr.bf16.mxu0 0
    %2269 = vmatpush1.bf16.msra.mxu0 0
    %2270 = vmatprep.subr.bf16.mxu0 0
    %2271 = vmatpush1.bf16.msra.mxu0 0
    %2272 = vmatprep.subr.bf16.mxu0 0
    %2273 = vmatpush1.bf16.msra.mxu0 0
    %2274 = vmatprep.subr.bf16.mxu0 0
    %2275 = vmatpush1.bf16.msra.mxu0 0
    %2276 = vmatprep.subr.bf16.mxu0 0
    %2277 = vmatpush1.bf16.msra.mxu0 0
    %2278 = vmatprep.subr.bf16.mxu0 0
    %2279 = vmatpush1.bf16.msra.mxu0 0
    %2280 = vmatprep.subr.bf16.mxu0 0
    %2281 = vmatpush1.bf16.msra.mxu0 0
    %2282 = vmatprep.subr.bf16.mxu0 0
    %2283 = vmatpush1.bf16.msra.mxu0 0
    %2284 = vmatprep.subr.bf16.mxu0 0
    %2285 = vmatpush1.bf16.msra.mxu0 0
    %2286 = vmatprep.mubr.bf16.mxu0 0
    %2287 = vmatmul.mubr.bf16.gmra.mrb[0].mxu0 %v2252
    %v2288 = vpop.f32.mrb[0].mxu0
    %v2289 = vadd.f32 0.0, %v2288
    %v2290 = vpop.f32.mrb[0].mxu0
    %v2291 = vadd.f32 0.0, %v2290
    %v2292 = vpop.f32.mrb[0].mxu0
    %v2293 = vpop.f32.mrb[0].mxu0
    %2294 = vdwg.mxu0
    %2295 = vmatprep.subr.bf16.mxu0 %v2222
    %2296 = vmatpush1.bf16.msra.mxu0 %v2221
    %2297 = vmatprep.subr.bf16.mxu0 %v2226
    %2298 = vmatpush1.bf16.msra.mxu0 %v2225
    %2299 = vmatprep.subr.bf16.mxu0 %v2230
    %2300 = vmatpush1.bf16.msra.mxu0 %v2229
    %2301 = vmatprep.subr.bf16.mxu0 %v2234
    %2302 = vmatpush1.bf16.msra.mxu0 %v2233
    %2303 = vmatprep.subr.bf16.mxu0 0
    %2304 = vmatpush1.bf16.msra.mxu0 0
    %2305 = vmatprep.subr.bf16.mxu0 0
    %2306 = vmatpush1.bf16.msra.mxu0 0
    %2307 = vmatprep.subr.bf16.mxu0 0
    %2308 = vmatpush1.bf16.msra.mxu0 0
    %2309 = vmatprep.subr.bf16.mxu0 0
    %2310 = vmatpush1.bf16.msra.mxu0 0
    %2311 = vmatprep.subr.bf16.mxu0 0
    %2312 = vmatpush1.bf16.msra.mxu0 0
    %2313 = vmatprep.subr.bf16.mxu0 0
    %2314 = vmatpush1.bf16.msra.mxu0 0
    %2315 = vmatprep.subr.bf16.mxu0 0
    %2316 = vmatpush1.bf16.msra.mxu0 0
    %2317 = vmatprep.subr.bf16.mxu0 0
    %2318 = vmatpush1.bf16.msra.mxu0 0
    %2319 = vmatprep.subr.bf16.mxu0 0
    %2320 = vmatpush1.bf16.msra.mxu0 0
    %2321 = vmatprep.subr.bf16.mxu0 0
    %2322 = vmatpush1.bf16.msra.mxu0 0
    %2323 = vmatprep.subr.bf16.mxu0 0
    %2324 = vmatpush1.bf16.msra.mxu0 0
    %2325 = vmatprep.subr.bf16.mxu0 0
    %2326 = vmatpush1.bf16.msra.mxu0 0
    %2327 = vmatprep.mubr.bf16.mxu0 0
    %2328 = vmatmul.mubr.bf16.gmra.mrb[0].mxu0 %v2252
    %v2329 = vpop.f32.mrb[0].mxu0
    %v2330 = vadd.f32 0.0, %v2329
    %v2331 = vpop.f32.mrb[0].mxu0
    %v2332 = vadd.f32 0.0, %v2331
    %v2333 = vpop.f32.mrb[0].mxu0
    %v2334 = vpop.f32.mrb[0].mxu0
    %2335 = vdwg.mxu0
    %v2336 = vadd.f32 %v2017, %v2289
    %v2337 = vadd.f32 %v2018, %v2291
    %v2338 = vadd.f32 %v2019, %v2330
    %v2339 = vadd.f32 %v2020, %v2332
    %2340 = vmatprep.subr.bf16.mxu0 0
    %2341 = vmatpush1.bf16.msra.mxu0 %v169
    %2342 = vmatprep.subr.bf16.mxu0 0
    %2343 = vmatpush1.bf16.msra.mxu0 %v170
    %2344 = vmatprep.subr.bf16.mxu0 0
    %2345 = vmatpush1.bf16.msra.mxu0 %v171
    %2346 = vmatprep.subr.bf16.mxu0 0
    %2347 = vmatpush1.bf16.msra.mxu0 %v172
    %2348 = vmatprep.subr.bf16.mxu0 0
    %2349 = vmatpush1.bf16.msra.mxu0 %v173
    %2350 = vmatprep.subr.bf16.mxu0 0
    %2351 = vmatpush1.bf16.msra.mxu0 %v174
    %2352 = vmatprep.subr.bf16.mxu0 0
    %2353 = vmatpush1.bf16.msra.mxu0 %v175
    %2354 = vmatprep.subr.bf16.mxu0 0
    %2355 = vmatpush1.bf16.msra.mxu0 %v176
    %2356 = vmatprep.subr.bf16.mxu0 0
    %2357 = vmatpush1.bf16.msra.mxu0 %v177
    %2358 = vmatprep.subr.bf16.mxu0 0
    %2359 = vmatpush1.bf16.msra.mxu0 %v178
    %2360 = vmatprep.subr.bf16.mxu0 0
    %2361 = vmatpush1.bf16.msra.mxu0 %v179
    %2362 = vmatprep.subr.bf16.mxu0 0
    %2363 = vmatpush1.bf16.msra.mxu0 %v180
    %2364 = vmatprep.subr.bf16.mxu0 0
    %2365 = vmatpush1.bf16.msra.mxu0 0
    %2366 = vmatprep.subr.bf16.mxu0 0
    %2367 = vmatpush1.bf16.msra.mxu0 0
    %2368 = vmatprep.subr.bf16.mxu0 0
    %2369 = vmatpush1.bf16.msra.mxu0 0
    %2370 = vmatprep.subr.bf16.mxu0 0
    %2371 = vmatpush1.bf16.msra.mxu0 0
    %2372 = vmatprep.mubr.bf16.mxu0 %v1135
    %2373 = vmatmul.mubr.bf16.gmra.mrb[0].mxu0 %v387
    %v2374 = vpop.f32.mrb[0].mxu0
    %v2375 = vadd.f32 0.0, %v2374
    %v2376 = vpop.f32.mrb[0].mxu0
    %v2377 = vpop.f32.mrb[0].mxu0
    %v2378 = vpop.f32.mrb[0].mxu0
    %2379 = vdwg.mxu0
    %2380 = vmatprep.subr.bf16.mxu0 0
    %2381 = vmatpush1.bf16.msra.mxu0 %v286
    %2382 = vmatprep.subr.bf16.mxu0 0
    %2383 = vmatpush1.bf16.msra.mxu0 %v287
    %2384 = vmatprep.subr.bf16.mxu0 0
    %2385 = vmatpush1.bf16.msra.mxu0 %v288
    %2386 = vmatprep.subr.bf16.mxu0 0
    %2387 = vmatpush1.bf16.msra.mxu0 %v289
    %2388 = vmatprep.subr.bf16.mxu0 0
    %2389 = vmatpush1.bf16.msra.mxu0 %v290
    %2390 = vmatprep.subr.bf16.mxu0 0
    %2391 = vmatpush1.bf16.msra.mxu0 %v291
    %2392 = vmatprep.subr.bf16.mxu0 0
    %2393 = vmatpush1.bf16.msra.mxu0 %v292
    %2394 = vmatprep.subr.bf16.mxu0 0
    %2395 = vmatpush1.bf16.msra.mxu0 %v293
    %2396 = vmatprep.subr.bf16.mxu0 0
    %2397 = vmatpush1.bf16.msra.mxu0 %v294
    %2398 = vmatprep.subr.bf16.mxu0 0
    %2399 = vmatpush1.bf16.msra.mxu0 %v295
    %2400 = vmatprep.subr.bf16.mxu0 0
    %2401 = vmatpush1.bf16.msra.mxu0 %v296
    %2402 = vmatprep.subr.bf16.mxu0 0
    %2403 = vmatpush1.bf16.msra.mxu0 %v297
    %2404 = vmatprep.subr.bf16.mxu0 0
    %2405 = vmatpush1.bf16.msra.mxu0 0
    %2406 = vmatprep.subr.bf16.mxu0 0
    %2407 = vmatpush1.bf16.msra.mxu0 0
    %2408 = vmatprep.subr.bf16.mxu0 0
    %2409 = vmatpush1.bf16.msra.mxu0 0
    %2410 = vmatprep.subr.bf16.mxu0 0
    %2411 = vmatpush1.bf16.msra.mxu0 0
    %2412 = vmatprep.mubr.bf16.mxu0 %v1031
    %2413 = vmatmul.mubr.bf16.gmra.mrb[0].mxu0 %v111
    %v2414 = vpop.f32.mrb[0].mxu0
    %v2415 = vadd.f32 %v2375, %v2414
    %v2416 = vpop.f32.mrb[0].mxu0
    %v2417 = vpop.f32.mrb[0].mxu0
    %v2418 = vpop.f32.mrb[0].mxu0
    %2419 = vdwg.mxu0
    %v2420 = vcombine.high %v1785, %v1785
    %v2423 = vsel %vm193, %v2420, 0
    %2425 = vmatprep.subr.bf16.mxu0 0
    %2426 = vmatpush1.bf16.msra.mxu0 %v437
    %2427 = vmatprep.subr.bf16.mxu0 0
    %2428 = vmatpush1.bf16.msra.mxu0 %v438
    %2429 = vmatprep.subr.bf16.mxu0 0
    %2430 = vmatpush1.bf16.msra.mxu0 %v439
    %2431 = vmatprep.subr.bf16.mxu0 0
    %2432 = vmatpush1.bf16.msra.mxu0 %v440
    %2433 = vmatprep.subr.bf16.mxu0 0
    %2434 = vmatpush1.bf16.msra.mxu0 %v441
    %2435 = vmatprep.subr.bf16.mxu0 0
    %2436 = vmatpush1.bf16.msra.mxu0 %v442
    %2437 = vmatprep.subr.bf16.mxu0 0
    %2438 = vmatpush1.bf16.msra.mxu0 %v443
    %2439 = vmatprep.subr.bf16.mxu0 0
    %2440 = vmatpush1.bf16.msra.mxu0 %v444
    %2441 = vmatprep.subr.bf16.mxu0 0
    %2442 = vmatpush1.bf16.msra.mxu0 %v445
    %2443 = vmatprep.subr.bf16.mxu0 0
    %2444 = vmatpush1.bf16.msra.mxu0 %v446
    %2445 = vmatprep.subr.bf16.mxu0 0
    %2446 = vmatpush1.bf16.msra.mxu0 %v447
    %2447 = vmatprep.subr.bf16.mxu0 0
    %2448 = vmatpush1.bf16.msra.mxu0 %v448
    %2449 = vmatprep.subr.bf16.mxu0 0
    %2450 = vmatpush1.bf16.msra.mxu0 0
    %2451 = vmatprep.subr.bf16.mxu0 0
    %2452 = vmatpush1.bf16.msra.mxu0 0
    %2453 = vmatprep.subr.bf16.mxu0 0
    %2454 = vmatpush1.bf16.msra.mxu0 0
    %2455 = vmatprep.subr.bf16.mxu0 0
    %2456 = vmatpush1.bf16.msra.mxu0 0
    %2457 = vmatprep.mubr.bf16.mxu0 %v2423
    %2458 = vmatmul.mubr.bf16.gmra.mrb[0].mxu0 %v1786
    %v2459 = vpop.f32.mrb[0].mxu0
    %v2460 = vadd.f32 0.0, %v2459
    %v2461 = vpop.f32.mrb[0].mxu0
    %v2462 = vpop.f32.mrb[0].mxu0
    %v2463 = vpop.f32.mrb[0].mxu0
    %2464 = vdwg.mxu0
    %v2465 = vadd.f32 %v2415, %v2460
    %v2466 = vadd.f32 %v2465, %v509
    %v2467 = vmax.f32 %v2466, 0.0
    %v2468 = vpack.c.bf16 %v2467, %v2467
    %s2469 = scalar_lea.vmem %s3, 768
    %v2470 = vld [vmem:[%s2469] sm:$0xff]
    %v2471 = vld [vmem:[%s2469 + $0x8] sm:$0xff]
    %v2472 = vld [vmem:[%s2469 + $0x10] sm:$0xff]
    %v2473 = vld [vmem:[%s2469 + $0x18] sm:$0xff]
    %v2474 = vld [vmem:[%s2469 + $0x20] sm:$0xff]
    %v2475 = vld [vmem:[%s2469 + $0x28] sm:$0xff]
    %v2476 = vld [vmem:[%s2469 + $0x30] sm:$0xff]
    %v2477 = vld [vmem:[%s2469 + $0x38] sm:$0xff]
    %v2478 = vld [vmem:[%s2469 + $0x40] sm:$0xff]
    %v2479 = vld [vmem:[%s2469 + $0x48] sm:$0xff]
    %v2480 = vld [vmem:[%s2469 + $0x50] sm:$0xff]
    %v2481 = vld [vmem:[%s2469 + $0x58] sm:$0xff]
    %v2482 = vld [vmem:[%s2469 + $0x60] sm:$0xff]
    %v2483 = vld [vmem:[%s2469 + $0x68] sm:$0xff]
    %v2484 = vld [vmem:[%s2469 + $0x70] sm:$0xff]
    %v2485 = vld [vmem:[%s2469 + $0x78] sm:$0xff]
    %v2502 = vunpack.c.l.b16 %v2470
    %v2503 = vunpack.c.h.b16 %v2470
    %v2504 = vunpack.c.l.b16 %v2471
    %v2505 = vunpack.c.h.b16 %v2471
    %v2506 = vunpack.c.l.b16 %v2472
    %v2507 = vunpack.c.h.b16 %v2472
    %v2508 = vunpack.c.l.b16 %v2473
    %v2509 = vunpack.c.h.b16 %v2473
    %v2510 = vunpack.c.l.b16 %v2474
    %v2511 = vunpack.c.h.b16 %v2474
    %v2512 = vunpack.c.l.b16 %v2475
    %v2513 = vunpack.c.h.b16 %v2475
    %v2514 = vunpack.c.l.b16 %v2476
    %v2515 = vunpack.c.h.b16 %v2476
    %v2516 = vunpack.c.l.b16 %v2477
    %v2517 = vunpack.c.h.b16 %v2477
    %v2518 = vunpack.c.l.b16 %v2478
    %v2519 = vunpack.c.h.b16 %v2478
    %v2520 = vunpack.c.l.b16 %v2479
    %v2521 = vunpack.c.h.b16 %v2479
    %v2522 = vunpack.c.l.b16 %v2480
    %v2523 = vunpack.c.h.b16 %v2480
    %v2524 = vunpack.c.l.b16 %v2481
    %v2525 = vunpack.c.h.b16 %v2481
    %v2526 = vunpack.c.l.b16 %v2482
    %v2527 = vunpack.c.h.b16 %v2482
    %v2528 = vunpack.c.l.b16 %v2483
    %v2529 = vunpack.c.h.b16 %v2483
    %v2530 = vunpack.c.l.b16 %v2484
    %v2531 = vunpack.c.h.b16 %v2484
    %v2532 = vunpack.c.l.b16 %v2485
    %v2533 = vunpack.c.h.b16 %v2485
    %v2534 = vpack.c.b16 %v2506, %v2502
    %v2535 = vpack.c.b16 %v2507, %v2503
    %v2536 = vpack.c.b16 %v2508, %v2504
    %v2537 = vpack.c.b16 %v2509, %v2505
    %v2538 = vpack.c.b16 %v2514, %v2510
    %v2539 = vpack.c.b16 %v2515, %v2511
    %v2540 = vpack.c.b16 %v2516, %v2512
    %v2541 = vpack.c.b16 %v2517, %v2513
    %v2542 = vpack.c.b16 %v2522, %v2518
    %v2543 = vpack.c.b16 %v2523, %v2519
    %v2544 = vpack.c.b16 %v2524, %v2520
    %v2545 = vpack.c.b16 %v2525, %v2521
    %v2546 = vpack.c.b16 %v2530, %v2526
    %v2547 = vpack.c.b16 %v2531, %v2527
    %v2548 = vpack.c.b16 %v2532, %v2528
    %v2549 = vpack.c.b16 %v2533, %v2529
    %v2567 = vsel %vm193, %v2468, 0
    %2569 = vmatprep.subr.bf16.mxu0 %v2535
    %2570 = vmatpush1.bf16.msra.mxu0 %v2534
    %2571 = vmatprep.subr.bf16.mxu0 %v2539
    %2572 = vmatpush1.bf16.msra.mxu0 %v2538
    %2573 = vmatprep.subr.bf16.mxu0 %v2543
    %2574 = vmatpush1.bf16.msra.mxu0 %v2542
    %2575 = vmatprep.subr.bf16.mxu0 %v2547
    %2576 = vmatpush1.bf16.msra.mxu0 %v2546
    %2577 = vmatprep.subr.bf16.mxu0 0
    %2578 = vmatpush1.bf16.msra.mxu0 0
    %2579 = vmatprep.subr.bf16.mxu0 0
    %2580 = vmatpush1.bf16.msra.mxu0 0
    %2581 = vmatprep.subr.bf16.mxu0 0
    %2582 = vmatpush1.bf16.msra.mxu0 0
    %2583 = vmatprep.subr.bf16.mxu0 0
    %2584 = vmatpush1.bf16.msra.mxu0 0
    %2585 = vmatprep.subr.bf16.mxu0 0
    %2586 = vmatpush1.bf16.msra.mxu0 0
    %2587 = vmatprep.subr.bf16.mxu0 0
    %2588 = vmatpush1.bf16.msra.mxu0 0
    %2589 = vmatprep.subr.bf16.mxu0 0
    %2590 = vmatpush1.bf16.msra.mxu0 0
    %2591 = vmatprep.subr.bf16.mxu0 0
    %2592 = vmatpush1.bf16.msra.mxu0 0
    %2593 = vmatprep.subr.bf16.mxu0 0
    %2594 = vmatpush1.bf16.msra.mxu0 0
    %2595 = vmatprep.subr.bf16.mxu0 0
    %2596 = vmatpush1.bf16.msra.mxu0 0
    %2597 = vmatprep.subr.bf16.mxu0 0
    %2598 = vmatpush1.bf16.msra.mxu0 0
    %2599 = vmatprep.subr.bf16.mxu0 0
    %2600 = vmatpush1.bf16.msra.mxu0 0
    %2601 = vmatprep.mubr.bf16.mxu0 0
    %2602 = vmatmul.mubr.bf16.gmra.mrb[0].mxu0 %v2567
    %v2603 = vpop.f32.mrb[0].mxu0
    %v2604 = vadd.f32 0.0, %v2603
    %v2605 = vpop.f32.mrb[0].mxu0
    %v2606 = vadd.f32 0.0, %v2605
    %v2607 = vpop.f32.mrb[0].mxu0
    %v2608 = vpop.f32.mrb[0].mxu0
    %2609 = vdwg.mxu0
    %2610 = vmatprep.subr.bf16.mxu0 %v2537
    %2611 = vmatpush1.bf16.msra.mxu0 %v2536
    %2612 = vmatprep.subr.bf16.mxu0 %v2541
    %2613 = vmatpush1.bf16.msra.mxu0 %v2540
    %2614 = vmatprep.subr.bf16.mxu0 %v2545
    %2615 = vmatpush1.bf16.msra.mxu0 %v2544
    %2616 = vmatprep.subr.bf16.mxu0 %v2549
    %2617 = vmatpush1.bf16.msra.mxu0 %v2548
    %2618 = vmatprep.subr.bf16.mxu0 0
    %2619 = vmatpush1.bf16.msra.mxu0 0
    %2620 = vmatprep.subr.bf16.mxu0 0
    %2621 = vmatpush1.bf16.msra.mxu0 0
    %2622 = vmatprep.subr.bf16.mxu0 0
    %2623 = vmatpush1.bf16.msra.mxu0 0
    %2624 = vmatprep.subr.bf16.mxu0 0
    %2625 = vmatpush1.bf16.msra.mxu0 0
    %2626 = vmatprep.subr.bf16.mxu0 0
    %2627 = vmatpush1.bf16.msra.mxu0 0
    %2628 = vmatprep.subr.bf16.mxu0 0
    %2629 = vmatpush1.bf16.msra.mxu0 0
    %2630 = vmatprep.subr.bf16.mxu0 0
    %2631 = vmatpush1.bf16.msra.mxu0 0
    %2632 = vmatprep.subr.bf16.mxu0 0
    %2633 = vmatpush1.bf16.msra.mxu0 0
    %2634 = vmatprep.subr.bf16.mxu0 0
    %2635 = vmatpush1.bf16.msra.mxu0 0
    %2636 = vmatprep.subr.bf16.mxu0 0
    %2637 = vmatpush1.bf16.msra.mxu0 0
    %2638 = vmatprep.subr.bf16.mxu0 0
    %2639 = vmatpush1.bf16.msra.mxu0 0
    %2640 = vmatprep.subr.bf16.mxu0 0
    %2641 = vmatpush1.bf16.msra.mxu0 0
    %2642 = vmatprep.mubr.bf16.mxu0 0
    %2643 = vmatmul.mubr.bf16.gmra.mrb[0].mxu0 %v2567
    %v2644 = vpop.f32.mrb[0].mxu0
    %v2645 = vadd.f32 0.0, %v2644
    %v2646 = vpop.f32.mrb[0].mxu0
    %v2647 = vadd.f32 0.0, %v2646
    %v2648 = vpop.f32.mrb[0].mxu0
    %v2649 = vpop.f32.mrb[0].mxu0
    %2650 = vdwg.mxu0
    %v2651 = vadd.f32 %v2336, %v2604
    %v2652 = vadd.f32 %v2337, %v2606
    %v2653 = vadd.f32 %v2338, %v2645
    %v2654 = vadd.f32 %v2339, %v2647
    %2655 = vmatprep.subr.bf16.mxu0 0
    %2656 = vmatpush1.bf16.msra.mxu0 %v169
    %2657 = vmatprep.subr.bf16.mxu0 0
    %2658 = vmatpush1.bf16.msra.mxu0 %v170
    %2659 = vmatprep.subr.bf16.mxu0 0
    %2660 = vmatpush1.bf16.msra.mxu0 %v171
    %2661 = vmatprep.subr.bf16.mxu0 0
    %2662 = vmatpush1.bf16.msra.mxu0 %v172
    %2663 = vmatprep.subr.bf16.mxu0 0
    %2664 = vmatpush1.bf16.msra.mxu0 %v173
    %2665 = vmatprep.subr.bf16.mxu0 0
    %2666 = vmatpush1.bf16.msra.mxu0 %v174
    %2667 = vmatprep.subr.bf16.mxu0 0
    %2668 = vmatpush1.bf16.msra.mxu0 %v175
    %2669 = vmatprep.subr.bf16.mxu0 0
    %2670 = vmatpush1.bf16.msra.mxu0 %v176
    %2671 = vmatprep.subr.bf16.mxu0 0
    %2672 = vmatpush1.bf16.msra.mxu0 %v177
    %2673 = vmatprep.subr.bf16.mxu0 0
    %2674 = vmatpush1.bf16.msra.mxu0 %v178
    %2675 = vmatprep.subr.bf16.mxu0 0
    %2676 = vmatpush1.bf16.msra.mxu0 %v179
    %2677 = vmatprep.subr.bf16.mxu0 0
    %2678 = vmatpush1.bf16.msra.mxu0 %v180
    %2679 = vmatprep.subr.bf16.mxu0 0
    %2680 = vmatpush1.bf16.msra.mxu0 0
    %2681 = vmatprep.subr.bf16.mxu0 0
    %2682 = vmatpush1.bf16.msra.mxu0 0
    %2683 = vmatprep.subr.bf16.mxu0 0
    %2684 = vmatpush1.bf16.msra.mxu0 0
    %2685 = vmatprep.subr.bf16.mxu0 0
    %2686 = vmatpush1.bf16.msra.mxu0 0
    %2687 = vmatprep.mubr.bf16.mxu0 %v1466
    %2688 = vmatmul.mubr.bf16.gmra.mrb[0].mxu0 %v1463
    %v2689 = vpop.f32.mrb[0].mxu0
    %v2690 = vadd.f32 0.0, %v2689
    %v2691 = vpop.f32.mrb[0].mxu0
    %v2692 = vpop.f32.mrb[0].mxu0
    %v2693 = vpop.f32.mrb[0].mxu0
    %2694 = vdwg.mxu0
    %2695 = vmatprep.subr.bf16.mxu0 0
    %2696 = vmatpush1.bf16.msra.mxu0 %v286
    %2697 = vmatprep.subr.bf16.mxu0 0
    %2698 = vmatpush1.bf16.msra.mxu0 %v287
    %2699 = vmatprep.subr.bf16.mxu0 0
    %2700 = vmatpush1.bf16.msra.mxu0 %v288
    %2701 = vmatprep.subr.bf16.mxu0 0
    %2702 = vmatpush1.bf16.msra.mxu0 %v289
    %2703 = vmatprep.subr.bf16.mxu0 0
    %2704 = vmatpush1.bf16.msra.mxu0 %v290
    %2705 = vmatprep.subr.bf16.mxu0 0
    %2706 = vmatpush1.bf16.msra.mxu0 %v291
    %2707 = vmatprep.subr.bf16.mxu0 0
    %2708 = vmatpush1.bf16.msra.mxu0 %v292
    %2709 = vmatprep.subr.bf16.mxu0 0
    %2710 = vmatpush1.bf16.msra.mxu0 %v293
    %2711 = vmatprep.subr.bf16.mxu0 0
    %2712 = vmatpush1.bf16.msra.mxu0 %v294
    %2713 = vmatprep.subr.bf16.mxu0 0
    %2714 = vmatpush1.bf16.msra.mxu0 %v295
    %2715 = vmatprep.subr.bf16.mxu0 0
    %2716 = vmatpush1.bf16.msra.mxu0 %v296
    %2717 = vmatprep.subr.bf16.mxu0 0
    %2718 = vmatpush1.bf16.msra.mxu0 %v297
    %2719 = vmatprep.subr.bf16.mxu0 0
    %2720 = vmatpush1.bf16.msra.mxu0 0
    %2721 = vmatprep.subr.bf16.mxu0 0
    %2722 = vmatpush1.bf16.msra.mxu0 0
    %2723 = vmatprep.subr.bf16.mxu0 0
    %2724 = vmatpush1.bf16.msra.mxu0 0
    %2725 = vmatprep.subr.bf16.mxu0 0
    %2726 = vmatpush1.bf16.msra.mxu0 0
    %2727 = vmatprep.mubr.bf16.mxu0 %v1372
    %2728 = vmatmul.mubr.bf16.gmra.mrb[0].mxu0 %v1369
    %v2729 = vpop.f32.mrb[0].mxu0
    %v2730 = vadd.f32 %v2690, %v2729
    %v2731 = vpop.f32.mrb[0].mxu0
    %v2732 = vpop.f32.mrb[0].mxu0
    %v2733 = vpop.f32.mrb[0].mxu0
    %2734 = vdwg.mxu0
    %2735 = vrot.lane.b32.xlu0 %v2420, 64
    %v2736 = vpop.permute.xlu0 %2735
    %v2737 = vsel %vm534, %v2104, %v2736
    %v2740 = vsel %vm193, %v2736, 0
    %2742 = vmatprep.subr.bf16.mxu0 0
    %2743 = vmatpush1.bf16.msra.mxu0 %v437
    %2744 = vmatprep.subr.bf16.mxu0 0
    %2745 = vmatpush1.bf16.msra.mxu0 %v438
    %2746 = vmatprep.subr.bf16.mxu0 0
    %2747 = vmatpush1.bf16.msra.mxu0 %v439
    %2748 = vmatprep.subr.bf16.mxu0 0
    %2749 = vmatpush1.bf16.msra.mxu0 %v440
    %2750 = vmatprep.subr.bf16.mxu0 0
    %2751 = vmatpush1.bf16.msra.mxu0 %v441
    %2752 = vmatprep.subr.bf16.mxu0 0
    %2753 = vmatpush1.bf16.msra.mxu0 %v442
    %2754 = vmatprep.subr.bf16.mxu0 0
    %2755 = vmatpush1.bf16.msra.mxu0 %v443
    %2756 = vmatprep.subr.bf16.mxu0 0
    %2757 = vmatpush1.bf16.msra.mxu0 %v444
    %2758 = vmatprep.subr.bf16.mxu0 0
    %2759 = vmatpush1.bf16.msra.mxu0 %v445
    %2760 = vmatprep.subr.bf16.mxu0 0
    %2761 = vmatpush1.bf16.msra.mxu0 %v446
    %2762 = vmatprep.subr.bf16.mxu0 0
    %2763 = vmatpush1.bf16.msra.mxu0 %v447
    %2764 = vmatprep.subr.bf16.mxu0 0
    %2765 = vmatpush1.bf16.msra.mxu0 %v448
    %2766 = vmatprep.subr.bf16.mxu0 0
    %2767 = vmatpush1.bf16.msra.mxu0 0
    %2768 = vmatprep.subr.bf16.mxu0 0
    %2769 = vmatpush1.bf16.msra.mxu0 0
    %2770 = vmatprep.subr.bf16.mxu0 0
    %2771 = vmatpush1.bf16.msra.mxu0 0
    %2772 = vmatprep.subr.bf16.mxu0 0
    %2773 = vmatpush1.bf16.msra.mxu0 0
    %2774 = vmatprep.mubr.bf16.mxu0 %v2740
    %2775 = vmatmul.mubr.bf16.gmra.mrb[0].mxu0 %v2737
    %v2776 = vpop.f32.mrb[0].mxu0
    %v2777 = vadd.f32 0.0, %v2776
    %v2778 = vpop.f32.mrb[0].mxu0
    %v2779 = vpop.f32.mrb[0].mxu0
    %v2780 = vpop.f32.mrb[0].mxu0
    %2781 = vdwg.mxu0
    %v2782 = vadd.f32 %v2730, %v2777
    %v2783 = vadd.f32 %v2782, %v509
    %v2784 = vmax.f32 %v2783, 0.0
    %v2785 = vpack.c.bf16 %v2784, %v2784
    %s2786 = scalar_lea.vmem %s3, 896
    %v2787 = vld [vmem:[%s2786] sm:$0xff]
    %v2788 = vld [vmem:[%s2786 + $0x8] sm:$0xff]
    %v2789 = vld [vmem:[%s2786 + $0x10] sm:$0xff]
    %v2790 = vld [vmem:[%s2786 + $0x18] sm:$0xff]
    %v2791 = vld [vmem:[%s2786 + $0x20] sm:$0xff]
    %v2792 = vld [vmem:[%s2786 + $0x28] sm:$0xff]
    %v2793 = vld [vmem:[%s2786 + $0x30] sm:$0xff]
    %v2794 = vld [vmem:[%s2786 + $0x38] sm:$0xff]
    %v2795 = vld [vmem:[%s2786 + $0x40] sm:$0xff]
    %v2796 = vld [vmem:[%s2786 + $0x48] sm:$0xff]
    %v2797 = vld [vmem:[%s2786 + $0x50] sm:$0xff]
    %v2798 = vld [vmem:[%s2786 + $0x58] sm:$0xff]
    %v2799 = vld [vmem:[%s2786 + $0x60] sm:$0xff]
    %v2800 = vld [vmem:[%s2786 + $0x68] sm:$0xff]
    %v2801 = vld [vmem:[%s2786 + $0x70] sm:$0xff]
    %v2802 = vld [vmem:[%s2786 + $0x78] sm:$0xff]
    %v2819 = vunpack.c.l.b16 %v2787
    %v2820 = vunpack.c.h.b16 %v2787
    %v2821 = vunpack.c.l.b16 %v2788
    %v2822 = vunpack.c.h.b16 %v2788
    %v2823 = vunpack.c.l.b16 %v2789
    %v2824 = vunpack.c.h.b16 %v2789
    %v2825 = vunpack.c.l.b16 %v2790
    %v2826 = vunpack.c.h.b16 %v2790
    %v2827 = vunpack.c.l.b16 %v2791
    %v2828 = vunpack.c.h.b16 %v2791
    %v2829 = vunpack.c.l.b16 %v2792
    %v2830 = vunpack.c.h.b16 %v2792
    %v2831 = vunpack.c.l.b16 %v2793
    %v2832 = vunpack.c.h.b16 %v2793
    %v2833 = vunpack.c.l.b16 %v2794
    %v2834 = vunpack.c.h.b16 %v2794
    %v2835 = vunpack.c.l.b16 %v2795
    %v2836 = vunpack.c.h.b16 %v2795
    %v2837 = vunpack.c.l.b16 %v2796
    %v2838 = vunpack.c.h.b16 %v2796
    %v2839 = vunpack.c.l.b16 %v2797
    %v2840 = vunpack.c.h.b16 %v2797
    %v2841 = vunpack.c.l.b16 %v2798
    %v2842 = vunpack.c.h.b16 %v2798
    %v2843 = vunpack.c.l.b16 %v2799
    %v2844 = vunpack.c.h.b16 %v2799
    %v2845 = vunpack.c.l.b16 %v2800
    %v2846 = vunpack.c.h.b16 %v2800
    %v2847 = vunpack.c.l.b16 %v2801
    %v2848 = vunpack.c.h.b16 %v2801
    %v2849 = vunpack.c.l.b16 %v2802
    %v2850 = vunpack.c.h.b16 %v2802
    %v2851 = vpack.c.b16 %v2823, %v2819
    %v2852 = vpack.c.b16 %v2824, %v2820
    %v2853 = vpack.c.b16 %v2825, %v2821
    %v2854 = vpack.c.b16 %v2826, %v2822
    %v2855 = vpack.c.b16 %v2831, %v2827
    %v2856 = vpack.c.b16 %v2832, %v2828
    %v2857 = vpack.c.b16 %v2833, %v2829
    %v2858 = vpack.c.b16 %v2834, %v2830
    %v2859 = vpack.c.b16 %v2839, %v2835
    %v2860 = vpack.c.b16 %v2840, %v2836
    %v2861 = vpack.c.b16 %v2841, %v2837
    %v2862 = vpack.c.b16 %v2842, %v2838
    %v2863 = vpack.c.b16 %v2847, %v2843
    %v2864 = vpack.c.b16 %v2848, %v2844
    %v2865 = vpack.c.b16 %v2849, %v2845
    %v2866 = vpack.c.b16 %v2850, %v2846
    %v2884 = vsel %vm193, %v2785, 0
    %2886 = vmatprep.subr.bf16.mxu0 %v2852
    %2887 = vmatpush1.bf16.msra.mxu0 %v2851
    %2888 = vmatprep.subr.bf16.mxu0 %v2856
    %2889 = vmatpush1.bf16.msra.mxu0 %v2855
    %2890 = vmatprep.subr.bf16.mxu0 %v2860
    %2891 = vmatpush1.bf16.msra.mxu0 %v2859
    %2892 = vmatprep.subr.bf16.mxu0 %v2864
    %2893 = vmatpush1.bf16.msra.mxu0 %v2863
    %2894 = vmatprep.subr.bf16.mxu0 0
    %2895 = vmatpush1.bf16.msra.mxu0 0
    %2896 = vmatprep.subr.bf16.mxu0 0
    %2897 = vmatpush1.bf16.msra.mxu0 0
    %2898 = vmatprep.subr.bf16.mxu0 0
    %2899 = vmatpush1.bf16.msra.mxu0 0
    %2900 = vmatprep.subr.bf16.mxu0 0
    %2901 = vmatpush1.bf16.msra.mxu0 0
    %2902 = vmatprep.subr.bf16.mxu0 0
    %2903 = vmatpush1.bf16.msra.mxu0 0
    %2904 = vmatprep.subr.bf16.mxu0 0
    %2905 = vmatpush1.bf16.msra.mxu0 0
    %2906 = vmatprep.subr.bf16.mxu0 0
    %2907 = vmatpush1.bf16.msra.mxu0 0
    %2908 = vmatprep.subr.bf16.mxu0 0
    %2909 = vmatpush1.bf16.msra.mxu0 0
    %2910 = vmatprep.subr.bf16.mxu0 0
    %2911 = vmatpush1.bf16.msra.mxu0 0
    %2912 = vmatprep.subr.bf16.mxu0 0
    %2913 = vmatpush1.bf16.msra.mxu0 0
    %2914 = vmatprep.subr.bf16.mxu0 0
    %2915 = vmatpush1.bf16.msra.mxu0 0
    %2916 = vmatprep.subr.bf16.mxu0 0
    %2917 = vmatpush1.bf16.msra.mxu0 0
    %2918 = vmatprep.mubr.bf16.mxu0 0
    %2919 = vmatmul.mubr.bf16.gmra.mrb[0].mxu0 %v2884
    %v2920 = vpop.f32.mrb[0].mxu0
    %v2921 = vadd.f32 0.0, %v2920
    %v2922 = vpop.f32.mrb[0].mxu0
    %v2923 = vadd.f32 0.0, %v2922
    %v2924 = vpop.f32.mrb[0].mxu0
    %v2925 = vpop.f32.mrb[0].mxu0
    %2926 = vdwg.mxu0
    %2927 = vmatprep.subr.bf16.mxu0 %v2854
    %2928 = vmatpush1.bf16.msra.mxu0 %v2853
    %2929 = vmatprep.subr.bf16.mxu0 %v2858
    %2930 = vmatpush1.bf16.msra.mxu0 %v2857
    %2931 = vmatprep.subr.bf16.mxu0 %v2862
    %2932 = vmatpush1.bf16.msra.mxu0 %v2861
    %2933 = vmatprep.subr.bf16.mxu0 %v2866
    %2934 = vmatpush1.bf16.msra.mxu0 %v2865
    %2935 = vmatprep.subr.bf16.mxu0 0
    %2936 = vmatpush1.bf16.msra.mxu0 0
    %2937 = vmatprep.subr.bf16.mxu0 0
    %2938 = vmatpush1.bf16.msra.mxu0 0
    %2939 = vmatprep.subr.bf16.mxu0 0
    %2940 = vmatpush1.bf16.msra.mxu0 0
    %2941 = vmatprep.subr.bf16.mxu0 0
    %2942 = vmatpush1.bf16.msra.mxu0 0
    %2943 = vmatprep.subr.bf16.mxu0 0
    %2944 = vmatpush1.bf16.msra.mxu0 0
    %2945 = vmatprep.subr.bf16.mxu0 0
    %2946 = vmatpush1.bf16.msra.mxu0 0
    %2947 = vmatprep.subr.bf16.mxu0 0
    %2948 = vmatpush1.bf16.msra.mxu0 0
    %2949 = vmatprep.subr.bf16.mxu0 0
    %2950 = vmatpush1.bf16.msra.mxu0 0
    %2951 = vmatprep.subr.bf16.mxu0 0
    %2952 = vmatpush1.bf16.msra.mxu0 0
    %2953 = vmatprep.subr.bf16.mxu0 0
    %2954 = vmatpush1.bf16.msra.mxu0 0
    %2955 = vmatprep.subr.bf16.mxu0 0
    %2956 = vmatpush1.bf16.msra.mxu0 0
    %2957 = vmatprep.subr.bf16.mxu0 0
    %2958 = vmatpush1.bf16.msra.mxu0 0
    %2959 = vmatprep.mubr.bf16.mxu0 0
    %2960 = vmatmul.mubr.bf16.gmra.mrb[0].mxu0 %v2884
    %v2961 = vpop.f32.mrb[0].mxu0
    %v2962 = vadd.f32 0.0, %v2961
    %v2963 = vpop.f32.mrb[0].mxu0
    %v2964 = vadd.f32 0.0, %v2963
    %v2965 = vpop.f32.mrb[0].mxu0
    %v2966 = vpop.f32.mrb[0].mxu0
    %2967 = vdwg.mxu0
    %v2968 = vadd.f32 %v2651, %v2921
    %v2969 = vadd.f32 %v2652, %v2923
    %v2970 = vadd.f32 %v2653, %v2962
    %v2971 = vadd.f32 %v2654, %v2964
    %2972 = vmatprep.subr.bf16.mxu0 0
    %2973 = vmatpush1.bf16.msra.mxu0 %v169
    %2974 = vmatprep.subr.bf16.mxu0 0
    %2975 = vmatpush1.bf16.msra.mxu0 %v170
    %2976 = vmatprep.subr.bf16.mxu0 0
    %2977 = vmatpush1.bf16.msra.mxu0 %v171
    %2978 = vmatprep.subr.bf16.mxu0 0
    %2979 = vmatpush1.bf16.msra.mxu0 %v172
    %2980 = vmatprep.subr.bf16.mxu0 0
    %2981 = vmatpush1.bf16.msra.mxu0 %v173
    %2982 = vmatprep.subr.bf16.mxu0 0
    %2983 = vmatpush1.bf16.msra.mxu0 %v174
    %2984 = vmatprep.subr.bf16.mxu0 0
    %2985 = vmatpush1.bf16.msra.mxu0 %v175
    %2986 = vmatprep.subr.bf16.mxu0 0
    %2987 = vmatpush1.bf16.msra.mxu0 %v176
    %2988 = vmatprep.subr.bf16.mxu0 0
    %2989 = vmatpush1.bf16.msra.mxu0 %v177
    %2990 = vmatprep.subr.bf16.mxu0 0
    %2991 = vmatpush1.bf16.msra.mxu0 %v178
    %2992 = vmatprep.subr.bf16.mxu0 0
    %2993 = vmatpush1.bf16.msra.mxu0 %v179
    %2994 = vmatprep.subr.bf16.mxu0 0
    %2995 = vmatpush1.bf16.msra.mxu0 %v180
    %2996 = vmatprep.subr.bf16.mxu0 0
    %2997 = vmatpush1.bf16.msra.mxu0 0
    %2998 = vmatprep.subr.bf16.mxu0 0
    %2999 = vmatpush1.bf16.msra.mxu0 0
    %3000 = vmatprep.subr.bf16.mxu0 0
    %3001 = vmatpush1.bf16.msra.mxu0 0
    %3002 = vmatprep.subr.bf16.mxu0 0
    %3003 = vmatpush1.bf16.msra.mxu0 0
    %3004 = vmatprep.mubr.bf16.mxu0 %v1789
    %3005 = vmatmul.mubr.bf16.gmra.mrb[0].mxu0 %v1785
    %v3006 = vpop.f32.mrb[0].mxu0
    %v3007 = vadd.f32 0.0, %v3006
    %v3008 = vpop.f32.mrb[0].mxu0
    %v3009 = vpop.f32.mrb[0].mxu0
    %v3010 = vpop.f32.mrb[0].mxu0
    %3011 = vdwg.mxu0
    %3012 = vmatprep.subr.bf16.mxu0 0
    %3013 = vmatpush1.bf16.msra.mxu0 %v286
    %3014 = vmatprep.subr.bf16.mxu0 0
    %3015 = vmatpush1.bf16.msra.mxu0 %v287
    %3016 = vmatprep.subr.bf16.mxu0 0
    %3017 = vmatpush1.bf16.msra.mxu0 %v288
    %3018 = vmatprep.subr.bf16.mxu0 0
    %3019 = vmatpush1.bf16.msra.mxu0 %v289
    %3020 = vmatprep.subr.bf16.mxu0 0
    %3021 = vmatpush1.bf16.msra.mxu0 %v290
    %3022 = vmatprep.subr.bf16.mxu0 0
    %3023 = vmatpush1.bf16.msra.mxu0 %v291
    %3024 = vmatprep.subr.bf16.mxu0 0
    %3025 = vmatpush1.bf16.msra.mxu0 %v292
    %3026 = vmatprep.subr.bf16.mxu0 0
    %3027 = vmatpush1.bf16.msra.mxu0 %v293
    %3028 = vmatprep.subr.bf16.mxu0 0
    %3029 = vmatpush1.bf16.msra.mxu0 %v294
    %3030 = vmatprep.subr.bf16.mxu0 0
    %3031 = vmatpush1.bf16.msra.mxu0 %v295
    %3032 = vmatprep.subr.bf16.mxu0 0
    %3033 = vmatpush1.bf16.msra.mxu0 %v296
    %3034 = vmatprep.subr.bf16.mxu0 0
    %3035 = vmatpush1.bf16.msra.mxu0 %v297
    %3036 = vmatprep.subr.bf16.mxu0 0
    %3037 = vmatpush1.bf16.msra.mxu0 0
    %3038 = vmatprep.subr.bf16.mxu0 0
    %3039 = vmatpush1.bf16.msra.mxu0 0
    %3040 = vmatprep.subr.bf16.mxu0 0
    %3041 = vmatpush1.bf16.msra.mxu0 0
    %3042 = vmatprep.subr.bf16.mxu0 0
    %3043 = vmatpush1.bf16.msra.mxu0 0
    %3044 = vmatprep.mubr.bf16.mxu0 %v462
    %3045 = vmatmul.mubr.bf16.gmra.mrb[0].mxu0 %v386
    %v3046 = vpop.f32.mrb[0].mxu0
    %v3047 = vadd.f32 %v3007, %v3046
    %v3048 = vpop.f32.mrb[0].mxu0
    %v3049 = vpop.f32.mrb[0].mxu0
    %v3050 = vpop.f32.mrb[0].mxu0
    %3051 = vdwg.mxu0
    %v3052 = vcombine.high %v29, %v29
    %v3054 = vunpack.c.l.s4 1966171168
    %v3055 = vunpack.c.0.s8 %v3054
    %v3056 = vlaneseq
    %v3057 = vshrl.u32 %v3056, 7
    %v3058 = vsub.s32 %v3055, %v3057
    %v3059 = vrot.slane %v3052, %v3058
    %v3060 = vcombine.high %v3059, %v3059
    %v3062 = vunpack.c.l.s4 1966171168
    %v3063 = vunpack.c.0.s8 %v3062
    %v3064 = vlaneseq
    %v3065 = vshrl.u32 %v3064, 7
    %v3066 = vsub.s32 %v3063, %v3065
    %v3067 = vrot.slane %v3059, %v3066
    %v3069 = vunpack.c.l.s4 1966171168
    %v3070 = vunpack.c.0.s8 %v3069
    %v3071 = vlaneseq
    %v3072 = vshrl.u32 %v3071, 7
    %v3073 = vsub.s32 %v3070, %v3072
    %v3074 = vrot.slane %v3060, %v3073
    %v3077 = vsel %vm193, %v3074, 0
    %3079 = vmatprep.subr.bf16.mxu0 0
    %3080 = vmatpush1.bf16.msra.mxu0 %v437
    %3081 = vmatprep.subr.bf16.mxu0 0
    %3082 = vmatpush1.bf16.msra.mxu0 %v438
    %3083 = vmatprep.subr.bf16.mxu0 0
    %3084 = vmatpush1.bf16.msra.mxu0 %v439
    %3085 = vmatprep.subr.bf16.mxu0 0
    %3086 = vmatpush1.bf16.msra.mxu0 %v440
    %3087 = vmatprep.subr.bf16.mxu0 0
    %3088 = vmatpush1.bf16.msra.mxu0 %v441
    %3089 = vmatprep.subr.bf16.mxu0 0
    %3090 = vmatpush1.bf16.msra.mxu0 %v442
    %3091 = vmatprep.subr.bf16.mxu0 0
    %3092 = vmatpush1.bf16.msra.mxu0 %v443
    %3093 = vmatprep.subr.bf16.mxu0 0
    %3094 = vmatpush1.bf16.msra.mxu0 %v444
    %3095 = vmatprep.subr.bf16.mxu0 0
    %3096 = vmatpush1.bf16.msra.mxu0 %v445
    %3097 = vmatprep.subr.bf16.mxu0 0
    %3098 = vmatpush1.bf16.msra.mxu0 %v446
    %3099 = vmatprep.subr.bf16.mxu0 0
    %3100 = vmatpush1.bf16.msra.mxu0 %v447
    %3101 = vmatprep.subr.bf16.mxu0 0
    %3102 = vmatpush1.bf16.msra.mxu0 %v448
    %3103 = vmatprep.subr.bf16.mxu0 0
    %3104 = vmatpush1.bf16.msra.mxu0 0
    %3105 = vmatprep.subr.bf16.mxu0 0
    %3106 = vmatpush1.bf16.msra.mxu0 0
    %3107 = vmatprep.subr.bf16.mxu0 0
    %3108 = vmatpush1.bf16.msra.mxu0 0
    %3109 = vmatprep.subr.bf16.mxu0 0
    %3110 = vmatpush1.bf16.msra.mxu0 0
    %3111 = vmatprep.mubr.bf16.mxu0 %v3077
    %3112 = vmatmul.mubr.bf16.gmra.mrb[0].mxu0 %v3067
    %v3113 = vpop.f32.mrb[0].mxu0
    %v3114 = vadd.f32 0.0, %v3113
    %v3115 = vpop.f32.mrb[0].mxu0
    %v3116 = vpop.f32.mrb[0].mxu0
    %v3117 = vpop.f32.mrb[0].mxu0
    %3118 = vdwg.mxu0
    %v3119 = vadd.f32 %v3047, %v3114
    %v3120 = vadd.f32 %v3119, %v509
    %v3121 = vmax.f32 %v3120, 0.0
    %v3122 = vpack.c.bf16 %v3121, %v3121
    %s3123 = scalar_lea.vmem %s3, 1024
    %v3124 = vld [vmem:[%s3123] sm:$0xff]
    %v3125 = vld [vmem:[%s3123 + $0x8] sm:$0xff]
    %v3126 = vld [vmem:[%s3123 + $0x10] sm:$0xff]
    %v3127 = vld [vmem:[%s3123 + $0x18] sm:$0xff]
    %v3128 = vld [vmem:[%s3123 + $0x20] sm:$0xff]
    %v3129 = vld [vmem:[%s3123 + $0x28] sm:$0xff]
    %v3130 = vld [vmem:[%s3123 + $0x30] sm:$0xff]
    %v3131 = vld [vmem:[%s3123 + $0x38] sm:$0xff]
    %v3132 = vld [vmem:[%s3123 + $0x40] sm:$0xff]
    %v3133 = vld [vmem:[%s3123 + $0x48] sm:$0xff]
    %v3134 = vld [vmem:[%s3123 + $0x50] sm:$0xff]
    %v3135 = vld [vmem:[%s3123 + $0x58] sm:$0xff]
    %v3136 = vld [vmem:[%s3123 + $0x60] sm:$0xff]
    %v3137 = vld [vmem:[%s3123 + $0x68] sm:$0xff]
    %v3138 = vld [vmem:[%s3123 + $0x70] sm:$0xff]
    %v3139 = vld [vmem:[%s3123 + $0x78] sm:$0xff]
    %v3156 = vunpack.c.l.b16 %v3124
    %v3157 = vunpack.c.h.b16 %v3124
    %v3158 = vunpack.c.l.b16 %v3125
    %v3159 = vunpack.c.h.b16 %v3125
    %v3160 = vunpack.c.l.b16 %v3126
    %v3161 = vunpack.c.h.b16 %v3126
    %v3162 = vunpack.c.l.b16 %v3127
    %v3163 = vunpack.c.h.b16 %v3127
    %v3164 = vunpack.c.l.b16 %v3128
    %v3165 = vunpack.c.h.b16 %v3128
    %v3166 = vunpack.c.l.b16 %v3129
    %v3167 = vunpack.c.h.b16 %v3129
    %v3168 = vunpack.c.l.b16 %v3130
    %v3169 = vunpack.c.h.b16 %v3130
    %v3170 = vunpack.c.l.b16 %v3131
    %v3171 = vunpack.c.h.b16 %v3131
    %v3172 = vunpack.c.l.b16 %v3132
    %v3173 = vunpack.c.h.b16 %v3132
    %v3174 = vunpack.c.l.b16 %v3133
    %v3175 = vunpack.c.h.b16 %v3133
    %v3176 = vunpack.c.l.b16 %v3134
    %v3177 = vunpack.c.h.b16 %v3134
    %v3178 = vunpack.c.l.b16 %v3135
    %v3179 = vunpack.c.h.b16 %v3135
    %v3180 = vunpack.c.l.b16 %v3136
    %v3181 = vunpack.c.h.b16 %v3136
    %v3182 = vunpack.c.l.b16 %v3137
    %v3183 = vunpack.c.h.b16 %v3137
    %v3184 = vunpack.c.l.b16 %v3138
    %v3185 = vunpack.c.h.b16 %v3138
    %v3186 = vunpack.c.l.b16 %v3139
    %v3187 = vunpack.c.h.b16 %v3139
    %v3188 = vpack.c.b16 %v3160, %v3156
    %v3189 = vpack.c.b16 %v3161, %v3157
    %v3190 = vpack.c.b16 %v3162, %v3158
    %v3191 = vpack.c.b16 %v3163, %v3159
    %v3192 = vpack.c.b16 %v3168, %v3164
    %v3193 = vpack.c.b16 %v3169, %v3165
    %v3194 = vpack.c.b16 %v3170, %v3166
    %v3195 = vpack.c.b16 %v3171, %v3167
    %v3196 = vpack.c.b16 %v3176, %v3172
    %v3197 = vpack.c.b16 %v3177, %v3173
    %v3198 = vpack.c.b16 %v3178, %v3174
    %v3199 = vpack.c.b16 %v3179, %v3175
    %v3200 = vpack.c.b16 %v3184, %v3180
    %v3201 = vpack.c.b16 %v3185, %v3181
    %v3202 = vpack.c.b16 %v3186, %v3182
    %v3203 = vpack.c.b16 %v3187, %v3183
    %v3221 = vsel %vm193, %v3122, 0
    %3223 = vmatprep.subr.bf16.mxu0 %v3189
    %3224 = vmatpush1.bf16.msra.mxu0 %v3188
    %3225 = vmatprep.subr.bf16.mxu0 %v3193
    %3226 = vmatpush1.bf16.msra.mxu0 %v3192
    %3227 = vmatprep.subr.bf16.mxu0 %v3197
    %3228 = vmatpush1.bf16.msra.mxu0 %v3196
    %3229 = vmatprep.subr.bf16.mxu0 %v3201
    %3230 = vmatpush1.bf16.msra.mxu0 %v3200
    %3231 = vmatprep.subr.bf16.mxu0 0
    %3232 = vmatpush1.bf16.msra.mxu0 0
    %3233 = vmatprep.subr.bf16.mxu0 0
    %3234 = vmatpush1.bf16.msra.mxu0 0
    %3235 = vmatprep.subr.bf16.mxu0 0
    %3236 = vmatpush1.bf16.msra.mxu0 0
    %3237 = vmatprep.subr.bf16.mxu0 0
    %3238 = vmatpush1.bf16.msra.mxu0 0
    %3239 = vmatprep.subr.bf16.mxu0 0
    %3240 = vmatpush1.bf16.msra.mxu0 0
    %3241 = vmatprep.subr.bf16.mxu0 0
    %3242 = vmatpush1.bf16.msra.mxu0 0
    %3243 = vmatprep.subr.bf16.mxu0 0
    %3244 = vmatpush1.bf16.msra.mxu0 0
    %3245 = vmatprep.subr.bf16.mxu0 0
    %3246 = vmatpush1.bf16.msra.mxu0 0
    %3247 = vmatprep.subr.bf16.mxu0 0
    %3248 = vmatpush1.bf16.msra.mxu0 0
    %3249 = vmatprep.subr.bf16.mxu0 0
    %3250 = vmatpush1.bf16.msra.mxu0 0
    %3251 = vmatprep.subr.bf16.mxu0 0
    %3252 = vmatpush1.bf16.msra.mxu0 0
    %3253 = vmatprep.subr.bf16.mxu0 0
    %3254 = vmatpush1.bf16.msra.mxu0 0
    %3255 = vmatprep.mubr.bf16.mxu0 0
    %3256 = vmatmul.mubr.bf16.gmra.mrb[0].mxu0 %v3221
    %v3257 = vpop.f32.mrb[0].mxu0
    %v3258 = vadd.f32 0.0, %v3257
    %v3259 = vpop.f32.mrb[0].mxu0
    %v3260 = vadd.f32 0.0, %v3259
    %v3261 = vpop.f32.mrb[0].mxu0
    %v3262 = vpop.f32.mrb[0].mxu0
    %3263 = vdwg.mxu0
    %3264 = vmatprep.subr.bf16.mxu0 %v3191
    %3265 = vmatpush1.bf16.msra.mxu0 %v3190
    %3266 = vmatprep.subr.bf16.mxu0 %v3195
    %3267 = vmatpush1.bf16.msra.mxu0 %v3194
    %3268 = vmatprep.subr.bf16.mxu0 %v3199
    %3269 = vmatpush1.bf16.msra.mxu0 %v3198
    %3270 = vmatprep.subr.bf16.mxu0 %v3203
    %3271 = vmatpush1.bf16.msra.mxu0 %v3202
    %3272 = vmatprep.subr.bf16.mxu0 0
    %3273 = vmatpush1.bf16.msra.mxu0 0
    %3274 = vmatprep.subr.bf16.mxu0 0
    %3275 = vmatpush1.bf16.msra.mxu0 0
    %3276 = vmatprep.subr.bf16.mxu0 0
    %3277 = vmatpush1.bf16.msra.mxu0 0
    %3278 = vmatprep.subr.bf16.mxu0 0
    %3279 = vmatpush1.bf16.msra.mxu0 0
    %3280 = vmatprep.subr.bf16.mxu0 0
    %3281 = vmatpush1.bf16.msra.mxu0 0
    %3282 = vmatprep.subr.bf16.mxu0 0
    %3283 = vmatpush1.bf16.msra.mxu0 0
    %3284 = vmatprep.subr.bf16.mxu0 0
    %3285 = vmatpush1.bf16.msra.mxu0 0
    %3286 = vmatprep.subr.bf16.mxu0 0
    %3287 = vmatpush1.bf16.msra.mxu0 0
    %3288 = vmatprep.subr.bf16.mxu0 0
    %3289 = vmatpush1.bf16.msra.mxu0 0
    %3290 = vmatprep.subr.bf16.mxu0 0
    %3291 = vmatpush1.bf16.msra.mxu0 0
    %3292 = vmatprep.subr.bf16.mxu0 0
    %3293 = vmatpush1.bf16.msra.mxu0 0
    %3294 = vmatprep.subr.bf16.mxu0 0
    %3295 = vmatpush1.bf16.msra.mxu0 0
    %3296 = vmatprep.mubr.bf16.mxu0 0
    %3297 = vmatmul.mubr.bf16.gmra.mrb[0].mxu0 %v3221
    %v3298 = vpop.f32.mrb[0].mxu0
    %v3299 = vadd.f32 0.0, %v3298
    %v3300 = vpop.f32.mrb[0].mxu0
    %v3301 = vadd.f32 0.0, %v3300
    %v3302 = vpop.f32.mrb[0].mxu0
    %v3303 = vpop.f32.mrb[0].mxu0
    %3304 = vdwg.mxu0
    %v3305 = vadd.f32 %v2968, %v3258
    %v3306 = vadd.f32 %v2969, %v3260
    %v3307 = vadd.f32 %v2970, %v3299
    %v3308 = vadd.f32 %v2971, %v3301
    %3309 = vmatprep.subr.bf16.mxu0 0
    %3310 = vmatpush1.bf16.msra.mxu0 %v169
    %3311 = vmatprep.subr.bf16.mxu0 0
    %3312 = vmatpush1.bf16.msra.mxu0 %v170
    %3313 = vmatprep.subr.bf16.mxu0 0
    %3314 = vmatpush1.bf16.msra.mxu0 %v171
    %3315 = vmatprep.subr.bf16.mxu0 0
    %3316 = vmatpush1.bf16.msra.mxu0 %v172
    %3317 = vmatprep.subr.bf16.mxu0 0
    %3318 = vmatpush1.bf16.msra.mxu0 %v173
    %3319 = vmatprep.subr.bf16.mxu0 0
    %3320 = vmatpush1.bf16.msra.mxu0 %v174
    %3321 = vmatprep.subr.bf16.mxu0 0
    %3322 = vmatpush1.bf16.msra.mxu0 %v175
    %3323 = vmatprep.subr.bf16.mxu0 0
    %3324 = vmatpush1.bf16.msra.mxu0 %v176
    %3325 = vmatprep.subr.bf16.mxu0 0
    %3326 = vmatpush1.bf16.msra.mxu0 %v177
    %3327 = vmatprep.subr.bf16.mxu0 0
    %3328 = vmatpush1.bf16.msra.mxu0 %v178
    %3329 = vmatprep.subr.bf16.mxu0 0
    %3330 = vmatpush1.bf16.msra.mxu0 %v179
    %3331 = vmatprep.subr.bf16.mxu0 0
    %3332 = vmatpush1.bf16.msra.mxu0 %v180
    %3333 = vmatprep.subr.bf16.mxu0 0
    %3334 = vmatpush1.bf16.msra.mxu0 0
    %3335 = vmatprep.subr.bf16.mxu0 0
    %3336 = vmatpush1.bf16.msra.mxu0 0
    %3337 = vmatprep.subr.bf16.mxu0 0
    %3338 = vmatpush1.bf16.msra.mxu0 0
    %3339 = vmatprep.subr.bf16.mxu0 0
    %3340 = vmatpush1.bf16.msra.mxu0 0
    %3341 = vmatprep.mubr.bf16.mxu0 %v2108
    %3342 = vmatmul.mubr.bf16.gmra.mrb[0].mxu0 %v2105
    %v3343 = vpop.f32.mrb[0].mxu0
    %v3344 = vadd.f32 0.0, %v3343
    %v3345 = vpop.f32.mrb[0].mxu0
    %v3346 = vpop.f32.mrb[0].mxu0
    %v3347 = vpop.f32.mrb[0].mxu0
    %3348 = vdwg.mxu0
    %3349 = vmatprep.subr.bf16.mxu0 0
    %3350 = vmatpush1.bf16.msra.mxu0 %v286
    %3351 = vmatprep.subr.bf16.mxu0 0
    %3352 = vmatpush1.bf16.msra.mxu0 %v287
    %3353 = vmatprep.subr.bf16.mxu0 0
    %3354 = vmatpush1.bf16.msra.mxu0 %v288
    %3355 = vmatprep.subr.bf16.mxu0 0
    %3356 = vmatpush1.bf16.msra.mxu0 %v289
    %3357 = vmatprep.subr.bf16.mxu0 0
    %3358 = vmatpush1.bf16.msra.mxu0 %v290
    %3359 = vmatprep.subr.bf16.mxu0 0
    %3360 = vmatpush1.bf16.msra.mxu0 %v291
    %3361 = vmatprep.subr.bf16.mxu0 0
    %3362 = vmatpush1.bf16.msra.mxu0 %v292
    %3363 = vmatprep.subr.bf16.mxu0 0
    %3364 = vmatpush1.bf16.msra.mxu0 %v293
    %3365 = vmatprep.subr.bf16.mxu0 0
    %3366 = vmatpush1.bf16.msra.mxu0 %v294
    %3367 = vmatprep.subr.bf16.mxu0 0
    %3368 = vmatpush1.bf16.msra.mxu0 %v295
    %3369 = vmatprep.subr.bf16.mxu0 0
    %3370 = vmatpush1.bf16.msra.mxu0 %v296
    %3371 = vmatprep.subr.bf16.mxu0 0
    %3372 = vmatpush1.bf16.msra.mxu0 %v297
    %3373 = vmatprep.subr.bf16.mxu0 0
    %3374 = vmatpush1.bf16.msra.mxu0 0
    %3375 = vmatprep.subr.bf16.mxu0 0
    %3376 = vmatpush1.bf16.msra.mxu0 0
    %3377 = vmatprep.subr.bf16.mxu0 0
    %3378 = vmatpush1.bf16.msra.mxu0 0
    %3379 = vmatprep.subr.bf16.mxu0 0
    %3380 = vmatpush1.bf16.msra.mxu0 0
    %3381 = vmatprep.mubr.bf16.mxu0 %v636
    %3382 = vmatmul.mubr.bf16.gmra.mrb[0].mxu0 %v633
    %v3383 = vpop.f32.mrb[0].mxu0
    %v3384 = vadd.f32 %v3344, %v3383
    %v3385 = vpop.f32.mrb[0].mxu0
    %v3386 = vpop.f32.mrb[0].mxu0
    %v3387 = vpop.f32.mrb[0].mxu0
    %3388 = vdwg.mxu0
    %3389 = vrot.lane.b32.xlu0 %v3067, 64
    %v3390 = vpop.permute.xlu0 %3389
    %3391 = vrot.lane.b32.xlu0 %v3074, 64
    %v3392 = vpop.permute.xlu0 %3391
    %v3393 = vsel %vm534, %v3390, %v3392
    %v3396 = vsel %vm193, %v3392, 0
    %3398 = vmatprep.subr.bf16.mxu0 0
    %3399 = vmatpush1.bf16.msra.mxu0 %v437
    %3400 = vmatprep.subr.bf16.mxu0 0
    %3401 = vmatpush1.bf16.msra.mxu0 %v438
    %3402 = vmatprep.subr.bf16.mxu0 0
    %3403 = vmatpush1.bf16.msra.mxu0 %v439
    %3404 = vmatprep.subr.bf16.mxu0 0
    %3405 = vmatpush1.bf16.msra.mxu0 %v440
    %3406 = vmatprep.subr.bf16.mxu0 0
    %3407 = vmatpush1.bf16.msra.mxu0 %v441
    %3408 = vmatprep.subr.bf16.mxu0 0
    %3409 = vmatpush1.bf16.msra.mxu0 %v442
    %3410 = vmatprep.subr.bf16.mxu0 0
    %3411 = vmatpush1.bf16.msra.mxu0 %v443
    %3412 = vmatprep.subr.bf16.mxu0 0
    %3413 = vmatpush1.bf16.msra.mxu0 %v444
    %3414 = vmatprep.subr.bf16.mxu0 0
    %3415 = vmatpush1.bf16.msra.mxu0 %v445
    %3416 = vmatprep.subr.bf16.mxu0 0
    %3417 = vmatpush1.bf16.msra.mxu0 %v446
    %3418 = vmatprep.subr.bf16.mxu0 0
    %3419 = vmatpush1.bf16.msra.mxu0 %v447
    %3420 = vmatprep.subr.bf16.mxu0 0
    %3421 = vmatpush1.bf16.msra.mxu0 %v448
    %3422 = vmatprep.subr.bf16.mxu0 0
    %3423 = vmatpush1.bf16.msra.mxu0 0
    %3424 = vmatprep.subr.bf16.mxu0 0
    %3425 = vmatpush1.bf16.msra.mxu0 0
    %3426 = vmatprep.subr.bf16.mxu0 0
    %3427 = vmatpush1.bf16.msra.mxu0 0
    %3428 = vmatprep.subr.bf16.mxu0 0
    %3429 = vmatpush1.bf16.msra.mxu0 0
    %3430 = vmatprep.mubr.bf16.mxu0 %v3396
    %3431 = vmatmul.mubr.bf16.gmra.mrb[0].mxu0 %v3393
    %v3432 = vpop.f32.mrb[0].mxu0
    %v3433 = vadd.f32 0.0, %v3432
    %v3434 = vpop.f32.mrb[0].mxu0
    %v3435 = vpop.f32.mrb[0].mxu0
    %v3436 = vpop.f32.mrb[0].mxu0
    %3437 = vdwg.mxu0
    %v3438 = vadd.f32 %v3384, %v3433
    %v3439 = vadd.f32 %v3438, %v509
    %v3440 = vmax.f32 %v3439, 0.0
    %v3441 = vpack.c.bf16 %v3440, %v3440
    %s3442 = scalar_lea.vmem %s3, 1152
    %v3443 = vld [vmem:[%s3442] sm:$0xff]
    %v3444 = vld [vmem:[%s3442 + $0x8] sm:$0xff]
    %v3445 = vld [vmem:[%s3442 + $0x10] sm:$0xff]
    %v3446 = vld [vmem:[%s3442 + $0x18] sm:$0xff]
    %v3447 = vld [vmem:[%s3442 + $0x20] sm:$0xff]
    %v3448 = vld [vmem:[%s3442 + $0x28] sm:$0xff]
    %v3449 = vld [vmem:[%s3442 + $0x30] sm:$0xff]
    %v3450 = vld [vmem:[%s3442 + $0x38] sm:$0xff]
    %v3451 = vld [vmem:[%s3442 + $0x40] sm:$0xff]
    %v3452 = vld [vmem:[%s3442 + $0x48] sm:$0xff]
    %v3453 = vld [vmem:[%s3442 + $0x50] sm:$0xff]
    %v3454 = vld [vmem:[%s3442 + $0x58] sm:$0xff]
    %v3455 = vld [vmem:[%s3442 + $0x60] sm:$0xff]
    %v3456 = vld [vmem:[%s3442 + $0x68] sm:$0xff]
    %v3457 = vld [vmem:[%s3442 + $0x70] sm:$0xff]
    %v3458 = vld [vmem:[%s3442 + $0x78] sm:$0xff]
    %v3475 = vunpack.c.l.b16 %v3443
    %v3476 = vunpack.c.h.b16 %v3443
    %v3477 = vunpack.c.l.b16 %v3444
    %v3478 = vunpack.c.h.b16 %v3444
    %v3479 = vunpack.c.l.b16 %v3445
    %v3480 = vunpack.c.h.b16 %v3445
    %v3481 = vunpack.c.l.b16 %v3446
    %v3482 = vunpack.c.h.b16 %v3446
    %v3483 = vunpack.c.l.b16 %v3447
    %v3484 = vunpack.c.h.b16 %v3447
    %v3485 = vunpack.c.l.b16 %v3448
    %v3486 = vunpack.c.h.b16 %v3448
    %v3487 = vunpack.c.l.b16 %v3449
    %v3488 = vunpack.c.h.b16 %v3449
    %v3489 = vunpack.c.l.b16 %v3450
    %v3490 = vunpack.c.h.b16 %v3450
    %v3491 = vunpack.c.l.b16 %v3451
    %v3492 = vunpack.c.h.b16 %v3451
    %v3493 = vunpack.c.l.b16 %v3452
    %v3494 = vunpack.c.h.b16 %v3452
    %v3495 = vunpack.c.l.b16 %v3453
    %v3496 = vunpack.c.h.b16 %v3453
    %v3497 = vunpack.c.l.b16 %v3454
    %v3498 = vunpack.c.h.b16 %v3454
    %v3499 = vunpack.c.l.b16 %v3455
    %v3500 = vunpack.c.h.b16 %v3455
    %v3501 = vunpack.c.l.b16 %v3456
    %v3502 = vunpack.c.h.b16 %v3456
    %v3503 = vunpack.c.l.b16 %v3457
    %v3504 = vunpack.c.h.b16 %v3457
    %v3505 = vunpack.c.l.b16 %v3458
    %v3506 = vunpack.c.h.b16 %v3458
    %v3507 = vpack.c.b16 %v3479, %v3475
    %v3508 = vpack.c.b16 %v3480, %v3476
    %v3509 = vpack.c.b16 %v3481, %v3477
    %v3510 = vpack.c.b16 %v3482, %v3478
    %v3511 = vpack.c.b16 %v3487, %v3483
    %v3512 = vpack.c.b16 %v3488, %v3484
    %v3513 = vpack.c.b16 %v3489, %v3485
    %v3514 = vpack.c.b16 %v3490, %v3486
    %v3515 = vpack.c.b16 %v3495, %v3491
    %v3516 = vpack.c.b16 %v3496, %v3492
    %v3517 = vpack.c.b16 %v3497, %v3493
    %v3518 = vpack.c.b16 %v3498, %v3494
    %v3519 = vpack.c.b16 %v3503, %v3499
    %v3520 = vpack.c.b16 %v3504, %v3500
    %v3521 = vpack.c.b16 %v3505, %v3501
    %v3522 = vpack.c.b16 %v3506, %v3502
    %v3540 = vsel %vm193, %v3441, 0
    %3542 = vmatprep.subr.bf16.mxu0 %v3508
    %3543 = vmatpush1.bf16.msra.mxu0 %v3507
    %3544 = vmatprep.subr.bf16.mxu0 %v3512
    %3545 = vmatpush1.bf16.msra.mxu0 %v3511
    %3546 = vmatprep.subr.bf16.mxu0 %v3516
    %3547 = vmatpush1.bf16.msra.mxu0 %v3515
    %3548 = vmatprep.subr.bf16.mxu0 %v3520
    %3549 = vmatpush1.bf16.msra.mxu0 %v3519
    %3550 = vmatprep.subr.bf16.mxu0 0
    %3551 = vmatpush1.bf16.msra.mxu0 0
    %3552 = vmatprep.subr.bf16.mxu0 0
    %3553 = vmatpush1.bf16.msra.mxu0 0
    %3554 = vmatprep.subr.bf16.mxu0 0
    %3555 = vmatpush1.bf16.msra.mxu0 0
    %3556 = vmatprep.subr.bf16.mxu0 0
    %3557 = vmatpush1.bf16.msra.mxu0 0
    %3558 = vmatprep.subr.bf16.mxu0 0
    %3559 = vmatpush1.bf16.msra.mxu0 0
    %3560 = vmatprep.subr.bf16.mxu0 0
    %3561 = vmatpush1.bf16.msra.mxu0 0
    %3562 = vmatprep.subr.bf16.mxu0 0
    %3563 = vmatpush1.bf16.msra.mxu0 0
    %3564 = vmatprep.subr.bf16.mxu0 0
    %3565 = vmatpush1.bf16.msra.mxu0 0
    %3566 = vmatprep.subr.bf16.mxu0 0
    %3567 = vmatpush1.bf16.msra.mxu0 0
    %3568 = vmatprep.subr.bf16.mxu0 0
    %3569 = vmatpush1.bf16.msra.mxu0 0
    %3570 = vmatprep.subr.bf16.mxu0 0
    %3571 = vmatpush1.bf16.msra.mxu0 0
    %3572 = vmatprep.subr.bf16.mxu0 0
    %3573 = vmatpush1.bf16.msra.mxu0 0
    %3574 = vmatprep.mubr.bf16.mxu0 0
    %3575 = vmatmul.mubr.bf16.gmra.mrb[0].mxu0 %v3540
    %v3576 = vpop.f32.mrb[0].mxu0
    %v3577 = vadd.f32 0.0, %v3576
    %v3578 = vpop.f32.mrb[0].mxu0
    %v3579 = vadd.f32 0.0, %v3578
    %v3580 = vpop.f32.mrb[0].mxu0
    %v3581 = vpop.f32.mrb[0].mxu0
    %3582 = vdwg.mxu0
    %3583 = vmatprep.subr.bf16.mxu0 %v3510
    %3584 = vmatpush1.bf16.msra.mxu0 %v3509
    %3585 = vmatprep.subr.bf16.mxu0 %v3514
    %3586 = vmatpush1.bf16.msra.mxu0 %v3513
    %3587 = vmatprep.subr.bf16.mxu0 %v3518
    %3588 = vmatpush1.bf16.msra.mxu0 %v3517
    %3589 = vmatprep.subr.bf16.mxu0 %v3522
    %3590 = vmatpush1.bf16.msra.mxu0 %v3521
    %3591 = vmatprep.subr.bf16.mxu0 0
    %3592 = vmatpush1.bf16.msra.mxu0 0
    %3593 = vmatprep.subr.bf16.mxu0 0
    %3594 = vmatpush1.bf16.msra.mxu0 0
    %3595 = vmatprep.subr.bf16.mxu0 0
    %3596 = vmatpush1.bf16.msra.mxu0 0
    %3597 = vmatprep.subr.bf16.mxu0 0
    %3598 = vmatpush1.bf16.msra.mxu0 0
    %3599 = vmatprep.subr.bf16.mxu0 0
    %3600 = vmatpush1.bf16.msra.mxu0 0
    %3601 = vmatprep.subr.bf16.mxu0 0
    %3602 = vmatpush1.bf16.msra.mxu0 0
    %3603 = vmatprep.subr.bf16.mxu0 0
    %3604 = vmatpush1.bf16.msra.mxu0 0
    %3605 = vmatprep.subr.bf16.mxu0 0
    %3606 = vmatpush1.bf16.msra.mxu0 0
    %3607 = vmatprep.subr.bf16.mxu0 0
    %3608 = vmatpush1.bf16.msra.mxu0 0
    %3609 = vmatprep.subr.bf16.mxu0 0
    %3610 = vmatpush1.bf16.msra.mxu0 0
    %3611 = vmatprep.subr.bf16.mxu0 0
    %3612 = vmatpush1.bf16.msra.mxu0 0
    %3613 = vmatprep.subr.bf16.mxu0 0
    %3614 = vmatpush1.bf16.msra.mxu0 0
    %3615 = vmatprep.mubr.bf16.mxu0 0
    %3616 = vmatmul.mubr.bf16.gmra.mrb[0].mxu0 %v3540
    %v3617 = vpop.f32.mrb[0].mxu0
    %v3618 = vadd.f32 0.0, %v3617
    %v3619 = vpop.f32.mrb[0].mxu0
    %v3620 = vadd.f32 0.0, %v3619
    %v3621 = vpop.f32.mrb[0].mxu0
    %v3622 = vpop.f32.mrb[0].mxu0
    %3623 = vdwg.mxu0
    %v3624 = vadd.f32 %v3305, %v3577
    %v3625 = vadd.f32 %v3306, %v3579
    %v3626 = vadd.f32 %v3307, %v3618
    %v3627 = vadd.f32 %v3308, %v3620
    %3628 = vmatprep.subr.bf16.mxu0 0
    %3629 = vmatpush1.bf16.msra.mxu0 %v169
    %3630 = vmatprep.subr.bf16.mxu0 0
    %3631 = vmatpush1.bf16.msra.mxu0 %v170
    %3632 = vmatprep.subr.bf16.mxu0 0
    %3633 = vmatpush1.bf16.msra.mxu0 %v171
    %3634 = vmatprep.subr.bf16.mxu0 0
    %3635 = vmatpush1.bf16.msra.mxu0 %v172
    %3636 = vmatprep.subr.bf16.mxu0 0
    %3637 = vmatpush1.bf16.msra.mxu0 %v173
    %3638 = vmatprep.subr.bf16.mxu0 0
    %3639 = vmatpush1.bf16.msra.mxu0 %v174
    %3640 = vmatprep.subr.bf16.mxu0 0
    %3641 = vmatpush1.bf16.msra.mxu0 %v175
    %3642 = vmatprep.subr.bf16.mxu0 0
    %3643 = vmatpush1.bf16.msra.mxu0 %v176
    %3644 = vmatprep.subr.bf16.mxu0 0
    %3645 = vmatpush1.bf16.msra.mxu0 %v177
    %3646 = vmatprep.subr.bf16.mxu0 0
    %3647 = vmatpush1.bf16.msra.mxu0 %v178
    %3648 = vmatprep.subr.bf16.mxu0 0
    %3649 = vmatpush1.bf16.msra.mxu0 %v179
    %3650 = vmatprep.subr.bf16.mxu0 0
    %3651 = vmatpush1.bf16.msra.mxu0 %v180
    %3652 = vmatprep.subr.bf16.mxu0 0
    %3653 = vmatpush1.bf16.msra.mxu0 0
    %3654 = vmatprep.subr.bf16.mxu0 0
    %3655 = vmatpush1.bf16.msra.mxu0 0
    %3656 = vmatprep.subr.bf16.mxu0 0
    %3657 = vmatpush1.bf16.msra.mxu0 0
    %3658 = vmatprep.subr.bf16.mxu0 0
    %3659 = vmatpush1.bf16.msra.mxu0 0
    %3660 = vmatprep.mubr.bf16.mxu0 %v2423
    %3661 = vmatmul.mubr.bf16.gmra.mrb[0].mxu0 %v1786
    %v3662 = vpop.f32.mrb[0].mxu0
    %v3663 = vadd.f32 0.0, %v3662
    %v3664 = vpop.f32.mrb[0].mxu0
    %v3665 = vpop.f32.mrb[0].mxu0
    %v3666 = vpop.f32.mrb[0].mxu0
    %3667 = vdwg.mxu0
    %3668 = vmatprep.subr.bf16.mxu0 0
    %3669 = vmatpush1.bf16.msra.mxu0 %v286
    %3670 = vmatprep.subr.bf16.mxu0 0
    %3671 = vmatpush1.bf16.msra.mxu0 %v287
    %3672 = vmatprep.subr.bf16.mxu0 0
    %3673 = vmatpush1.bf16.msra.mxu0 %v288
    %3674 = vmatprep.subr.bf16.mxu0 0
    %3675 = vmatpush1.bf16.msra.mxu0 %v289
    %3676 = vmatprep.subr.bf16.mxu0 0
    %3677 = vmatpush1.bf16.msra.mxu0 %v290
    %3678 = vmatprep.subr.bf16.mxu0 0
    %3679 = vmatpush1.bf16.msra.mxu0 %v291
    %3680 = vmatprep.subr.bf16.mxu0 0
    %3681 = vmatpush1.bf16.msra.mxu0 %v292
    %3682 = vmatprep.subr.bf16.mxu0 0
    %3683 = vmatpush1.bf16.msra.mxu0 %v293
    %3684 = vmatprep.subr.bf16.mxu0 0
    %3685 = vmatpush1.bf16.msra.mxu0 %v294
    %3686 = vmatprep.subr.bf16.mxu0 0
    %3687 = vmatpush1.bf16.msra.mxu0 %v295
    %3688 = vmatprep.subr.bf16.mxu0 0
    %3689 = vmatpush1.bf16.msra.mxu0 %v296
    %3690 = vmatprep.subr.bf16.mxu0 0
    %3691 = vmatpush1.bf16.msra.mxu0 %v297
    %3692 = vmatprep.subr.bf16.mxu0 0
    %3693 = vmatpush1.bf16.msra.mxu0 0
    %3694 = vmatprep.subr.bf16.mxu0 0
    %3695 = vmatpush1.bf16.msra.mxu0 0
    %3696 = vmatprep.subr.bf16.mxu0 0
    %3697 = vmatpush1.bf16.msra.mxu0 0
    %3698 = vmatprep.subr.bf16.mxu0 0
    %3699 = vmatpush1.bf16.msra.mxu0 0
    %3700 = vmatprep.mubr.bf16.mxu0 %v1135
    %3701 = vmatmul.mubr.bf16.gmra.mrb[0].mxu0 %v387
    %v3702 = vpop.f32.mrb[0].mxu0
    %v3703 = vadd.f32 %v3663, %v3702
    %v3704 = vpop.f32.mrb[0].mxu0
    %v3705 = vpop.f32.mrb[0].mxu0
    %v3706 = vpop.f32.mrb[0].mxu0
    %3707 = vdwg.mxu0
    %v3708 = vcombine.high %v3067, %v3067
    %v3711 = vsel %vm193, %v3708, 0
    %3713 = vmatprep.subr.bf16.mxu0 0
    %3714 = vmatpush1.bf16.msra.mxu0 %v437
    %3715 = vmatprep.subr.bf16.mxu0 0
    %3716 = vmatpush1.bf16.msra.mxu0 %v438
    %3717 = vmatprep.subr.bf16.mxu0 0
    %3718 = vmatpush1.bf16.msra.mxu0 %v439
    %3719 = vmatprep.subr.bf16.mxu0 0
    %3720 = vmatpush1.bf16.msra.mxu0 %v440
    %3721 = vmatprep.subr.bf16.mxu0 0
    %3722 = vmatpush1.bf16.msra.mxu0 %v441
    %3723 = vmatprep.subr.bf16.mxu0 0
    %3724 = vmatpush1.bf16.msra.mxu0 %v442
    %3725 = vmatprep.subr.bf16.mxu0 0
    %3726 = vmatpush1.bf16.msra.mxu0 %v443
    %3727 = vmatprep.subr.bf16.mxu0 0
    %3728 = vmatpush1.bf16.msra.mxu0 %v444
    %3729 = vmatprep.subr.bf16.mxu0 0
    %3730 = vmatpush1.bf16.msra.mxu0 %v445
    %3731 = vmatprep.subr.bf16.mxu0 0
    %3732 = vmatpush1.bf16.msra.mxu0 %v446
    %3733 = vmatprep.subr.bf16.mxu0 0
    %3734 = vmatpush1.bf16.msra.mxu0 %v447
    %3735 = vmatprep.subr.bf16.mxu0 0
    %3736 = vmatpush1.bf16.msra.mxu0 %v448
    %3737 = vmatprep.subr.bf16.mxu0 0
    %3738 = vmatpush1.bf16.msra.mxu0 0
    %3739 = vmatprep.subr.bf16.mxu0 0
    %3740 = vmatpush1.bf16.msra.mxu0 0
    %3741 = vmatprep.subr.bf16.mxu0 0
    %3742 = vmatpush1.bf16.msra.mxu0 0
    %3743 = vmatprep.subr.bf16.mxu0 0
    %3744 = vmatpush1.bf16.msra.mxu0 0
    %3745 = vmatprep.mubr.bf16.mxu0 %v3711
    %3746 = vmatmul.mubr.bf16.gmra.mrb[0].mxu0 %v3074
    %v3747 = vpop.f32.mrb[0].mxu0
    %v3748 = vadd.f32 0.0, %v3747
    %v3749 = vpop.f32.mrb[0].mxu0
    %v3750 = vpop.f32.mrb[0].mxu0
    %v3751 = vpop.f32.mrb[0].mxu0
    %3752 = vdwg.mxu0
    %v3753 = vadd.f32 %v3703, %v3748
    %v3754 = vadd.f32 %v3753, %v509
    %v3755 = vmax.f32 %v3754, 0.0
    %v3756 = vpack.c.bf16 %v3755, %v3755
    %s3757 = scalar_lea.vmem %s3, 1280
    %v3758 = vld [vmem:[%s3757] sm:$0xff]
    %v3759 = vld [vmem:[%s3757 + $0x8] sm:$0xff]
    %v3760 = vld [vmem:[%s3757 + $0x10] sm:$0xff]
    %v3761 = vld [vmem:[%s3757 + $0x18] sm:$0xff]
    %v3762 = vld [vmem:[%s3757 + $0x20] sm:$0xff]
    %v3763 = vld [vmem:[%s3757 + $0x28] sm:$0xff]
    %v3764 = vld [vmem:[%s3757 + $0x30] sm:$0xff]
    %v3765 = vld [vmem:[%s3757 + $0x38] sm:$0xff]
    %v3766 = vld [vmem:[%s3757 + $0x40] sm:$0xff]
    %v3767 = vld [vmem:[%s3757 + $0x48] sm:$0xff]
    %v3768 = vld [vmem:[%s3757 + $0x50] sm:$0xff]
    %v3769 = vld [vmem:[%s3757 + $0x58] sm:$0xff]
    %v3770 = vld [vmem:[%s3757 + $0x60] sm:$0xff]
    %v3771 = vld [vmem:[%s3757 + $0x68] sm:$0xff]
    %v3772 = vld [vmem:[%s3757 + $0x70] sm:$0xff]
    %v3773 = vld [vmem:[%s3757 + $0x78] sm:$0xff]
    %v3790 = vunpack.c.l.b16 %v3758
    %v3791 = vunpack.c.h.b16 %v3758
    %v3792 = vunpack.c.l.b16 %v3759
    %v3793 = vunpack.c.h.b16 %v3759
    %v3794 = vunpack.c.l.b16 %v3760
    %v3795 = vunpack.c.h.b16 %v3760
    %v3796 = vunpack.c.l.b16 %v3761
    %v3797 = vunpack.c.h.b16 %v3761
    %v3798 = vunpack.c.l.b16 %v3762
    %v3799 = vunpack.c.h.b16 %v3762
    %v3800 = vunpack.c.l.b16 %v3763
    %v3801 = vunpack.c.h.b16 %v3763
    %v3802 = vunpack.c.l.b16 %v3764
    %v3803 = vunpack.c.h.b16 %v3764
    %v3804 = vunpack.c.l.b16 %v3765
    %v3805 = vunpack.c.h.b16 %v3765
    %v3806 = vunpack.c.l.b16 %v3766
    %v3807 = vunpack.c.h.b16 %v3766
    %v3808 = vunpack.c.l.b16 %v3767
    %v3809 = vunpack.c.h.b16 %v3767
    %v3810 = vunpack.c.l.b16 %v3768
    %v3811 = vunpack.c.h.b16 %v3768
    %v3812 = vunpack.c.l.b16 %v3769
    %v3813 = vunpack.c.h.b16 %v3769
    %v3814 = vunpack.c.l.b16 %v3770
    %v3815 = vunpack.c.h.b16 %v3770
    %v3816 = vunpack.c.l.b16 %v3771
    %v3817 = vunpack.c.h.b16 %v3771
    %v3818 = vunpack.c.l.b16 %v3772
    %v3819 = vunpack.c.h.b16 %v3772
    %v3820 = vunpack.c.l.b16 %v3773
    %v3821 = vunpack.c.h.b16 %v3773
    %v3822 = vpack.c.b16 %v3794, %v3790
    %v3823 = vpack.c.b16 %v3795, %v3791
    %v3824 = vpack.c.b16 %v3796, %v3792
    %v3825 = vpack.c.b16 %v3797, %v3793
    %v3826 = vpack.c.b16 %v3802, %v3798
    %v3827 = vpack.c.b16 %v3803, %v3799
    %v3828 = vpack.c.b16 %v3804, %v3800
    %v3829 = vpack.c.b16 %v3805, %v3801
    %v3830 = vpack.c.b16 %v3810, %v3806
    %v3831 = vpack.c.b16 %v3811, %v3807
    %v3832 = vpack.c.b16 %v3812, %v3808
    %v3833 = vpack.c.b16 %v3813, %v3809
    %v3834 = vpack.c.b16 %v3818, %v3814
    %v3835 = vpack.c.b16 %v3819, %v3815
    %v3836 = vpack.c.b16 %v3820, %v3816
    %v3837 = vpack.c.b16 %v3821, %v3817
    %v3855 = vsel %vm193, %v3756, 0
    %3857 = vmatprep.subr.bf16.mxu0 %v3823
    %3858 = vmatpush1.bf16.msra.mxu0 %v3822
    %3859 = vmatprep.subr.bf16.mxu0 %v3827
    %3860 = vmatpush1.bf16.msra.mxu0 %v3826
    %3861 = vmatprep.subr.bf16.mxu0 %v3831
    %3862 = vmatpush1.bf16.msra.mxu0 %v3830
    %3863 = vmatprep.subr.bf16.mxu0 %v3835
    %3864 = vmatpush1.bf16.msra.mxu0 %v3834
    %3865 = vmatprep.subr.bf16.mxu0 0
    %3866 = vmatpush1.bf16.msra.mxu0 0
    %3867 = vmatprep.subr.bf16.mxu0 0
    %3868 = vmatpush1.bf16.msra.mxu0 0
    %3869 = vmatprep.subr.bf16.mxu0 0
    %3870 = vmatpush1.bf16.msra.mxu0 0
    %3871 = vmatprep.subr.bf16.mxu0 0
    %3872 = vmatpush1.bf16.msra.mxu0 0
    %3873 = vmatprep.subr.bf16.mxu0 0
    %3874 = vmatpush1.bf16.msra.mxu0 0
    %3875 = vmatprep.subr.bf16.mxu0 0
    %3876 = vmatpush1.bf16.msra.mxu0 0
    %3877 = vmatprep.subr.bf16.mxu0 0
    %3878 = vmatpush1.bf16.msra.mxu0 0
    %3879 = vmatprep.subr.bf16.mxu0 0
    %3880 = vmatpush1.bf16.msra.mxu0 0
    %3881 = vmatprep.subr.bf16.mxu0 0
    %3882 = vmatpush1.bf16.msra.mxu0 0
    %3883 = vmatprep.subr.bf16.mxu0 0
    %3884 = vmatpush1.bf16.msra.mxu0 0
    %3885 = vmatprep.subr.bf16.mxu0 0
    %3886 = vmatpush1.bf16.msra.mxu0 0
    %3887 = vmatprep.subr.bf16.mxu0 0
    %3888 = vmatpush1.bf16.msra.mxu0 0
    %3889 = vmatprep.mubr.bf16.mxu0 0
    %3890 = vmatmul.mubr.bf16.gmra.mrb[0].mxu0 %v3855
    %v3891 = vpop.f32.mrb[0].mxu0
    %v3892 = vadd.f32 0.0, %v3891
    %v3893 = vpop.f32.mrb[0].mxu0
    %v3894 = vadd.f32 0.0, %v3893
    %v3895 = vpop.f32.mrb[0].mxu0
    %v3896 = vpop.f32.mrb[0].mxu0
    %3897 = vdwg.mxu0
    %3898 = vmatprep.subr.bf16.mxu0 %v3825
    %3899 = vmatpush1.bf16.msra.mxu0 %v3824
    %3900 = vmatprep.subr.bf16.mxu0 %v3829
    %3901 = vmatpush1.bf16.msra.mxu0 %v3828
    %3902 = vmatprep.subr.bf16.mxu0 %v3833
    %3903 = vmatpush1.bf16.msra.mxu0 %v3832
    %3904 = vmatprep.subr.bf16.mxu0 %v3837
    %3905 = vmatpush1.bf16.msra.mxu0 %v3836
    %3906 = vmatprep.subr.bf16.mxu0 0
    %3907 = vmatpush1.bf16.msra.mxu0 0
    %3908 = vmatprep.subr.bf16.mxu0 0
    %3909 = vmatpush1.bf16.msra.mxu0 0
    %3910 = vmatprep.subr.bf16.mxu0 0
    %3911 = vmatpush1.bf16.msra.mxu0 0
    %3912 = vmatprep.subr.bf16.mxu0 0
    %3913 = vmatpush1.bf16.msra.mxu0 0
    %3914 = vmatprep.subr.bf16.mxu0 0
    %3915 = vmatpush1.bf16.msra.mxu0 0
    %3916 = vmatprep.subr.bf16.mxu0 0
    %3917 = vmatpush1.bf16.msra.mxu0 0
    %3918 = vmatprep.subr.bf16.mxu0 0
    %3919 = vmatpush1.bf16.msra.mxu0 0
    %3920 = vmatprep.subr.bf16.mxu0 0
    %3921 = vmatpush1.bf16.msra.mxu0 0
    %3922 = vmatprep.subr.bf16.mxu0 0
    %3923 = vmatpush1.bf16.msra.mxu0 0
    %3924 = vmatprep.subr.bf16.mxu0 0
    %3925 = vmatpush1.bf16.msra.mxu0 0
    %3926 = vmatprep.subr.bf16.mxu0 0
    %3927 = vmatpush1.bf16.msra.mxu0 0
    %3928 = vmatprep.subr.bf16.mxu0 0
    %3929 = vmatpush1.bf16.msra.mxu0 0
    %3930 = vmatprep.mubr.bf16.mxu0 0
    %3931 = vmatmul.mubr.bf16.gmra.mrb[0].mxu0 %v3855
    %v3932 = vpop.f32.mrb[0].mxu0
    %v3933 = vadd.f32 0.0, %v3932
    %v3934 = vpop.f32.mrb[0].mxu0
    %v3935 = vadd.f32 0.0, %v3934
    %v3936 = vpop.f32.mrb[0].mxu0
    %v3937 = vpop.f32.mrb[0].mxu0
    %3938 = vdwg.mxu0
    %v3939 = vadd.f32 %v3624, %v3892
    %v3940 = vadd.f32 %v3625, %v3894
    %v3941 = vadd.f32 %v3626, %v3933
    %v3942 = vadd.f32 %v3627, %v3935
    %3943 = vmatprep.subr.bf16.mxu0 0
    %3944 = vmatpush1.bf16.msra.mxu0 %v169
    %3945 = vmatprep.subr.bf16.mxu0 0
    %3946 = vmatpush1.bf16.msra.mxu0 %v170
    %3947 = vmatprep.subr.bf16.mxu0 0
    %3948 = vmatpush1.bf16.msra.mxu0 %v171
    %3949 = vmatprep.subr.bf16.mxu0 0
    %3950 = vmatpush1.bf16.msra.mxu0 %v172
    %3951 = vmatprep.subr.bf16.mxu0 0
    %3952 = vmatpush1.bf16.msra.mxu0 %v173
    %3953 = vmatprep.subr.bf16.mxu0 0
    %3954 = vmatpush1.bf16.msra.mxu0 %v174
    %3955 = vmatprep.subr.bf16.mxu0 0
    %3956 = vmatpush1.bf16.msra.mxu0 %v175
    %3957 = vmatprep.subr.bf16.mxu0 0
    %3958 = vmatpush1.bf16.msra.mxu0 %v176
    %3959 = vmatprep.subr.bf16.mxu0 0
    %3960 = vmatpush1.bf16.msra.mxu0 %v177
    %3961 = vmatprep.subr.bf16.mxu0 0
    %3962 = vmatpush1.bf16.msra.mxu0 %v178
    %3963 = vmatprep.subr.bf16.mxu0 0
    %3964 = vmatpush1.bf16.msra.mxu0 %v179
    %3965 = vmatprep.subr.bf16.mxu0 0
    %3966 = vmatpush1.bf16.msra.mxu0 %v180
    %3967 = vmatprep.subr.bf16.mxu0 0
    %3968 = vmatpush1.bf16.msra.mxu0 0
    %3969 = vmatprep.subr.bf16.mxu0 0
    %3970 = vmatpush1.bf16.msra.mxu0 0
    %3971 = vmatprep.subr.bf16.mxu0 0
    %3972 = vmatpush1.bf16.msra.mxu0 0
    %3973 = vmatprep.subr.bf16.mxu0 0
    %3974 = vmatpush1.bf16.msra.mxu0 0
    %3975 = vmatprep.mubr.bf16.mxu0 %v2740
    %3976 = vmatmul.mubr.bf16.gmra.mrb[0].mxu0 %v2737
    %v3977 = vpop.f32.mrb[0].mxu0
    %v3978 = vadd.f32 0.0, %v3977
    %v3979 = vpop.f32.mrb[0].mxu0
    %v3980 = vpop.f32.mrb[0].mxu0
    %v3981 = vpop.f32.mrb[0].mxu0
    %3982 = vdwg.mxu0
    %3983 = vmatprep.subr.bf16.mxu0 0
    %3984 = vmatpush1.bf16.msra.mxu0 %v286
    %3985 = vmatprep.subr.bf16.mxu0 0
    %3986 = vmatpush1.bf16.msra.mxu0 %v287
    %3987 = vmatprep.subr.bf16.mxu0 0
    %3988 = vmatpush1.bf16.msra.mxu0 %v288
    %3989 = vmatprep.subr.bf16.mxu0 0
    %3990 = vmatpush1.bf16.msra.mxu0 %v289
    %3991 = vmatprep.subr.bf16.mxu0 0
    %3992 = vmatpush1.bf16.msra.mxu0 %v290
    %3993 = vmatprep.subr.bf16.mxu0 0
    %3994 = vmatpush1.bf16.msra.mxu0 %v291
    %3995 = vmatprep.subr.bf16.mxu0 0
    %3996 = vmatpush1.bf16.msra.mxu0 %v292
    %3997 = vmatprep.subr.bf16.mxu0 0
    %3998 = vmatpush1.bf16.msra.mxu0 %v293
    %3999 = vmatprep.subr.bf16.mxu0 0
    %4000 = vmatpush1.bf16.msra.mxu0 %v294
    %4001 = vmatprep.subr.bf16.mxu0 0
    %4002 = vmatpush1.bf16.msra.mxu0 %v295
    %4003 = vmatprep.subr.bf16.mxu0 0
    %4004 = vmatpush1.bf16.msra.mxu0 %v296
    %4005 = vmatprep.subr.bf16.mxu0 0
    %4006 = vmatpush1.bf16.msra.mxu0 %v297
    %4007 = vmatprep.subr.bf16.mxu0 0
    %4008 = vmatpush1.bf16.msra.mxu0 0
    %4009 = vmatprep.subr.bf16.mxu0 0
    %4010 = vmatpush1.bf16.msra.mxu0 0
    %4011 = vmatprep.subr.bf16.mxu0 0
    %4012 = vmatpush1.bf16.msra.mxu0 0
    %4013 = vmatprep.subr.bf16.mxu0 0
    %4014 = vmatpush1.bf16.msra.mxu0 0
    %4015 = vmatprep.mubr.bf16.mxu0 %v1466
    %4016 = vmatmul.mubr.bf16.gmra.mrb[0].mxu0 %v1463
    %v4017 = vpop.f32.mrb[0].mxu0
    %v4018 = vadd.f32 %v3978, %v4017
    %v4019 = vpop.f32.mrb[0].mxu0
    %v4020 = vpop.f32.mrb[0].mxu0
    %v4021 = vpop.f32.mrb[0].mxu0
    %4022 = vdwg.mxu0
    %4023 = vrot.lane.b32.xlu0 %v3708, 64
    %v4024 = vpop.permute.xlu0 %4023
    %v4025 = vsel %vm534, %v3392, %v4024
    %v4028 = vsel %vm193, %v4024, 0
    %4030 = vmatprep.subr.bf16.mxu0 0
    %4031 = vmatpush1.bf16.msra.mxu0 %v437
    %4032 = vmatprep.subr.bf16.mxu0 0
    %4033 = vmatpush1.bf16.msra.mxu0 %v438
    %4034 = vmatprep.subr.bf16.mxu0 0
    %4035 = vmatpush1.bf16.msra.mxu0 %v439
    %4036 = vmatprep.subr.bf16.mxu0 0
    %4037 = vmatpush1.bf16.msra.mxu0 %v440
    %4038 = vmatprep.subr.bf16.mxu0 0
    %4039 = vmatpush1.bf16.msra.mxu0 %v441
    %4040 = vmatprep.subr.bf16.mxu0 0
    %4041 = vmatpush1.bf16.msra.mxu0 %v442
    %4042 = vmatprep.subr.bf16.mxu0 0
    %4043 = vmatpush1.bf16.msra.mxu0 %v443
    %4044 = vmatprep.subr.bf16.mxu0 0
    %4045 = vmatpush1.bf16.msra.mxu0 %v444
    %4046 = vmatprep.subr.bf16.mxu0 0
    %4047 = vmatpush1.bf16.msra.mxu0 %v445
    %4048 = vmatprep.subr.bf16.mxu0 0
    %4049 = vmatpush1.bf16.msra.mxu0 %v446
    %4050 = vmatprep.subr.bf16.mxu0 0
    %4051 = vmatpush1.bf16.msra.mxu0 %v447
    %4052 = vmatprep.subr.bf16.mxu0 0
    %4053 = vmatpush1.bf16.msra.mxu0 %v448
    %4054 = vmatprep.subr.bf16.mxu0 0
    %4055 = vmatpush1.bf16.msra.mxu0 0
    %4056 = vmatprep.subr.bf16.mxu0 0
    %4057 = vmatpush1.bf16.msra.mxu0 0
    %4058 = vmatprep.subr.bf16.mxu0 0
    %4059 = vmatpush1.bf16.msra.mxu0 0
    %4060 = vmatprep.subr.bf16.mxu0 0
    %4061 = vmatpush1.bf16.msra.mxu0 0
    %4062 = vmatprep.mubr.bf16.mxu0 %v4028
    %4063 = vmatmul.mubr.bf16.gmra.mrb[0].mxu0 %v4025
    %v4064 = vpop.f32.mrb[0].mxu0
    %v4065 = vadd.f32 0.0, %v4064
    %v4066 = vpop.f32.mrb[0].mxu0
    %v4067 = vpop.f32.mrb[0].mxu0
    %v4068 = vpop.f32.mrb[0].mxu0
    %4069 = vdwg.mxu0
    %v4070 = vadd.f32 %v4018, %v4065
    %v4071 = vadd.f32 %v4070, %v509
    %v4072 = vmax.f32 %v4071, 0.0
    %v4073 = vpack.c.bf16 %v4072, %v4072
    %s4074 = scalar_lea.vmem %s3, 1408
    %v4075 = vld [vmem:[%s4074] sm:$0xff]
    %v4076 = vld [vmem:[%s4074 + $0x8] sm:$0xff]
    %v4077 = vld [vmem:[%s4074 + $0x10] sm:$0xff]
    %v4078 = vld [vmem:[%s4074 + $0x18] sm:$0xff]
    %v4079 = vld [vmem:[%s4074 + $0x20] sm:$0xff]
    %v4080 = vld [vmem:[%s4074 + $0x28] sm:$0xff]
    %v4081 = vld [vmem:[%s4074 + $0x30] sm:$0xff]
    %v4082 = vld [vmem:[%s4074 + $0x38] sm:$0xff]
    %v4083 = vld [vmem:[%s4074 + $0x40] sm:$0xff]
    %v4084 = vld [vmem:[%s4074 + $0x48] sm:$0xff]
    %v4085 = vld [vmem:[%s4074 + $0x50] sm:$0xff]
    %v4086 = vld [vmem:[%s4074 + $0x58] sm:$0xff]
    %v4087 = vld [vmem:[%s4074 + $0x60] sm:$0xff]
    %v4088 = vld [vmem:[%s4074 + $0x68] sm:$0xff]
    %v4089 = vld [vmem:[%s4074 + $0x70] sm:$0xff]
    %v4090 = vld [vmem:[%s4074 + $0x78] sm:$0xff]
    %v4107 = vunpack.c.l.b16 %v4075
    %v4108 = vunpack.c.h.b16 %v4075
    %v4109 = vunpack.c.l.b16 %v4076
    %v4110 = vunpack.c.h.b16 %v4076
    %v4111 = vunpack.c.l.b16 %v4077
    %v4112 = vunpack.c.h.b16 %v4077
    %v4113 = vunpack.c.l.b16 %v4078
    %v4114 = vunpack.c.h.b16 %v4078
    %v4115 = vunpack.c.l.b16 %v4079
    %v4116 = vunpack.c.h.b16 %v4079
    %v4117 = vunpack.c.l.b16 %v4080
    %v4118 = vunpack.c.h.b16 %v4080
    %v4119 = vunpack.c.l.b16 %v4081
    %v4120 = vunpack.c.h.b16 %v4081
    %v4121 = vunpack.c.l.b16 %v4082
    %v4122 = vunpack.c.h.b16 %v4082
    %v4123 = vunpack.c.l.b16 %v4083
    %v4124 = vunpack.c.h.b16 %v4083
    %v4125 = vunpack.c.l.b16 %v4084
    %v4126 = vunpack.c.h.b16 %v4084
    %v4127 = vunpack.c.l.b16 %v4085
    %v4128 = vunpack.c.h.b16 %v4085
    %v4129 = vunpack.c.l.b16 %v4086
    %v4130 = vunpack.c.h.b16 %v4086
    %v4131 = vunpack.c.l.b16 %v4087
    %v4132 = vunpack.c.h.b16 %v4087
    %v4133 = vunpack.c.l.b16 %v4088
    %v4134 = vunpack.c.h.b16 %v4088
    %v4135 = vunpack.c.l.b16 %v4089
    %v4136 = vunpack.c.h.b16 %v4089
    %v4137 = vunpack.c.l.b16 %v4090
    %v4138 = vunpack.c.h.b16 %v4090
    %v4139 = vpack.c.b16 %v4111, %v4107
    %v4140 = vpack.c.b16 %v4112, %v4108
    %v4141 = vpack.c.b16 %v4113, %v4109
    %v4142 = vpack.c.b16 %v4114, %v4110
    %v4143 = vpack.c.b16 %v4119, %v4115
    %v4144 = vpack.c.b16 %v4120, %v4116
    %v4145 = vpack.c.b16 %v4121, %v4117
    %v4146 = vpack.c.b16 %v4122, %v4118
    %v4147 = vpack.c.b16 %v4127, %v4123
    %v4148 = vpack.c.b16 %v4128, %v4124
    %v4149 = vpack.c.b16 %v4129, %v4125
    %v4150 = vpack.c.b16 %v4130, %v4126
    %v4151 = vpack.c.b16 %v4135, %v4131
    %v4152 = vpack.c.b16 %v4136, %v4132
    %v4153 = vpack.c.b16 %v4137, %v4133
    %v4154 = vpack.c.b16 %v4138, %v4134
    %v4172 = vsel %vm193, %v4073, 0
    %4174 = vmatprep.subr.bf16.mxu0 %v4140
    %4175 = vmatpush1.bf16.msra.mxu0 %v4139
    %4176 = vmatprep.subr.bf16.mxu0 %v4144
    %4177 = vmatpush1.bf16.msra.mxu0 %v4143
    %4178 = vmatprep.subr.bf16.mxu0 %v4148
    %4179 = vmatpush1.bf16.msra.mxu0 %v4147
    %4180 = vmatprep.subr.bf16.mxu0 %v4152
    %4181 = vmatpush1.bf16.msra.mxu0 %v4151
    %4182 = vmatprep.subr.bf16.mxu0 0
    %4183 = vmatpush1.bf16.msra.mxu0 0
    %4184 = vmatprep.subr.bf16.mxu0 0
    %4185 = vmatpush1.bf16.msra.mxu0 0
    %4186 = vmatprep.subr.bf16.mxu0 0
    %4187 = vmatpush1.bf16.msra.mxu0 0
    %4188 = vmatprep.subr.bf16.mxu0 0
    %4189 = vmatpush1.bf16.msra.mxu0 0
    %4190 = vmatprep.subr.bf16.mxu0 0
    %4191 = vmatpush1.bf16.msra.mxu0 0
    %4192 = vmatprep.subr.bf16.mxu0 0
    %4193 = vmatpush1.bf16.msra.mxu0 0
    %4194 = vmatprep.subr.bf16.mxu0 0
    %4195 = vmatpush1.bf16.msra.mxu0 0
    %4196 = vmatprep.subr.bf16.mxu0 0
    %4197 = vmatpush1.bf16.msra.mxu0 0
    %4198 = vmatprep.subr.bf16.mxu0 0
    %4199 = vmatpush1.bf16.msra.mxu0 0
    %4200 = vmatprep.subr.bf16.mxu0 0
    %4201 = vmatpush1.bf16.msra.mxu0 0
    %4202 = vmatprep.subr.bf16.mxu0 0
    %4203 = vmatpush1.bf16.msra.mxu0 0
    %4204 = vmatprep.subr.bf16.mxu0 0
    %4205 = vmatpush1.bf16.msra.mxu0 0
    %4206 = vmatprep.mubr.bf16.mxu0 0
    %4207 = vmatmul.mubr.bf16.gmra.mrb[0].mxu0 %v4172
    %v4208 = vpop.f32.mrb[0].mxu0
    %v4209 = vadd.f32 0.0, %v4208
    %v4210 = vpop.f32.mrb[0].mxu0
    %v4211 = vadd.f32 0.0, %v4210
    %v4212 = vpop.f32.mrb[0].mxu0
    %v4213 = vpop.f32.mrb[0].mxu0
    %4214 = vdwg.mxu0
    %4215 = vmatprep.subr.bf16.mxu0 %v4142
    %4216 = vmatpush1.bf16.msra.mxu0 %v4141
    %4217 = vmatprep.subr.bf16.mxu0 %v4146
    %4218 = vmatpush1.bf16.msra.mxu0 %v4145
    %4219 = vmatprep.subr.bf16.mxu0 %v4150
    %4220 = vmatpush1.bf16.msra.mxu0 %v4149
    %4221 = vmatprep.subr.bf16.mxu0 %v4154
    %4222 = vmatpush1.bf16.msra.mxu0 %v4153
    %4223 = vmatprep.subr.bf16.mxu0 0
    %4224 = vmatpush1.bf16.msra.mxu0 0
    %4225 = vmatprep.subr.bf16.mxu0 0
    %4226 = vmatpush1.bf16.msra.mxu0 0
    %4227 = vmatprep.subr.bf16.mxu0 0
    %4228 = vmatpush1.bf16.msra.mxu0 0
    %4229 = vmatprep.subr.bf16.mxu0 0
    %4230 = vmatpush1.bf16.msra.mxu0 0
    %4231 = vmatprep.subr.bf16.mxu0 0
    %4232 = vmatpush1.bf16.msra.mxu0 0
    %4233 = vmatprep.subr.bf16.mxu0 0
    %4234 = vmatpush1.bf16.msra.mxu0 0
    %4235 = vmatprep.subr.bf16.mxu0 0
    %4236 = vmatpush1.bf16.msra.mxu0 0
    %4237 = vmatprep.subr.bf16.mxu0 0
    %4238 = vmatpush1.bf16.msra.mxu0 0
    %4239 = vmatprep.subr.bf16.mxu0 0
    %4240 = vmatpush1.bf16.msra.mxu0 0
    %4241 = vmatprep.subr.bf16.mxu0 0
    %4242 = vmatpush1.bf16.msra.mxu0 0
    %4243 = vmatprep.subr.bf16.mxu0 0
    %4244 = vmatpush1.bf16.msra.mxu0 0
    %4245 = vmatprep.subr.bf16.mxu0 0
    %4246 = vmatpush1.bf16.msra.mxu0 0
    %4247 = vmatprep.mubr.bf16.mxu0 0
    %4248 = vmatmul.mubr.bf16.gmra.mrb[0].mxu0 %v4172
    %v4249 = vpop.f32.mrb[0].mxu0
    %v4250 = vadd.f32 0.0, %v4249
    %v4251 = vpop.f32.mrb[0].mxu0
    %v4252 = vadd.f32 0.0, %v4251
    %v4253 = vpop.f32.mrb[0].mxu0
    %v4254 = vpop.f32.mrb[0].mxu0
    %4255 = vdwg.mxu0
    %v4256 = vadd.f32 %v3939, %v4209
    %v4257 = vadd.f32 %v3940, %v4211
    %v4258 = vadd.f32 %v3941, %v4250
    %v4259 = vadd.f32 %v3942, %v4252
    %4260 = vmatprep.subr.bf16.mxu0 0
    %4261 = vmatpush1.bf16.msra.mxu0 %v169
    %4262 = vmatprep.subr.bf16.mxu0 0
    %4263 = vmatpush1.bf16.msra.mxu0 %v170
    %4264 = vmatprep.subr.bf16.mxu0 0
    %4265 = vmatpush1.bf16.msra.mxu0 %v171
    %4266 = vmatprep.subr.bf16.mxu0 0
    %4267 = vmatpush1.bf16.msra.mxu0 %v172
    %4268 = vmatprep.subr.bf16.mxu0 0
    %4269 = vmatpush1.bf16.msra.mxu0 %v173
    %4270 = vmatprep.subr.bf16.mxu0 0
    %4271 = vmatpush1.bf16.msra.mxu0 %v174
    %4272 = vmatprep.subr.bf16.mxu0 0
    %4273 = vmatpush1.bf16.msra.mxu0 %v175
    %4274 = vmatprep.subr.bf16.mxu0 0
    %4275 = vmatpush1.bf16.msra.mxu0 %v176
    %4276 = vmatprep.subr.bf16.mxu0 0
    %4277 = vmatpush1.bf16.msra.mxu0 %v177
    %4278 = vmatprep.subr.bf16.mxu0 0
    %4279 = vmatpush1.bf16.msra.mxu0 %v178
    %4280 = vmatprep.subr.bf16.mxu0 0
    %4281 = vmatpush1.bf16.msra.mxu0 %v179
    %4282 = vmatprep.subr.bf16.mxu0 0
    %4283 = vmatpush1.bf16.msra.mxu0 %v180
    %4284 = vmatprep.subr.bf16.mxu0 0
    %4285 = vmatpush1.bf16.msra.mxu0 0
    %4286 = vmatprep.subr.bf16.mxu0 0
    %4287 = vmatpush1.bf16.msra.mxu0 0
    %4288 = vmatprep.subr.bf16.mxu0 0
    %4289 = vmatpush1.bf16.msra.mxu0 0
    %4290 = vmatprep.subr.bf16.mxu0 0
    %4291 = vmatpush1.bf16.msra.mxu0 0
    %4292 = vmatprep.mubr.bf16.mxu0 %v3077
    %4293 = vmatmul.mubr.bf16.gmra.mrb[0].mxu0 %v3067
    %v4294 = vpop.f32.mrb[0].mxu0
    %v4295 = vadd.f32 0.0, %v4294
    %v4296 = vpop.f32.mrb[0].mxu0
    %v4297 = vpop.f32.mrb[0].mxu0
    %v4298 = vpop.f32.mrb[0].mxu0
    %4299 = vdwg.mxu0
    %4300 = vmatprep.subr.bf16.mxu0 0
    %4301 = vmatpush1.bf16.msra.mxu0 %v286
    %4302 = vmatprep.subr.bf16.mxu0 0
    %4303 = vmatpush1.bf16.msra.mxu0 %v287
    %4304 = vmatprep.subr.bf16.mxu0 0
    %4305 = vmatpush1.bf16.msra.mxu0 %v288
    %4306 = vmatprep.subr.bf16.mxu0 0
    %4307 = vmatpush1.bf16.msra.mxu0 %v289
    %4308 = vmatprep.subr.bf16.mxu0 0
    %4309 = vmatpush1.bf16.msra.mxu0 %v290
    %4310 = vmatprep.subr.bf16.mxu0 0
    %4311 = vmatpush1.bf16.msra.mxu0 %v291
    %4312 = vmatprep.subr.bf16.mxu0 0
    %4313 = vmatpush1.bf16.msra.mxu0 %v292
    %4314 = vmatprep.subr.bf16.mxu0 0
    %4315 = vmatpush1.bf16.msra.mxu0 %v293
    %4316 = vmatprep.subr.bf16.mxu0 0
    %4317 = vmatpush1.bf16.msra.mxu0 %v294
    %4318 = vmatprep.subr.bf16.mxu0 0
    %4319 = vmatpush1.bf16.msra.mxu0 %v295
    %4320 = vmatprep.subr.bf16.mxu0 0
    %4321 = vmatpush1.bf16.msra.mxu0 %v296
    %4322 = vmatprep.subr.bf16.mxu0 0
    %4323 = vmatpush1.bf16.msra.mxu0 %v297
    %4324 = vmatprep.subr.bf16.mxu0 0
    %4325 = vmatpush1.bf16.msra.mxu0 0
    %4326 = vmatprep.subr.bf16.mxu0 0
    %4327 = vmatpush1.bf16.msra.mxu0 0
    %4328 = vmatprep.subr.bf16.mxu0 0
    %4329 = vmatpush1.bf16.msra.mxu0 0
    %4330 = vmatprep.subr.bf16.mxu0 0
    %4331 = vmatpush1.bf16.msra.mxu0 0
    %4332 = vmatprep.mubr.bf16.mxu0 %v1789
    %4333 = vmatmul.mubr.bf16.gmra.mrb[0].mxu0 %v1785
    %v4334 = vpop.f32.mrb[0].mxu0
    %v4335 = vadd.f32 %v4295, %v4334
    %v4336 = vpop.f32.mrb[0].mxu0
    %v4337 = vpop.f32.mrb[0].mxu0
    %v4338 = vpop.f32.mrb[0].mxu0
    %4339 = vdwg.mxu0
    %v4341 = vcombine.high %v3074, %v3074
    %v4343 = vunpack.c.l.s4 1966171168
    %v4344 = vunpack.c.0.s8 %v4343
    %v4345 = vlaneseq
    %v4346 = vshrl.u32 %v4345, 7
    %v4347 = vsub.s32 %v4344, %v4346
    %v4348 = vrot.slane %v30, %v4347
    %v4350 = vunpack.c.l.s4 1966171168
    %v4351 = vunpack.c.0.s8 %v4350
    %v4352 = vlaneseq
    %v4353 = vshrl.u32 %v4352, 7
    %v4354 = vsub.s32 %v4351, %v4353
    %v4355 = vrot.slane %v4348, %v4354
    %v4358 = vsel %vm193, %v4355, 0
    %4360 = vmatprep.subr.bf16.mxu0 0
    %4361 = vmatpush1.bf16.msra.mxu0 %v437
    %4362 = vmatprep.subr.bf16.mxu0 0
    %4363 = vmatpush1.bf16.msra.mxu0 %v438
    %4364 = vmatprep.subr.bf16.mxu0 0
    %4365 = vmatpush1.bf16.msra.mxu0 %v439
    %4366 = vmatprep.subr.bf16.mxu0 0
    %4367 = vmatpush1.bf16.msra.mxu0 %v440
    %4368 = vmatprep.subr.bf16.mxu0 0
    %4369 = vmatpush1.bf16.msra.mxu0 %v441
    %4370 = vmatprep.subr.bf16.mxu0 0
    %4371 = vmatpush1.bf16.msra.mxu0 %v442
    %4372 = vmatprep.subr.bf16.mxu0 0
    %4373 = vmatpush1.bf16.msra.mxu0 %v443
    %4374 = vmatprep.subr.bf16.mxu0 0
    %4375 = vmatpush1.bf16.msra.mxu0 %v444
    %4376 = vmatprep.subr.bf16.mxu0 0
    %4377 = vmatpush1.bf16.msra.mxu0 %v445
    %4378 = vmatprep.subr.bf16.mxu0 0
    %4379 = vmatpush1.bf16.msra.mxu0 %v446
    %4380 = vmatprep.subr.bf16.mxu0 0
    %4381 = vmatpush1.bf16.msra.mxu0 %v447
    %4382 = vmatprep.subr.bf16.mxu0 0
    %4383 = vmatpush1.bf16.msra.mxu0 %v448
    %4384 = vmatprep.subr.bf16.mxu0 0
    %4385 = vmatpush1.bf16.msra.mxu0 0
    %4386 = vmatprep.subr.bf16.mxu0 0
    %4387 = vmatpush1.bf16.msra.mxu0 0
    %4388 = vmatprep.subr.bf16.mxu0 0
    %4389 = vmatpush1.bf16.msra.mxu0 0
    %4390 = vmatprep.subr.bf16.mxu0 0
    %4391 = vmatpush1.bf16.msra.mxu0 0
    %4392 = vmatprep.mubr.bf16.mxu0 %v4358
    %4393 = vmatmul.mubr.bf16.gmra.mrb[0].mxu0 %v4341
    %v4394 = vpop.f32.mrb[0].mxu0
    %v4395 = vadd.f32 0.0, %v4394
    %v4396 = vpop.f32.mrb[0].mxu0
    %v4397 = vpop.f32.mrb[0].mxu0
    %v4398 = vpop.f32.mrb[0].mxu0
    %4399 = vdwg.mxu0
    %v4400 = vadd.f32 %v4335, %v4395
    %v4401 = vadd.f32 %v4400, %v509
    %v4402 = vmax.f32 %v4401, 0.0
    %v4403 = vpack.c.bf16 %v4402, %v4402
    %s4404 = scalar_lea.vmem %s3, 1536
    %v4405 = vld [vmem:[%s4404] sm:$0xff]
    %v4406 = vld [vmem:[%s4404 + $0x8] sm:$0xff]
    %v4407 = vld [vmem:[%s4404 + $0x10] sm:$0xff]
    %v4408 = vld [vmem:[%s4404 + $0x18] sm:$0xff]
    %v4409 = vld [vmem:[%s4404 + $0x20] sm:$0xff]
    %v4410 = vld [vmem:[%s4404 + $0x28] sm:$0xff]
    %v4411 = vld [vmem:[%s4404 + $0x30] sm:$0xff]
    %v4412 = vld [vmem:[%s4404 + $0x38] sm:$0xff]
    %v4413 = vld [vmem:[%s4404 + $0x40] sm:$0xff]
    %v4414 = vld [vmem:[%s4404 + $0x48] sm:$0xff]
    %v4415 = vld [vmem:[%s4404 + $0x50] sm:$0xff]
    %v4416 = vld [vmem:[%s4404 + $0x58] sm:$0xff]
    %v4417 = vld [vmem:[%s4404 + $0x60] sm:$0xff]
    %v4418 = vld [vmem:[%s4404 + $0x68] sm:$0xff]
    %v4419 = vld [vmem:[%s4404 + $0x70] sm:$0xff]
    %v4420 = vld [vmem:[%s4404 + $0x78] sm:$0xff]
    %v4437 = vunpack.c.l.b16 %v4405
    %v4438 = vunpack.c.h.b16 %v4405
    %v4439 = vunpack.c.l.b16 %v4406
    %v4440 = vunpack.c.h.b16 %v4406
    %v4441 = vunpack.c.l.b16 %v4407
    %v4442 = vunpack.c.h.b16 %v4407
    %v4443 = vunpack.c.l.b16 %v4408
    %v4444 = vunpack.c.h.b16 %v4408
    %v4445 = vunpack.c.l.b16 %v4409
    %v4446 = vunpack.c.h.b16 %v4409
    %v4447 = vunpack.c.l.b16 %v4410
    %v4448 = vunpack.c.h.b16 %v4410
    %v4449 = vunpack.c.l.b16 %v4411
    %v4450 = vunpack.c.h.b16 %v4411
    %v4451 = vunpack.c.l.b16 %v4412
    %v4452 = vunpack.c.h.b16 %v4412
    %v4453 = vunpack.c.l.b16 %v4413
    %v4454 = vunpack.c.h.b16 %v4413
    %v4455 = vunpack.c.l.b16 %v4414
    %v4456 = vunpack.c.h.b16 %v4414
    %v4457 = vunpack.c.l.b16 %v4415
    %v4458 = vunpack.c.h.b16 %v4415
    %v4459 = vunpack.c.l.b16 %v4416
    %v4460 = vunpack.c.h.b16 %v4416
    %v4461 = vunpack.c.l.b16 %v4417
    %v4462 = vunpack.c.h.b16 %v4417
    %v4463 = vunpack.c.l.b16 %v4418
    %v4464 = vunpack.c.h.b16 %v4418
    %v4465 = vunpack.c.l.b16 %v4419
    %v4466 = vunpack.c.h.b16 %v4419
    %v4467 = vunpack.c.l.b16 %v4420
    %v4468 = vunpack.c.h.b16 %v4420
    %v4469 = vpack.c.b16 %v4441, %v4437
    %v4470 = vpack.c.b16 %v4442, %v4438
    %v4471 = vpack.c.b16 %v4443, %v4439
    %v4472 = vpack.c.b16 %v4444, %v4440
    %v4473 = vpack.c.b16 %v4449, %v4445
    %v4474 = vpack.c.b16 %v4450, %v4446
    %v4475 = vpack.c.b16 %v4451, %v4447
    %v4476 = vpack.c.b16 %v4452, %v4448
    %v4477 = vpack.c.b16 %v4457, %v4453
    %v4478 = vpack.c.b16 %v4458, %v4454
    %v4479 = vpack.c.b16 %v4459, %v4455
    %v4480 = vpack.c.b16 %v4460, %v4456
    %v4481 = vpack.c.b16 %v4465, %v4461
    %v4482 = vpack.c.b16 %v4466, %v4462
    %v4483 = vpack.c.b16 %v4467, %v4463
    %v4484 = vpack.c.b16 %v4468, %v4464
    %v4502 = vsel %vm193, %v4403, 0
    %4504 = vmatprep.subr.bf16.mxu0 %v4470
    %4505 = vmatpush1.bf16.msra.mxu0 %v4469
    %4506 = vmatprep.subr.bf16.mxu0 %v4474
    %4507 = vmatpush1.bf16.msra.mxu0 %v4473
    %4508 = vmatprep.subr.bf16.mxu0 %v4478
    %4509 = vmatpush1.bf16.msra.mxu0 %v4477
    %4510 = vmatprep.subr.bf16.mxu0 %v4482
    %4511 = vmatpush1.bf16.msra.mxu0 %v4481
    %4512 = vmatprep.subr.bf16.mxu0 0
    %4513 = vmatpush1.bf16.msra.mxu0 0
    %4514 = vmatprep.subr.bf16.mxu0 0
    %4515 = vmatpush1.bf16.msra.mxu0 0
    %4516 = vmatprep.subr.bf16.mxu0 0
    %4517 = vmatpush1.bf16.msra.mxu0 0
    %4518 = vmatprep.subr.bf16.mxu0 0
    %4519 = vmatpush1.bf16.msra.mxu0 0
    %4520 = vmatprep.subr.bf16.mxu0 0
    %4521 = vmatpush1.bf16.msra.mxu0 0
    %4522 = vmatprep.subr.bf16.mxu0 0
    %4523 = vmatpush1.bf16.msra.mxu0 0
    %4524 = vmatprep.subr.bf16.mxu0 0
    %4525 = vmatpush1.bf16.msra.mxu0 0
    %4526 = vmatprep.subr.bf16.mxu0 0
    %4527 = vmatpush1.bf16.msra.mxu0 0
    %4528 = vmatprep.subr.bf16.mxu0 0
    %4529 = vmatpush1.bf16.msra.mxu0 0
    %4530 = vmatprep.subr.bf16.mxu0 0
    %4531 = vmatpush1.bf16.msra.mxu0 0
    %4532 = vmatprep.subr.bf16.mxu0 0
    %4533 = vmatpush1.bf16.msra.mxu0 0
    %4534 = vmatprep.subr.bf16.mxu0 0
    %4535 = vmatpush1.bf16.msra.mxu0 0
    %4536 = vmatprep.mubr.bf16.mxu0 0
    %4537 = vmatmul.mubr.bf16.gmra.mrb[0].mxu0 %v4502
    %v4538 = vpop.f32.mrb[0].mxu0
    %v4539 = vadd.f32 0.0, %v4538
    %v4540 = vpop.f32.mrb[0].mxu0
    %v4541 = vadd.f32 0.0, %v4540
    %v4542 = vpop.f32.mrb[0].mxu0
    %v4543 = vpop.f32.mrb[0].mxu0
    %4544 = vdwg.mxu0
    %4545 = vmatprep.subr.bf16.mxu0 %v4472
    %4546 = vmatpush1.bf16.msra.mxu0 %v4471
    %4547 = vmatprep.subr.bf16.mxu0 %v4476
    %4548 = vmatpush1.bf16.msra.mxu0 %v4475
    %4549 = vmatprep.subr.bf16.mxu0 %v4480
    %4550 = vmatpush1.bf16.msra.mxu0 %v4479
    %4551 = vmatprep.subr.bf16.mxu0 %v4484
    %4552 = vmatpush1.bf16.msra.mxu0 %v4483
    %4553 = vmatprep.subr.bf16.mxu0 0
    %4554 = vmatpush1.bf16.msra.mxu0 0
    %4555 = vmatprep.subr.bf16.mxu0 0
    %4556 = vmatpush1.bf16.msra.mxu0 0
    %4557 = vmatprep.subr.bf16.mxu0 0
    %4558 = vmatpush1.bf16.msra.mxu0 0
    %4559 = vmatprep.subr.bf16.mxu0 0
    %4560 = vmatpush1.bf16.msra.mxu0 0
    %4561 = vmatprep.subr.bf16.mxu0 0
    %4562 = vmatpush1.bf16.msra.mxu0 0
    %4563 = vmatprep.subr.bf16.mxu0 0
    %4564 = vmatpush1.bf16.msra.mxu0 0
    %4565 = vmatprep.subr.bf16.mxu0 0
    %4566 = vmatpush1.bf16.msra.mxu0 0
    %4567 = vmatprep.subr.bf16.mxu0 0
    %4568 = vmatpush1.bf16.msra.mxu0 0
    %4569 = vmatprep.subr.bf16.mxu0 0
    %4570 = vmatpush1.bf16.msra.mxu0 0
    %4571 = vmatprep.subr.bf16.mxu0 0
    %4572 = vmatpush1.bf16.msra.mxu0 0
    %4573 = vmatprep.subr.bf16.mxu0 0
    %4574 = vmatpush1.bf16.msra.mxu0 0
    %4575 = vmatprep.subr.bf16.mxu0 0
    %4576 = vmatpush1.bf16.msra.mxu0 0
    %4577 = vmatprep.mubr.bf16.mxu0 0
    %4578 = vmatmul.mubr.bf16.gmra.mrb[0].mxu0 %v4502
    %v4579 = vpop.f32.mrb[0].mxu0
    %v4580 = vadd.f32 0.0, %v4579
    %v4581 = vpop.f32.mrb[0].mxu0
    %v4582 = vadd.f32 0.0, %v4581
    %v4583 = vpop.f32.mrb[0].mxu0
    %v4584 = vpop.f32.mrb[0].mxu0
    %4585 = vdwg.mxu0
    %v4586 = vadd.f32 %v4256, %v4539
    %v4587 = vadd.f32 %v4257, %v4541
    %v4588 = vadd.f32 %v4258, %v4580
    %v4589 = vadd.f32 %v4259, %v4582
    %4590 = vmatprep.subr.bf16.mxu0 0
    %4591 = vmatpush1.bf16.msra.mxu0 %v169
    %4592 = vmatprep.subr.bf16.mxu0 0
    %4593 = vmatpush1.bf16.msra.mxu0 %v170
    %4594 = vmatprep.subr.bf16.mxu0 0
    %4595 = vmatpush1.bf16.msra.mxu0 %v171
    %4596 = vmatprep.subr.bf16.mxu0 0
    %4597 = vmatpush1.bf16.msra.mxu0 %v172
    %4598 = vmatprep.subr.bf16.mxu0 0
    %4599 = vmatpush1.bf16.msra.mxu0 %v173
    %4600 = vmatprep.subr.bf16.mxu0 0
    %4601 = vmatpush1.bf16.msra.mxu0 %v174
    %4602 = vmatprep.subr.bf16.mxu0 0
    %4603 = vmatpush1.bf16.msra.mxu0 %v175
    %4604 = vmatprep.subr.bf16.mxu0 0
    %4605 = vmatpush1.bf16.msra.mxu0 %v176
    %4606 = vmatprep.subr.bf16.mxu0 0
    %4607 = vmatpush1.bf16.msra.mxu0 %v177
    %4608 = vmatprep.subr.bf16.mxu0 0
    %4609 = vmatpush1.bf16.msra.mxu0 %v178
    %4610 = vmatprep.subr.bf16.mxu0 0
    %4611 = vmatpush1.bf16.msra.mxu0 %v179
    %4612 = vmatprep.subr.bf16.mxu0 0
    %4613 = vmatpush1.bf16.msra.mxu0 %v180
    %4614 = vmatprep.subr.bf16.mxu0 0
    %4615 = vmatpush1.bf16.msra.mxu0 0
    %4616 = vmatprep.subr.bf16.mxu0 0
    %4617 = vmatpush1.bf16.msra.mxu0 0
    %4618 = vmatprep.subr.bf16.mxu0 0
    %4619 = vmatpush1.bf16.msra.mxu0 0
    %4620 = vmatprep.subr.bf16.mxu0 0
    %4621 = vmatpush1.bf16.msra.mxu0 0
    %4622 = vmatprep.mubr.bf16.mxu0 %v3396
    %4623 = vmatmul.mubr.bf16.gmra.mrb[0].mxu0 %v3393
    %v4624 = vpop.f32.mrb[0].mxu0
    %v4625 = vadd.f32 0.0, %v4624
    %v4626 = vpop.f32.mrb[0].mxu0
    %v4627 = vpop.f32.mrb[0].mxu0
    %v4628 = vpop.f32.mrb[0].mxu0
    %4629 = vdwg.mxu0
    %4630 = vmatprep.subr.bf16.mxu0 0
    %4631 = vmatpush1.bf16.msra.mxu0 %v286
    %4632 = vmatprep.subr.bf16.mxu0 0
    %4633 = vmatpush1.bf16.msra.mxu0 %v287
    %4634 = vmatprep.subr.bf16.mxu0 0
    %4635 = vmatpush1.bf16.msra.mxu0 %v288
    %4636 = vmatprep.subr.bf16.mxu0 0
    %4637 = vmatpush1.bf16.msra.mxu0 %v289
    %4638 = vmatprep.subr.bf16.mxu0 0
    %4639 = vmatpush1.bf16.msra.mxu0 %v290
    %4640 = vmatprep.subr.bf16.mxu0 0
    %4641 = vmatpush1.bf16.msra.mxu0 %v291
    %4642 = vmatprep.subr.bf16.mxu0 0
    %4643 = vmatpush1.bf16.msra.mxu0 %v292
    %4644 = vmatprep.subr.bf16.mxu0 0
    %4645 = vmatpush1.bf16.msra.mxu0 %v293
    %4646 = vmatprep.subr.bf16.mxu0 0
    %4647 = vmatpush1.bf16.msra.mxu0 %v294
    %4648 = vmatprep.subr.bf16.mxu0 0
    %4649 = vmatpush1.bf16.msra.mxu0 %v295
    %4650 = vmatprep.subr.bf16.mxu0 0
    %4651 = vmatpush1.bf16.msra.mxu0 %v296
    %4652 = vmatprep.subr.bf16.mxu0 0
    %4653 = vmatpush1.bf16.msra.mxu0 %v297
    %4654 = vmatprep.subr.bf16.mxu0 0
    %4655 = vmatpush1.bf16.msra.mxu0 0
    %4656 = vmatprep.subr.bf16.mxu0 0
    %4657 = vmatpush1.bf16.msra.mxu0 0
    %4658 = vmatprep.subr.bf16.mxu0 0
    %4659 = vmatpush1.bf16.msra.mxu0 0
    %4660 = vmatprep.subr.bf16.mxu0 0
    %4661 = vmatpush1.bf16.msra.mxu0 0
    %4662 = vmatprep.mubr.bf16.mxu0 %v2108
    %4663 = vmatmul.mubr.bf16.gmra.mrb[0].mxu0 %v2105
    %v4664 = vpop.f32.mrb[0].mxu0
    %v4665 = vadd.f32 %v4625, %v4664
    %v4666 = vpop.f32.mrb[0].mxu0
    %v4667 = vpop.f32.mrb[0].mxu0
    %v4668 = vpop.f32.mrb[0].mxu0
    %4669 = vdwg.mxu0
    %4670 = vrot.lane.b32.xlu0 %v4341, 64
    %v4671 = vpop.permute.xlu0 %4670
    %4672 = vrot.lane.b32.xlu0 %v4355, 64
    %v4673 = vpop.permute.xlu0 %4672
    %v4674 = vsel %vm534, %v4671, %v4673
    %v4677 = vsel %vm193, %v4673, 0
    %4679 = vmatprep.subr.bf16.mxu0 0
    %4680 = vmatpush1.bf16.msra.mxu0 %v437
    %4681 = vmatprep.subr.bf16.mxu0 0
    %4682 = vmatpush1.bf16.msra.mxu0 %v438
    %4683 = vmatprep.subr.bf16.mxu0 0
    %4684 = vmatpush1.bf16.msra.mxu0 %v439
    %4685 = vmatprep.subr.bf16.mxu0 0
    %4686 = vmatpush1.bf16.msra.mxu0 %v440
    %4687 = vmatprep.subr.bf16.mxu0 0
    %4688 = vmatpush1.bf16.msra.mxu0 %v441
    %4689 = vmatprep.subr.bf16.mxu0 0
    %4690 = vmatpush1.bf16.msra.mxu0 %v442
    %4691 = vmatprep.subr.bf16.mxu0 0
    %4692 = vmatpush1.bf16.msra.mxu0 %v443
    %4693 = vmatprep.subr.bf16.mxu0 0
    %4694 = vmatpush1.bf16.msra.mxu0 %v444
    %4695 = vmatprep.subr.bf16.mxu0 0
    %4696 = vmatpush1.bf16.msra.mxu0 %v445
    %4697 = vmatprep.subr.bf16.mxu0 0
    %4698 = vmatpush1.bf16.msra.mxu0 %v446
    %4699 = vmatprep.subr.bf16.mxu0 0
    %4700 = vmatpush1.bf16.msra.mxu0 %v447
    %4701 = vmatprep.subr.bf16.mxu0 0
    %4702 = vmatpush1.bf16.msra.mxu0 %v448
    %4703 = vmatprep.subr.bf16.mxu0 0
    %4704 = vmatpush1.bf16.msra.mxu0 0
    %4705 = vmatprep.subr.bf16.mxu0 0
    %4706 = vmatpush1.bf16.msra.mxu0 0
    %4707 = vmatprep.subr.bf16.mxu0 0
    %4708 = vmatpush1.bf16.msra.mxu0 0
    %4709 = vmatprep.subr.bf16.mxu0 0
    %4710 = vmatpush1.bf16.msra.mxu0 0
    %4711 = vmatprep.mubr.bf16.mxu0 %v4677
    %4712 = vmatmul.mubr.bf16.gmra.mrb[0].mxu0 %v4674
    %v4713 = vpop.f32.mrb[0].mxu0
    %v4714 = vadd.f32 0.0, %v4713
    %v4715 = vpop.f32.mrb[0].mxu0
    %v4716 = vpop.f32.mrb[0].mxu0
    %v4717 = vpop.f32.mrb[0].mxu0
    %4718 = vdwg.mxu0
    %v4719 = vadd.f32 %v4665, %v4714
    %v4720 = vadd.f32 %v4719, %v509
    %v4721 = vmax.f32 %v4720, 0.0
    %v4722 = vpack.c.bf16 %v4721, %v4721
    %s4723 = scalar_lea.vmem %s3, 1664
    %v4724 = vld [vmem:[%s4723] sm:$0xff]
    %v4725 = vld [vmem:[%s4723 + $0x8] sm:$0xff]
    %v4726 = vld [vmem:[%s4723 + $0x10] sm:$0xff]
    %v4727 = vld [vmem:[%s4723 + $0x18] sm:$0xff]
    %v4728 = vld [vmem:[%s4723 + $0x20] sm:$0xff]
    %v4729 = vld [vmem:[%s4723 + $0x28] sm:$0xff]
    %v4730 = vld [vmem:[%s4723 + $0x30] sm:$0xff]
    %v4731 = vld [vmem:[%s4723 + $0x38] sm:$0xff]
    %v4732 = vld [vmem:[%s4723 + $0x40] sm:$0xff]
    %v4733 = vld [vmem:[%s4723 + $0x48] sm:$0xff]
    %v4734 = vld [vmem:[%s4723 + $0x50] sm:$0xff]
    %v4735 = vld [vmem:[%s4723 + $0x58] sm:$0xff]
    %v4736 = vld [vmem:[%s4723 + $0x60] sm:$0xff]
    %v4737 = vld [vmem:[%s4723 + $0x68] sm:$0xff]
    %v4738 = vld [vmem:[%s4723 + $0x70] sm:$0xff]
    %v4739 = vld [vmem:[%s4723 + $0x78] sm:$0xff]
    %v4756 = vunpack.c.l.b16 %v4724
    %v4757 = vunpack.c.h.b16 %v4724
    %v4758 = vunpack.c.l.b16 %v4725
    %v4759 = vunpack.c.h.b16 %v4725
    %v4760 = vunpack.c.l.b16 %v4726
    %v4761 = vunpack.c.h.b16 %v4726
    %v4762 = vunpack.c.l.b16 %v4727
    %v4763 = vunpack.c.h.b16 %v4727
    %v4764 = vunpack.c.l.b16 %v4728
    %v4765 = vunpack.c.h.b16 %v4728
    %v4766 = vunpack.c.l.b16 %v4729
    %v4767 = vunpack.c.h.b16 %v4729
    %v4768 = vunpack.c.l.b16 %v4730
    %v4769 = vunpack.c.h.b16 %v4730
    %v4770 = vunpack.c.l.b16 %v4731
    %v4771 = vunpack.c.h.b16 %v4731
    %v4772 = vunpack.c.l.b16 %v4732
    %v4773 = vunpack.c.h.b16 %v4732
    %v4774 = vunpack.c.l.b16 %v4733
    %v4775 = vunpack.c.h.b16 %v4733
    %v4776 = vunpack.c.l.b16 %v4734
    %v4777 = vunpack.c.h.b16 %v4734
    %v4778 = vunpack.c.l.b16 %v4735
    %v4779 = vunpack.c.h.b16 %v4735
    %v4780 = vunpack.c.l.b16 %v4736
    %v4781 = vunpack.c.h.b16 %v4736
    %v4782 = vunpack.c.l.b16 %v4737
    %v4783 = vunpack.c.h.b16 %v4737
    %v4784 = vunpack.c.l.b16 %v4738
    %v4785 = vunpack.c.h.b16 %v4738
    %v4786 = vunpack.c.l.b16 %v4739
    %v4787 = vunpack.c.h.b16 %v4739
    %v4788 = vpack.c.b16 %v4760, %v4756
    %v4789 = vpack.c.b16 %v4761, %v4757
    %v4790 = vpack.c.b16 %v4762, %v4758
    %v4791 = vpack.c.b16 %v4763, %v4759
    %v4792 = vpack.c.b16 %v4768, %v4764
    %v4793 = vpack.c.b16 %v4769, %v4765
    %v4794 = vpack.c.b16 %v4770, %v4766
    %v4795 = vpack.c.b16 %v4771, %v4767
    %v4796 = vpack.c.b16 %v4776, %v4772
    %v4797 = vpack.c.b16 %v4777, %v4773
    %v4798 = vpack.c.b16 %v4778, %v4774
    %v4799 = vpack.c.b16 %v4779, %v4775
    %v4800 = vpack.c.b16 %v4784, %v4780
    %v4801 = vpack.c.b16 %v4785, %v4781
    %v4802 = vpack.c.b16 %v4786, %v4782
    %v4803 = vpack.c.b16 %v4787, %v4783
    %v4821 = vsel %vm193, %v4722, 0
    %4823 = vmatprep.subr.bf16.mxu0 %v4789
    %4824 = vmatpush1.bf16.msra.mxu0 %v4788
    %4825 = vmatprep.subr.bf16.mxu0 %v4793
    %4826 = vmatpush1.bf16.msra.mxu0 %v4792
    %4827 = vmatprep.subr.bf16.mxu0 %v4797
    %4828 = vmatpush1.bf16.msra.mxu0 %v4796
    %4829 = vmatprep.subr.bf16.mxu0 %v4801
    %4830 = vmatpush1.bf16.msra.mxu0 %v4800
    %4831 = vmatprep.subr.bf16.mxu0 0
    %4832 = vmatpush1.bf16.msra.mxu0 0
    %4833 = vmatprep.subr.bf16.mxu0 0
    %4834 = vmatpush1.bf16.msra.mxu0 0
    %4835 = vmatprep.subr.bf16.mxu0 0
    %4836 = vmatpush1.bf16.msra.mxu0 0
    %4837 = vmatprep.subr.bf16.mxu0 0
    %4838 = vmatpush1.bf16.msra.mxu0 0
    %4839 = vmatprep.subr.bf16.mxu0 0
    %4840 = vmatpush1.bf16.msra.mxu0 0
    %4841 = vmatprep.subr.bf16.mxu0 0
    %4842 = vmatpush1.bf16.msra.mxu0 0
    %4843 = vmatprep.subr.bf16.mxu0 0
    %4844 = vmatpush1.bf16.msra.mxu0 0
    %4845 = vmatprep.subr.bf16.mxu0 0
    %4846 = vmatpush1.bf16.msra.mxu0 0
    %4847 = vmatprep.subr.bf16.mxu0 0
    %4848 = vmatpush1.bf16.msra.mxu0 0
    %4849 = vmatprep.subr.bf16.mxu0 0
    %4850 = vmatpush1.bf16.msra.mxu0 0
    %4851 = vmatprep.subr.bf16.mxu0 0
    %4852 = vmatpush1.bf16.msra.mxu0 0
    %4853 = vmatprep.subr.bf16.mxu0 0
    %4854 = vmatpush1.bf16.msra.mxu0 0
    %4855 = vmatprep.mubr.bf16.mxu0 0
    %4856 = vmatmul.mubr.bf16.gmra.mrb[0].mxu0 %v4821
    %v4857 = vpop.f32.mrb[0].mxu0
    %v4858 = vadd.f32 0.0, %v4857
    %v4859 = vpop.f32.mrb[0].mxu0
    %v4860 = vadd.f32 0.0, %v4859
    %v4861 = vpop.f32.mrb[0].mxu0
    %v4862 = vpop.f32.mrb[0].mxu0
    %4863 = vdwg.mxu0
    %4864 = vmatprep.subr.bf16.mxu0 %v4791
    %4865 = vmatpush1.bf16.msra.mxu0 %v4790
    %4866 = vmatprep.subr.bf16.mxu0 %v4795
    %4867 = vmatpush1.bf16.msra.mxu0 %v4794
    %4868 = vmatprep.subr.bf16.mxu0 %v4799
    %4869 = vmatpush1.bf16.msra.mxu0 %v4798
    %4870 = vmatprep.subr.bf16.mxu0 %v4803
    %4871 = vmatpush1.bf16.msra.mxu0 %v4802
    %4872 = vmatprep.subr.bf16.mxu0 0
    %4873 = vmatpush1.bf16.msra.mxu0 0
    %4874 = vmatprep.subr.bf16.mxu0 0
    %4875 = vmatpush1.bf16.msra.mxu0 0
    %4876 = vmatprep.subr.bf16.mxu0 0
    %4877 = vmatpush1.bf16.msra.mxu0 0
    %4878 = vmatprep.subr.bf16.mxu0 0
    %4879 = vmatpush1.bf16.msra.mxu0 0
    %4880 = vmatprep.subr.bf16.mxu0 0
    %4881 = vmatpush1.bf16.msra.mxu0 0
    %4882 = vmatprep.subr.bf16.mxu0 0
    %4883 = vmatpush1.bf16.msra.mxu0 0
    %4884 = vmatprep.subr.bf16.mxu0 0
    %4885 = vmatpush1.bf16.msra.mxu0 0
    %4886 = vmatprep.subr.bf16.mxu0 0
    %4887 = vmatpush1.bf16.msra.mxu0 0
    %4888 = vmatprep.subr.bf16.mxu0 0
    %4889 = vmatpush1.bf16.msra.mxu0 0
    %4890 = vmatprep.subr.bf16.mxu0 0
    %4891 = vmatpush1.bf16.msra.mxu0 0
    %4892 = vmatprep.subr.bf16.mxu0 0
    %4893 = vmatpush1.bf16.msra.mxu0 0
    %4894 = vmatprep.subr.bf16.mxu0 0
    %4895 = vmatpush1.bf16.msra.mxu0 0
    %4896 = vmatprep.mubr.bf16.mxu0 0
    %4897 = vmatmul.mubr.bf16.gmra.mrb[0].mxu0 %v4821
    %v4898 = vpop.f32.mrb[0].mxu0
    %v4899 = vadd.f32 0.0, %v4898
    %v4900 = vpop.f32.mrb[0].mxu0
    %v4901 = vadd.f32 0.0, %v4900
    %v4902 = vpop.f32.mrb[0].mxu0
    %v4903 = vpop.f32.mrb[0].mxu0
    %4904 = vdwg.mxu0
    %v4905 = vadd.f32 %v4586, %v4858
    %v4906 = vadd.f32 %v4587, %v4860
    %v4907 = vadd.f32 %v4588, %v4899
    %v4908 = vadd.f32 %v4589, %v4901
    %4909 = vmatprep.subr.bf16.mxu0 0
    %4910 = vmatpush1.bf16.msra.mxu0 %v169
    %4911 = vmatprep.subr.bf16.mxu0 0
    %4912 = vmatpush1.bf16.msra.mxu0 %v170
    %4913 = vmatprep.subr.bf16.mxu0 0
    %4914 = vmatpush1.bf16.msra.mxu0 %v171
    %4915 = vmatprep.subr.bf16.mxu0 0
    %4916 = vmatpush1.bf16.msra.mxu0 %v172
    %4917 = vmatprep.subr.bf16.mxu0 0
    %4918 = vmatpush1.bf16.msra.mxu0 %v173
    %4919 = vmatprep.subr.bf16.mxu0 0
    %4920 = vmatpush1.bf16.msra.mxu0 %v174
    %4921 = vmatprep.subr.bf16.mxu0 0
    %4922 = vmatpush1.bf16.msra.mxu0 %v175
    %4923 = vmatprep.subr.bf16.mxu0 0
    %4924 = vmatpush1.bf16.msra.mxu0 %v176
    %4925 = vmatprep.subr.bf16.mxu0 0
    %4926 = vmatpush1.bf16.msra.mxu0 %v177
    %4927 = vmatprep.subr.bf16.mxu0 0
    %4928 = vmatpush1.bf16.msra.mxu0 %v178
    %4929 = vmatprep.subr.bf16.mxu0 0
    %4930 = vmatpush1.bf16.msra.mxu0 %v179
    %4931 = vmatprep.subr.bf16.mxu0 0
    %4932 = vmatpush1.bf16.msra.mxu0 %v180
    %4933 = vmatprep.subr.bf16.mxu0 0
    %4934 = vmatpush1.bf16.msra.mxu0 0
    %4935 = vmatprep.subr.bf16.mxu0 0
    %4936 = vmatpush1.bf16.msra.mxu0 0
    %4937 = vmatprep.subr.bf16.mxu0 0
    %4938 = vmatpush1.bf16.msra.mxu0 0
    %4939 = vmatprep.subr.bf16.mxu0 0
    %4940 = vmatpush1.bf16.msra.mxu0 0
    %4941 = vmatprep.mubr.bf16.mxu0 %v3711
    %4942 = vmatmul.mubr.bf16.gmra.mrb[0].mxu0 %v3074
    %v4943 = vpop.f32.mrb[0].mxu0
    %v4944 = vadd.f32 0.0, %v4943
    %v4945 = vpop.f32.mrb[0].mxu0
    %v4946 = vpop.f32.mrb[0].mxu0
    %v4947 = vpop.f32.mrb[0].mxu0
    %4948 = vdwg.mxu0
    %4949 = vmatprep.subr.bf16.mxu0 0
    %4950 = vmatpush1.bf16.msra.mxu0 %v286
    %4951 = vmatprep.subr.bf16.mxu0 0
    %4952 = vmatpush1.bf16.msra.mxu0 %v287
    %4953 = vmatprep.subr.bf16.mxu0 0
    %4954 = vmatpush1.bf16.msra.mxu0 %v288
    %4955 = vmatprep.subr.bf16.mxu0 0
    %4956 = vmatpush1.bf16.msra.mxu0 %v289
    %4957 = vmatprep.subr.bf16.mxu0 0
    %4958 = vmatpush1.bf16.msra.mxu0 %v290
    %4959 = vmatprep.subr.bf16.mxu0 0
    %4960 = vmatpush1.bf16.msra.mxu0 %v291
    %4961 = vmatprep.subr.bf16.mxu0 0
    %4962 = vmatpush1.bf16.msra.mxu0 %v292
    %4963 = vmatprep.subr.bf16.mxu0 0
    %4964 = vmatpush1.bf16.msra.mxu0 %v293
    %4965 = vmatprep.subr.bf16.mxu0 0
    %4966 = vmatpush1.bf16.msra.mxu0 %v294
    %4967 = vmatprep.subr.bf16.mxu0 0
    %4968 = vmatpush1.bf16.msra.mxu0 %v295
    %4969 = vmatprep.subr.bf16.mxu0 0
    %4970 = vmatpush1.bf16.msra.mxu0 %v296
    %4971 = vmatprep.subr.bf16.mxu0 0
    %4972 = vmatpush1.bf16.msra.mxu0 %v297
    %4973 = vmatprep.subr.bf16.mxu0 0
    %4974 = vmatpush1.bf16.msra.mxu0 0
    %4975 = vmatprep.subr.bf16.mxu0 0
    %4976 = vmatpush1.bf16.msra.mxu0 0
    %4977 = vmatprep.subr.bf16.mxu0 0
    %4978 = vmatpush1.bf16.msra.mxu0 0
    %4979 = vmatprep.subr.bf16.mxu0 0
    %4980 = vmatpush1.bf16.msra.mxu0 0
    %4981 = vmatprep.mubr.bf16.mxu0 %v2423
    %4982 = vmatmul.mubr.bf16.gmra.mrb[0].mxu0 %v1786
    %v4983 = vpop.f32.mrb[0].mxu0
    %v4984 = vadd.f32 %v4944, %v4983
    %v4985 = vpop.f32.mrb[0].mxu0
    %v4986 = vpop.f32.mrb[0].mxu0
    %v4987 = vpop.f32.mrb[0].mxu0
    %4988 = vdwg.mxu0
    %v4989 = vcombine.high %v4348, %v4348
    %v4991 = vunpack.c.l.s4 1966171168
    %v4992 = vunpack.c.0.s8 %v4991
    %v4993 = vlaneseq
    %v4994 = vshrl.u32 %v4993, 7
    %v4995 = vsub.s32 %v4992, %v4994
    %v4996 = vrot.slane %v4989, %v4995
    %v4999 = vsel %vm193, %v4996, 0
    %5001 = vmatprep.subr.bf16.mxu0 0
    %5002 = vmatpush1.bf16.msra.mxu0 %v437
    %5003 = vmatprep.subr.bf16.mxu0 0
    %5004 = vmatpush1.bf16.msra.mxu0 %v438
    %5005 = vmatprep.subr.bf16.mxu0 0
    %5006 = vmatpush1.bf16.msra.mxu0 %v439
    %5007 = vmatprep.subr.bf16.mxu0 0
    %5008 = vmatpush1.bf16.msra.mxu0 %v440
    %5009 = vmatprep.subr.bf16.mxu0 0
    %5010 = vmatpush1.bf16.msra.mxu0 %v441
    %5011 = vmatprep.subr.bf16.mxu0 0
    %5012 = vmatpush1.bf16.msra.mxu0 %v442
    %5013 = vmatprep.subr.bf16.mxu0 0
    %5014 = vmatpush1.bf16.msra.mxu0 %v443
    %5015 = vmatprep.subr.bf16.mxu0 0
    %5016 = vmatpush1.bf16.msra.mxu0 %v444
    %5017 = vmatprep.subr.bf16.mxu0 0
    %5018 = vmatpush1.bf16.msra.mxu0 %v445
    %5019 = vmatprep.subr.bf16.mxu0 0
    %5020 = vmatpush1.bf16.msra.mxu0 %v446
    %5021 = vmatprep.subr.bf16.mxu0 0
    %5022 = vmatpush1.bf16.msra.mxu0 %v447
    %5023 = vmatprep.subr.bf16.mxu0 0
    %5024 = vmatpush1.bf16.msra.mxu0 %v448
    %5025 = vmatprep.subr.bf16.mxu0 0
    %5026 = vmatpush1.bf16.msra.mxu0 0
    %5027 = vmatprep.subr.bf16.mxu0 0
    %5028 = vmatpush1.bf16.msra.mxu0 0
    %5029 = vmatprep.subr.bf16.mxu0 0
    %5030 = vmatpush1.bf16.msra.mxu0 0
    %5031 = vmatprep.subr.bf16.mxu0 0
    %5032 = vmatpush1.bf16.msra.mxu0 0
    %5033 = vmatprep.mubr.bf16.mxu0 %v4999
    %5034 = vmatmul.mubr.bf16.gmra.mrb[0].mxu0 %v4355
    %v5035 = vpop.f32.mrb[0].mxu0
    %v5036 = vadd.f32 0.0, %v5035
    %v5037 = vpop.f32.mrb[0].mxu0
    %v5038 = vpop.f32.mrb[0].mxu0
    %v5039 = vpop.f32.mrb[0].mxu0
    %5040 = vdwg.mxu0
    %v5041 = vadd.f32 %v4984, %v5036
    %v5042 = vadd.f32 %v5041, %v509
    %v5043 = vmax.f32 %v5042, 0.0
    %v5044 = vpack.c.bf16 %v5043, %v5043
    %s5045 = scalar_lea.vmem %s3, 1792
    %v5046 = vld [vmem:[%s5045] sm:$0xff]
    %v5047 = vld [vmem:[%s5045 + $0x8] sm:$0xff]
    %v5048 = vld [vmem:[%s5045 + $0x10] sm:$0xff]
    %v5049 = vld [vmem:[%s5045 + $0x18] sm:$0xff]
    %v5050 = vld [vmem:[%s5045 + $0x20] sm:$0xff]
    %v5051 = vld [vmem:[%s5045 + $0x28] sm:$0xff]
    %v5052 = vld [vmem:[%s5045 + $0x30] sm:$0xff]
    %v5053 = vld [vmem:[%s5045 + $0x38] sm:$0xff]
    %v5054 = vld [vmem:[%s5045 + $0x40] sm:$0xff]
    %v5055 = vld [vmem:[%s5045 + $0x48] sm:$0xff]
    %v5056 = vld [vmem:[%s5045 + $0x50] sm:$0xff]
    %v5057 = vld [vmem:[%s5045 + $0x58] sm:$0xff]
    %v5058 = vld [vmem:[%s5045 + $0x60] sm:$0xff]
    %v5059 = vld [vmem:[%s5045 + $0x68] sm:$0xff]
    %v5060 = vld [vmem:[%s5045 + $0x70] sm:$0xff]
    %v5061 = vld [vmem:[%s5045 + $0x78] sm:$0xff]
    %v5078 = vunpack.c.l.b16 %v5046
    %v5079 = vunpack.c.h.b16 %v5046
    %v5080 = vunpack.c.l.b16 %v5047
    %v5081 = vunpack.c.h.b16 %v5047
    %v5082 = vunpack.c.l.b16 %v5048
    %v5083 = vunpack.c.h.b16 %v5048
    %v5084 = vunpack.c.l.b16 %v5049
    %v5085 = vunpack.c.h.b16 %v5049
    %v5086 = vunpack.c.l.b16 %v5050
    %v5087 = vunpack.c.h.b16 %v5050
    %v5088 = vunpack.c.l.b16 %v5051
    %v5089 = vunpack.c.h.b16 %v5051
    %v5090 = vunpack.c.l.b16 %v5052
    %v5091 = vunpack.c.h.b16 %v5052
    %v5092 = vunpack.c.l.b16 %v5053
    %v5093 = vunpack.c.h.b16 %v5053
    %v5094 = vunpack.c.l.b16 %v5054
    %v5095 = vunpack.c.h.b16 %v5054
    %v5096 = vunpack.c.l.b16 %v5055
    %v5097 = vunpack.c.h.b16 %v5055
    %v5098 = vunpack.c.l.b16 %v5056
    %v5099 = vunpack.c.h.b16 %v5056
    %v5100 = vunpack.c.l.b16 %v5057
    %v5101 = vunpack.c.h.b16 %v5057
    %v5102 = vunpack.c.l.b16 %v5058
    %v5103 = vunpack.c.h.b16 %v5058
    %v5104 = vunpack.c.l.b16 %v5059
    %v5105 = vunpack.c.h.b16 %v5059
    %v5106 = vunpack.c.l.b16 %v5060
    %v5107 = vunpack.c.h.b16 %v5060
    %v5108 = vunpack.c.l.b16 %v5061
    %v5109 = vunpack.c.h.b16 %v5061
    %v5110 = vpack.c.b16 %v5082, %v5078
    %v5111 = vpack.c.b16 %v5083, %v5079
    %v5112 = vpack.c.b16 %v5084, %v5080
    %v5113 = vpack.c.b16 %v5085, %v5081
    %v5114 = vpack.c.b16 %v5090, %v5086
    %v5115 = vpack.c.b16 %v5091, %v5087
    %v5116 = vpack.c.b16 %v5092, %v5088
    %v5117 = vpack.c.b16 %v5093, %v5089
    %v5118 = vpack.c.b16 %v5098, %v5094
    %v5119 = vpack.c.b16 %v5099, %v5095
    %v5120 = vpack.c.b16 %v5100, %v5096
    %v5121 = vpack.c.b16 %v5101, %v5097
    %v5122 = vpack.c.b16 %v5106, %v5102
    %v5123 = vpack.c.b16 %v5107, %v5103
    %v5124 = vpack.c.b16 %v5108, %v5104
    %v5125 = vpack.c.b16 %v5109, %v5105
    %v5143 = vsel %vm193, %v5044, 0
    %5145 = vmatprep.subr.bf16.mxu0 %v5111
    %5146 = vmatpush1.bf16.msra.mxu0 %v5110
    %5147 = vmatprep.subr.bf16.mxu0 %v5115
    %5148 = vmatpush1.bf16.msra.mxu0 %v5114
    %5149 = vmatprep.subr.bf16.mxu0 %v5119
    %5150 = vmatpush1.bf16.msra.mxu0 %v5118
    %5151 = vmatprep.subr.bf16.mxu0 %v5123
    %5152 = vmatpush1.bf16.msra.mxu0 %v5122
    %5153 = vmatprep.subr.bf16.mxu0 0
    %5154 = vmatpush1.bf16.msra.mxu0 0
    %5155 = vmatprep.subr.bf16.mxu0 0
    %5156 = vmatpush1.bf16.msra.mxu0 0
    %5157 = vmatprep.subr.bf16.mxu0 0
    %5158 = vmatpush1.bf16.msra.mxu0 0
    %5159 = vmatprep.subr.bf16.mxu0 0
    %5160 = vmatpush1.bf16.msra.mxu0 0
    %5161 = vmatprep.subr.bf16.mxu0 0
    %5162 = vmatpush1.bf16.msra.mxu0 0
    %5163 = vmatprep.subr.bf16.mxu0 0
    %5164 = vmatpush1.bf16.msra.mxu0 0
    %5165 = vmatprep.subr.bf16.mxu0 0
    %5166 = vmatpush1.bf16.msra.mxu0 0
    %5167 = vmatprep.subr.bf16.mxu0 0
    %5168 = vmatpush1.bf16.msra.mxu0 0
    %5169 = vmatprep.subr.bf16.mxu0 0
    %5170 = vmatpush1.bf16.msra.mxu0 0
    %5171 = vmatprep.subr.bf16.mxu0 0
    %5172 = vmatpush1.bf16.msra.mxu0 0
    %5173 = vmatprep.subr.bf16.mxu0 0
    %5174 = vmatpush1.bf16.msra.mxu0 0
    %5175 = vmatprep.subr.bf16.mxu0 0
    %5176 = vmatpush1.bf16.msra.mxu0 0
    %5177 = vmatprep.mubr.bf16.mxu0 0
    %5178 = vmatmul.mubr.bf16.gmra.mrb[0].mxu0 %v5143
    %v5179 = vpop.f32.mrb[0].mxu0
    %v5180 = vadd.f32 0.0, %v5179
    %v5181 = vpop.f32.mrb[0].mxu0
    %v5182 = vadd.f32 0.0, %v5181
    %v5183 = vpop.f32.mrb[0].mxu0
    %v5184 = vpop.f32.mrb[0].mxu0
    %5185 = vdwg.mxu0
    %5186 = vmatprep.subr.bf16.mxu0 %v5113
    %5187 = vmatpush1.bf16.msra.mxu0 %v5112
    %5188 = vmatprep.subr.bf16.mxu0 %v5117
    %5189 = vmatpush1.bf16.msra.mxu0 %v5116
    %5190 = vmatprep.subr.bf16.mxu0 %v5121
    %5191 = vmatpush1.bf16.msra.mxu0 %v5120
    %5192 = vmatprep.subr.bf16.mxu0 %v5125
    %5193 = vmatpush1.bf16.msra.mxu0 %v5124
    %5194 = vmatprep.subr.bf16.mxu0 0
    %5195 = vmatpush1.bf16.msra.mxu0 0
    %5196 = vmatprep.subr.bf16.mxu0 0
    %5197 = vmatpush1.bf16.msra.mxu0 0
    %5198 = vmatprep.subr.bf16.mxu0 0
    %5199 = vmatpush1.bf16.msra.mxu0 0
    %5200 = vmatprep.subr.bf16.mxu0 0
    %5201 = vmatpush1.bf16.msra.mxu0 0
    %5202 = vmatprep.subr.bf16.mxu0 0
    %5203 = vmatpush1.bf16.msra.mxu0 0
    %5204 = vmatprep.subr.bf16.mxu0 0
    %5205 = vmatpush1.bf16.msra.mxu0 0
    %5206 = vmatprep.subr.bf16.mxu0 0
    %5207 = vmatpush1.bf16.msra.mxu0 0
    %5208 = vmatprep.subr.bf16.mxu0 0
    %5209 = vmatpush1.bf16.msra.mxu0 0
    %5210 = vmatprep.subr.bf16.mxu0 0
    %5211 = vmatpush1.bf16.msra.mxu0 0
    %5212 = vmatprep.subr.bf16.mxu0 0
    %5213 = vmatpush1.bf16.msra.mxu0 0
    %5214 = vmatprep.subr.bf16.mxu0 0
    %5215 = vmatpush1.bf16.msra.mxu0 0
    %5216 = vmatprep.subr.bf16.mxu0 0
    %5217 = vmatpush1.bf16.msra.mxu0 0
    %5218 = vmatprep.mubr.bf16.mxu0 0
    %5219 = vmatmul.mubr.bf16.gmra.mrb[0].mxu0 %v5143
    %v5220 = vpop.f32.mrb[0].mxu0
    %v5221 = vadd.f32 0.0, %v5220
    %v5222 = vpop.f32.mrb[0].mxu0
    %v5223 = vadd.f32 0.0, %v5222
    %v5224 = vpop.f32.mrb[0].mxu0
    %v5225 = vpop.f32.mrb[0].mxu0
    %5226 = vdwg.mxu0
    %v5227 = vadd.f32 %v4905, %v5180
    %v5228 = vadd.f32 %v4906, %v5182
    %v5229 = vadd.f32 %v4907, %v5221
    %v5230 = vadd.f32 %v4908, %v5223
    %5231 = vmatprep.subr.bf16.mxu0 0
    %5232 = vmatpush1.bf16.msra.mxu0 %v169
    %5233 = vmatprep.subr.bf16.mxu0 0
    %5234 = vmatpush1.bf16.msra.mxu0 %v170
    %5235 = vmatprep.subr.bf16.mxu0 0
    %5236 = vmatpush1.bf16.msra.mxu0 %v171
    %5237 = vmatprep.subr.bf16.mxu0 0
    %5238 = vmatpush1.bf16.msra.mxu0 %v172
    %5239 = vmatprep.subr.bf16.mxu0 0
    %5240 = vmatpush1.bf16.msra.mxu0 %v173
    %5241 = vmatprep.subr.bf16.mxu0 0
    %5242 = vmatpush1.bf16.msra.mxu0 %v174
    %5243 = vmatprep.subr.bf16.mxu0 0
    %5244 = vmatpush1.bf16.msra.mxu0 %v175
    %5245 = vmatprep.subr.bf16.mxu0 0
    %5246 = vmatpush1.bf16.msra.mxu0 %v176
    %5247 = vmatprep.subr.bf16.mxu0 0
    %5248 = vmatpush1.bf16.msra.mxu0 %v177
    %5249 = vmatprep.subr.bf16.mxu0 0
    %5250 = vmatpush1.bf16.msra.mxu0 %v178
    %5251 = vmatprep.subr.bf16.mxu0 0
    %5252 = vmatpush1.bf16.msra.mxu0 %v179
    %5253 = vmatprep.subr.bf16.mxu0 0
    %5254 = vmatpush1.bf16.msra.mxu0 %v180
    %5255 = vmatprep.subr.bf16.mxu0 0
    %5256 = vmatpush1.bf16.msra.mxu0 0
    %5257 = vmatprep.subr.bf16.mxu0 0
    %5258 = vmatpush1.bf16.msra.mxu0 0
    %5259 = vmatprep.subr.bf16.mxu0 0
    %5260 = vmatpush1.bf16.msra.mxu0 0
    %5261 = vmatprep.subr.bf16.mxu0 0
    %5262 = vmatpush1.bf16.msra.mxu0 0
    %5263 = vmatprep.mubr.bf16.mxu0 %v4028
    %5264 = vmatmul.mubr.bf16.gmra.mrb[0].mxu0 %v4025
    %v5265 = vpop.f32.mrb[0].mxu0
    %v5266 = vadd.f32 0.0, %v5265
    %v5267 = vpop.f32.mrb[0].mxu0
    %v5268 = vpop.f32.mrb[0].mxu0
    %v5269 = vpop.f32.mrb[0].mxu0
    %5270 = vdwg.mxu0
    %5271 = vmatprep.subr.bf16.mxu0 0
    %5272 = vmatpush1.bf16.msra.mxu0 %v286
    %5273 = vmatprep.subr.bf16.mxu0 0
    %5274 = vmatpush1.bf16.msra.mxu0 %v287
    %5275 = vmatprep.subr.bf16.mxu0 0
    %5276 = vmatpush1.bf16.msra.mxu0 %v288
    %5277 = vmatprep.subr.bf16.mxu0 0
    %5278 = vmatpush1.bf16.msra.mxu0 %v289
    %5279 = vmatprep.subr.bf16.mxu0 0
    %5280 = vmatpush1.bf16.msra.mxu0 %v290
    %5281 = vmatprep.subr.bf16.mxu0 0
    %5282 = vmatpush1.bf16.msra.mxu0 %v291
    %5283 = vmatprep.subr.bf16.mxu0 0
    %5284 = vmatpush1.bf16.msra.mxu0 %v292
    %5285 = vmatprep.subr.bf16.mxu0 0
    %5286 = vmatpush1.bf16.msra.mxu0 %v293
    %5287 = vmatprep.subr.bf16.mxu0 0
    %5288 = vmatpush1.bf16.msra.mxu0 %v294
    %5289 = vmatprep.subr.bf16.mxu0 0
    %5290 = vmatpush1.bf16.msra.mxu0 %v295
    %5291 = vmatprep.subr.bf16.mxu0 0
    %5292 = vmatpush1.bf16.msra.mxu0 %v296
    %5293 = vmatprep.subr.bf16.mxu0 0
    %5294 = vmatpush1.bf16.msra.mxu0 %v297
    %5295 = vmatprep.subr.bf16.mxu0 0
    %5296 = vmatpush1.bf16.msra.mxu0 0
    %5297 = vmatprep.subr.bf16.mxu0 0
    %5298 = vmatpush1.bf16.msra.mxu0 0
    %5299 = vmatprep.subr.bf16.mxu0 0
    %5300 = vmatpush1.bf16.msra.mxu0 0
    %5301 = vmatprep.subr.bf16.mxu0 0
    %5302 = vmatpush1.bf16.msra.mxu0 0
    %5303 = vmatprep.mubr.bf16.mxu0 %v2740
    %5304 = vmatmul.mubr.bf16.gmra.mrb[0].mxu0 %v2737
    %v5305 = vpop.f32.mrb[0].mxu0
    %v5306 = vadd.f32 %v5266, %v5305
    %v5307 = vpop.f32.mrb[0].mxu0
    %v5308 = vpop.f32.mrb[0].mxu0
    %v5309 = vpop.f32.mrb[0].mxu0
    %5310 = vdwg.mxu0
    %5311 = vrot.lane.b32.xlu0 %v4996, 64
    %v5312 = vpop.permute.xlu0 %5311
    %v5313 = vsel %vm534, %v4673, %v5312
    %v5316 = vsel %vm193, %v5312, 0
    %5318 = vmatprep.subr.bf16.mxu0 0
    %5319 = vmatpush1.bf16.msra.mxu0 %v437
    %5320 = vmatprep.subr.bf16.mxu0 0
    %5321 = vmatpush1.bf16.msra.mxu0 %v438
    %5322 = vmatprep.subr.bf16.mxu0 0
    %5323 = vmatpush1.bf16.msra.mxu0 %v439
    %5324 = vmatprep.subr.bf16.mxu0 0
    %5325 = vmatpush1.bf16.msra.mxu0 %v440
    %5326 = vmatprep.subr.bf16.mxu0 0
    %5327 = vmatpush1.bf16.msra.mxu0 %v441
    %5328 = vmatprep.subr.bf16.mxu0 0
    %5329 = vmatpush1.bf16.msra.mxu0 %v442
    %5330 = vmatprep.subr.bf16.mxu0 0
    %5331 = vmatpush1.bf16.msra.mxu0 %v443
    %5332 = vmatprep.subr.bf16.mxu0 0
    %5333 = vmatpush1.bf16.msra.mxu0 %v444
    %5334 = vmatprep.subr.bf16.mxu0 0
    %5335 = vmatpush1.bf16.msra.mxu0 %v445
    %5336 = vmatprep.subr.bf16.mxu0 0
    %5337 = vmatpush1.bf16.msra.mxu0 %v446
    %5338 = vmatprep.subr.bf16.mxu0 0
    %5339 = vmatpush1.bf16.msra.mxu0 %v447
    %5340 = vmatprep.subr.bf16.mxu0 0
    %5341 = vmatpush1.bf16.msra.mxu0 %v448
    %5342 = vmatprep.subr.bf16.mxu0 0
    %5343 = vmatpush1.bf16.msra.mxu0 0
    %5344 = vmatprep.subr.bf16.mxu0 0
    %5345 = vmatpush1.bf16.msra.mxu0 0
    %5346 = vmatprep.subr.bf16.mxu0 0
    %5347 = vmatpush1.bf16.msra.mxu0 0
    %5348 = vmatprep.subr.bf16.mxu0 0
    %5349 = vmatpush1.bf16.msra.mxu0 0
    %5350 = vmatprep.mubr.bf16.mxu0 %v5316
    %5351 = vmatmul.mubr.bf16.gmra.mrb[0].mxu0 %v5313
    %v5352 = vpop.f32.mrb[0].mxu0
    %v5353 = vadd.f32 0.0, %v5352
    %v5354 = vpop.f32.mrb[0].mxu0
    %v5355 = vpop.f32.mrb[0].mxu0
    %v5356 = vpop.f32.mrb[0].mxu0
    %5357 = vdwg.mxu0
    %v5358 = vadd.f32 %v5306, %v5353
    %v5359 = vadd.f32 %v5358, %v509
    %v5360 = vmax.f32 %v5359, 0.0
    %v5361 = vpack.c.bf16 %v5360, %v5360
    %s5362 = scalar_lea.vmem %s3, 1920
    %v5363 = vld [vmem:[%s5362] sm:$0xff]
    %v5364 = vld [vmem:[%s5362 + $0x8] sm:$0xff]
    %v5365 = vld [vmem:[%s5362 + $0x10] sm:$0xff]
    %v5366 = vld [vmem:[%s5362 + $0x18] sm:$0xff]
    %v5367 = vld [vmem:[%s5362 + $0x20] sm:$0xff]
    %v5368 = vld [vmem:[%s5362 + $0x28] sm:$0xff]
    %v5369 = vld [vmem:[%s5362 + $0x30] sm:$0xff]
    %v5370 = vld [vmem:[%s5362 + $0x38] sm:$0xff]
    %v5371 = vld [vmem:[%s5362 + $0x40] sm:$0xff]
    %v5372 = vld [vmem:[%s5362 + $0x48] sm:$0xff]
    %v5373 = vld [vmem:[%s5362 + $0x50] sm:$0xff]
    %v5374 = vld [vmem:[%s5362 + $0x58] sm:$0xff]
    %v5375 = vld [vmem:[%s5362 + $0x60] sm:$0xff]
    %v5376 = vld [vmem:[%s5362 + $0x68] sm:$0xff]
    %v5377 = vld [vmem:[%s5362 + $0x70] sm:$0xff]
    %v5378 = vld [vmem:[%s5362 + $0x78] sm:$0xff]
    %v5395 = vunpack.c.l.b16 %v5363
    %v5396 = vunpack.c.h.b16 %v5363
    %v5397 = vunpack.c.l.b16 %v5364
    %v5398 = vunpack.c.h.b16 %v5364
    %v5399 = vunpack.c.l.b16 %v5365
    %v5400 = vunpack.c.h.b16 %v5365
    %v5401 = vunpack.c.l.b16 %v5366
    %v5402 = vunpack.c.h.b16 %v5366
    %v5403 = vunpack.c.l.b16 %v5367
    %v5404 = vunpack.c.h.b16 %v5367
    %v5405 = vunpack.c.l.b16 %v5368
    %v5406 = vunpack.c.h.b16 %v5368
    %v5407 = vunpack.c.l.b16 %v5369
    %v5408 = vunpack.c.h.b16 %v5369
    %v5409 = vunpack.c.l.b16 %v5370
    %v5410 = vunpack.c.h.b16 %v5370
    %v5411 = vunpack.c.l.b16 %v5371
    %v5412 = vunpack.c.h.b16 %v5371
    %v5413 = vunpack.c.l.b16 %v5372
    %v5414 = vunpack.c.h.b16 %v5372
    %v5415 = vunpack.c.l.b16 %v5373
    %v5416 = vunpack.c.h.b16 %v5373
    %v5417 = vunpack.c.l.b16 %v5374
    %v5418 = vunpack.c.h.b16 %v5374
    %v5419 = vunpack.c.l.b16 %v5375
    %v5420 = vunpack.c.h.b16 %v5375
    %v5421 = vunpack.c.l.b16 %v5376
    %v5422 = vunpack.c.h.b16 %v5376
    %v5423 = vunpack.c.l.b16 %v5377
    %v5424 = vunpack.c.h.b16 %v5377
    %v5425 = vunpack.c.l.b16 %v5378
    %v5426 = vunpack.c.h.b16 %v5378
    %v5427 = vpack.c.b16 %v5399, %v5395
    %v5428 = vpack.c.b16 %v5400, %v5396
    %v5429 = vpack.c.b16 %v5401, %v5397
    %v5430 = vpack.c.b16 %v5402, %v5398
    %v5431 = vpack.c.b16 %v5407, %v5403
    %v5432 = vpack.c.b16 %v5408, %v5404
    %v5433 = vpack.c.b16 %v5409, %v5405
    %v5434 = vpack.c.b16 %v5410, %v5406
    %v5435 = vpack.c.b16 %v5415, %v5411
    %v5436 = vpack.c.b16 %v5416, %v5412
    %v5437 = vpack.c.b16 %v5417, %v5413
    %v5438 = vpack.c.b16 %v5418, %v5414
    %v5439 = vpack.c.b16 %v5423, %v5419
    %v5440 = vpack.c.b16 %v5424, %v5420
    %v5441 = vpack.c.b16 %v5425, %v5421
    %v5442 = vpack.c.b16 %v5426, %v5422
    %v5460 = vsel %vm193, %v5361, 0
    %5462 = vmatprep.subr.bf16.mxu0 %v5428
    %5463 = vmatpush1.bf16.msra.mxu0 %v5427
    %5464 = vmatprep.subr.bf16.mxu0 %v5432
    %5465 = vmatpush1.bf16.msra.mxu0 %v5431
    %5466 = vmatprep.subr.bf16.mxu0 %v5436
    %5467 = vmatpush1.bf16.msra.mxu0 %v5435
    %5468 = vmatprep.subr.bf16.mxu0 %v5440
    %5469 = vmatpush1.bf16.msra.mxu0 %v5439
    %5470 = vmatprep.subr.bf16.mxu0 0
    %5471 = vmatpush1.bf16.msra.mxu0 0
    %5472 = vmatprep.subr.bf16.mxu0 0
    %5473 = vmatpush1.bf16.msra.mxu0 0
    %5474 = vmatprep.subr.bf16.mxu0 0
    %5475 = vmatpush1.bf16.msra.mxu0 0
    %5476 = vmatprep.subr.bf16.mxu0 0
    %5477 = vmatpush1.bf16.msra.mxu0 0
    %5478 = vmatprep.subr.bf16.mxu0 0
    %5479 = vmatpush1.bf16.msra.mxu0 0
    %5480 = vmatprep.subr.bf16.mxu0 0
    %5481 = vmatpush1.bf16.msra.mxu0 0
    %5482 = vmatprep.subr.bf16.mxu0 0
    %5483 = vmatpush1.bf16.msra.mxu0 0
    %5484 = vmatprep.subr.bf16.mxu0 0
    %5485 = vmatpush1.bf16.msra.mxu0 0
    %5486 = vmatprep.subr.bf16.mxu0 0
    %5487 = vmatpush1.bf16.msra.mxu0 0
    %5488 = vmatprep.subr.bf16.mxu0 0
    %5489 = vmatpush1.bf16.msra.mxu0 0
    %5490 = vmatprep.subr.bf16.mxu0 0
    %5491 = vmatpush1.bf16.msra.mxu0 0
    %5492 = vmatprep.subr.bf16.mxu0 0
    %5493 = vmatpush1.bf16.msra.mxu0 0
    %5494 = vmatprep.mubr.bf16.mxu0 0
    %5495 = vmatmul.mubr.bf16.gmra.mrb[0].mxu0 %v5460
    %v5496 = vpop.f32.mrb[0].mxu0
    %v5497 = vadd.f32 0.0, %v5496
    %v5498 = vpop.f32.mrb[0].mxu0
    %v5499 = vadd.f32 0.0, %v5498
    %v5500 = vpop.f32.mrb[0].mxu0
    %v5501 = vpop.f32.mrb[0].mxu0
    %5502 = vdwg.mxu0
    %5503 = vmatprep.subr.bf16.mxu0 %v5430
    %5504 = vmatpush1.bf16.msra.mxu0 %v5429
    %5505 = vmatprep.subr.bf16.mxu0 %v5434
    %5506 = vmatpush1.bf16.msra.mxu0 %v5433
    %5507 = vmatprep.subr.bf16.mxu0 %v5438
    %5508 = vmatpush1.bf16.msra.mxu0 %v5437
    %5509 = vmatprep.subr.bf16.mxu0 %v5442
    %5510 = vmatpush1.bf16.msra.mxu0 %v5441
    %5511 = vmatprep.subr.bf16.mxu0 0
    %5512 = vmatpush1.bf16.msra.mxu0 0
    %5513 = vmatprep.subr.bf16.mxu0 0
    %5514 = vmatpush1.bf16.msra.mxu0 0
    %5515 = vmatprep.subr.bf16.mxu0 0
    %5516 = vmatpush1.bf16.msra.mxu0 0
    %5517 = vmatprep.subr.bf16.mxu0 0
    %5518 = vmatpush1.bf16.msra.mxu0 0
    %5519 = vmatprep.subr.bf16.mxu0 0
    %5520 = vmatpush1.bf16.msra.mxu0 0
    %5521 = vmatprep.subr.bf16.mxu0 0
    %5522 = vmatpush1.bf16.msra.mxu0 0
    %5523 = vmatprep.subr.bf16.mxu0 0
    %5524 = vmatpush1.bf16.msra.mxu0 0
    %5525 = vmatprep.subr.bf16.mxu0 0
    %5526 = vmatpush1.bf16.msra.mxu0 0
    %5527 = vmatprep.subr.bf16.mxu0 0
    %5528 = vmatpush1.bf16.msra.mxu0 0
    %5529 = vmatprep.subr.bf16.mxu0 0
    %5530 = vmatpush1.bf16.msra.mxu0 0
    %5531 = vmatprep.subr.bf16.mxu0 0
    %5532 = vmatpush1.bf16.msra.mxu0 0
    %5533 = vmatprep.subr.bf16.mxu0 0
    %5534 = vmatpush1.bf16.msra.mxu0 0
    %5535 = vmatprep.mubr.bf16.mxu0 0
    %5536 = vmatmul.mubr.bf16.gmra.mrb[0].mxu0 %v5460
    %v5537 = vpop.f32.mrb[0].mxu0
    %v5538 = vadd.f32 0.0, %v5537
    %v5539 = vpop.f32.mrb[0].mxu0
    %v5540 = vadd.f32 0.0, %v5539
    %v5541 = vpop.f32.mrb[0].mxu0
    %v5542 = vpop.f32.mrb[0].mxu0
    %5543 = vdwg.mxu0
    %v5544 = vadd.f32 %v5227, %v5497
    %v5545 = vadd.f32 %v5228, %v5499
    %v5546 = vadd.f32 %v5229, %v5538
    %v5547 = vadd.f32 %v5230, %v5540
    %v5548 = vld [vmem:[%s4] sm:$0xf]
    %v5550 = vlaneseq
    %v5551 = vshrl.u32 %v5550, 7
    %v5552 = vsub.s32 0, %v5551
    %v5553 = vrot.slane %v5548, %v5552
    %v5554 = vlaneseq
    %v5555 = vshrl.u32 %v5554, 7
    %v5556 = vsub.s32 1, %v5555
    %v5557 = vrot.slane %v5548, %v5556
    %v5558 = vlaneseq
    %v5559 = vshrl.u32 %v5558, 7
    %v5560 = vsub.s32 2, %v5559
    %v5561 = vrot.slane %v5548, %v5560
    %v5562 = vlaneseq
    %v5563 = vshrl.u32 %v5562, 7
    %v5564 = vsub.s32 3, %v5563
    %v5565 = vrot.slane %v5548, %v5564
    %v5570 = vadd.f32 %v5544, %v5553
    %v5571 = vadd.f32 %v5545, %v5557
    %v5572 = vadd.f32 %v5546, %v5561
    %v5573 = vadd.f32 %v5547, %v5565
    %v5574 = vmax.f32 %v5570, 0.0
    %v5575 = vmax.f32 %v5571, 0.0
    %v5576 = vmax.f32 %v5572, 0.0
    %v5577 = vmax.f32 %v5573, 0.0
    %v5578 = vpack.c.bf16 %v5574, %v5574
    %v5579 = vpack.c.bf16 %v5575, %v5575
    %v5580 = vpack.c.bf16 %v5576, %v5576
    %v5581 = vpack.c.bf16 %v5577, %v5577
    %v5582 = vld [vmem:[%s5] sm:$0xf]
    %v5583 = vld [vmem:[%s5 + $0x4] sm:$0xf]
    %v5584 = vld [vmem:[%s5 + $0x8] sm:$0xf]
    %v5585 = vld [vmem:[%s5 + $0xc] sm:$0xf]
    %v5586 = vld [vmem:[%s5 + $0x10] sm:$0xf]
    %v5587 = vld [vmem:[%s5 + $0x14] sm:$0xf]
    %v5588 = vld [vmem:[%s5 + $0x18] sm:$0xf]
    %v5589 = vld [vmem:[%s5 + $0x1c] sm:$0xf]
    %v5590 = vld [vmem:[%s5 + $0x20] sm:$0xf]
    %v5591 = vld [vmem:[%s5 + $0x24] sm:$0xf]
    %v5592 = vld [vmem:[%s5 + $0x28] sm:$0xf]
    %v5593 = vld [vmem:[%s5 + $0x2c] sm:$0xf]
    %v5594 = vld [vmem:[%s5 + $0x30] sm:$0xf]
    %v5595 = vld [vmem:[%s5 + $0x34] sm:$0xf]
    %v5596 = vld [vmem:[%s5 + $0x38] sm:$0xf]
    %v5597 = vld [vmem:[%s5 + $0x3c] sm:$0xf]
    %v5598 = vld [vmem:[%s5 + $0x40] sm:$0xf]
    %v5599 = vld [vmem:[%s5 + $0x44] sm:$0xf]
    %v5600 = vld [vmem:[%s5 + $0x48] sm:$0xf]
    %v5601 = vld [vmem:[%s5 + $0x4c] sm:$0xf]
    %v5602 = vld [vmem:[%s5 + $0x50] sm:$0xf]
    %v5603 = vld [vmem:[%s5 + $0x54] sm:$0xf]
    %v5604 = vld [vmem:[%s5 + $0x58] sm:$0xf]
    %v5605 = vld [vmem:[%s5 + $0x5c] sm:$0xf]
    %v5606 = vld [vmem:[%s5 + $0x60] sm:$0xf]
    %v5607 = vld [vmem:[%s5 + $0x64] sm:$0xf]
    %v5608 = vld [vmem:[%s5 + $0x68] sm:$0xf]
    %v5609 = vld [vmem:[%s5 + $0x6c] sm:$0xf]
    %v5610 = vld [vmem:[%s5 + $0x70] sm:$0xf]
    %v5611 = vld [vmem:[%s5 + $0x74] sm:$0xf]
    %v5612 = vld [vmem:[%s5 + $0x78] sm:$0xf]
    %v5613 = vld [vmem:[%s5 + $0x7c] sm:$0xf]
    %v5614 = vld [vmem:[%s5 + $0x80] sm:$0xf]
    %v5615 = vld [vmem:[%s5 + $0x84] sm:$0xf]
    %v5616 = vld [vmem:[%s5 + $0x88] sm:$0xf]
    %v5617 = vld [vmem:[%s5 + $0x8c] sm:$0xf]
    %v5618 = vld [vmem:[%s5 + $0x90] sm:$0xf]
    %v5619 = vld [vmem:[%s5 + $0x94] sm:$0xf]
    %v5620 = vld [vmem:[%s5 + $0x98] sm:$0xf]
    %v5621 = vld [vmem:[%s5 + $0x9c] sm:$0xf]
    %v5622 = vld [vmem:[%s5 + $0xa0] sm:$0xf]
    %v5623 = vld [vmem:[%s5 + $0xa4] sm:$0xf]
    %v5624 = vld [vmem:[%s5 + $0xa8] sm:$0xf]
    %v5625 = vld [vmem:[%s5 + $0xac] sm:$0xf]
    %v5626 = vld [vmem:[%s5 + $0xb0] sm:$0xf]
    %v5627 = vld [vmem:[%s5 + $0xb4] sm:$0xf]
    %v5628 = vld [vmem:[%s5 + $0xb8] sm:$0xf]
    %v5629 = vld [vmem:[%s5 + $0xbc] sm:$0xf]
    %v5630 = vld [vmem:[%s5 + $0xc0] sm:$0xf]
    %v5631 = vld [vmem:[%s5 + $0xc4] sm:$0xf]
    %v5632 = vld [vmem:[%s5 + $0xc8] sm:$0xf]
    %v5633 = vld [vmem:[%s5 + $0xcc] sm:$0xf]
    %v5634 = vld [vmem:[%s5 + $0xd0] sm:$0xf]
    %v5635 = vld [vmem:[%s5 + $0xd4] sm:$0xf]
    %v5636 = vld [vmem:[%s5 + $0xd8] sm:$0xf]
    %v5637 = vld [vmem:[%s5 + $0xdc] sm:$0xf]
    %v5638 = vld [vmem:[%s5 + $0xe0] sm:$0xf]
    %v5639 = vld [vmem:[%s5 + $0xe4] sm:$0xf]
    %v5640 = vld [vmem:[%s5 + $0xe8] sm:$0xf]
    %v5641 = vld [vmem:[%s5 + $0xec] sm:$0xf]
    %v5642 = vld [vmem:[%s5 + $0xf0] sm:$0xf]
    %v5643 = vld [vmem:[%s5 + $0xf4] sm:$0xf]
    %v5644 = vld [vmem:[%s5 + $0xf8] sm:$0xf]
    %v5645 = vld [vmem:[%s5 + $0xfc] sm:$0xf]
    %v5646 = vld [vmem:[%s6] sm:$0x1]
    %v5648 = vlaneseq
    %v5649 = vshrl.u32 %v5648, 7
    %v5650 = vsub.s32 0, %v5649
    %v5651 = vrot.slane %v5646, %v5650
    %v5717 = vunpack.c.l.b16 %v5582
    %v5718 = vunpack.c.l.b16 %v5583
    %v5719 = vunpack.c.l.b16 %v5584
    %v5720 = vunpack.c.l.b16 %v5585
    %v5721 = vunpack.c.l.b16 %v5586
    %v5722 = vunpack.c.l.b16 %v5587
    %v5723 = vunpack.c.l.b16 %v5588
    %v5724 = vunpack.c.l.b16 %v5589
    %v5725 = vunpack.c.l.b16 %v5590
    %v5726 = vunpack.c.l.b16 %v5591
    %v5727 = vunpack.c.l.b16 %v5592
    %v5728 = vunpack.c.l.b16 %v5593
    %v5729 = vunpack.c.l.b16 %v5594
    %v5730 = vunpack.c.l.b16 %v5595
    %v5731 = vunpack.c.l.b16 %v5596
    %v5732 = vunpack.c.l.b16 %v5597
    %v5733 = vunpack.c.l.b16 %v5598
    %v5734 = vunpack.c.l.b16 %v5599
    %v5735 = vunpack.c.l.b16 %v5600
    %v5736 = vunpack.c.l.b16 %v5601
    %v5737 = vunpack.c.l.b16 %v5602
    %v5738 = vunpack.c.l.b16 %v5603
    %v5739 = vunpack.c.l.b16 %v5604
    %v5740 = vunpack.c.l.b16 %v5605
    %v5741 = vunpack.c.l.b16 %v5606
    %v5742 = vunpack.c.l.b16 %v5607
    %v5743 = vunpack.c.l.b16 %v5608
    %v5744 = vunpack.c.l.b16 %v5609
    %v5745 = vunpack.c.l.b16 %v5610
    %v5746 = vunpack.c.l.b16 %v5611
    %v5747 = vunpack.c.l.b16 %v5612
    %v5748 = vunpack.c.l.b16 %v5613
    %v5749 = vunpack.c.l.b16 %v5614
    %v5750 = vunpack.c.l.b16 %v5615
    %v5751 = vunpack.c.l.b16 %v5616
    %v5752 = vunpack.c.l.b16 %v5617
    %v5753 = vunpack.c.l.b16 %v5618
    %v5754 = vunpack.c.l.b16 %v5619
    %v5755 = vunpack.c.l.b16 %v5620
    %v5756 = vunpack.c.l.b16 %v5621
    %v5757 = vunpack.c.l.b16 %v5622
    %v5758 = vunpack.c.l.b16 %v5623
    %v5759 = vunpack.c.l.b16 %v5624
    %v5760 = vunpack.c.l.b16 %v5625
    %v5761 = vunpack.c.l.b16 %v5626
    %v5762 = vunpack.c.l.b16 %v5627
    %v5763 = vunpack.c.l.b16 %v5628
    %v5764 = vunpack.c.l.b16 %v5629
    %v5765 = vunpack.c.l.b16 %v5630
    %v5766 = vunpack.c.l.b16 %v5631
    %v5767 = vunpack.c.l.b16 %v5632
    %v5768 = vunpack.c.l.b16 %v5633
    %v5769 = vunpack.c.l.b16 %v5634
    %v5770 = vunpack.c.l.b16 %v5635
    %v5771 = vunpack.c.l.b16 %v5636
    %v5772 = vunpack.c.l.b16 %v5637
    %v5773 = vunpack.c.l.b16 %v5638
    %v5774 = vunpack.c.l.b16 %v5639
    %v5775 = vunpack.c.l.b16 %v5640
    %v5776 = vunpack.c.l.b16 %v5641
    %v5777 = vunpack.c.l.b16 %v5642
    %v5778 = vunpack.c.l.b16 %v5643
    %v5779 = vunpack.c.l.b16 %v5644
    %v5780 = vunpack.c.l.b16 %v5645
    %v5781 = vpack.c.b16 %v5718, %v5717
    %v5782 = vpack.c.b16 %v5720, %v5719
    %v5783 = vpack.c.b16 %v5722, %v5721
    %v5784 = vpack.c.b16 %v5724, %v5723
    %v5785 = vpack.c.b16 %v5726, %v5725
    %v5786 = vpack.c.b16 %v5728, %v5727
    %v5787 = vpack.c.b16 %v5730, %v5729
    %v5788 = vpack.c.b16 %v5732, %v5731
    %v5789 = vpack.c.b16 %v5734, %v5733
    %v5790 = vpack.c.b16 %v5736, %v5735
    %v5791 = vpack.c.b16 %v5738, %v5737
    %v5792 = vpack.c.b16 %v5740, %v5739
    %v5793 = vpack.c.b16 %v5742, %v5741
    %v5794 = vpack.c.b16 %v5744, %v5743
    %v5795 = vpack.c.b16 %v5746, %v5745
    %v5796 = vpack.c.b16 %v5748, %v5747
    %v5797 = vpack.c.b16 %v5750, %v5749
    %v5798 = vpack.c.b16 %v5752, %v5751
    %v5799 = vpack.c.b16 %v5754, %v5753
    %v5800 = vpack.c.b16 %v5756, %v5755
    %v5801 = vpack.c.b16 %v5758, %v5757
    %v5802 = vpack.c.b16 %v5760, %v5759
    %v5803 = vpack.c.b16 %v5762, %v5761
    %v5804 = vpack.c.b16 %v5764, %v5763
    %v5805 = vpack.c.b16 %v5766, %v5765
    %v5806 = vpack.c.b16 %v5768, %v5767
    %v5807 = vpack.c.b16 %v5770, %v5769
    %v5808 = vpack.c.b16 %v5772, %v5771
    %v5809 = vpack.c.b16 %v5774, %v5773
    %v5810 = vpack.c.b16 %v5776, %v5775
    %v5811 = vpack.c.b16 %v5778, %v5777
    %v5812 = vpack.c.b16 %v5780, %v5779
    %5845 = vmatprep.subr.bf16.mxu0 0
    %5846 = vmatpush1.bf16.msra.mxu0 %v5781
    %5847 = vmatprep.subr.bf16.mxu0 0
    %5848 = vmatpush1.bf16.msra.mxu0 %v5782
    %5849 = vmatprep.subr.bf16.mxu0 0
    %5850 = vmatpush1.bf16.msra.mxu0 %v5783
    %5851 = vmatprep.subr.bf16.mxu0 0
    %5852 = vmatpush1.bf16.msra.mxu0 %v5784
    %5853 = vmatprep.subr.bf16.mxu0 0
    %5854 = vmatpush1.bf16.msra.mxu0 %v5785
    %5855 = vmatprep.subr.bf16.mxu0 0
    %5856 = vmatpush1.bf16.msra.mxu0 %v5786
    %5857 = vmatprep.subr.bf16.mxu0 0
    %5858 = vmatpush1.bf16.msra.mxu0 %v5787
    %5859 = vmatprep.subr.bf16.mxu0 0
    %5860 = vmatpush1.bf16.msra.mxu0 %v5788
    %5861 = vmatprep.subr.bf16.mxu0 0
    %5862 = vmatpush1.bf16.msra.mxu0 %v5789
    %5863 = vmatprep.subr.bf16.mxu0 0
    %5864 = vmatpush1.bf16.msra.mxu0 %v5790
    %5865 = vmatprep.subr.bf16.mxu0 0
    %5866 = vmatpush1.bf16.msra.mxu0 %v5791
    %5867 = vmatprep.subr.bf16.mxu0 0
    %5868 = vmatpush1.bf16.msra.mxu0 %v5792
    %5869 = vmatprep.subr.bf16.mxu0 0
    %5870 = vmatpush1.bf16.msra.mxu0 %v5793
    %5871 = vmatprep.subr.bf16.mxu0 0
    %5872 = vmatpush1.bf16.msra.mxu0 %v5794
    %5873 = vmatprep.subr.bf16.mxu0 0
    %5874 = vmatpush1.bf16.msra.mxu0 %v5795
    %5875 = vmatprep.subr.bf16.mxu0 0
    %5876 = vmatpush1.bf16.msra.mxu0 %v5796
    %5877 = vmatprep.mubr.bf16.mxu0 %v5579
    %5878 = vmatmul.mubr.bf16.gmra.mrb[0].mxu0 %v5578
    %v5879 = vpop.f32.mrb[0].mxu0
    %v5880 = vadd.f32 %v5651, %v5879
    %v5881 = vpop.f32.mrb[0].mxu0
    %v5882 = vpop.f32.mrb[0].mxu0
    %v5883 = vpop.f32.mrb[0].mxu0
    %5884 = vdwg.mxu0
    %5885 = vmatprep.subr.bf16.mxu0 0
    %5886 = vmatpush1.bf16.msra.mxu0 %v5797
    %5887 = vmatprep.subr.bf16.mxu0 0
    %5888 = vmatpush1.bf16.msra.mxu0 %v5798
    %5889 = vmatprep.subr.bf16.mxu0 0
    %5890 = vmatpush1.bf16.msra.mxu0 %v5799
    %5891 = vmatprep.subr.bf16.mxu0 0
    %5892 = vmatpush1.bf16.msra.mxu0 %v5800
    %5893 = vmatprep.subr.bf16.mxu0 0
    %5894 = vmatpush1.bf16.msra.mxu0 %v5801
    %5895 = vmatprep.subr.bf16.mxu0 0
    %5896 = vmatpush1.bf16.msra.mxu0 %v5802
    %5897 = vmatprep.subr.bf16.mxu0 0
    %5898 = vmatpush1.bf16.msra.mxu0 %v5803
    %5899 = vmatprep.subr.bf16.mxu0 0
    %5900 = vmatpush1.bf16.msra.mxu0 %v5804
    %5901 = vmatprep.subr.bf16.mxu0 0
    %5902 = vmatpush1.bf16.msra.mxu0 %v5805
    %5903 = vmatprep.subr.bf16.mxu0 0
    %5904 = vmatpush1.bf16.msra.mxu0 %v5806
    %5905 = vmatprep.subr.bf16.mxu0 0
    %5906 = vmatpush1.bf16.msra.mxu0 %v5807
    %5907 = vmatprep.subr.bf16.mxu0 0
    %5908 = vmatpush1.bf16.msra.mxu0 %v5808
    %5909 = vmatprep.subr.bf16.mxu0 0
    %5910 = vmatpush1.bf16.msra.mxu0 %v5809
    %5911 = vmatprep.subr.bf16.mxu0 0
    %5912 = vmatpush1.bf16.msra.mxu0 %v5810
    %5913 = vmatprep.subr.bf16.mxu0 0
    %5914 = vmatpush1.bf16.msra.mxu0 %v5811
    %5915 = vmatprep.subr.bf16.mxu0 0
    %5916 = vmatpush1.bf16.msra.mxu0 %v5812
    %5917 = vmatprep.mubr.bf16.mxu0 %v5581
    %5918 = vmatmul.mubr.bf16.gmra.mrb[0].mxu0 %v5580
    %v5919 = vpop.f32.mrb[0].mxu0
    %v5920 = vadd.f32 %v5880, %v5919
    %v5921 = vpop.f32.mrb[0].mxu0
    %v5922 = vpop.f32.mrb[0].mxu0
    %v5923 = vpop.f32.mrb[0].mxu0
    %5924 = vdwg.mxu0
    %5926 = vset.pattern.permute.xlu0 3
    %5927 = vperm.xlu0 %5926, %v5920
    %v5928 = vpop.permute.xlu0 %5927
    %v5930 = vadd.f32 %v5928, %v5920
    %vm5931 = vcmask 17408
    %v5932 = vsel %vm5931, %v5920, 0.0
    %5933 = vadd.xlane.f32.xlu0 %v5932
    %v5934 = vpop.xlane.xlu0 %5933
    %v5935 = vrcp.pop 3.0
    %v5936 = vmul.f32 %v5934, %v5935
    %v5937 = vsub.f32 %v5930, %v5936
    %5938 = vst.msk [vmem:[#allocation2] sm:$0x3] %vm5931, %v5937
    // Predicated region
    $region30: #{dddqn_forward.5} parent=1 // pred_check
      _
    $region31: #{dddqn_forward.5} parent=1 // pred_check_branch
      %5940 = sbr.rel (0) target = $region33
    $region32: #{dddqn_forward.5} parent=1 // pred_region
      %s5942 = ssub.s32 32, 32
      %5943 = vsyncadd [#allocation3], %s5942
      %s5945 = sshll.u32 [#allocation2], 4
      %s5946 = int_to_ptr.vmem [resolvable:$true] %s5945
      %5948 = dma.vmem_to_hbm [thread:$0]  %s5946, 32, %s7, [#allocation3]
    $region33: #{dddqn_forward.5} parent=1 // pred_fallthru
      _
    // Predicated region
    $region34: #{dddqn_forward.5} parent=1 // pred_check
      _
    $region35: #{dddqn_forward.5} parent=1 // pred_check_branch
      %5950 = sbr.rel (0) target = $region37
    $region36: #{dddqn_forward.5} parent=1 // pred_region
      %5951 = dma.done [#allocation3], 32
    $region37: #{dddqn_forward.5} parent=1 // pred_fallthru
      _
    %5952 = vsyncpa [#allocation3], 1

</llo_original>
